<compile_context>
chip_gen: v7x
topology: tpu7x:2x2x1
jax: 0.10.0
libtpu: 0.0.40
codegen_flags: <defaults>
</compile_context>

<pallas_src>
import functools

import jax
import jax.numpy as jnp
from jax.experimental import pallas as pl
from jax.experimental.pallas import tpu as pltpu

EPS = 1e-5
LANE = 128
VMEM_LIMIT = 32 * 1024 * 1024


def _round_up(x, m):
    return (x + m - 1) // m * m


def _pick_tile_m(m):
    for tm in (512, 256, 128, 64, 32, 16):
        if m % tm == 0:
            return tm
    return m


def _cparams(*sem):
    return pltpu.CompilerParams(dimension_semantics=sem,
                                vmem_limit_bytes=VMEM_LIMIT)


def _partial_stats(y):
    """Per-channel partial (sum, sum-of-squares) of an f32 tile y:[rows, C] -> (2, C)."""
    s = jnp.sum(y, axis=0, keepdims=True)
    ss = jnp.sum(y * y, axis=0, keepdims=True)
    return jnp.concatenate([s, ss], axis=0)


# ----------------------------- Pallas kernels -----------------------------------------

def _conv1x1_stats_kernel(x_ref, w_ref, y_ref, stats_ref):
    # 1x1x1 conv == plain matmul over flattened voxels; bf16 operands, f32 accumulation.
    y = jnp.dot(x_ref[...], w_ref[...], preferred_element_type=jnp.float32)
    y_ref[...] = y
    stats_ref[...] = _partial_stats(y).reshape(1, 2, y.shape[1])


def _bn_relu_kernel(y_ref, scale_ref, shift_ref, a_ref):
    # y*scale + shift == (y - mean) * rsqrt(var + eps) * gamma + beta
    a = jnp.maximum(y_ref[...] * scale_ref[...] + shift_ref[...], 0.0)
    a_ref[...] = a.astype(a_ref.dtype)


def _bn_relu_conv1x1_stats_kernel(y_ref, scale_ref, shift_ref, w_ref, o_ref, stats_ref):
    # Fused: BN-apply + ReLU (f32) -> bf16 -> 1x1x1 conv matmul; emits next-BN partial stats.
    a = jnp.maximum(y_ref[...] * scale_ref[...] + shift_ref[...], 0.0)
    y = jnp.dot(a.astype(jnp.bfloat16), w_ref[...], preferred_element_type=jnp.float32)
    o_ref[...] = y
    stats_ref[...] = _partial_stats(y).reshape(1, 2, y.shape[1])


def _bn_add_relu_kernel(y_ref, scale_ref, shift_ref, res_ref, o_ref):
    o_ref[...] = jnp.maximum(
        y_ref[...] * scale_ref[...] + shift_ref[...] + res_ref[...], 0.0)


def _conv3x3x3_stats_kernel(xp_ref, w_ref, y_ref, stats_ref, *, H, W, C):
    # Implicit GEMM for one (sample, output-depth-slice): accumulate 27 shifted matmuls.
    # xp_ref: (1, D+2, H+2, W+2, C) zero-padded bf16 activation, resident per sample.
    d = pl.program_id(1)
    acc = jnp.zeros((H * W, C), jnp.float32)
    for kd in range(3):
        plane = xp_ref[0, pl.ds(d + kd, 1), :, :, :]              # (1, H+2, W+2, C) bf16
        plane = plane.reshape(H + 2, W + 2, C).astype(jnp.float32)
        for kh in range(3):
            for kw in range(3):
                patch = plane[kh:kh + H, kw:kw + W, :].reshape(H * W, C)
                wk = w_ref[(kd * 3 + kh) * 3 + kw]                # (C, C) bf16
                acc += jnp.dot(patch.astype(jnp.bfloat16), wk,
                               preferred_element_type=jnp.float32)
    y_ref[...] = acc.reshape(1, 1, H, W, C)
    stats_ref[...] = _partial_stats(acc).reshape(1, 1, 2, C)


# ----------------------------- pallas_call wrappers ------------------------------------

def _conv1x1_call(x2d, w, tm):
    M, Cin = x2d.shape
    Cout = w.shape[1]
    T = M // tm
    return pl.pallas_call(
        _conv1x1_stats_kernel,
        grid=(T,),
        in_specs=[pl.BlockSpec((tm, Cin), lambda i: (i, 0)),
                  pl.BlockSpec((Cin, Cout), lambda i: (0, 0))],
        out_specs=(pl.BlockSpec((tm, Cout), lambda i: (i, 0)),
                   pl.BlockSpec((1, 2, Cout), lambda i: (i, 0, 0))),
        out_shape=(jax.ShapeDtypeStruct((M, Cout), jnp.float32),
                   jax.ShapeDtypeStruct((T, 2, Cout), jnp.float32)),
        compiler_params=_cparams("parallel"),
    )(x2d, w)


def _bn_relu_call(y, scale, shift, tm, out_dtype):
    M, C = y.shape
    return pl.pallas_call(
        _bn_relu_kernel,
        grid=(M // tm,),
        in_specs=[pl.BlockSpec((tm, C), lambda i: (i, 0)),
                  pl.BlockSpec((1, C), lambda i: (0, 0)),
                  pl.BlockSpec((1, C), lambda i: (0, 0))],
        out_specs=pl.BlockSpec((tm, C), lambda i: (i, 0)),
        out_shape=jax.ShapeDtypeStruct((M, C), out_dtype),
        compiler_params=_cparams("parallel"),
    )(y, scale, shift)


def _conv3x3x3_call(xp, w):
    N, Dp2, Hp2, Wp2, C = xp.shape
    D, H, W = Dp2 - 2, Hp2 - 2, Wp2 - 2
    kernel = functools.partial(_conv3x3x3_stats_kernel, H=H, W=W, C=C)
    return pl.pallas_call(
        kernel,
        grid=(N, D),
        in_specs=[pl.BlockSpec((1, Dp2, Hp2, Wp2, C), lambda n, d: (n, 0, 0, 0, 0)),
                  pl.BlockSpec((27, C, C), lambda n, d: (0, 0, 0))],
        out_specs=(pl.BlockSpec((1, 1, H, W, C), lambda n, d: (n, d, 0, 0, 0)),
                   pl.BlockSpec((1, 1, 2, C), lambda n, d: (n, d, 0, 0))),
        out_shape=(jax.ShapeDtypeStruct((N, D, H, W, C), jnp.float32),
                   jax.ShapeDtypeStruct((N, D, 2, C), jnp.float32)),
        compiler_params=_cparams("parallel", "arbitrary"),
    )(xp, w)


def _bn_relu_conv1x1_call(y, scale, shift, w, tm):
    M, Cin = y.shape
    Cout = w.shape[1]
    T = M // tm
    return pl.pallas_call(
        _bn_relu_conv1x1_stats_kernel,
        grid=(T,),
        in_specs=[pl.BlockSpec((tm, Cin), lambda i: (i, 0)),
                  pl.BlockSpec((1, Cin), lambda i: (0, 0)),
                  pl.BlockSpec((1, Cin), lambda i: (0, 0)),
                  pl.BlockSpec((Cin, Cout), lambda i: (0, 0))],
        out_specs=(pl.BlockSpec((tm, Cout), lambda i: (i, 0)),
                   pl.BlockSpec((1, 2, Cout), lambda i: (i, 0, 0))),
        out_shape=(jax.ShapeDtypeStruct((M, Cout), jnp.float32),
                   jax.ShapeDtypeStruct((T, 2, Cout), jnp.float32)),
        compiler_params=_cparams("parallel"),
    )(y, scale, shift, w)


def _bn_add_relu_call(y, scale, shift, res, tm):
    M, C = y.shape
    return pl.pallas_call(
        _bn_add_relu_kernel,
        grid=(M // tm,),
        in_specs=[pl.BlockSpec((tm, C), lambda i: (i, 0)),
                  pl.BlockSpec((1, C), lambda i: (0, 0)),
                  pl.BlockSpec((1, C), lambda i: (0, 0)),
                  pl.BlockSpec((tm, C), lambda i: (i, 0))],
        out_specs=pl.BlockSpec((tm, C), lambda i: (i, 0)),
        out_shape=jax.ShapeDtypeStruct((M, C), jnp.float32),
        compiler_params=_cparams("parallel"),
    )(y, scale, shift, res)


# ----------------------------- JAX glue -------------------------------------------------

def _bn_scale_shift(stats, count, gamma, beta):
    """Combine per-tile partial (sum, sumsq) into affine (scale, shift) for y*scale+shift."""
    tot = jnp.sum(stats.reshape(-1, 2, stats.shape[-1]), axis=0)   # (2, C)
    mean = tot[0] / count
    var = tot[1] / count - mean * mean          # biased variance (training-mode BN)
    scale = gamma * jax.lax.rsqrt(var + EPS)
    shift = beta - mean * scale
    return scale[None, :], shift[None, :]


def bottleneck_forward(x_ncdhw, params):
    """Forward pass of Bottleneck (stride=1, downsample=None). x: [N, C, D, H, W]."""
    N, Cin, D, H, W = x_ncdhw.shape
    planes = params["conv1_w"].shape[0]
    P4 = 4 * planes
    assert Cin == P4, "identity residual requires inplanes == planes * expansion"
    M = N * D * H * W
    tm = _pick_tile_m(M)

    Cpad = _round_up(Cin, LANE)       # padded expansion / input width
    Ppad = _round_up(planes, LANE)    # padded bottleneck width

    def pad2d(a, r, c):
        return jnp.pad(a, ((0, r - a.shape[0]), (0, c - a.shape[1])))

    def pad_vec(v, c):
        return jnp.pad(v.astype(jnp.float32), (0, c - v.shape[0]))

    # NCDHW -> NDHWC -> [M, C] slab; channels zero-padded to a lane-dense width.
    x2d = jnp.transpose(x_ncdhw, (0, 2, 3, 4, 1)).astype(jnp.float32).reshape(M, Cin)
    res = jnp.pad(x2d, ((0, 0), (0, Cpad - Cin)))     # identity residual (f32)
    x_bf = res.astype(jnp.bfloat16)

    # conv weights -> zero-padded bf16 matmul weights
    w1 = pad2d(params["conv1_w"].reshape(planes, Cin).T, Cpad, Ppad).astype(jnp.bfloat16)
    w2 = jnp.transpose(params["conv2_w"], (2, 3, 4, 1, 0)).reshape(27, planes, planes)
    w2 = jnp.pad(w2, ((0, 0), (0, Ppad - planes), (0, Ppad - planes))).astype(jnp.bfloat16)
    w3 = pad2d(params["conv3_w"].reshape(P4, planes).T, Ppad, Cpad).astype(jnp.bfloat16)

    g1, b1 = pad_vec(params["bn1_gamma"], Ppad), pad_vec(params["bn1_beta"], Ppad)
    g2, b2 = pad_vec(params["bn2_gamma"], Ppad), pad_vec(params["bn2_beta"], Ppad)
    g3, b3 = pad_vec(params["bn3_gamma"], Cpad), pad_vec(params["bn3_beta"], Cpad)

    # ---- conv1 (1x1x1) + bn1 partial stats (pass 1) ------------------------------------
    y1, st1 = _conv1x1_call(x_bf, w1, tm)
    sc1, sh1 = _bn_scale_shift(st1, M, g1, b1)
    # ---- bn1 apply + ReLU (pass 2); bf16 activation feeds the 3x3x3 conv ----------------
    a1 = _bn_relu_call(y1, sc1, sh1, tm, jnp.bfloat16)
    a1p = jnp.pad(a1.reshape(N, D, H, W, Ppad),
                  ((0, 0), (1, 1), (1, 1), (1, 1), (0, 0)))
    # ---- conv2 (3x3x3 implicit GEMM, no HBM im2col) + bn2 partial stats -----------------
    y2, st2 = _conv3x3x3_call(a1p, w2)
    sc2, sh2 = _bn_scale_shift(st2, M, g2, b2)
    # ---- bn2 apply + ReLU fused into conv3 (1x1x1) + bn3 partial stats ------------------
    y3, st3 = _bn_relu_conv1x1_call(y2.reshape(M, Ppad), sc2, sh2, w3, tm)
    sc3, sh3 = _bn_scale_shift(st3, M, g3, b3)
    # ---- bn3 apply + residual add + ReLU -------------------------------------------------
    out2d = _bn_add_relu_call(y3, sc3, sh3, res, tm)

    out = out2d[:, :P4].reshape(N, D, H, W, P4)
    return jnp.transpose(out, (0, 4, 1, 2, 3))        # back to NCDHW


# ----------------------------- pure-JAX reference (correctness check) -------------------

def _reference_forward(x, params):
    """Reference with the same bf16 operand quantization points as the Pallas kernels."""
    bf = lambda t: t.astype(jnp.bfloat16).astype(jnp.float32)

    def conv(x, w, pad):
        return jax.lax.conv_general_dilated(
            bf(x), bf(w), window_strides=(1, 1, 1), padding=((pad, pad),) * 3,
            dimension_numbers=("NCDHW", "OIDHW", "NCDHW"))

    def bn(y, gamma, beta):
        mean = jnp.mean(y, axis=(0, 2, 3, 4))
        var = jnp.mean(y * y, axis=(0, 2, 3, 4)) - mean * mean
        scale = (gamma * jax.lax.rsqrt(var + EPS)).reshape(1, -1, 1, 1, 1)
        shift = beta.reshape(1, -1, 1, 1, 1) - mean.reshape(1, -1, 1, 1, 1) * scale
        return y * scale + shift

    out = jax.nn.relu(bn(conv(x, params["conv1_w"], 0),
                         params["bn1_gamma"], params["bn1_beta"]))
    out = jax.nn.relu(bn(conv(out, params["conv2_w"], 1),
                         params["bn2_gamma"], params["bn2_beta"]))
    out = bn(conv(out, params["conv3_w"], 0),
             params["bn3_gamma"], params["bn3_beta"])
    return jax.nn.relu(out + x)


# ----------------------------- main ------------------------------------------------------

if __name__ == "__main__":
    # Small shapes consistent with the module: inplanes == planes * expansion
    # (stride=1, downsample=None => identity residual).
    N, planes, D, H, W = 2, 4, 8, 8, 8
    inplanes = planes * 4

    key = jax.random.PRNGKey(0)
    kx, k1, k2, k3 = jax.random.split(key, 4)

    x = jax.random.normal(kx, (N, inplanes, D, H, W), dtype=jnp.float32)
    params = {
        "conv1_w": 0.1 * jax.random.normal(k1, (planes, inplanes, 1, 1, 1), dtype=jnp.float32),
        "conv2_w": 0.1 * jax.random.normal(k2, (planes, planes, 3, 3, 3), dtype=jnp.float32),
        "conv3_w": 0.1 * jax.random.normal(k3, (planes * 4, planes, 1, 1, 1), dtype=jnp.float32),
        "bn1_gamma": 1.0 + 0.1 * jnp.arange(planes, dtype=jnp.float32),
        "bn1_beta": 0.05 * jnp.arange(planes, dtype=jnp.float32),
        "bn2_gamma": 1.0 - 0.05 * jnp.arange(planes, dtype=jnp.float32),
        "bn2_beta": -0.02 * jnp.arange(planes, dtype=jnp.float32),
        "bn3_gamma": 1.0 + 0.02 * jnp.arange(planes * 4, dtype=jnp.float32),
        "bn3_beta": 0.01 * jnp.arange(planes * 4, dtype=jnp.float32),
    }

    out = jax.block_until_ready(jax.jit(bottleneck_forward)(x, params))
    ref = jax.block_until_ready(_reference_forward(x, params))

    assert out.shape == (N, planes * 4, D, H, W), out.shape
    max_err = float(jnp.max(jnp.abs(out - ref)))
    assert jnp.allclose(out, ref, atol=2e-2, rtol=2e-2), max_err

    print("KERNEL_OK")
</pallas_src>

<mosaic_0001>
module attributes {stable_mosaic.version = 11 : i64} {
  func.func @_conv1x1_stats_kernel(%arg0: i32, %arg1: memref<512x128xbf16, #tpu.memory_space<vmem>>, %arg2: memref<128x128xbf16, #tpu.memory_space<vmem>>, %arg3: memref<512x128xf32, #tpu.memory_space<vmem>>, %arg4: memref<1x2x128xf32, #tpu.memory_space<vmem>>) attributes {dimension_semantics = [#tpu.dimension_semantics<parallel>], iteration_bounds = array<i64: 2>, scalar_prefetch = 0 : i64, scratch_operands = 0 : i64, tpu.core_type = #tpu.core_type<tc>, window_params = [{transform_indices = @transform_0, window_bounds = array<i64: 512, 128>}, {pipeline_mode = #tpu.pipeline_mode<synchronous>, transform_indices = @transform_1, window_bounds = array<i64: 128, 128>}, {transform_indices = @transform_2, window_bounds = array<i64: 512, 128>}, {transform_indices = @transform_3, window_bounds = array<i64: 1, 2, 128>}]} {
    %c0 = arith.constant 0 : index
    %c0_0 = arith.constant 0 : index
    %0 = vector.load %arg1[%c0, %c0_0] : memref<512x128xbf16, #tpu.memory_space<vmem>>, vector<512x128xbf16>
    %c0_1 = arith.constant 0 : index
    %c0_2 = arith.constant 0 : index
    %1 = vector.load %arg2[%c0_1, %c0_2] : memref<128x128xbf16, #tpu.memory_space<vmem>>, vector<128x128xbf16>
    %cst = arith.constant dense<0.000000e+00> : vector<512x128xf32>
    %2 = tpu.matmul %0, %1, %cst {dimension_numbers = #tpu.dot_dimension_numbers<[1], [0], [0], [1], [0, 0, 1, 1], [], []>} : vector<512x128xbf16>, vector<128x128xbf16>, vector<512x128xf32> -> vector<512x128xf32>
    %c0_3 = arith.constant 0 : index
    %c0_4 = arith.constant 0 : index
    %3 = vector.load %arg3[%c0_3, %c0_4] : memref<512x128xf32, #tpu.memory_space<vmem>>, vector<512x128xf32>
    tpu.vector_store %arg3[%c0_3, %c0_4], %2 {strides = array<i32>} : memref<512x128xf32, #tpu.memory_space<vmem>>, vector<512x128xf32>,
    %cst_5 = arith.constant dense<0.000000e+00> : vector<128xf32>
    %4 = vector.multi_reduction <add>, %2, %cst_5 [0] : vector<512x128xf32> to vector<128xf32>
    %5 = vector.shape_cast %4 : vector<128xf32> to vector<1x128xf32>
    %6 = arith.mulf %2, %2 : vector<512x128xf32>
    %cst_6 = arith.constant dense<0.000000e+00> : vector<128xf32>
    %7 = vector.multi_reduction <add>, %6, %cst_6 [0] : vector<512x128xf32> to vector<128xf32>
    %8 = vector.shape_cast %7 : vector<128xf32> to vector<1x128xf32>
    %9 = tpu.concatenate %5, %8 in 0 : vector<1x128xf32>, vector<1x128xf32> -> vector<2x128xf32>
    %10 = vector.shape_cast %9 : vector<2x128xf32> to vector<1x2x128xf32>
    %c0_7 = arith.constant 0 : index
    %c0_8 = arith.constant 0 : index
    %c0_9 = arith.constant 0 : index
    %11 = vector.load %arg4[%c0_7, %c0_8, %c0_9] : memref<1x2x128xf32, #tpu.memory_space<vmem>>, vector<1x2x128xf32>
    tpu.vector_store %arg4[%c0_7, %c0_8, %c0_9], %10 {strides = array<i32>} : memref<1x2x128xf32, #tpu.memory_space<vmem>>, vector<1x2x128xf32>,
    return
  }
  func.func @transform_0(%arg0: i32) -> (i32, i32) {
    %c0_i32 = arith.constant 0 : i32
    %c0_i32_0 = arith.constant 0 : i32
    return %arg0, %c0_i32 : i32, i32
  }
  func.func @transform_1(%arg0: i32) -> (i32, i32) {
    %c0_i32 = arith.constant 0 : i32
    %c0_i32_0 = arith.constant 0 : i32
    %c0_i32_1 = arith.constant 0 : i32
    return %c0_i32, %c0_i32_0 : i32, i32
  }
  func.func @transform_2(%arg0: i32) -> (i32, i32) {
    %c0_i32 = arith.constant 0 : i32
    %c0_i32_0 = arith.constant 0 : i32
    return %arg0, %c0_i32 : i32, i32
  }
  func.func @transform_3(%arg0: i32) -> (i32, i32, i32) {
    %c0_i32 = arith.constant 0 : i32
    %c0_i32_0 = arith.constant 0 : i32
    %c0_i32_1 = arith.constant 0 : i32
    return %arg0, %c0_i32, %c0_i32_0 : i32, i32, i32
  }
}

module attributes {stable_mosaic.version = 11 : i64} {
  func.func @_bn_relu_kernel(%arg0: i32, %arg1: memref<512x128xf32, #tpu.memory_space<vmem>>, %arg2: memref<1x128xf32, #tpu.memory_space<vmem>>, %arg3: memref<1x128xf32, #tpu.memory_space<vmem>>, %arg4: memref<512x128xbf16, #tpu.memory_space<vmem>>) attributes {dimension_semantics = [#tpu.dimension_semantics<parallel>], iteration_bounds = array<i64: 2>, scalar_prefetch = 0 : i64, scratch_operands = 0 : i64, tpu.core_type = #tpu.core_type<tc>, window_params = [{transform_indices = @transform_0, window_bounds = array<i64: 512, 128>}, {pipeline_mode = #tpu.pipeline_mode<synchronous>, transform_indices = @transform_1, window_bounds = array<i64: 1, 128>}, {pipeline_mode = #tpu.pipeline_mode<synchronous>, transform_indices = @transform_2, window_bounds = array<i64: 1, 128>}, {transform_indices = @transform_3, window_bounds = array<i64: 512, 128>}]} {
    %c0 = arith.constant 0 : index
    %c0_0 = arith.constant 0 : index
    %0 = vector.load %arg1[%c0, %c0_0] : memref<512x128xf32, #tpu.memory_space<vmem>>, vector<512x128xf32>
    %c0_1 = arith.constant 0 : index
    %c0_2 = arith.constant 0 : index
    %1 = vector.load %arg2[%c0_1, %c0_2] : memref<1x128xf32, #tpu.memory_space<vmem>>, vector<1x128xf32>
    %2 = vector.broadcast %1 : vector<1x128xf32> to vector<512x128xf32>
    %3 = arith.mulf %0, %2 : vector<512x128xf32>
    %c0_3 = arith.constant 0 : index
    %c0_4 = arith.constant 0 : index
    %4 = vector.load %arg3[%c0_3, %c0_4] : memref<1x128xf32, #tpu.memory_space<vmem>>, vector<1x128xf32>
    %5 = vector.broadcast %4 : vector<1x128xf32> to vector<512x128xf32>
    %6 = arith.addf %3, %5 : vector<512x128xf32>
    %cst = arith.constant 0.000000e+00 : f32
    %7 = vector.broadcast %cst : f32 to vector<512x128xf32>
    %8 = arith.maximumf %6, %7 : vector<512x128xf32>
    %9 = arith.truncf %8 : vector<512x128xf32> to vector<512x128xbf16>
    %c0_5 = arith.constant 0 : index
    %c0_6 = arith.constant 0 : index
    %10 = vector.load %arg4[%c0_5, %c0_6] : memref<512x128xbf16, #tpu.memory_space<vmem>>, vector<512x128xbf16>
    tpu.vector_store %arg4[%c0_5, %c0_6], %9 {strides = array<i32>} : memref<512x128xbf16, #tpu.memory_space<vmem>>, vector<512x128xbf16>,
    return
  }
  func.func @transform_0(%arg0: i32) -> (i32, i32) {
    %c0_i32 = arith.constant 0 : i32
    %c0_i32_0 = arith.constant 0 : i32
    return %arg0, %c0_i32 : i32, i32
  }
  func.func @transform_1(%arg0: i32) -> (i32, i32) {
    %c0_i32 = arith.constant 0 : i32
    %c0_i32_0 = arith.constant 0 : i32
    %c0_i32_1 = arith.constant 0 : i32
    return %c0_i32, %c0_i32_0 : i32, i32
  }
  func.func @transform_2(%arg0: i32) -> (i32, i32) {
    %c0_i32 = arith.constant 0 : i32
    %c0_i32_0 = arith.constant 0 : i32
    %c0_i32_1 = arith.constant 0 : i32
    return %c0_i32, %c0_i32_0 : i32, i32
  }
  func.func @transform_3(%arg0: i32) -> (i32, i32) {
    %c0_i32 = arith.constant 0 : i32
    %c0_i32_0 = arith.constant 0 : i32
    return %arg0, %c0_i32 : i32, i32
  }
}

module attributes {stable_mosaic.version = 11 : i64} {
  func.func @_conv3x3x3_stats_kernel(%arg0: i32, %arg1: i32, %arg2: memref<1x10x10x10x128xbf16, #tpu.memory_space<vmem>>, %arg3: memref<27x128x128xbf16, #tpu.memory_space<vmem>>, %arg4: memref<1x1x8x8x128xf32, #tpu.memory_space<vmem>>, %arg5: memref<1x1x2x128xf32, #tpu.memory_space<vmem>>) attributes {dimension_semantics = [#tpu.dimension_semantics<parallel>, #tpu.dimension_semantics<arbitrary>], iteration_bounds = array<i64: 2, 8>, scalar_prefetch = 0 : i64, scratch_operands = 0 : i64, tpu.core_type = #tpu.core_type<tc>, window_params = [{transform_indices = @transform_0, window_bounds = array<i64: 1, 10, 10, 10, 128>}, {pipeline_mode = #tpu.pipeline_mode<synchronous>, transform_indices = @transform_1, window_bounds = array<i64: 27, 128, 128>}, {transform_indices = @transform_2, window_bounds = array<i64: 1, 1, 8, 8, 128>}, {transform_indices = @transform_3, window_bounds = array<i64: 1, 1, 2, 128>}]} {
    %cst = arith.constant 0.000000e+00 : f32
    %0 = vector.broadcast %cst : f32 to vector<64x128xf32>
    %c0_i32 = arith.constant 0 : i32
    %1 = arith.addi %arg1, %c0_i32 : i32
    %c0 = arith.constant 0 : index
    %2 = arith.index_cast %1 : i32 to index
    %c0_0 = arith.constant 0 : index
    %c0_1 = arith.constant 0 : index
    %c0_2 = arith.constant 0 : index
    %3 = vector.load %arg2[%c0, %2, %c0_0, %c0_1, %c0_2] : memref<1x10x10x10x128xbf16, #tpu.memory_space<vmem>>, vector<1x1x10x10x128xbf16>
    %4 = vector.shape_cast %3 : vector<1x1x10x10x128xbf16> to vector<1x10x10x128xbf16>
    %5 = vector.shape_cast %4 : vector<1x10x10x128xbf16> to vector<10x10x128xbf16>
    %6 = arith.extf %5 : vector<10x10x128xbf16> to vector<10x10x128xf32>
    %7 = vector.extract_strided_slice %6 {offsets = [0, 0, 0], sizes = [8, 8, 128], strides = [1, 1, 1]} : vector<10x10x128xf32> to vector<8x8x128xf32>
    %8 = vector.shape_cast %7 : vector<8x8x128xf32> to vector<64x128xf32>
    %c0_3 = arith.constant 0 : index
    %c0_4 = arith.constant 0 : index
    %c0_5 = arith.constant 0 : index
    %9 = vector.load %arg3[%c0_3, %c0_4, %c0_5] : memref<27x128x128xbf16, #tpu.memory_space<vmem>>, vector<1x128x128xbf16>
    %10 = vector.shape_cast %9 : vector<1x128x128xbf16> to vector<128x128xbf16>
    %11 = arith.truncf %8 : vector<64x128xf32> to vector<64x128xbf16>
    %cst_6 = arith.constant dense<0.000000e+00> : vector<64x128xf32>
    %12 = tpu.matmul %11, %10, %cst_6 {dimension_numbers = #tpu.dot_dimension_numbers<[1], [0], [0], [1], [0, 0, 1, 1], [], []>} : vector<64x128xbf16>, vector<128x128xbf16>, vector<64x128xf32> -> vector<64x128xf32>
    %13 = arith.addf %0, %12 : vector<64x128xf32>
    %14 = vector.extract_strided_slice %6 {offsets = [0, 1, 0], sizes = [8, 8, 128], strides = [1, 1, 1]} : vector<10x10x128xf32> to vector<8x8x128xf32>
    %15 = vector.shape_cast %14 : vector<8x8x128xf32> to vector<64x128xf32>
    %c1 = arith.constant 1 : index
    %c0_7 = arith.constant 0 : index
    %c0_8 = arith.constant 0 : index
    %16 = vector.load %arg3[%c1, %c0_7, %c0_8] : memref<27x128x128xbf16, #tpu.memory_space<vmem>>, vector<1x128x128xbf16>
    %17 = vector.shape_cast %16 : vector<1x128x128xbf16> to vector<128x128xbf16>
    %18 = arith.truncf %15 : vector<64x128xf32> to vector<64x128xbf16>
    %cst_9 = arith.constant dense<0.000000e+00> : vector<64x128xf32>
    %19 = tpu.matmul %18, %17, %cst_9 {dimension_numbers = #tpu.dot_dimension_numbers<[1], [0], [0], [1], [0, 0, 1, 1], [], []>} : vector<64x128xbf16>, vector<128x128xbf16>, vector<64x128xf32> -> vector<64x128xf32>
    %20 = arith.addf %13, %19 : vector<64x128xf32>
    %21 = vector.extract_strided_slice %6 {offsets = [0, 2, 0], sizes = [8, 8, 128], strides = [1, 1, 1]} : vector<10x10x128xf32> to vector<8x8x128xf32>
    %22 = vector.shape_cast %21 : vector<8x8x128xf32> to vector<64x128xf32>
    %c2 = arith.constant 2 : index
    %c0_10 = arith.constant 0 : index
    %c0_11 = arith.constant 0 : index
    %23 = vector.load %arg3[%c2, %c0_10, %c0_11] : memref<27x128x128xbf16, #tpu.memory_space<vmem>>, vector<1x128x128xbf16>
    %24 = vector.shape_cast %23 : vector<1x128x128xbf16> to vector<128x128xbf16>
    %25 = arith.truncf %22 : vector<64x128xf32> to vector<64x128xbf16>
    %cst_12 = arith.constant dense<0.000000e+00> : vector<64x128xf32>
    %26 = tpu.matmul %25, %24, %cst_12 {dimension_numbers = #tpu.dot_dimension_numbers<[1], [0], [0], [1], [0, 0, 1, 1], [], []>} : vector<64x128xbf16>, vector<128x128xbf16>, vector<64x128xf32> -> vector<64x128xf32>
    %27 = arith.addf %20, %26 : vector<64x128xf32>
    %28 = vector.extract_strided_slice %6 {offsets = [1, 0, 0], sizes = [8, 8, 128], strides = [1, 1, 1]} : vector<10x10x128xf32> to vector<8x8x128xf32>
    %29 = vector.shape_cast %28 : vector<8x8x128xf32> to vector<64x128xf32>
    %c3 = arith.constant 3 : index
    %c0_13 = arith.constant 0 : index
    %c0_14 = arith.constant 0 : index
    %30 = vector.load %arg3[%c3, %c0_13, %c0_14] : memref<27x128x128xbf16, #tpu.memory_space<vmem>>, vector<1x128x128xbf16>
    %31 = vector.shape_cast %30 : vector<1x128x128xbf16> to vector<128x128xbf16>
    %32 = arith.truncf %29 : vector<64x128xf32> to vector<64x128xbf16>
    %cst_15 = arith.constant dense<0.000000e+00> : vector<64x128xf32>
    %33 = tpu.matmul %32, %31, %cst_15 {dimension_numbers = #tpu.dot_dimension_numbers<[1], [0], [0], [1], [0, 0, 1, 1], [], []>} : vector<64x128xbf16>, vector<128x128xbf16>, vector<64x128xf32> -> vector<64x128xf32>
    %34 = arith.addf %27, %33 : vector<64x128xf32>
    %35 = vector.extract_strided_slice %6 {offsets = [1, 1, 0], sizes = [8, 8, 128], strides = [1, 1, 1]} : vector<10x10x128xf32> to vector<8x8x128xf32>
    %36 = vector.shape_cast %35 : vector<8x8x128xf32> to vector<64x128xf32>
    %c4 = arith.constant 4 : index
    %c0_16 = arith.constant 0 : index
    %c0_17 = arith.constant 0 : index
    %37 = vector.load %arg3[%c4, %c0_16, %c0_17] : memref<27x128x128xbf16, #tpu.memory_space<vmem>>, vector<1x128x128xbf16>
    %38 = vector.shape_cast %37 : vector<1x128x128xbf16> to vector<128x128xbf16>
    %39 = arith.truncf %36 : vector<64x128xf32> to vector<64x128xbf16>
    %cst_18 = arith.constant dense<0.000000e+00> : vector<64x128xf32>
    %40 = tpu.matmul %39, %38, %cst_18 {dimension_numbers = #tpu.dot_dimension_numbers<[1], [0], [0], [1], [0, 0, 1, 1], [], []>} : vector<64x128xbf16>, vector<128x128xbf16>, vector<64x128xf32> -> vector<64x128xf32>
    %41 = arith.addf %34, %40 : vector<64x128xf32>
    %42 = vector.extract_strided_slice %6 {offsets = [1, 2, 0], sizes = [8, 8, 128], strides = [1, 1, 1]} : vector<10x10x128xf32> to vector<8x8x128xf32>
    %43 = vector.shape_cast %42 : vector<8x8x128xf32> to vector<64x128xf32>
    %c5 = arith.constant 5 : index
    %c0_19 = arith.constant 0 : index
    %c0_20 = arith.constant 0 : index
    %44 = vector.load %arg3[%c5, %c0_19, %c0_20] : memref<27x128x128xbf16, #tpu.memory_space<vmem>>, vector<1x128x128xbf16>
    %45 = vector.shape_cast %44 : vector<1x128x128xbf16> to vector<128x128xbf16>
    %46 = arith.truncf %43 : vector<64x128xf32> to vector<64x128xbf16>
    %cst_21 = arith.constant dense<0.000000e+00> : vector<64x128xf32>
    %47 = tpu.matmul %46, %45, %cst_21 {dimension_numbers = #tpu.dot_dimension_numbers<[1], [0], [0], [1], [0, 0, 1, 1], [], []>} : vector<64x128xbf16>, vector<128x128xbf16>, vector<64x128xf32> -> vector<64x128xf32>
    %48 = arith.addf %41, %47 : vector<64x128xf32>
    %49 = vector.extract_strided_slice %6 {offsets = [2, 0, 0], sizes = [8, 8, 128], strides = [1, 1, 1]} : vector<10x10x128xf32> to vector<8x8x128xf32>
    %50 = vector.shape_cast %49 : vector<8x8x128xf32> to vector<64x128xf32>
    %c6 = arith.constant 6 : index
    %c0_22 = arith.constant 0 : index
    %c0_23 = arith.constant 0 : index
    %51 = vector.load %arg3[%c6, %c0_22, %c0_23] : memref<27x128x128xbf16, #tpu.memory_space<vmem>>, vector<1x128x128xbf16>
    %52 = vector.shape_cast %51 : vector<1x128x128xbf16> to vector<128x128xbf16>
    %53 = arith.truncf %50 : vector<64x128xf32> to vector<64x128xbf16>
    %cst_24 = arith.constant dense<0.000000e+00> : vector<64x128xf32>
    %54 = tpu.matmul %53, %52, %cst_24 {dimension_numbers = #tpu.dot_dimension_numbers<[1], [0], [0], [1], [0, 0, 1, 1], [], []>} : vector<64x128xbf16>, vector<128x128xbf16>, vector<64x128xf32> -> vector<64x128xf32>
    %55 = arith.addf %48, %54 : vector<64x128xf32>
    %56 = vector.extract_strided_slice %6 {offsets = [2, 1, 0], sizes = [8, 8, 128], strides = [1, 1, 1]} : vector<10x10x128xf32> to vector<8x8x128xf32>
    %57 = vector.shape_cast %56 : vector<8x8x128xf32> to vector<64x128xf32>
    %c7 = arith.constant 7 : index
    %c0_25 = arith.constant 0 : index
    %c0_26 = arith.constant 0 : index
    %58 = vector.load %arg3[%c7, %c0_25, %c0_26] : memref<27x128x128xbf16, #tpu.memory_space<vmem>>, vector<1x128x128xbf16>
    %59 = vector.shape_cast %58 : vector<1x128x128xbf16> to vector<128x128xbf16>
    %60 = arith.truncf %57 : vector<64x128xf32> to vector<64x128xbf16>
    %cst_27 = arith.constant dense<0.000000e+00> : vector<64x128xf32>
    %61 = tpu.matmul %60, %59, %cst_27 {dimension_numbers = #tpu.dot_dimension_numbers<[1], [0], [0], [1], [0, 0, 1, 1], [], []>} : vector<64x128xbf16>, vector<128x128xbf16>, vector<64x128xf32> -> vector<64x128xf32>
    %62 = arith.addf %55, %61 : vector<64x128xf32>
    %63 = vector.extract_strided_slice %6 {offsets = [2, 2, 0], sizes = [8, 8, 128], strides = [1, 1, 1]} : vector<10x10x128xf32> to vector<8x8x128xf32>
    %64 = vector.shape_cast %63 : vector<8x8x128xf32> to vector<64x128xf32>
    %c8 = arith.constant 8 : index
    %c0_28 = arith.constant 0 : index
    %c0_29 = arith.constant 0 : index
    %65 = vector.load %arg3[%c8, %c0_28, %c0_29] : memref<27x128x128xbf16, #tpu.memory_space<vmem>>, vector<1x128x128xbf16>
    %66 = vector.shape_cast %65 : vector<1x128x128xbf16> to vector<128x128xbf16>
    %67 = arith.truncf %64 : vector<64x128xf32> to vector<64x128xbf16>
    %cst_30 = arith.constant dense<0.000000e+00> : vector<64x128xf32>
    %68 = tpu.matmul %67, %66, %cst_30 {dimension_numbers = #tpu.dot_dimension_numbers<[1], [0], [0], [1], [0, 0, 1, 1], [], []>} : vector<64x128xbf16>, vector<128x128xbf16>, vector<64x128xf32> -> vector<64x128xf32>
    %69 = arith.addf %62, %68 : vector<64x128xf32>
    %c1_i32 = arith.constant 1 : i32
    %70 = arith.addi %arg1, %c1_i32 : i32
    %c0_31 = arith.constant 0 : index
    %71 = arith.index_cast %70 : i32 to index
    %c0_32 = arith.constant 0 : index
    %c0_33 = arith.constant 0 : index
    %c0_34 = arith.constant 0 : index
    %72 = vector.load %arg2[%c0_31, %71, %c0_32, %c0_33, %c0_34] : memref<1x10x10x10x128xbf16, #tpu.memory_space<vmem>>, vector<1x1x10x10x128xbf16>
    %73 = vector.shape_cast %72 : vector<1x1x10x10x128xbf16> to vector<1x10x10x128xbf16>
    %74 = vector.shape_cast %73 : vector<1x10x10x128xbf16> to vector<10x10x128xbf16>
    %75 = arith.extf %74 : vector<10x10x128xbf16> to vector<10x10x128xf32>
    %76 = vector.extract_strided_slice %75 {offsets = [0, 0, 0], sizes = [8, 8, 128], strides = [1, 1, 1]} : vector<10x10x128xf32> to vector<8x8x128xf32>
    %77 = vector.shape_cast %76 : vector<8x8x128xf32> to vector<64x128xf32>
    %c9 = arith.constant 9 : index
    %c0_35 = arith.constant 0 : index
    %c0_36 = arith.constant 0 : index
    %78 = vector.load %arg3[%c9, %c0_35, %c0_36] : memref<27x128x128xbf16, #tpu.memory_space<vmem>>, vector<1x128x128xbf16>
    %79 = vector.shape_cast %78 : vector<1x128x128xbf16> to vector<128x128xbf16>
    %80 = arith.truncf %77 : vector<64x128xf32> to vector<64x128xbf16>
    %cst_37 = arith.constant dense<0.000000e+00> : vector<64x128xf32>
    %81 = tpu.matmul %80, %79, %cst_37 {dimension_numbers = #tpu.dot_dimension_numbers<[1], [0], [0], [1], [0, 0, 1, 1], [], []>} : vector<64x128xbf16>, vector<128x128xbf16>, vector<64x128xf32> -> vector<64x128xf32>
    %82 = arith.addf %69, %81 : vector<64x128xf32>
    %83 = vector.extract_strided_slice %75 {offsets = [0, 1, 0], sizes = [8, 8, 128], strides = [1, 1, 1]} : vector<10x10x128xf32> to vector<8x8x128xf32>
    %84 = vector.shape_cast %83 : vector<8x8x128xf32> to vector<64x128xf32>
    %c10 = arith.constant 10 : index
    %c0_38 = arith.constant 0 : index
    %c0_39 = arith.constant 0 : index
    %85 = vector.load %arg3[%c10, %c0_38, %c0_39] : memref<27x128x128xbf16, #tpu.memory_space<vmem>>, vector<1x128x128xbf16>
    %86 = vector.shape_cast %85 : vector<1x128x128xbf16> to vector<128x128xbf16>
    %87 = arith.truncf %84 : vector<64x128xf32> to vector<64x128xbf16>
    %cst_40 = arith.constant dense<0.000000e+00> : vector<64x128xf32>
    %88 = tpu.matmul %87, %86, %cst_40 {dimension_numbers = #tpu.dot_dimension_numbers<[1], [0], [0], [1], [0, 0, 1, 1], [], []>} : vector<64x128xbf16>, vector<128x128xbf16>, vector<64x128xf32> -> vector<64x128xf32>
    %89 = arith.addf %82, %88 : vector<64x128xf32>
    %90 = vector.extract_strided_slice %75 {offsets = [0, 2, 0], sizes = [8, 8, 128], strides = [1, 1, 1]} : vector<10x10x128xf32> to vector<8x8x128xf32>
    %91 = vector.shape_cast %90 : vector<8x8x128xf32> to vector<64x128xf32>
    %c11 = arith.constant 11 : index
    %c0_41 = arith.constant 0 : index
    %c0_42 = arith.constant 0 : index
    %92 = vector.load %arg3[%c11, %c0_41, %c0_42] : memref<27x128x128xbf16, #tpu.memory_space<vmem>>, vector<1x128x128xbf16>
    %93 = vector.shape_cast %92 : vector<1x128x128xbf16> to vector<128x128xbf16>
    %94 = arith.truncf %91 : vector<64x128xf32> to vector<64x128xbf16>
    %cst_43 = arith.constant dense<0.000000e+00> : vector<64x128xf32>
    %95 = tpu.matmul %94, %93, %cst_43 {dimension_numbers = #tpu.dot_dimension_numbers<[1], [0], [0], [1], [0, 0, 1, 1], [], []>} : vector<64x128xbf16>, vector<128x128xbf16>, vector<64x128xf32> -> vector<64x128xf32>
    %96 = arith.addf %89, %95 : vector<64x128xf32>
    %97 = vector.extract_strided_slice %75 {offsets = [1, 0, 0], sizes = [8, 8, 128], strides = [1, 1, 1]} : vector<10x10x128xf32> to vector<8x8x128xf32>
    %98 = vector.shape_cast %97 : vector<8x8x128xf32> to vector<64x128xf32>
    %c12 = arith.constant 12 : index
    %c0_44 = arith.constant 0 : index
    %c0_45 = arith.constant 0 : index
    %99 = vector.load %arg3[%c12, %c0_44, %c0_45] : memref<27x128x128xbf16, #tpu.memory_space<vmem>>, vector<1x128x128xbf16>
    %100 = vector.shape_cast %99 : vector<1x128x128xbf16> to vector<128x128xbf16>
    %101 = arith.truncf %98 : vector<64x128xf32> to vector<64x128xbf16>
    %cst_46 = arith.constant dense<0.000000e+00> : vector<64x128xf32>
    %102 = tpu.matmul %101, %100, %cst_46 {dimension_numbers = #tpu.dot_dimension_numbers<[1], [0], [0], [1], [0, 0, 1, 1], [], []>} : vector<64x128xbf16>, vector<128x128xbf16>, vector<64x128xf32> -> vector<64x128xf32>
    %103 = arith.addf %96, %102 : vector<64x128xf32>
    %104 = vector.extract_strided_slice %75 {offsets = [1, 1, 0], sizes = [8, 8, 128], strides = [1, 1, 1]} : vector<10x10x128xf32> to vector<8x8x128xf32>
    %105 = vector.shape_cast %104 : vector<8x8x128xf32> to vector<64x128xf32>
    %c13 = arith.constant 13 : index
    %c0_47 = arith.constant 0 : index
    %c0_48 = arith.constant 0 : index
    %106 = vector.load %arg3[%c13, %c0_47, %c0_48] : memref<27x128x128xbf16, #tpu.memory_space<vmem>>, vector<1x128x128xbf16>
    %107 = vector.shape_cast %106 : vector<1x128x128xbf16> to vector<128x128xbf16>
    %108 = arith.truncf %105 : vector<64x128xf32> to vector<64x128xbf16>
    %cst_49 = arith.constant dense<0.000000e+00> : vector<64x128xf32>
    %109 = tpu.matmul %108, %107, %cst_49 {dimension_numbers = #tpu.dot_dimension_numbers<[1], [0], [0], [1], [0, 0, 1, 1], [], []>} : vector<64x128xbf16>, vector<128x128xbf16>, vector<64x128xf32> -> vector<64x128xf32>
    %110 = arith.addf %103, %109 : vector<64x128xf32>
    %111 = vector.extract_strided_slice %75 {offsets = [1, 2, 0], sizes = [8, 8, 128], strides = [1, 1, 1]} : vector<10x10x128xf32> to vector<8x8x128xf32>
    %112 = vector.shape_cast %111 : vector<8x8x128xf32> to vector<64x128xf32>
    %c14 = arith.constant 14 : index
    %c0_50 = arith.constant 0 : index
    %c0_51 = arith.constant 0 : index
    %113 = vector.load %arg3[%c14, %c0_50, %c0_51] : memref<27x128x128xbf16, #tpu.memory_space<vmem>>, vector<1x128x128xbf16>
    %114 = vector.shape_cast %113 : vector<1x128x128xbf16> to vector<128x128xbf16>
    %115 = arith.truncf %112 : vector<64x128xf32> to vector<64x128xbf16>
    %cst_52 = arith.constant dense<0.000000e+00> : vector<64x128xf32>
    %116 = tpu.matmul %115, %114, %cst_52 {dimension_numbers = #tpu.dot_dimension_numbers<[1], [0], [0], [1], [0, 0, 1, 1], [], []>} : vector<64x128xbf16>, vector<128x128xbf16>, vector<64x128xf32> -> vector<64x128xf32>
    %117 = arith.addf %110, %116 : vector<64x128xf32>
    %118 = vector.extract_strided_slice %75 {offsets = [2, 0, 0], sizes = [8, 8, 128], strides = [1, 1, 1]} : vector<10x10x128xf32> to vector<8x8x128xf32>
    %119 = vector.shape_cast %118 : vector<8x8x128xf32> to vector<64x128xf32>
    %c15 = arith.constant 15 : index
    %c0_53 = arith.constant 0 : index
    %c0_54 = arith.constant 0 : index
    %120 = vector.load %arg3[%c15, %c0_53, %c0_54] : memref<27x128x128xbf16, #tpu.memory_space<vmem>>, vector<1x128x128xbf16>
    %121 = vector.shape_cast %120 : vector<1x128x128xbf16> to vector<128x128xbf16>
    %122 = arith.truncf %119 : vector<64x128xf32> to vector<64x128xbf16>
    %cst_55 = arith.constant dense<0.000000e+00> : vector<64x128xf32>
    %123 = tpu.matmul %122, %121, %cst_55 {dimension_numbers = #tpu.dot_dimension_numbers<[1], [0], [0], [1], [0, 0, 1, 1], [], []>} : vector<64x128xbf16>, vector<128x128xbf16>, vector<64x128xf32> -> vector<64x128xf32>
    %124 = arith.addf %117, %123 : vector<64x128xf32>
    %125 = vector.extract_strided_slice %75 {offsets = [2, 1, 0], sizes = [8, 8, 128], strides = [1, 1, 1]} : vector<10x10x128xf32> to vector<8x8x128xf32>
    %126 = vector.shape_cast %125 : vector<8x8x128xf32> to vector<64x128xf32>
    %c16 = arith.constant 16 : index
    %c0_56 = arith.constant 0 : index
    %c0_57 = arith.constant 0 : index
    %127 = vector.load %arg3[%c16, %c0_56, %c0_57] : memref<27x128x128xbf16, #tpu.memory_space<vmem>>, vector<1x128x128xbf16>
    %128 = vector.shape_cast %127 : vector<1x128x128xbf16> to vector<128x128xbf16>
    %129 = arith.truncf %126 : vector<64x128xf32> to vector<64x128xbf16>
    %cst_58 = arith.constant dense<0.000000e+00> : vector<64x128xf32>
    %130 = tpu.matmul %129, %128, %cst_58 {dimension_numbers = #tpu.dot_dimension_numbers<[1], [0], [0], [1], [0, 0, 1, 1], [], []>} : vector<64x128xbf16>, vector<128x128xbf16>, vector<64x128xf32> -> vector<64x128xf32>
    %131 = arith.addf %124, %130 : vector<64x128xf32>
    %132 = vector.extract_strided_slice %75 {offsets = [2, 2, 0], sizes = [8, 8, 128], strides = [1, 1, 1]} : vector<10x10x128xf32> to vector<8x8x128xf32>
    %133 = vector.shape_cast %132 : vector<8x8x128xf32> to vector<64x128xf32>
    %c17 = arith.constant 17 : index
    %c0_59 = arith.constant 0 : index
    %c0_60 = arith.constant 0 : index
    %134 = vector.load %arg3[%c17, %c0_59, %c0_60] : memref<27x128x128xbf16, #tpu.memory_space<vmem>>, vector<1x128x128xbf16>
    %135 = vector.shape_cast %134 : vector<1x128x128xbf16> to vector<128x128xbf16>
    %136 = arith.truncf %133 : vector<64x128xf32> to vector<64x128xbf16>
    %cst_61 = arith.constant dense<0.000000e+00> : vector<64x128xf32>
    %137 = tpu.matmul %136, %135, %cst_61 {dimension_numbers = #tpu.dot_dimension_numbers<[1], [0], [0], [1], [0, 0, 1, 1], [], []>} : vector<64x128xbf16>, vector<128x128xbf16>, vector<64x128xf32> -> vector<64x128xf32>
    %138 = arith.addf %131, %137 : vector<64x128xf32>
    %c2_i32 = arith.constant 2 : i32
    %139 = arith.addi %arg1, %c2_i32 : i32
    %c0_62 = arith.constant 0 : index
    %140 = arith.index_cast %139 : i32 to index
    %c0_63 = arith.constant 0 : index
    %c0_64 = arith.constant 0 : index
    %c0_65 = arith.constant 0 : index
    %141 = vector.load %arg2[%c0_62, %140, %c0_63, %c0_64, %c0_65] : memref<1x10x10x10x128xbf16, #tpu.memory_space<vmem>>, vector<1x1x10x10x128xbf16>
    %142 = vector.shape_cast %141 : vector<1x1x10x10x128xbf16> to vector<1x10x10x128xbf16>
    %143 = vector.shape_cast %142 : vector<1x10x10x128xbf16> to vector<10x10x128xbf16>
    %144 = arith.extf %143 : vector<10x10x128xbf16> to vector<10x10x128xf32>
    %145 = vector.extract_strided_slice %144 {offsets = [0, 0, 0], sizes = [8, 8, 128], strides = [1, 1, 1]} : vector<10x10x128xf32> to vector<8x8x128xf32>
    %146 = vector.shape_cast %145 : vector<8x8x128xf32> to vector<64x128xf32>
    %c18 = arith.constant 18 : index
    %c0_66 = arith.constant 0 : index
    %c0_67 = arith.constant 0 : index
    %147 = vector.load %arg3[%c18, %c0_66, %c0_67] : memref<27x128x128xbf16, #tpu.memory_space<vmem>>, vector<1x128x128xbf16>
    %148 = vector.shape_cast %147 : vector<1x128x128xbf16> to vector<128x128xbf16>
    %149 = arith.truncf %146 : vector<64x128xf32> to vector<64x128xbf16>
    %cst_68 = arith.constant dense<0.000000e+00> : vector<64x128xf32>
    %150 = tpu.matmul %149, %148, %cst_68 {dimension_numbers = #tpu.dot_dimension_numbers<[1], [0], [0], [1], [0, 0, 1, 1], [], []>} : vector<64x128xbf16>, vector<128x128xbf16>, vector<64x128xf32> -> vector<64x128xf32>
    %151 = arith.addf %138, %150 : vector<64x128xf32>
    %152 = vector.extract_strided_slice %144 {offsets = [0, 1, 0], sizes = [8, 8, 128], strides = [1, 1, 1]} : vector<10x10x128xf32> to vector<8x8x128xf32>
    %153 = vector.shape_cast %152 : vector<8x8x128xf32> to vector<64x128xf32>
    %c19 = arith.constant 19 : index
    %c0_69 = arith.constant 0 : index
    %c0_70 = arith.constant 0 : index
    %154 = vector.load %arg3[%c19, %c0_69, %c0_70] : memref<27x128x128xbf16, #tpu.memory_space<vmem>>, vector<1x128x128xbf16>
    %155 = vector.shape_cast %154 : vector<1x128x128xbf16> to vector<128x128xbf16>
    %156 = arith.truncf %153 : vector<64x128xf32> to vector<64x128xbf16>
    %cst_71 = arith.constant dense<0.000000e+00> : vector<64x128xf32>
    %157 = tpu.matmul %156, %155, %cst_71 {dimension_numbers = #tpu.dot_dimension_numbers<[1], [0], [0], [1], [0, 0, 1, 1], [], []>} : vector<64x128xbf16>, vector<128x128xbf16>, vector<64x128xf32> -> vector<64x128xf32>
    %158 = arith.addf %151, %157 : vector<64x128xf32>
    %159 = vector.extract_strided_slice %144 {offsets = [0, 2, 0], sizes = [8, 8, 128], strides = [1, 1, 1]} : vector<10x10x128xf32> to vector<8x8x128xf32>
    %160 = vector.shape_cast %159 : vector<8x8x128xf32> to vector<64x128xf32>
    %c20 = arith.constant 20 : index
    %c0_72 = arith.constant 0 : index
    %c0_73 = arith.constant 0 : index
    %161 = vector.load %arg3[%c20, %c0_72, %c0_73] : memref<27x128x128xbf16, #tpu.memory_space<vmem>>, vector<1x128x128xbf16>
    %162 = vector.shape_cast %161 : vector<1x128x128xbf16> to vector<128x128xbf16>
    %163 = arith.truncf %160 : vector<64x128xf32> to vector<64x128xbf16>
    %cst_74 = arith.constant dense<0.000000e+00> : vector<64x128xf32>
    %164 = tpu.matmul %163, %162, %cst_74 {dimension_numbers = #tpu.dot_dimension_numbers<[1], [0], [0], [1], [0, 0, 1, 1], [], []>} : vector<64x128xbf16>, vector<128x128xbf16>, vector<64x128xf32> -> vector<64x128xf32>
    %165 = arith.addf %158, %164 : vector<64x128xf32>
    %166 = vector.extract_strided_slice %144 {offsets = [1, 0, 0], sizes = [8, 8, 128], strides = [1, 1, 1]} : vector<10x10x128xf32> to vector<8x8x128xf32>
    %167 = vector.shape_cast %166 : vector<8x8x128xf32> to vector<64x128xf32>
    %c21 = arith.constant 21 : index
    %c0_75 = arith.constant 0 : index
    %c0_76 = arith.constant 0 : index
    %168 = vector.load %arg3[%c21, %c0_75, %c0_76] : memref<27x128x128xbf16, #tpu.memory_space<vmem>>, vector<1x128x128xbf16>
    %169 = vector.shape_cast %168 : vector<1x128x128xbf16> to vector<128x128xbf16>
    %170 = arith.truncf %167 : vector<64x128xf32> to vector<64x128xbf16>
    %cst_77 = arith.constant dense<0.000000e+00> : vector<64x128xf32>
    %171 = tpu.matmul %170, %169, %cst_77 {dimension_numbers = #tpu.dot_dimension_numbers<[1], [0], [0], [1], [0, 0, 1, 1], [], []>} : vector<64x128xbf16>, vector<128x128xbf16>, vector<64x128xf32> -> vector<64x128xf32>
    %172 = arith.addf %165, %171 : vector<64x128xf32>
    %173 = vector.extract_strided_slice %144 {offsets = [1, 1, 0], sizes = [8, 8, 128], strides = [1, 1, 1]} : vector<10x10x128xf32> to vector<8x8x128xf32>
    %174 = vector.shape_cast %173 : vector<8x8x128xf32> to vector<64x128xf32>
    %c22 = arith.constant 22 : index
    %c0_78 = arith.constant 0 : index
    %c0_79 = arith.constant 0 : index
    %175 = vector.load %arg3[%c22, %c0_78, %c0_79] : memref<27x128x128xbf16, #tpu.memory_space<vmem>>, vector<1x128x128xbf16>
    %176 = vector.shape_cast %175 : vector<1x128x128xbf16> to vector<128x128xbf16>
    %177 = arith.truncf %174 : vector<64x128xf32> to vector<64x128xbf16>
    %cst_80 = arith.constant dense<0.000000e+00> : vector<64x128xf32>
    %178 = tpu.matmul %177, %176, %cst_80 {dimension_numbers = #tpu.dot_dimension_numbers<[1], [0], [0], [1], [0, 0, 1, 1], [], []>} : vector<64x128xbf16>, vector<128x128xbf16>, vector<64x128xf32> -> vector<64x128xf32>
    %179 = arith.addf %172, %178 : vector<64x128xf32>
    %180 = vector.extract_strided_slice %144 {offsets = [1, 2, 0], sizes = [8, 8, 128], strides = [1, 1, 1]} : vector<10x10x128xf32> to vector<8x8x128xf32>
    %181 = vector.shape_cast %180 : vector<8x8x128xf32> to vector<64x128xf32>
    %c23 = arith.constant 23 : index
    %c0_81 = arith.constant 0 : index
    %c0_82 = arith.constant 0 : index
    %182 = vector.load %arg3[%c23, %c0_81, %c0_82] : memref<27x128x128xbf16, #tpu.memory_space<vmem>>, vector<1x128x128xbf16>
    %183 = vector.shape_cast %182 : vector<1x128x128xbf16> to vector<128x128xbf16>
    %184 = arith.truncf %181 : vector<64x128xf32> to vector<64x128xbf16>
    %cst_83 = arith.constant dense<0.000000e+00> : vector<64x128xf32>
    %185 = tpu.matmul %184, %183, %cst_83 {dimension_numbers = #tpu.dot_dimension_numbers<[1], [0], [0], [1], [0, 0, 1, 1], [], []>} : vector<64x128xbf16>, vector<128x128xbf16>, vector<64x128xf32> -> vector<64x128xf32>
    %186 = arith.addf %179, %185 : vector<64x128xf32>
    %187 = vector.extract_strided_slice %144 {offsets = [2, 0, 0], sizes = [8, 8, 128], strides = [1, 1, 1]} : vector<10x10x128xf32> to vector<8x8x128xf32>
    %188 = vector.shape_cast %187 : vector<8x8x128xf32> to vector<64x128xf32>
    %c24 = arith.constant 24 : index
    %c0_84 = arith.constant 0 : index
    %c0_85 = arith.constant 0 : index
    %189 = vector.load %arg3[%c24, %c0_84, %c0_85] : memref<27x128x128xbf16, #tpu.memory_space<vmem>>, vector<1x128x128xbf16>
    %190 = vector.shape_cast %189 : vector<1x128x128xbf16> to vector<128x128xbf16>
    %191 = arith.truncf %188 : vector<64x128xf32> to vector<64x128xbf16>
    %cst_86 = arith.constant dense<0.000000e+00> : vector<64x128xf32>
    %192 = tpu.matmul %191, %190, %cst_86 {dimension_numbers = #tpu.dot_dimension_numbers<[1], [0], [0], [1], [0, 0, 1, 1], [], []>} : vector<64x128xbf16>, vector<128x128xbf16>, vector<64x128xf32> -> vector<64x128xf32>
    %193 = arith.addf %186, %192 : vector<64x128xf32>
    %194 = vector.extract_strided_slice %144 {offsets = [2, 1, 0], sizes = [8, 8, 128], strides = [1, 1, 1]} : vector<10x10x128xf32> to vector<8x8x128xf32>
    %195 = vector.shape_cast %194 : vector<8x8x128xf32> to vector<64x128xf32>
    %c25 = arith.constant 25 : index
    %c0_87 = arith.constant 0 : index
    %c0_88 = arith.constant 0 : index
    %196 = vector.load %arg3[%c25, %c0_87, %c0_88] : memref<27x128x128xbf16, #tpu.memory_space<vmem>>, vector<1x128x128xbf16>
    %197 = vector.shape_cast %196 : vector<1x128x128xbf16> to vector<128x128xbf16>
    %198 = arith.truncf %195 : vector<64x128xf32> to vector<64x128xbf16>
    %cst_89 = arith.constant dense<0.000000e+00> : vector<64x128xf32>
    %199 = tpu.matmul %198, %197, %cst_89 {dimension_numbers = #tpu.dot_dimension_numbers<[1], [0], [0], [1], [0, 0, 1, 1], [], []>} : vector<64x128xbf16>, vector<128x128xbf16>, vector<64x128xf32> -> vector<64x128xf32>
    %200 = arith.addf %193, %199 : vector<64x128xf32>
    %201 = vector.extract_strided_slice %144 {offsets = [2, 2, 0], sizes = [8, 8, 128], strides = [1, 1, 1]} : vector<10x10x128xf32> to vector<8x8x128xf32>
    %202 = vector.shape_cast %201 : vector<8x8x128xf32> to vector<64x128xf32>
    %c26 = arith.constant 26 : index
    %c0_90 = arith.constant 0 : index
    %c0_91 = arith.constant 0 : index
    %203 = vector.load %arg3[%c26, %c0_90, %c0_91] : memref<27x128x128xbf16, #tpu.memory_space<vmem>>, vector<1x128x128xbf16>
    %204 = vector.shape_cast %203 : vector<1x128x128xbf16> to vector<128x128xbf16>
    %205 = arith.truncf %202 : vector<64x128xf32> to vector<64x128xbf16>
    %cst_92 = arith.constant dense<0.000000e+00> : vector<64x128xf32>
    %206 = tpu.matmul %205, %204, %cst_92 {dimension_numbers = #tpu.dot_dimension_numbers<[1], [0], [0], [1], [0, 0, 1, 1], [], []>} : vector<64x128xbf16>, vector<128x128xbf16>, vector<64x128xf32> -> vector<64x128xf32>
    %207 = arith.addf %200, %206 : vector<64x128xf32>
    %208 = vector.shape_cast %207 : vector<64x128xf32> to vector<1x1x8x8x128xf32>
    %c0_93 = arith.constant 0 : index
    %c0_94 = arith.constant 0 : index
    %c0_95 = arith.constant 0 : index
    %c0_96 = arith.constant 0 : index
    %c0_97 = arith.constant 0 : index
    %209 = vector.load %arg4[%c0_93, %c0_94, %c0_95, %c0_96, %c0_97] : memref<1x1x8x8x128xf32, #tpu.memory_space<vmem>>, vector<1x1x8x8x128xf32>
    tpu.vector_store %arg4[%c0_93, %c0_94, %c0_95, %c0_96, %c0_97], %208 {strides = array<i32>} : memref<1x1x8x8x128xf32, #tpu.memory_space<vmem>>, vector<1x1x8x8x128xf32>,
    %cst_98 = arith.constant dense<0.000000e+00> : vector<128xf32>
    %210 = vector.multi_reduction <add>, %207, %cst_98 [0] : vector<64x128xf32> to vector<128xf32>
    %211 = vector.shape_cast %210 : vector<128xf32> to vector<1x128xf32>
    %212 = arith.mulf %207, %207 : vector<64x128xf32>
    %cst_99 = arith.constant dense<0.000000e+00> : vector<128xf32>
    %213 = vector.multi_reduction <add>, %212, %cst_99 [0] : vector<64x128xf32> to vector<128xf32>
    %214 = vector.shape_cast %213 : vector<128xf32> to vector<1x128xf32>
    %215 = tpu.concatenate %211, %214 in 0 : vector<1x128xf32>, vector<1x128xf32> -> vector<2x128xf32>
    %216 = vector.shape_cast %215 : vector<2x128xf32> to vector<1x1x2x128xf32>
    %c0_100 = arith.constant 0 : index
    %c0_101 = arith.constant 0 : index
    %c0_102 = arith.constant 0 : index
    %c0_103 = arith.constant 0 : index
    %217 = vector.load %arg5[%c0_100, %c0_101, %c0_102, %c0_103] : memref<1x1x2x128xf32, #tpu.memory_space<vmem>>, vector<1x1x2x128xf32>
    tpu.vector_store %arg5[%c0_100, %c0_101, %c0_102, %c0_103], %216 {strides = array<i32>} : memref<1x1x2x128xf32, #tpu.memory_space<vmem>>, vector<1x1x2x128xf32>,
    return
  }
  func.func @transform_0(%arg0: i32, %arg1: i32) -> (i32, i32, i32, i32, i32) {
    %c0_i32 = arith.constant 0 : i32
    %c0_i32_0 = arith.constant 0 : i32
    %c0_i32_1 = arith.constant 0 : i32
    %c0_i32_2 = arith.constant 0 : i32
    %c0_i32_3 = arith.constant 0 : i32
    return %arg0, %c0_i32, %c0_i32_0, %c0_i32_1, %c0_i32_2 : i32, i32, i32, i32, i32
  }
  func.func @transform_1(%arg0: i32, %arg1: i32) -> (i32, i32, i32) {
    %c0_i32 = arith.constant 0 : i32
    %c0_i32_0 = arith.constant 0 : i32
    %c0_i32_1 = arith.constant 0 : i32
    %c0_i32_2 = arith.constant 0 : i32
    return %c0_i32, %c0_i32_0, %c0_i32_1 : i32, i32, i32
  }
  func.func @transform_2(%arg0: i32, %arg1: i32) -> (i32, i32, i32, i32, i32) {
    %c0_i32 = arith.constant 0 : i32
    %c0_i32_0 = arith.constant 0 : i32
    %c0_i32_1 = arith.constant 0 : i32
    %c0_i32_2 = arith.constant 0 : i32
    return %arg0, %arg1, %c0_i32, %c0_i32_0, %c0_i32_1 : i32, i32, i32, i32, i32
  }
  func.func @transform_3(%arg0: i32, %arg1: i32) -> (i32, i32, i32, i32) {
    %c0_i32 = arith.constant 0 : i32
    %c0_i32_0 = arith.constant 0 : i32
    %c0_i32_1 = arith.constant 0 : i32
    return %arg0, %arg1, %c0_i32, %c0_i32_0 : i32, i32, i32, i32
  }
}

module attributes {stable_mosaic.version = 11 : i64} {
  func.func @_bn_relu_conv1x1_stats_kernel(%arg0: i32, %arg1: memref<512x128xf32, #tpu.memory_space<vmem>>, %arg2: memref<1x128xf32, #tpu.memory_space<vmem>>, %arg3: memref<1x128xf32, #tpu.memory_space<vmem>>, %arg4: memref<128x128xbf16, #tpu.memory_space<vmem>>, %arg5: memref<512x128xf32, #tpu.memory_space<vmem>>, %arg6: memref<1x2x128xf32, #tpu.memory_space<vmem>>) attributes {dimension_semantics = [#tpu.dimension_semantics<parallel>], iteration_bounds = array<i64: 2>, scalar_prefetch = 0 : i64, scratch_operands = 0 : i64, tpu.core_type = #tpu.core_type<tc>, window_params = [{transform_indices = @transform_0, window_bounds = array<i64: 512, 128>}, {pipeline_mode = #tpu.pipeline_mode<synchronous>, transform_indices = @transform_1, window_bounds = array<i64: 1, 128>}, {pipeline_mode = #tpu.pipeline_mode<synchronous>, transform_indices = @transform_2, window_bounds = array<i64: 1, 128>}, {pipeline_mode = #tpu.pipeline_mode<synchronous>, transform_indices = @transform_3, window_bounds = array<i64: 128, 128>}, {transform_indices = @transform_4, window_bounds = array<i64: 512, 128>}, {transform_indices = @transform_5, window_bounds = array<i64: 1, 2, 128>}]} {
    %c0 = arith.constant 0 : index
    %c0_0 = arith.constant 0 : index
    %0 = vector.load %arg1[%c0, %c0_0] : memref<512x128xf32, #tpu.memory_space<vmem>>, vector<512x128xf32>
    %c0_1 = arith.constant 0 : index
    %c0_2 = arith.constant 0 : index
    %1 = vector.load %arg2[%c0_1, %c0_2] : memref<1x128xf32, #tpu.memory_space<vmem>>, vector<1x128xf32>
    %2 = vector.broadcast %1 : vector<1x128xf32> to vector<512x128xf32>
    %3 = arith.mulf %0, %2 : vector<512x128xf32>
    %c0_3 = arith.constant 0 : index
    %c0_4 = arith.constant 0 : index
    %4 = vector.load %arg3[%c0_3, %c0_4] : memref<1x128xf32, #tpu.memory_space<vmem>>, vector<1x128xf32>
    %5 = vector.broadcast %4 : vector<1x128xf32> to vector<512x128xf32>
    %6 = arith.addf %3, %5 : vector<512x128xf32>
    %cst = arith.constant 0.000000e+00 : f32
    %7 = vector.broadcast %cst : f32 to vector<512x128xf32>
    %8 = arith.maximumf %6, %7 : vector<512x128xf32>
    %9 = arith.truncf %8 : vector<512x128xf32> to vector<512x128xbf16>
    %c0_5 = arith.constant 0 : index
    %c0_6 = arith.constant 0 : index
    %10 = vector.load %arg4[%c0_5, %c0_6] : memref<128x128xbf16, #tpu.memory_space<vmem>>, vector<128x128xbf16>
    %cst_7 = arith.constant dense<0.000000e+00> : vector<512x128xf32>
    %11 = tpu.matmul %9, %10, %cst_7 {dimension_numbers = #tpu.dot_dimension_numbers<[1], [0], [0], [1], [0, 0, 1, 1], [], []>} : vector<512x128xbf16>, vector<128x128xbf16>, vector<512x128xf32> -> vector<512x128xf32>
    %c0_8 = arith.constant 0 : index
    %c0_9 = arith.constant 0 : index
    %12 = vector.load %arg5[%c0_8, %c0_9] : memref<512x128xf32, #tpu.memory_space<vmem>>, vector<512x128xf32>
    tpu.vector_store %arg5[%c0_8, %c0_9], %11 {strides = array<i32>} : memref<512x128xf32, #tpu.memory_space<vmem>>, vector<512x128xf32>,
    %cst_10 = arith.constant dense<0.000000e+00> : vector<128xf32>
    %13 = vector.multi_reduction <add>, %11, %cst_10 [0] : vector<512x128xf32> to vector<128xf32>
    %14 = vector.shape_cast %13 : vector<128xf32> to vector<1x128xf32>
    %15 = arith.mulf %11, %11 : vector<512x128xf32>
    %cst_11 = arith.constant dense<0.000000e+00> : vector<128xf32>
    %16 = vector.multi_reduction <add>, %15, %cst_11 [0] : vector<512x128xf32> to vector<128xf32>
    %17 = vector.shape_cast %16 : vector<128xf32> to vector<1x128xf32>
    %18 = tpu.concatenate %14, %17 in 0 : vector<1x128xf32>, vector<1x128xf32> -> vector<2x128xf32>
    %19 = vector.shape_cast %18 : vector<2x128xf32> to vector<1x2x128xf32>
    %c0_12 = arith.constant 0 : index
    %c0_13 = arith.constant 0 : index
    %c0_14 = arith.constant 0 : index
    %20 = vector.load %arg6[%c0_12, %c0_13, %c0_14] : memref<1x2x128xf32, #tpu.memory_space<vmem>>, vector<1x2x128xf32>
    tpu.vector_store %arg6[%c0_12, %c0_13, %c0_14], %19 {strides = array<i32>} : memref<1x2x128xf32, #tpu.memory_space<vmem>>, vector<1x2x128xf32>,
    return
  }
  func.func @transform_0(%arg0: i32) -> (i32, i32) {
    %c0_i32 = arith.constant 0 : i32
    %c0_i32_0 = arith.constant 0 : i32
    return %arg0, %c0_i32 : i32, i32
  }
  func.func @transform_1(%arg0: i32) -> (i32, i32) {
    %c0_i32 = arith.constant 0 : i32
    %c0_i32_0 = arith.constant 0 : i32
    %c0_i32_1 = arith.constant 0 : i32
    return %c0_i32, %c0_i32_0 : i32, i32
  }
  func.func @transform_2(%arg0: i32) -> (i32, i32) {
    %c0_i32 = arith.constant 0 : i32
    %c0_i32_0 = arith.constant 0 : i32
    %c0_i32_1 = arith.constant 0 : i32
    return %c0_i32, %c0_i32_0 : i32, i32
  }
  func.func @transform_3(%arg0: i32) -> (i32, i32) {
    %c0_i32 = arith.constant 0 : i32
    %c0_i32_0 = arith.constant 0 : i32
    %c0_i32_1 = arith.constant 0 : i32
    return %c0_i32, %c0_i32_0 : i32, i32
  }
  func.func @transform_4(%arg0: i32) -> (i32, i32) {
    %c0_i32 = arith.constant 0 : i32
    %c0_i32_0 = arith.constant 0 : i32
    return %arg0, %c0_i32 : i32, i32
  }
  func.func @transform_5(%arg0: i32) -> (i32, i32, i32) {
    %c0_i32 = arith.constant 0 : i32
    %c0_i32_0 = arith.constant 0 : i32
    %c0_i32_1 = arith.constant 0 : i32
    return %arg0, %c0_i32, %c0_i32_0 : i32, i32, i32
  }
}

module attributes {stable_mosaic.version = 11 : i64} {
  func.func @_bn_add_relu_kernel(%arg0: i32, %arg1: memref<512x128xf32, #tpu.memory_space<vmem>>, %arg2: memref<1x128xf32, #tpu.memory_space<vmem>>, %arg3: memref<1x128xf32, #tpu.memory_space<vmem>>, %arg4: memref<512x128xf32, #tpu.memory_space<vmem>>, %arg5: memref<512x128xf32, #tpu.memory_space<vmem>>) attributes {dimension_semantics = [#tpu.dimension_semantics<parallel>], iteration_bounds = array<i64: 2>, scalar_prefetch = 0 : i64, scratch_operands = 0 : i64, tpu.core_type = #tpu.core_type<tc>, window_params = [{transform_indices = @transform_0, window_bounds = array<i64: 512, 128>}, {pipeline_mode = #tpu.pipeline_mode<synchronous>, transform_indices = @transform_1, window_bounds = array<i64: 1, 128>}, {pipeline_mode = #tpu.pipeline_mode<synchronous>, transform_indices = @transform_2, window_bounds = array<i64: 1, 128>}, {transform_indices = @transform_3, window_bounds = array<i64: 512, 128>}, {transform_indices = @transform_4, window_bounds = array<i64: 512, 128>}]} {
    %c0 = arith.constant 0 : index
    %c0_0 = arith.constant 0 : index
    %0 = vector.load %arg1[%c0, %c0_0] : memref<512x128xf32, #tpu.memory_space<vmem>>, vector<512x128xf32>
    %c0_1 = arith.constant 0 : index
    %c0_2 = arith.constant 0 : index
    %1 = vector.load %arg2[%c0_1, %c0_2] : memref<1x128xf32, #tpu.memory_space<vmem>>, vector<1x128xf32>
    %2 = vector.broadcast %1 : vector<1x128xf32> to vector<512x128xf32>
    %3 = arith.mulf %0, %2 : vector<512x128xf32>
    %c0_3 = arith.constant 0 : index
    %c0_4 = arith.constant 0 : index
    %4 = vector.load %arg3[%c0_3, %c0_4] : memref<1x128xf32, #tpu.memory_space<vmem>>, vector<1x128xf32>
    %5 = vector.broadcast %4 : vector<1x128xf32> to vector<512x128xf32>
    %6 = arith.addf %3, %5 : vector<512x128xf32>
    %c0_5 = arith.constant 0 : index
    %c0_6 = arith.constant 0 : index
    %7 = vector.load %arg4[%c0_5, %c0_6] : memref<512x128xf32, #tpu.memory_space<vmem>>, vector<512x128xf32>
    %8 = arith.addf %6, %7 : vector<512x128xf32>
    %cst = arith.constant 0.000000e+00 : f32
    %9 = vector.broadcast %cst : f32 to vector<512x128xf32>
    %10 = arith.maximumf %8, %9 : vector<512x128xf32>
    %c0_7 = arith.constant 0 : index
    %c0_8 = arith.constant 0 : index
    %11 = vector.load %arg5[%c0_7, %c0_8] : memref<512x128xf32, #tpu.memory_space<vmem>>, vector<512x128xf32>
    tpu.vector_store %arg5[%c0_7, %c0_8], %10 {strides = array<i32>} : memref<512x128xf32, #tpu.memory_space<vmem>>, vector<512x128xf32>,
    return
  }
  func.func @transform_0(%arg0: i32) -> (i32, i32) {
    %c0_i32 = arith.constant 0 : i32
    %c0_i32_0 = arith.constant 0 : i32
    return %arg0, %c0_i32 : i32, i32
  }
  func.func @transform_1(%arg0: i32) -> (i32, i32) {
    %c0_i32 = arith.constant 0 : i32
    %c0_i32_0 = arith.constant 0 : i32
    %c0_i32_1 = arith.constant 0 : i32
    return %c0_i32, %c0_i32_0 : i32, i32
  }
  func.func @transform_2(%arg0: i32) -> (i32, i32) {
    %c0_i32 = arith.constant 0 : i32
    %c0_i32_0 = arith.constant 0 : i32
    %c0_i32_1 = arith.constant 0 : i32
    return %c0_i32, %c0_i32_0 : i32, i32
  }
  func.func @transform_3(%arg0: i32) -> (i32, i32) {
    %c0_i32 = arith.constant 0 : i32
    %c0_i32_0 = arith.constant 0 : i32
    return %arg0, %c0_i32 : i32, i32
  }
  func.func @transform_4(%arg0: i32) -> (i32, i32) {
    %c0_i32 = arith.constant 0 : i32
    %c0_i32_0 = arith.constant 0 : i32
    return %arg0, %c0_i32 : i32, i32
  }
}

</mosaic_0001>

<llo_original>
// kernel: bottleneck_forward.6
$region0: #{bottleneck_forward.6}
  #allocation0 [shape = 'u32[]', space=smem, size = 0x4, offset = 0x4, fixed_abs, tag = 'smem constant byte address 0x4 - core index']
  #allocation1 [shape = 'u32[144,128]{1,0:T(1,128)}', space=vmem, size = 0x12000, scoped, tag = 'internal scratch']
  %s0 = inlined_call_operand.vmem [shape: f32[1024,128], index: 0, kind: input, shape index: {}]
  %s1 = inlined_call_operand.vmem [shape: f32[1,128], index: 1, kind: input, shape index: {}]
  %s2 = inlined_call_operand.vmem [shape: f32[1,128], index: 2, kind: input, shape index: {}]
  %s3 = inlined_call_operand.vmem [shape: bf16[1024,128], index: 3, kind: output, shape index: {}]
  %s4 = sld [smem:[#allocation0]]
  $region45: #{bottleneck_forward.6} parent=0
    _
  %s6 = ssub.s32 1, %s4
  %s7 = scalar_select 0, %s6, %s4
  loop: start=0, step=1, limit=4
  $region2: #{bottleneck_forward.6} parent=0 // loop_pre_header
    _
  $region3: #{bottleneck_forward.6} parent=0 // loop_header
    %s9 = sphi 0, %s13
    %p10 = scmp.ge.s32.totalorder %s9, 4
    %s19 = sphi 0, %s21
    %s22 = sphi 0, %s19
    %s23 = sphi 0, %s22
    %s39 = sphi 0, %s23
    %s43 = sphi 0, %s43
    %s45 = sphi 0, %s43
    %s46 = sphi 0, %s45
    %s60 = sphi 0, %s46
    %s64 = sphi 0, %s64
    %s66 = sphi 0, %s64
    %s67 = sphi 0, %s66
    %s81 = sphi 0, %s67
    %s87 = sphi 0, %s89
    %s90 = sphi 0, %s87
    %s91 = sphi 0, %s90
    %s107 = sphi 0, %s91
  $region4: #{bottleneck_forward.6} parent=0 // loop_header_branch
    %12 = sbr.rel (%p10) target = $region8
  $region5: #{bottleneck_forward.6} parent=0 // loop_body
    %s14 = ssub.s32 %s9, 1
    %s15 = ssub.s32 %s9, 2
    %s16 = sadd.s32 %s9, 1
    %s17 = ssub.s32 %s9, %s16
    %p18 = scmp.eq.s32.totalorder %s17, 0
    %s20 = sadd.s32 %s19, 1
    %s21 = scalar_select %p18, %s19, %s20
    %p24 = pneg %p18
    %p25 = scmp.eq.s32.totalorder %s9, 1
    %p26 = por %p24, %p25
    %p27 = scmp.ne.s32.totalorder %s19, %s22
    %p28 = scmp.eq.s32.totalorder %s9, 0
    %p29 = por %p27, %p28
    %p30 = scmp.ne.s32.totalorder %s19, %s22
    %p31 = scmp.eq.s32.totalorder %s14, 1
    %p32 = por %p30, %p31
    %p33 = scmp.ne.s32.totalorder %s22, %s23
    %p34 = scmp.eq.s32.totalorder %s14, 0
    %p35 = por %p33, %p34
    %p36 = scmp.ne.s32.totalorder %s22, %s23
    %p37 = scmp.eq.s32.totalorder %s15, 1
    %p38 = por %p36, %p37
    %p40 = scmp.ne.s32.totalorder %s23, %s39
    %p41 = scmp.eq.s32.totalorder %s15, 0
    %p42 = por %p40, %p41
    %s44 = sadd.s32 %s43, 1
    %p47 = scmp.eq.s32.totalorder %s9, 1
    %p48 = scmp.ne.s32.totalorder %s43, %s45
    %p49 = scmp.eq.s32.totalorder %s9, 0
    %p50 = por %p48, %p49
    %p51 = scmp.ne.s32.totalorder %s43, %s45
    %p52 = scmp.eq.s32.totalorder %s14, 1
    %p53 = por %p51, %p52
    %p54 = scmp.ne.s32.totalorder %s45, %s46
    %p55 = scmp.eq.s32.totalorder %s14, 0
    %p56 = por %p54, %p55
    %p57 = scmp.ne.s32.totalorder %s45, %s46
    %p58 = scmp.eq.s32.totalorder %s15, 1
    %p59 = por %p57, %p58
    %p61 = scmp.ne.s32.totalorder %s46, %s60
    %p62 = scmp.eq.s32.totalorder %s15, 0
    %p63 = por %p61, %p62
    %s65 = sadd.s32 %s64, 1
    %p68 = scmp.eq.s32.totalorder %s9, 1
    %p69 = scmp.ne.s32.totalorder %s64, %s66
    %p70 = scmp.eq.s32.totalorder %s9, 0
    %p71 = por %p69, %p70
    %p72 = scmp.ne.s32.totalorder %s64, %s66
    %p73 = scmp.eq.s32.totalorder %s14, 1
    %p74 = por %p72, %p73
    %p75 = scmp.ne.s32.totalorder %s66, %s67
    %p76 = scmp.eq.s32.totalorder %s14, 0
    %p77 = por %p75, %p76
    %p78 = scmp.ne.s32.totalorder %s66, %s67
    %p79 = scmp.eq.s32.totalorder %s15, 1
    %p80 = por %p78, %p79
    %p82 = scmp.ne.s32.totalorder %s67, %s81
    %p83 = scmp.eq.s32.totalorder %s15, 0
    %p84 = por %p82, %p83
    %s85 = ssub.s32 %s9, %s16
    %p86 = scmp.eq.s32.totalorder %s85, 0
    %s88 = sadd.s32 %s87, 1
    %s89 = scalar_select %p86, %s87, %s88
    %p92 = pneg %p86
    %p93 = scmp.eq.s32.totalorder %s9, 1
    %p94 = por %p92, %p93
    %p95 = scmp.ne.s32.totalorder %s87, %s90
    %p96 = scmp.eq.s32.totalorder %s9, 0
    %p97 = por %p95, %p96
    %p98 = scmp.ne.s32.totalorder %s87, %s90
    %p99 = scmp.eq.s32.totalorder %s14, 1
    %p100 = por %p98, %p99
    %p101 = scmp.ne.s32.totalorder %s90, %s91
    %p102 = scmp.eq.s32.totalorder %s14, 0
    %p103 = por %p101, %p102
    %p104 = scmp.ne.s32.totalorder %s90, %s91
    %p105 = scmp.eq.s32.totalorder %s15, 1
    %p106 = por %p104, %p105
    %p108 = scmp.ne.s32.totalorder %s91, %s107
    %p109 = scmp.eq.s32.totalorder %s15, 0
    %p110 = por %p108, %p109
    %p111 = scmp.le.s32.totalorder 1, %s9
    %p112 = scmp.lt.s32.totalorder %s9, 3
    %p113 = pnand %p111, %p112
    %p114 = pneg %p113
    // Predicated region
    $region9: #{bottleneck_forward.6} parent=5 // pred_check
      _
    $region10: #{bottleneck_forward.6} parent=5 // pred_check_branch
      %116 = sbr.rel (%p113) target = $region12
    $region11: #{bottleneck_forward.6} parent=5 // pred_region
      %s117 = ssub.s32 %s9, 1
      // Predicated region
      $region13: #{bottleneck_forward.6} parent=11 // pred_check
        %p118 = pneg %p56
      $region14: #{bottleneck_forward.6} parent=11 // pred_check_branch
        %120 = sbr.rel (%p118) target = $region16
      $region15: #{bottleneck_forward.6} parent=11 // pred_region
        _
      $region16: #{bottleneck_forward.6} parent=11 // pred_fallthru
        _
      // Predicated region
      $region17: #{bottleneck_forward.6} parent=11 // pred_check
        %p121 = pneg %p77
      $region18: #{bottleneck_forward.6} parent=11 // pred_check_branch
        %123 = sbr.rel (%p121) target = $region20
      $region19: #{bottleneck_forward.6} parent=11 // pred_region
        _
      $region20: #{bottleneck_forward.6} parent=11 // pred_fallthru
        _
    $region12: #{bottleneck_forward.6} parent=5 // pred_fallthru
      _
    %p124 = scmp.lt.s32.totalorder %s9, 2
    // Predicated region
    $region21: #{bottleneck_forward.6} parent=5 // pred_check
      %p125 = pneg %p124
    $region22: #{bottleneck_forward.6} parent=5 // pred_check_branch
      %127 = sbr.rel (%p125) target = $region24
    $region23: #{bottleneck_forward.6} parent=5 // pred_region
      // Predicated region
      $region25: #{bottleneck_forward.6} parent=23 // pred_check
        %p128 = pneg %p29
      $region26: #{bottleneck_forward.6} parent=23 // pred_check_branch
        %130 = sbr.rel (%p128) target = $region28
      $region27: #{bottleneck_forward.6} parent=23 // pred_region
        %s131 = smul.u32 64, %s9
        %p132 = scmp.lt.s32.totalorder %s131, 127
        %s133 = scalar_select %p132, %s131, 127
        %s134 = smul.addr %s133, 8
        %s135 = scalar_lea.vmem %s0, %s134
        %s136 = smul.u32 64, %s9
      $region28: #{bottleneck_forward.6} parent=23 // pred_fallthru
        _
    $region24: #{bottleneck_forward.6} parent=5 // pred_fallthru
      _
    %p137 = scmp.le.s32.totalorder 1, %s9
    %p138 = scmp.lt.s32.totalorder %s9, 3
    %p139 = pnand %p137, %p138
    %p140 = pneg %p139
    // Predicated region
    $region29: #{bottleneck_forward.6} parent=5 // pred_check
      _
    $region30: #{bottleneck_forward.6} parent=5 // pred_check_branch
      %142 = sbr.rel (%p139) target = $region32
    $region31: #{bottleneck_forward.6} parent=5 // pred_region
      %s143 = ssub.s32 %s9, 1
      %s144 = smul.u32 64, %s14
      %p145 = scmp.lt.s32.totalorder %s144, 127
      %s146 = scalar_select %p145, %s144, 127
      %s147 = smul.addr %s146, 8
      %s148 = scalar_lea.vmem %s0, %s147
      %p149 = pneg %p35
      %p150 = pneg %p32
      %p151 = pneg %p56
      %p152 = pneg %p53
      %p153 = pneg %p77
      %p154 = pneg %p74
      %p155 = pneg %p103
      %p156 = pneg %p100
      %s157 = smul.u32 64, %s14
      %p158 = scmp.lt.s32.totalorder %s157, 127
      %s159 = scalar_select %p158, %s157, 127
      %s160 = smul.addr %s159, 4
      %s161 = scalar_lea.vmem %s3, %s160
      %s162 = smul.u32 64, %s14
      %p163 = scmp.lt.s32.totalorder %s162, 127
      %s164 = scalar_select %p163, %s162, 127
      %s165 = smul.addr %s164, 8
      %s166 = scalar_lea.vmem %s0, %s165
      %s167 = smul.u32 64, %s14
      %s168 = smul.u32 64, %s14
      %p169 = scmp.lt.s32.totalorder %s168, 127
      %s170 = scalar_select %p169, %s168, 127
      %s171 = smul.addr %s170, 4
      %s172 = scalar_lea.vmem %s3, %s171
      %s173 = smul.u32 64, %s14
      %v174 = vld [vmem:[%s166] sm:$0xff]
      %v175 = vld [vmem:[%s166 + $0x8] sm:$0xff]
      %v176 = vld [vmem:[%s166 + $0x10] sm:$0xff]
      %v177 = vld [vmem:[%s166 + $0x18] sm:$0xff]
      %v178 = vld [vmem:[%s166 + $0x20] sm:$0xff]
      %v179 = vld [vmem:[%s166 + $0x28] sm:$0xff]
      %v180 = vld [vmem:[%s166 + $0x30] sm:$0xff]
      %v181 = vld [vmem:[%s166 + $0x38] sm:$0xff]
      %v182 = vld [vmem:[%s166 + $0x40] sm:$0xff]
      %v183 = vld [vmem:[%s166 + $0x48] sm:$0xff]
      %v184 = vld [vmem:[%s166 + $0x50] sm:$0xff]
      %v185 = vld [vmem:[%s166 + $0x58] sm:$0xff]
      %v186 = vld [vmem:[%s166 + $0x60] sm:$0xff]
      %v187 = vld [vmem:[%s166 + $0x68] sm:$0xff]
      %v188 = vld [vmem:[%s166 + $0x70] sm:$0xff]
      %v189 = vld [vmem:[%s166 + $0x78] sm:$0xff]
      %v190 = vld [vmem:[%s166 + $0x80] sm:$0xff]
      %v191 = vld [vmem:[%s166 + $0x88] sm:$0xff]
      %v192 = vld [vmem:[%s166 + $0x90] sm:$0xff]
      %v193 = vld [vmem:[%s166 + $0x98] sm:$0xff]
      %v194 = vld [vmem:[%s166 + $0xa0] sm:$0xff]
      %v195 = vld [vmem:[%s166 + $0xa8] sm:$0xff]
      %v196 = vld [vmem:[%s166 + $0xb0] sm:$0xff]
      %v197 = vld [vmem:[%s166 + $0xb8] sm:$0xff]
      %v198 = vld [vmem:[%s166 + $0xc0] sm:$0xff]
      %v199 = vld [vmem:[%s166 + $0xc8] sm:$0xff]
      %v200 = vld [vmem:[%s166 + $0xd0] sm:$0xff]
      %v201 = vld [vmem:[%s166 + $0xd8] sm:$0xff]
      %v202 = vld [vmem:[%s166 + $0xe0] sm:$0xff]
      %v203 = vld [vmem:[%s166 + $0xe8] sm:$0xff]
      %v204 = vld [vmem:[%s166 + $0xf0] sm:$0xff]
      %v205 = vld [vmem:[%s166 + $0xf8] sm:$0xff]
      %v206 = vld [vmem:[%s166 + $0x100] sm:$0xff]
      %v207 = vld [vmem:[%s166 + $0x108] sm:$0xff]
      %v208 = vld [vmem:[%s166 + $0x110] sm:$0xff]
      %v209 = vld [vmem:[%s166 + $0x118] sm:$0xff]
      %v210 = vld [vmem:[%s166 + $0x120] sm:$0xff]
      %v211 = vld [vmem:[%s166 + $0x128] sm:$0xff]
      %v212 = vld [vmem:[%s166 + $0x130] sm:$0xff]
      %v213 = vld [vmem:[%s166 + $0x138] sm:$0xff]
      %v214 = vld [vmem:[%s166 + $0x140] sm:$0xff]
      %v215 = vld [vmem:[%s166 + $0x148] sm:$0xff]
      %v216 = vld [vmem:[%s166 + $0x150] sm:$0xff]
      %v217 = vld [vmem:[%s166 + $0x158] sm:$0xff]
      %v218 = vld [vmem:[%s166 + $0x160] sm:$0xff]
      %v219 = vld [vmem:[%s166 + $0x168] sm:$0xff]
      %v220 = vld [vmem:[%s166 + $0x170] sm:$0xff]
      %v221 = vld [vmem:[%s166 + $0x178] sm:$0xff]
      %v222 = vld [vmem:[%s166 + $0x180] sm:$0xff]
      %v223 = vld [vmem:[%s166 + $0x188] sm:$0xff]
      %v224 = vld [vmem:[%s166 + $0x190] sm:$0xff]
      %v225 = vld [vmem:[%s166 + $0x198] sm:$0xff]
      %v226 = vld [vmem:[%s166 + $0x1a0] sm:$0xff]
      %v227 = vld [vmem:[%s166 + $0x1a8] sm:$0xff]
      %v228 = vld [vmem:[%s166 + $0x1b0] sm:$0xff]
      %v229 = vld [vmem:[%s166 + $0x1b8] sm:$0xff]
      %v230 = vld [vmem:[%s166 + $0x1c0] sm:$0xff]
      %v231 = vld [vmem:[%s166 + $0x1c8] sm:$0xff]
      %v232 = vld [vmem:[%s166 + $0x1d0] sm:$0xff]
      %v233 = vld [vmem:[%s166 + $0x1d8] sm:$0xff]
      %v234 = vld [vmem:[%s166 + $0x1e0] sm:$0xff]
      %v235 = vld [vmem:[%s166 + $0x1e8] sm:$0xff]
      %v236 = vld [vmem:[%s166 + $0x1f0] sm:$0xff]
      %v237 = vld [vmem:[%s166 + $0x1f8] sm:$0xff]
      %v238 = vld [vmem:[%s1] sm:$0x1]
      %v240 = vlaneseq
      %v241 = vshrl.u32 %v240, 7
      %v242 = vsub.s32 0, %v241
      %v243 = vrot.slane %v238, %v242
      %v245 = vmul.f32 %v174, %v243
      %v246 = vmul.f32 %v175, %v243
      %v247 = vmul.f32 %v176, %v243
      %v248 = vmul.f32 %v177, %v243
      %v249 = vmul.f32 %v178, %v243
      %v250 = vmul.f32 %v179, %v243
      %v251 = vmul.f32 %v180, %v243
      %v252 = vmul.f32 %v181, %v243
      %v253 = vmul.f32 %v182, %v243
      %v254 = vmul.f32 %v183, %v243
      %v255 = vmul.f32 %v184, %v243
      %v256 = vmul.f32 %v185, %v243
      %v257 = vmul.f32 %v186, %v243
      %v258 = vmul.f32 %v187, %v243
      %v259 = vmul.f32 %v188, %v243
      %v260 = vmul.f32 %v189, %v243
      %v261 = vmul.f32 %v190, %v243
      %v262 = vmul.f32 %v191, %v243
      %v263 = vmul.f32 %v192, %v243
      %v264 = vmul.f32 %v193, %v243
      %v265 = vmul.f32 %v194, %v243
      %v266 = vmul.f32 %v195, %v243
      %v267 = vmul.f32 %v196, %v243
      %v268 = vmul.f32 %v197, %v243
      %v269 = vmul.f32 %v198, %v243
      %v270 = vmul.f32 %v199, %v243
      %v271 = vmul.f32 %v200, %v243
      %v272 = vmul.f32 %v201, %v243
      %v273 = vmul.f32 %v202, %v243
      %v274 = vmul.f32 %v203, %v243
      %v275 = vmul.f32 %v204, %v243
      %v276 = vmul.f32 %v205, %v243
      %v277 = vmul.f32 %v206, %v243
      %v278 = vmul.f32 %v207, %v243
      %v279 = vmul.f32 %v208, %v243
      %v280 = vmul.f32 %v209, %v243
      %v281 = vmul.f32 %v210, %v243
      %v282 = vmul.f32 %v211, %v243
      %v283 = vmul.f32 %v212, %v243
      %v284 = vmul.f32 %v213, %v243
      %v285 = vmul.f32 %v214, %v243
      %v286 = vmul.f32 %v215, %v243
      %v287 = vmul.f32 %v216, %v243
      %v288 = vmul.f32 %v217, %v243
      %v289 = vmul.f32 %v218, %v243
      %v290 = vmul.f32 %v219, %v243
      %v291 = vmul.f32 %v220, %v243
      %v292 = vmul.f32 %v221, %v243
      %v293 = vmul.f32 %v222, %v243
      %v294 = vmul.f32 %v223, %v243
      %v295 = vmul.f32 %v224, %v243
      %v296 = vmul.f32 %v225, %v243
      %v297 = vmul.f32 %v226, %v243
      %v298 = vmul.f32 %v227, %v243
      %v299 = vmul.f32 %v228, %v243
      %v300 = vmul.f32 %v229, %v243
      %v301 = vmul.f32 %v230, %v243
      %v302 = vmul.f32 %v231, %v243
      %v303 = vmul.f32 %v232, %v243
      %v304 = vmul.f32 %v233, %v243
      %v305 = vmul.f32 %v234, %v243
      %v306 = vmul.f32 %v235, %v243
      %v307 = vmul.f32 %v236, %v243
      %v308 = vmul.f32 %v237, %v243
      %v309 = vld [vmem:[%s2] sm:$0x1]
      %v311 = vlaneseq
      %v312 = vshrl.u32 %v311, 7
      %v313 = vsub.s32 0, %v312
      %v314 = vrot.slane %v309, %v313
      %v316 = vadd.f32 %v245, %v314
      %v317 = vadd.f32 %v246, %v314
      %v318 = vadd.f32 %v247, %v314
      %v319 = vadd.f32 %v248, %v314
      %v320 = vadd.f32 %v249, %v314
      %v321 = vadd.f32 %v250, %v314
      %v322 = vadd.f32 %v251, %v314
      %v323 = vadd.f32 %v252, %v314
      %v324 = vadd.f32 %v253, %v314
      %v325 = vadd.f32 %v254, %v314
      %v326 = vadd.f32 %v255, %v314
      %v327 = vadd.f32 %v256, %v314
      %v328 = vadd.f32 %v257, %v314
      %v329 = vadd.f32 %v258, %v314
      %v330 = vadd.f32 %v259, %v314
      %v331 = vadd.f32 %v260, %v314
      %v332 = vadd.f32 %v261, %v314
      %v333 = vadd.f32 %v262, %v314
      %v334 = vadd.f32 %v263, %v314
      %v335 = vadd.f32 %v264, %v314
      %v336 = vadd.f32 %v265, %v314
      %v337 = vadd.f32 %v266, %v314
      %v338 = vadd.f32 %v267, %v314
      %v339 = vadd.f32 %v268, %v314
      %v340 = vadd.f32 %v269, %v314
      %v341 = vadd.f32 %v270, %v314
      %v342 = vadd.f32 %v271, %v314
      %v343 = vadd.f32 %v272, %v314
      %v344 = vadd.f32 %v273, %v314
      %v345 = vadd.f32 %v274, %v314
      %v346 = vadd.f32 %v275, %v314
      %v347 = vadd.f32 %v276, %v314
      %v348 = vadd.f32 %v277, %v314
      %v349 = vadd.f32 %v278, %v314
      %v350 = vadd.f32 %v279, %v314
      %v351 = vadd.f32 %v280, %v314
      %v352 = vadd.f32 %v281, %v314
      %v353 = vadd.f32 %v282, %v314
      %v354 = vadd.f32 %v283, %v314
      %v355 = vadd.f32 %v284, %v314
      %v356 = vadd.f32 %v285, %v314
      %v357 = vadd.f32 %v286, %v314
      %v358 = vadd.f32 %v287, %v314
      %v359 = vadd.f32 %v288, %v314
      %v360 = vadd.f32 %v289, %v314
      %v361 = vadd.f32 %v290, %v314
      %v362 = vadd.f32 %v291, %v314
      %v363 = vadd.f32 %v292, %v314
      %v364 = vadd.f32 %v293, %v314
      %v365 = vadd.f32 %v294, %v314
      %v366 = vadd.f32 %v295, %v314
      %v367 = vadd.f32 %v296, %v314
      %v368 = vadd.f32 %v297, %v314
      %v369 = vadd.f32 %v298, %v314
      %v370 = vadd.f32 %v299, %v314
      %v371 = vadd.f32 %v300, %v314
      %v372 = vadd.f32 %v301, %v314
      %v373 = vadd.f32 %v302, %v314
      %v374 = vadd.f32 %v303, %v314
      %v375 = vadd.f32 %v304, %v314
      %v376 = vadd.f32 %v305, %v314
      %v377 = vadd.f32 %v306, %v314
      %v378 = vadd.f32 %v307, %v314
      %v379 = vadd.f32 %v308, %v314
      %v380 = vmax.f32 %v316, 0.0
      %v381 = vmax.f32 %v317, 0.0
      %v382 = vmax.f32 %v318, 0.0
      %v383 = vmax.f32 %v319, 0.0
      %v384 = vmax.f32 %v320, 0.0
      %v385 = vmax.f32 %v321, 0.0
      %v386 = vmax.f32 %v322, 0.0
      %v387 = vmax.f32 %v323, 0.0
      %v388 = vmax.f32 %v324, 0.0
      %v389 = vmax.f32 %v325, 0.0
      %v390 = vmax.f32 %v326, 0.0
      %v391 = vmax.f32 %v327, 0.0
      %v392 = vmax.f32 %v328, 0.0
      %v393 = vmax.f32 %v329, 0.0
      %v394 = vmax.f32 %v330, 0.0
      %v395 = vmax.f32 %v331, 0.0
      %v396 = vmax.f32 %v332, 0.0
      %v397 = vmax.f32 %v333, 0.0
      %v398 = vmax.f32 %v334, 0.0
      %v399 = vmax.f32 %v335, 0.0
      %v400 = vmax.f32 %v336, 0.0
      %v401 = vmax.f32 %v337, 0.0
      %v402 = vmax.f32 %v338, 0.0
      %v403 = vmax.f32 %v339, 0.0
      %v404 = vmax.f32 %v340, 0.0
      %v405 = vmax.f32 %v341, 0.0
      %v406 = vmax.f32 %v342, 0.0
      %v407 = vmax.f32 %v343, 0.0
      %v408 = vmax.f32 %v344, 0.0
      %v409 = vmax.f32 %v345, 0.0
      %v410 = vmax.f32 %v346, 0.0
      %v411 = vmax.f32 %v347, 0.0
      %v412 = vmax.f32 %v348, 0.0
      %v413 = vmax.f32 %v349, 0.0
      %v414 = vmax.f32 %v350, 0.0
      %v415 = vmax.f32 %v351, 0.0
      %v416 = vmax.f32 %v352, 0.0
      %v417 = vmax.f32 %v353, 0.0
      %v418 = vmax.f32 %v354, 0.0
      %v419 = vmax.f32 %v355, 0.0
      %v420 = vmax.f32 %v356, 0.0
      %v421 = vmax.f32 %v357, 0.0
      %v422 = vmax.f32 %v358, 0.0
      %v423 = vmax.f32 %v359, 0.0
      %v424 = vmax.f32 %v360, 0.0
      %v425 = vmax.f32 %v361, 0.0
      %v426 = vmax.f32 %v362, 0.0
      %v427 = vmax.f32 %v363, 0.0
      %v428 = vmax.f32 %v364, 0.0
      %v429 = vmax.f32 %v365, 0.0
      %v430 = vmax.f32 %v366, 0.0
      %v431 = vmax.f32 %v367, 0.0
      %v432 = vmax.f32 %v368, 0.0
      %v433 = vmax.f32 %v369, 0.0
      %v434 = vmax.f32 %v370, 0.0
      %v435 = vmax.f32 %v371, 0.0
      %v436 = vmax.f32 %v372, 0.0
      %v437 = vmax.f32 %v373, 0.0
      %v438 = vmax.f32 %v374, 0.0
      %v439 = vmax.f32 %v375, 0.0
      %v440 = vmax.f32 %v376, 0.0
      %v441 = vmax.f32 %v377, 0.0
      %v442 = vmax.f32 %v378, 0.0
      %v443 = vmax.f32 %v379, 0.0
      %v444 = vpack.c.bf16 %v381, %v380
      %v445 = vpack.c.bf16 %v383, %v382
      %v446 = vpack.c.bf16 %v385, %v384
      %v447 = vpack.c.bf16 %v387, %v386
      %v448 = vpack.c.bf16 %v389, %v388
      %v449 = vpack.c.bf16 %v391, %v390
      %v450 = vpack.c.bf16 %v393, %v392
      %v451 = vpack.c.bf16 %v395, %v394
      %v452 = vpack.c.bf16 %v397, %v396
      %v453 = vpack.c.bf16 %v399, %v398
      %v454 = vpack.c.bf16 %v401, %v400
      %v455 = vpack.c.bf16 %v403, %v402
      %v456 = vpack.c.bf16 %v405, %v404
      %v457 = vpack.c.bf16 %v407, %v406
      %v458 = vpack.c.bf16 %v409, %v408
      %v459 = vpack.c.bf16 %v411, %v410
      %v460 = vpack.c.bf16 %v413, %v412
      %v461 = vpack.c.bf16 %v415, %v414
      %v462 = vpack.c.bf16 %v417, %v416
      %v463 = vpack.c.bf16 %v419, %v418
      %v464 = vpack.c.bf16 %v421, %v420
      %v465 = vpack.c.bf16 %v423, %v422
      %v466 = vpack.c.bf16 %v425, %v424
      %v467 = vpack.c.bf16 %v427, %v426
      %v468 = vpack.c.bf16 %v429, %v428
      %v469 = vpack.c.bf16 %v431, %v430
      %v470 = vpack.c.bf16 %v433, %v432
      %v471 = vpack.c.bf16 %v435, %v434
      %v472 = vpack.c.bf16 %v437, %v436
      %v473 = vpack.c.bf16 %v439, %v438
      %v474 = vpack.c.bf16 %v441, %v440
      %v475 = vpack.c.bf16 %v443, %v442
      %v508 = vunpack.c.l.b16 %v444
      %v509 = vunpack.c.h.b16 %v444
      %v510 = vunpack.c.l.b16 %v445
      %v511 = vunpack.c.h.b16 %v445
      %v512 = vunpack.c.l.b16 %v446
      %v513 = vunpack.c.h.b16 %v446
      %v514 = vunpack.c.l.b16 %v447
      %v515 = vunpack.c.h.b16 %v447
      %v516 = vunpack.c.l.b16 %v448
      %v517 = vunpack.c.h.b16 %v448
      %v518 = vunpack.c.l.b16 %v449
      %v519 = vunpack.c.h.b16 %v449
      %v520 = vunpack.c.l.b16 %v450
      %v521 = vunpack.c.h.b16 %v450
      %v522 = vunpack.c.l.b16 %v451
      %v523 = vunpack.c.h.b16 %v451
      %v524 = vunpack.c.l.b16 %v452
      %v525 = vunpack.c.h.b16 %v452
      %v526 = vunpack.c.l.b16 %v453
      %v527 = vunpack.c.h.b16 %v453
      %v528 = vunpack.c.l.b16 %v454
      %v529 = vunpack.c.h.b16 %v454
      %v530 = vunpack.c.l.b16 %v455
      %v531 = vunpack.c.h.b16 %v455
      %v532 = vunpack.c.l.b16 %v456
      %v533 = vunpack.c.h.b16 %v456
      %v534 = vunpack.c.l.b16 %v457
      %v535 = vunpack.c.h.b16 %v457
      %v536 = vunpack.c.l.b16 %v458
      %v537 = vunpack.c.h.b16 %v458
      %v538 = vunpack.c.l.b16 %v459
      %v539 = vunpack.c.h.b16 %v459
      %v540 = vunpack.c.l.b16 %v460
      %v541 = vunpack.c.h.b16 %v460
      %v542 = vunpack.c.l.b16 %v461
      %v543 = vunpack.c.h.b16 %v461
      %v544 = vunpack.c.l.b16 %v462
      %v545 = vunpack.c.h.b16 %v462
      %v546 = vunpack.c.l.b16 %v463
      %v547 = vunpack.c.h.b16 %v463
      %v548 = vunpack.c.l.b16 %v464
      %v549 = vunpack.c.h.b16 %v464
      %v550 = vunpack.c.l.b16 %v465
      %v551 = vunpack.c.h.b16 %v465
      %v552 = vunpack.c.l.b16 %v466
      %v553 = vunpack.c.h.b16 %v466
      %v554 = vunpack.c.l.b16 %v467
      %v555 = vunpack.c.h.b16 %v467
      %v556 = vunpack.c.l.b16 %v468
      %v557 = vunpack.c.h.b16 %v468
      %v558 = vunpack.c.l.b16 %v469
      %v559 = vunpack.c.h.b16 %v469
      %v560 = vunpack.c.l.b16 %v470
      %v561 = vunpack.c.h.b16 %v470
      %v562 = vunpack.c.l.b16 %v471
      %v563 = vunpack.c.h.b16 %v471
      %v564 = vunpack.c.l.b16 %v472
      %v565 = vunpack.c.h.b16 %v472
      %v566 = vunpack.c.l.b16 %v473
      %v567 = vunpack.c.h.b16 %v473
      %v568 = vunpack.c.l.b16 %v474
      %v569 = vunpack.c.h.b16 %v474
      %v570 = vunpack.c.l.b16 %v475
      %v571 = vunpack.c.h.b16 %v475
      %v572 = vpack.c.b16 %v508, %v508
      %v573 = vpack.c.b16 %v509, %v509
      %v574 = vpack.c.b16 %v510, %v510
      %v575 = vpack.c.b16 %v511, %v511
      %v576 = vpack.c.b16 %v512, %v512
      %v577 = vpack.c.b16 %v513, %v513
      %v578 = vpack.c.b16 %v514, %v514
      %v579 = vpack.c.b16 %v515, %v515
      %v580 = vpack.c.b16 %v516, %v516
      %v581 = vpack.c.b16 %v517, %v517
      %v582 = vpack.c.b16 %v518, %v518
      %v583 = vpack.c.b16 %v519, %v519
      %v584 = vpack.c.b16 %v520, %v520
      %v585 = vpack.c.b16 %v521, %v521
      %v586 = vpack.c.b16 %v522, %v522
      %v587 = vpack.c.b16 %v523, %v523
      %v588 = vpack.c.b16 %v524, %v524
      %v589 = vpack.c.b16 %v525, %v525
      %v590 = vpack.c.b16 %v526, %v526
      %v591 = vpack.c.b16 %v527, %v527
      %v592 = vpack.c.b16 %v528, %v528
      %v593 = vpack.c.b16 %v529, %v529
      %v594 = vpack.c.b16 %v530, %v530
      %v595 = vpack.c.b16 %v531, %v531
      %v596 = vpack.c.b16 %v532, %v532
      %v597 = vpack.c.b16 %v533, %v533
      %v598 = vpack.c.b16 %v534, %v534
      %v599 = vpack.c.b16 %v535, %v535
      %v600 = vpack.c.b16 %v536, %v536
      %v601 = vpack.c.b16 %v537, %v537
      %v602 = vpack.c.b16 %v538, %v538
      %v603 = vpack.c.b16 %v539, %v539
      %v604 = vpack.c.b16 %v540, %v540
      %v605 = vpack.c.b16 %v541, %v541
      %v606 = vpack.c.b16 %v542, %v542
      %v607 = vpack.c.b16 %v543, %v543
      %v608 = vpack.c.b16 %v544, %v544
      %v609 = vpack.c.b16 %v545, %v545
      %v610 = vpack.c.b16 %v546, %v546
      %v611 = vpack.c.b16 %v547, %v547
      %v612 = vpack.c.b16 %v548, %v548
      %v613 = vpack.c.b16 %v549, %v549
      %v614 = vpack.c.b16 %v550, %v550
      %v615 = vpack.c.b16 %v551, %v551
      %v616 = vpack.c.b16 %v552, %v552
      %v617 = vpack.c.b16 %v553, %v553
      %v618 = vpack.c.b16 %v554, %v554
      %v619 = vpack.c.b16 %v555, %v555
      %v620 = vpack.c.b16 %v556, %v556
      %v621 = vpack.c.b16 %v557, %v557
      %v622 = vpack.c.b16 %v558, %v558
      %v623 = vpack.c.b16 %v559, %v559
      %v624 = vpack.c.b16 %v560, %v560
      %v625 = vpack.c.b16 %v561, %v561
      %v626 = vpack.c.b16 %v562, %v562
      %v627 = vpack.c.b16 %v563, %v563
      %v628 = vpack.c.b16 %v564, %v564
      %v629 = vpack.c.b16 %v565, %v565
      %v630 = vpack.c.b16 %v566, %v566
      %v631 = vpack.c.b16 %v567, %v567
      %v632 = vpack.c.b16 %v568, %v568
      %v633 = vpack.c.b16 %v569, %v569
      %v634 = vpack.c.b16 %v570, %v570
      %v635 = vpack.c.b16 %v571, %v571
      %700 = vst [vmem:[%s172] sm:$0xf] %v572
      %701 = vst [vmem:[%s172 + $0x4] sm:$0xf] %v573
      %702 = vst [vmem:[%s172 + $0x8] sm:$0xf] %v574
      %703 = vst [vmem:[%s172 + $0xc] sm:$0xf] %v575
      %704 = vst [vmem:[%s172 + $0x10] sm:$0xf] %v576
      %705 = vst [vmem:[%s172 + $0x14] sm:$0xf] %v577
      %706 = vst [vmem:[%s172 + $0x18] sm:$0xf] %v578
      %707 = vst [vmem:[%s172 + $0x1c] sm:$0xf] %v579
      %708 = vst [vmem:[%s172 + $0x20] sm:$0xf] %v580
      %709 = vst [vmem:[%s172 + $0x24] sm:$0xf] %v581
      %710 = vst [vmem:[%s172 + $0x28] sm:$0xf] %v582
      %711 = vst [vmem:[%s172 + $0x2c] sm:$0xf] %v583
      %712 = vst [vmem:[%s172 + $0x30] sm:$0xf] %v584
      %713 = vst [vmem:[%s172 + $0x34] sm:$0xf] %v585
      %714 = vst [vmem:[%s172 + $0x38] sm:$0xf] %v586
      %715 = vst [vmem:[%s172 + $0x3c] sm:$0xf] %v587
      %716 = vst [vmem:[%s172 + $0x40] sm:$0xf] %v588
      %717 = vst [vmem:[%s172 + $0x44] sm:$0xf] %v589
      %718 = vst [vmem:[%s172 + $0x48] sm:$0xf] %v590
      %719 = vst [vmem:[%s172 + $0x4c] sm:$0xf] %v591
      %720 = vst [vmem:[%s172 + $0x50] sm:$0xf] %v592
      %721 = vst [vmem:[%s172 + $0x54] sm:$0xf] %v593
      %722 = vst [vmem:[%s172 + $0x58] sm:$0xf] %v594
      %723 = vst [vmem:[%s172 + $0x5c] sm:$0xf] %v595
      %724 = vst [vmem:[%s172 + $0x60] sm:$0xf] %v596
      %725 = vst [vmem:[%s172 + $0x64] sm:$0xf] %v597
      %726 = vst [vmem:[%s172 + $0x68] sm:$0xf] %v598
      %727 = vst [vmem:[%s172 + $0x6c] sm:$0xf] %v599
      %728 = vst [vmem:[%s172 + $0x70] sm:$0xf] %v600
      %729 = vst [vmem:[%s172 + $0x74] sm:$0xf] %v601
      %730 = vst [vmem:[%s172 + $0x78] sm:$0xf] %v602
      %731 = vst [vmem:[%s172 + $0x7c] sm:$0xf] %v603
      %732 = vst [vmem:[%s172 + $0x80] sm:$0xf] %v604
      %733 = vst [vmem:[%s172 + $0x84] sm:$0xf] %v605
      %734 = vst [vmem:[%s172 + $0x88] sm:$0xf] %v606
      %735 = vst [vmem:[%s172 + $0x8c] sm:$0xf] %v607
      %736 = vst [vmem:[%s172 + $0x90] sm:$0xf] %v608
      %737 = vst [vmem:[%s172 + $0x94] sm:$0xf] %v609
      %738 = vst [vmem:[%s172 + $0x98] sm:$0xf] %v610
      %739 = vst [vmem:[%s172 + $0x9c] sm:$0xf] %v611
      %740 = vst [vmem:[%s172 + $0xa0] sm:$0xf] %v612
      %741 = vst [vmem:[%s172 + $0xa4] sm:$0xf] %v613
      %742 = vst [vmem:[%s172 + $0xa8] sm:$0xf] %v614
      %743 = vst [vmem:[%s172 + $0xac] sm:$0xf] %v615
      %744 = vst [vmem:[%s172 + $0xb0] sm:$0xf] %v616
      %745 = vst [vmem:[%s172 + $0xb4] sm:$0xf] %v617
      %746 = vst [vmem:[%s172 + $0xb8] sm:$0xf] %v618
      %747 = vst [vmem:[%s172 + $0xbc] sm:$0xf] %v619
      %748 = vst [vmem:[%s172 + $0xc0] sm:$0xf] %v620
      %749 = vst [vmem:[%s172 + $0xc4] sm:$0xf] %v621
      %750 = vst [vmem:[%s172 + $0xc8] sm:$0xf] %v622
      %751 = vst [vmem:[%s172 + $0xcc] sm:$0xf] %v623
      %752 = vst [vmem:[%s172 + $0xd0] sm:$0xf] %v624
      %753 = vst [vmem:[%s172 + $0xd4] sm:$0xf] %v625
      %754 = vst [vmem:[%s172 + $0xd8] sm:$0xf] %v626
      %755 = vst [vmem:[%s172 + $0xdc] sm:$0xf] %v627
      %756 = vst [vmem:[%s172 + $0xe0] sm:$0xf] %v628
      %757 = vst [vmem:[%s172 + $0xe4] sm:$0xf] %v629
      %758 = vst [vmem:[%s172 + $0xe8] sm:$0xf] %v630
      %759 = vst [vmem:[%s172 + $0xec] sm:$0xf] %v631
      %760 = vst [vmem:[%s172 + $0xf0] sm:$0xf] %v632
      %761 = vst [vmem:[%s172 + $0xf4] sm:$0xf] %v633
      %762 = vst [vmem:[%s172 + $0xf8] sm:$0xf] %v634
      %763 = vst [vmem:[%s172 + $0xfc] sm:$0xf] %v635
      %s764 = smul.u32 64, %s14
      %p765 = scmp.lt.s32.totalorder %s764, 127
      %s766 = scalar_select %p765, %s764, 127
      %s767 = smul.addr %s766, 4
      %s768 = scalar_lea.vmem %s3, %s767
      // Predicated region
      $region33: #{bottleneck_forward.6} parent=31 // pred_check
        %p769 = pneg %p100
      $region34: #{bottleneck_forward.6} parent=31 // pred_check_branch
        %771 = sbr.rel (%p769) target = $region36
      $region35: #{bottleneck_forward.6} parent=31 // pred_region
        %s772 = smul.u32 64, %s14
      $region36: #{bottleneck_forward.6} parent=31 // pred_fallthru
        _
    $region32: #{bottleneck_forward.6} parent=5 // pred_fallthru
      _
    %p773 = scmp.le.s32.totalorder 2, %s9
    // Predicated region
    $region37: #{bottleneck_forward.6} parent=5 // pred_check
      %p774 = pneg %p773
    $region38: #{bottleneck_forward.6} parent=5 // pred_check_branch
      %776 = sbr.rel (%p774) target = $region40
    $region39: #{bottleneck_forward.6} parent=5 // pred_region
      %s777 = ssub.s32 %s9, 2
      // Predicated region
      $region41: #{bottleneck_forward.6} parent=39 // pred_check
        %p778 = pneg %p106
      $region42: #{bottleneck_forward.6} parent=39 // pred_check_branch
        %780 = sbr.rel (%p778) target = $region44
      $region43: #{bottleneck_forward.6} parent=39 // pred_region
        %s781 = smul.u32 64, %s15
        %p782 = scmp.lt.s32.totalorder %s781, 127
        %s783 = scalar_select %p782, %s781, 127
        %s784 = smul.addr %s783, 4
        %s785 = scalar_lea.vmem %s3, %s784
      $region44: #{bottleneck_forward.6} parent=39 // pred_fallthru
        _
    $region40: #{bottleneck_forward.6} parent=5 // pred_fallthru
      _
  $region6: #{bottleneck_forward.6} parent=0 // loop_footer
    %s13 = sadd.s32 1, %s9
  $region7: #{bottleneck_forward.6} parent=0 // loop_footer_branch
    %8 = sbr.rel target = $region3
  $region8: #{bottleneck_forward.6} parent=0 // loop_exit
    _

// kernel: bottleneck_forward.5
$region0: #{bottleneck_forward.5}
  #allocation0 [shape = 'u32[]', space=smem, size = 0x4, offset = 0x4, fixed_abs, tag = 'smem constant byte address 0x4 - core index']
  #allocation1 [shape = 'u32[144,128]{1,0:T(1,128)}', space=vmem, size = 0x12000, scoped, tag = 'internal scratch']
  %s0 = inlined_call_operand.vmem [shape: bf16[1024,128], index: 0, kind: input, shape index: {}]
  %s1 = inlined_call_operand.vmem [shape: bf16[128,128], index: 1, kind: input, shape index: {}]
  %s2 = inlined_call_operand.vmem [shape: f32[1024,128], index: 2, kind: output, shape index: {0}]
  %s3 = inlined_call_operand.vmem [shape: f32[2,2,128], index: 3, kind: output, shape index: {1}]
  %4 = xla_tuple %s2, %s3
  %s5 = sld [smem:[#allocation0]]
  $region49: #{bottleneck_forward.5} parent=0
    _
  %s7 = ssub.s32 1, %s5
  %s8 = scalar_select 0, %s7, %s5
  loop: start=0, step=1, limit=4
  $region2: #{bottleneck_forward.5} parent=0 // loop_pre_header
    _
  $region3: #{bottleneck_forward.5} parent=0 // loop_header
    %s10 = sphi 0, %s14
    %p11 = scmp.ge.s32.totalorder %s10, 4
    %s20 = sphi 0, %s22
    %s23 = sphi 0, %s20
    %s24 = sphi 0, %s23
    %s40 = sphi 0, %s24
    %s44 = sphi 0, %s44
    %s46 = sphi 0, %s44
    %s47 = sphi 0, %s46
    %s61 = sphi 0, %s47
    %s67 = sphi 0, %s69
    %s70 = sphi 0, %s67
    %s71 = sphi 0, %s70
    %s87 = sphi 0, %s71
    %s93 = sphi 0, %s95
    %s96 = sphi 0, %s93
    %s97 = sphi 0, %s96
    %s113 = sphi 0, %s97
  $region4: #{bottleneck_forward.5} parent=0 // loop_header_branch
    %13 = sbr.rel (%p11) target = $region8
  $region5: #{bottleneck_forward.5} parent=0 // loop_body
    %s15 = ssub.s32 %s10, 1
    %s16 = ssub.s32 %s10, 2
    %s17 = sadd.s32 %s10, 1
    %s18 = ssub.s32 %s10, %s17
    %p19 = scmp.eq.s32.totalorder %s18, 0
    %s21 = sadd.s32 %s20, 1
    %s22 = scalar_select %p19, %s20, %s21
    %p25 = pneg %p19
    %p26 = scmp.eq.s32.totalorder %s10, 1
    %p27 = por %p25, %p26
    %p28 = scmp.ne.s32.totalorder %s20, %s23
    %p29 = scmp.eq.s32.totalorder %s10, 0
    %p30 = por %p28, %p29
    %p31 = scmp.ne.s32.totalorder %s20, %s23
    %p32 = scmp.eq.s32.totalorder %s15, 1
    %p33 = por %p31, %p32
    %p34 = scmp.ne.s32.totalorder %s23, %s24
    %p35 = scmp.eq.s32.totalorder %s15, 0
    %p36 = por %p34, %p35
    %p37 = scmp.ne.s32.totalorder %s23, %s24
    %p38 = scmp.eq.s32.totalorder %s16, 1
    %p39 = por %p37, %p38
    %p41 = scmp.ne.s32.totalorder %s24, %s40
    %p42 = scmp.eq.s32.totalorder %s16, 0
    %p43 = por %p41, %p42
    %s45 = sadd.s32 %s44, 1
    %p48 = scmp.eq.s32.totalorder %s10, 1
    %p49 = scmp.ne.s32.totalorder %s44, %s46
    %p50 = scmp.eq.s32.totalorder %s10, 0
    %p51 = por %p49, %p50
    %p52 = scmp.ne.s32.totalorder %s44, %s46
    %p53 = scmp.eq.s32.totalorder %s15, 1
    %p54 = por %p52, %p53
    %p55 = scmp.ne.s32.totalorder %s46, %s47
    %p56 = scmp.eq.s32.totalorder %s15, 0
    %p57 = por %p55, %p56
    %p58 = scmp.ne.s32.totalorder %s46, %s47
    %p59 = scmp.eq.s32.totalorder %s16, 1
    %p60 = por %p58, %p59
    %p62 = scmp.ne.s32.totalorder %s47, %s61
    %p63 = scmp.eq.s32.totalorder %s16, 0
    %p64 = por %p62, %p63
    %s65 = ssub.s32 %s10, %s17
    %p66 = scmp.eq.s32.totalorder %s65, 0
    %s68 = sadd.s32 %s67, 1
    %s69 = scalar_select %p66, %s67, %s68
    %p72 = pneg %p66
    %p73 = scmp.eq.s32.totalorder %s10, 1
    %p74 = por %p72, %p73
    %p75 = scmp.ne.s32.totalorder %s67, %s70
    %p76 = scmp.eq.s32.totalorder %s10, 0
    %p77 = por %p75, %p76
    %p78 = scmp.ne.s32.totalorder %s67, %s70
    %p79 = scmp.eq.s32.totalorder %s15, 1
    %p80 = por %p78, %p79
    %p81 = scmp.ne.s32.totalorder %s70, %s71
    %p82 = scmp.eq.s32.totalorder %s15, 0
    %p83 = por %p81, %p82
    %p84 = scmp.ne.s32.totalorder %s70, %s71
    %p85 = scmp.eq.s32.totalorder %s16, 1
    %p86 = por %p84, %p85
    %p88 = scmp.ne.s32.totalorder %s71, %s87
    %p89 = scmp.eq.s32.totalorder %s16, 0
    %p90 = por %p88, %p89
    %s91 = ssub.s32 %s10, %s17
    %p92 = scmp.eq.s32.totalorder %s91, 0
    %s94 = sadd.s32 %s93, 1
    %s95 = scalar_select %p92, %s93, %s94
    %p98 = pneg %p92
    %p99 = scmp.eq.s32.totalorder %s10, 1
    %p100 = por %p98, %p99
    %p101 = scmp.ne.s32.totalorder %s93, %s96
    %p102 = scmp.eq.s32.totalorder %s10, 0
    %p103 = por %p101, %p102
    %p104 = scmp.ne.s32.totalorder %s93, %s96
    %p105 = scmp.eq.s32.totalorder %s15, 1
    %p106 = por %p104, %p105
    %p107 = scmp.ne.s32.totalorder %s96, %s97
    %p108 = scmp.eq.s32.totalorder %s15, 0
    %p109 = por %p107, %p108
    %p110 = scmp.ne.s32.totalorder %s96, %s97
    %p111 = scmp.eq.s32.totalorder %s16, 1
    %p112 = por %p110, %p111
    %p114 = scmp.ne.s32.totalorder %s97, %s113
    %p115 = scmp.eq.s32.totalorder %s16, 0
    %p116 = por %p114, %p115
    %p117 = scmp.le.s32.totalorder 1, %s10
    %p118 = scmp.lt.s32.totalorder %s10, 3
    %p119 = pnand %p117, %p118
    %p120 = pneg %p119
    // Predicated region
    $region9: #{bottleneck_forward.5} parent=5 // pred_check
      _
    $region10: #{bottleneck_forward.5} parent=5 // pred_check_branch
      %122 = sbr.rel (%p119) target = $region12
    $region11: #{bottleneck_forward.5} parent=5 // pred_region
      %s123 = ssub.s32 %s10, 1
      // Predicated region
      $region13: #{bottleneck_forward.5} parent=11 // pred_check
        %p124 = pneg %p57
      $region14: #{bottleneck_forward.5} parent=11 // pred_check_branch
        %126 = sbr.rel (%p124) target = $region16
      $region15: #{bottleneck_forward.5} parent=11 // pred_region
        _
      $region16: #{bottleneck_forward.5} parent=11 // pred_fallthru
        _
    $region12: #{bottleneck_forward.5} parent=5 // pred_fallthru
      _
    %p127 = scmp.lt.s32.totalorder %s10, 2
    // Predicated region
    $region17: #{bottleneck_forward.5} parent=5 // pred_check
      %p128 = pneg %p127
    $region18: #{bottleneck_forward.5} parent=5 // pred_check_branch
      %130 = sbr.rel (%p128) target = $region20
    $region19: #{bottleneck_forward.5} parent=5 // pred_region
      // Predicated region
      $region21: #{bottleneck_forward.5} parent=19 // pred_check
        %p131 = pneg %p30
      $region22: #{bottleneck_forward.5} parent=19 // pred_check_branch
        %133 = sbr.rel (%p131) target = $region24
      $region23: #{bottleneck_forward.5} parent=19 // pred_region
        %s134 = smul.u32 64, %s10
        %p135 = scmp.lt.s32.totalorder %s134, 127
        %s136 = scalar_select %p135, %s134, 127
        %s137 = smul.addr %s136, 4
        %s138 = scalar_lea.vmem %s0, %s137
        %s139 = smul.u32 64, %s10
      $region24: #{bottleneck_forward.5} parent=19 // pred_fallthru
        _
    $region20: #{bottleneck_forward.5} parent=5 // pred_fallthru
      _
    %p140 = scmp.le.s32.totalorder 1, %s10
    %p141 = scmp.lt.s32.totalorder %s10, 3
    %p142 = pnand %p140, %p141
    %p143 = pneg %p142
    // Predicated region
    $region25: #{bottleneck_forward.5} parent=5 // pred_check
      _
    $region26: #{bottleneck_forward.5} parent=5 // pred_check_branch
      %145 = sbr.rel (%p142) target = $region28
    $region27: #{bottleneck_forward.5} parent=5 // pred_region
      %s146 = ssub.s32 %s10, 1
      %s147 = smul.u32 64, %s15
      %p148 = scmp.lt.s32.totalorder %s147, 127
      %s149 = scalar_select %p148, %s147, 127
      %s150 = smul.addr %s149, 4
      %s151 = scalar_lea.vmem %s0, %s150
      %p152 = pneg %p36
      %p153 = pneg %p33
      %p154 = pneg %p57
      %p155 = pneg %p54
      %p156 = pneg %p83
      %p157 = pneg %p80
      %s158 = smul.u32 64, %s15
      %p159 = scmp.lt.s32.totalorder %s158, 127
      %s160 = scalar_select %p159, %s158, 127
      %s161 = smul.addr %s160, 8
      %s162 = scalar_lea.vmem %s2, %s161
      %p163 = pneg %p109
      %p164 = pneg %p106
      %p165 = scmp.lt.s32.totalorder %s15, 1
      %s166 = scalar_select %p165, %s15, 1
      %s167 = smul.addr %s166, 2
      %s168 = scalar_lea.vmem %s3, %s167
      %s169 = smul.u32 64, %s15
      %p170 = scmp.lt.s32.totalorder %s169, 127
      %s171 = scalar_select %p170, %s169, 127
      %s172 = smul.addr %s171, 4
      %s173 = scalar_lea.vmem %s0, %s172
      %s174 = smul.u32 64, %s15
      %s175 = smul.u32 64, %s15
      %p176 = scmp.lt.s32.totalorder %s175, 127
      %s177 = scalar_select %p176, %s175, 127
      %s178 = smul.addr %s177, 8
      %s179 = scalar_lea.vmem %s2, %s178
      %s180 = smul.u32 64, %s15
      %p181 = scmp.lt.s32.totalorder %s15, 1
      %s182 = scalar_select %p181, %s15, 1
      %s183 = smul.addr %s182, 2
      %s184 = scalar_lea.vmem %s3, %s183
      %v186 = vld [vmem:[%s173] sm:$0xf]
      %v187 = vld [vmem:[%s173 + $0x4] sm:$0xf]
      %v188 = vld [vmem:[%s173 + $0x8] sm:$0xf]
      %v189 = vld [vmem:[%s173 + $0xc] sm:$0xf]
      %v190 = vld [vmem:[%s173 + $0x10] sm:$0xf]
      %v191 = vld [vmem:[%s173 + $0x14] sm:$0xf]
      %v192 = vld [vmem:[%s173 + $0x18] sm:$0xf]
      %v193 = vld [vmem:[%s173 + $0x1c] sm:$0xf]
      %v194 = vld [vmem:[%s173 + $0x20] sm:$0xf]
      %v195 = vld [vmem:[%s173 + $0x24] sm:$0xf]
      %v196 = vld [vmem:[%s173 + $0x28] sm:$0xf]
      %v197 = vld [vmem:[%s173 + $0x2c] sm:$0xf]
      %v198 = vld [vmem:[%s173 + $0x30] sm:$0xf]
      %v199 = vld [vmem:[%s173 + $0x34] sm:$0xf]
      %v200 = vld [vmem:[%s173 + $0x38] sm:$0xf]
      %v201 = vld [vmem:[%s173 + $0x3c] sm:$0xf]
      %v202 = vld [vmem:[%s173 + $0x40] sm:$0xf]
      %v203 = vld [vmem:[%s173 + $0x44] sm:$0xf]
      %v204 = vld [vmem:[%s173 + $0x48] sm:$0xf]
      %v205 = vld [vmem:[%s173 + $0x4c] sm:$0xf]
      %v206 = vld [vmem:[%s173 + $0x50] sm:$0xf]
      %v207 = vld [vmem:[%s173 + $0x54] sm:$0xf]
      %v208 = vld [vmem:[%s173 + $0x58] sm:$0xf]
      %v209 = vld [vmem:[%s173 + $0x5c] sm:$0xf]
      %v210 = vld [vmem:[%s173 + $0x60] sm:$0xf]
      %v211 = vld [vmem:[%s173 + $0x64] sm:$0xf]
      %v212 = vld [vmem:[%s173 + $0x68] sm:$0xf]
      %v213 = vld [vmem:[%s173 + $0x6c] sm:$0xf]
      %v214 = vld [vmem:[%s173 + $0x70] sm:$0xf]
      %v215 = vld [vmem:[%s173 + $0x74] sm:$0xf]
      %v216 = vld [vmem:[%s173 + $0x78] sm:$0xf]
      %v217 = vld [vmem:[%s173 + $0x7c] sm:$0xf]
      %v218 = vld [vmem:[%s173 + $0x80] sm:$0xf]
      %v219 = vld [vmem:[%s173 + $0x84] sm:$0xf]
      %v220 = vld [vmem:[%s173 + $0x88] sm:$0xf]
      %v221 = vld [vmem:[%s173 + $0x8c] sm:$0xf]
      %v222 = vld [vmem:[%s173 + $0x90] sm:$0xf]
      %v223 = vld [vmem:[%s173 + $0x94] sm:$0xf]
      %v224 = vld [vmem:[%s173 + $0x98] sm:$0xf]
      %v225 = vld [vmem:[%s173 + $0x9c] sm:$0xf]
      %v226 = vld [vmem:[%s173 + $0xa0] sm:$0xf]
      %v227 = vld [vmem:[%s173 + $0xa4] sm:$0xf]
      %v228 = vld [vmem:[%s173 + $0xa8] sm:$0xf]
      %v229 = vld [vmem:[%s173 + $0xac] sm:$0xf]
      %v230 = vld [vmem:[%s173 + $0xb0] sm:$0xf]
      %v231 = vld [vmem:[%s173 + $0xb4] sm:$0xf]
      %v232 = vld [vmem:[%s173 + $0xb8] sm:$0xf]
      %v233 = vld [vmem:[%s173 + $0xbc] sm:$0xf]
      %v234 = vld [vmem:[%s173 + $0xc0] sm:$0xf]
      %v235 = vld [vmem:[%s173 + $0xc4] sm:$0xf]
      %v236 = vld [vmem:[%s173 + $0xc8] sm:$0xf]
      %v237 = vld [vmem:[%s173 + $0xcc] sm:$0xf]
      %v238 = vld [vmem:[%s173 + $0xd0] sm:$0xf]
      %v239 = vld [vmem:[%s173 + $0xd4] sm:$0xf]
      %v240 = vld [vmem:[%s173 + $0xd8] sm:$0xf]
      %v241 = vld [vmem:[%s173 + $0xdc] sm:$0xf]
      %v242 = vld [vmem:[%s173 + $0xe0] sm:$0xf]
      %v243 = vld [vmem:[%s173 + $0xe4] sm:$0xf]
      %v244 = vld [vmem:[%s173 + $0xe8] sm:$0xf]
      %v245 = vld [vmem:[%s173 + $0xec] sm:$0xf]
      %v246 = vld [vmem:[%s173 + $0xf0] sm:$0xf]
      %v247 = vld [vmem:[%s173 + $0xf4] sm:$0xf]
      %v248 = vld [vmem:[%s173 + $0xf8] sm:$0xf]
      %v249 = vld [vmem:[%s173 + $0xfc] sm:$0xf]
      %v250 = vld [vmem:[%s1] sm:$0xf]
      %v251 = vld [vmem:[%s1 + $0x4] sm:$0xf]
      %v252 = vld [vmem:[%s1 + $0x8] sm:$0xf]
      %v253 = vld [vmem:[%s1 + $0xc] sm:$0xf]
      %v254 = vld [vmem:[%s1 + $0x10] sm:$0xf]
      %v255 = vld [vmem:[%s1 + $0x14] sm:$0xf]
      %v256 = vld [vmem:[%s1 + $0x18] sm:$0xf]
      %v257 = vld [vmem:[%s1 + $0x1c] sm:$0xf]
      %v258 = vld [vmem:[%s1 + $0x20] sm:$0xf]
      %v259 = vld [vmem:[%s1 + $0x24] sm:$0xf]
      %v260 = vld [vmem:[%s1 + $0x28] sm:$0xf]
      %v261 = vld [vmem:[%s1 + $0x2c] sm:$0xf]
      %v262 = vld [vmem:[%s1 + $0x30] sm:$0xf]
      %v263 = vld [vmem:[%s1 + $0x34] sm:$0xf]
      %v264 = vld [vmem:[%s1 + $0x38] sm:$0xf]
      %v265 = vld [vmem:[%s1 + $0x3c] sm:$0xf]
      %v330 = vunpack.c.l.b16 %v186
      %v331 = vunpack.c.l.b16 %v187
      %v332 = vunpack.c.l.b16 %v188
      %v333 = vunpack.c.l.b16 %v189
      %v334 = vunpack.c.l.b16 %v190
      %v335 = vunpack.c.l.b16 %v191
      %v336 = vunpack.c.l.b16 %v192
      %v337 = vunpack.c.l.b16 %v193
      %v338 = vunpack.c.l.b16 %v194
      %v339 = vunpack.c.l.b16 %v195
      %v340 = vunpack.c.l.b16 %v196
      %v341 = vunpack.c.l.b16 %v197
      %v342 = vunpack.c.l.b16 %v198
      %v343 = vunpack.c.l.b16 %v199
      %v344 = vunpack.c.l.b16 %v200
      %v345 = vunpack.c.l.b16 %v201
      %v346 = vunpack.c.l.b16 %v202
      %v347 = vunpack.c.l.b16 %v203
      %v348 = vunpack.c.l.b16 %v204
      %v349 = vunpack.c.l.b16 %v205
      %v350 = vunpack.c.l.b16 %v206
      %v351 = vunpack.c.l.b16 %v207
      %v352 = vunpack.c.l.b16 %v208
      %v353 = vunpack.c.l.b16 %v209
      %v354 = vunpack.c.l.b16 %v210
      %v355 = vunpack.c.l.b16 %v211
      %v356 = vunpack.c.l.b16 %v212
      %v357 = vunpack.c.l.b16 %v213
      %v358 = vunpack.c.l.b16 %v214
      %v359 = vunpack.c.l.b16 %v215
      %v360 = vunpack.c.l.b16 %v216
      %v361 = vunpack.c.l.b16 %v217
      %v362 = vunpack.c.l.b16 %v218
      %v363 = vunpack.c.l.b16 %v219
      %v364 = vunpack.c.l.b16 %v220
      %v365 = vunpack.c.l.b16 %v221
      %v366 = vunpack.c.l.b16 %v222
      %v367 = vunpack.c.l.b16 %v223
      %v368 = vunpack.c.l.b16 %v224
      %v369 = vunpack.c.l.b16 %v225
      %v370 = vunpack.c.l.b16 %v226
      %v371 = vunpack.c.l.b16 %v227
      %v372 = vunpack.c.l.b16 %v228
      %v373 = vunpack.c.l.b16 %v229
      %v374 = vunpack.c.l.b16 %v230
      %v375 = vunpack.c.l.b16 %v231
      %v376 = vunpack.c.l.b16 %v232
      %v377 = vunpack.c.l.b16 %v233
      %v378 = vunpack.c.l.b16 %v234
      %v379 = vunpack.c.l.b16 %v235
      %v380 = vunpack.c.l.b16 %v236
      %v381 = vunpack.c.l.b16 %v237
      %v382 = vunpack.c.l.b16 %v238
      %v383 = vunpack.c.l.b16 %v239
      %v384 = vunpack.c.l.b16 %v240
      %v385 = vunpack.c.l.b16 %v241
      %v386 = vunpack.c.l.b16 %v242
      %v387 = vunpack.c.l.b16 %v243
      %v388 = vunpack.c.l.b16 %v244
      %v389 = vunpack.c.l.b16 %v245
      %v390 = vunpack.c.l.b16 %v246
      %v391 = vunpack.c.l.b16 %v247
      %v392 = vunpack.c.l.b16 %v248
      %v393 = vunpack.c.l.b16 %v249
      %v394 = vpack.c.b16 %v331, %v330
      %v395 = vpack.c.b16 %v333, %v332
      %v396 = vpack.c.b16 %v335, %v334
      %v397 = vpack.c.b16 %v337, %v336
      %v398 = vpack.c.b16 %v339, %v338
      %v399 = vpack.c.b16 %v341, %v340
      %v400 = vpack.c.b16 %v343, %v342
      %v401 = vpack.c.b16 %v345, %v344
      %v402 = vpack.c.b16 %v347, %v346
      %v403 = vpack.c.b16 %v349, %v348
      %v404 = vpack.c.b16 %v351, %v350
      %v405 = vpack.c.b16 %v353, %v352
      %v406 = vpack.c.b16 %v355, %v354
      %v407 = vpack.c.b16 %v357, %v356
      %v408 = vpack.c.b16 %v359, %v358
      %v409 = vpack.c.b16 %v361, %v360
      %v410 = vpack.c.b16 %v363, %v362
      %v411 = vpack.c.b16 %v365, %v364
      %v412 = vpack.c.b16 %v367, %v366
      %v413 = vpack.c.b16 %v369, %v368
      %v414 = vpack.c.b16 %v371, %v370
      %v415 = vpack.c.b16 %v373, %v372
      %v416 = vpack.c.b16 %v375, %v374
      %v417 = vpack.c.b16 %v377, %v376
      %v418 = vpack.c.b16 %v379, %v378
      %v419 = vpack.c.b16 %v381, %v380
      %v420 = vpack.c.b16 %v383, %v382
      %v421 = vpack.c.b16 %v385, %v384
      %v422 = vpack.c.b16 %v387, %v386
      %v423 = vpack.c.b16 %v389, %v388
      %v424 = vpack.c.b16 %v391, %v390
      %v425 = vpack.c.b16 %v393, %v392
      %v474 = vunpack.c.l.b16 %v250
      %v475 = vunpack.c.l.b16 %v251
      %v476 = vunpack.c.l.b16 %v252
      %v477 = vunpack.c.l.b16 %v253
      %v478 = vunpack.c.l.b16 %v254
      %v479 = vunpack.c.l.b16 %v255
      %v480 = vunpack.c.l.b16 %v256
      %v481 = vunpack.c.l.b16 %v257
      %v482 = vunpack.c.l.b16 %v258
      %v483 = vunpack.c.l.b16 %v259
      %v484 = vunpack.c.l.b16 %v260
      %v485 = vunpack.c.l.b16 %v261
      %v486 = vunpack.c.l.b16 %v262
      %v487 = vunpack.c.l.b16 %v263
      %v488 = vunpack.c.l.b16 %v264
      %v489 = vunpack.c.l.b16 %v265
      %v490 = vpack.c.b16 %v475, %v474
      %v491 = vpack.c.b16 %v477, %v476
      %v492 = vpack.c.b16 %v479, %v478
      %v493 = vpack.c.b16 %v481, %v480
      %v494 = vpack.c.b16 %v483, %v482
      %v495 = vpack.c.b16 %v485, %v484
      %v496 = vpack.c.b16 %v487, %v486
      %v497 = vpack.c.b16 %v489, %v488
      %506 = vmatprep.subr.bf16.mxu0 0
      %507 = vmatpush1.bf16.msra.mxu0 %v490
      %508 = vmatprep.subr.bf16.mxu0 0
      %509 = vmatpush1.bf16.msra.mxu0 %v491
      %510 = vmatprep.subr.bf16.mxu0 0
      %511 = vmatpush1.bf16.msra.mxu0 %v492
      %512 = vmatprep.subr.bf16.mxu0 0
      %513 = vmatpush1.bf16.msra.mxu0 %v493
      %514 = vmatprep.subr.bf16.mxu0 0
      %515 = vmatpush1.bf16.msra.mxu0 %v494
      %516 = vmatprep.subr.bf16.mxu0 0
      %517 = vmatpush1.bf16.msra.mxu0 %v495
      %518 = vmatprep.subr.bf16.mxu0 0
      %519 = vmatpush1.bf16.msra.mxu0 %v496
      %520 = vmatprep.subr.bf16.mxu0 0
      %521 = vmatpush1.bf16.msra.mxu0 %v497
      %522 = vmatprep.subr.bf16.mxu0 0
      %523 = vmatpush1.bf16.msra.mxu0 0
      %524 = vmatprep.subr.bf16.mxu0 0
      %525 = vmatpush1.bf16.msra.mxu0 0
      %526 = vmatprep.subr.bf16.mxu0 0
      %527 = vmatpush1.bf16.msra.mxu0 0
      %528 = vmatprep.subr.bf16.mxu0 0
      %529 = vmatpush1.bf16.msra.mxu0 0
      %530 = vmatprep.subr.bf16.mxu0 0
      %531 = vmatpush1.bf16.msra.mxu0 0
      %532 = vmatprep.subr.bf16.mxu0 0
      %533 = vmatpush1.bf16.msra.mxu0 0
      %534 = vmatprep.subr.bf16.mxu0 0
      %535 = vmatpush1.bf16.msra.mxu0 0
      %536 = vmatprep.subr.bf16.mxu0 0
      %537 = vmatpush1.bf16.msra.mxu0 0
      %538 = vmatprep.mubr.bf16.mxu0 0
      %539 = vmatmul.mubr.bf16.gmra.mrb[0].mxu0 %v394
      %v540 = vpop.f32.mrb[0].mxu0
      %v541 = vadd.f32 0.0, %v540
      %v542 = vpop.f32.mrb[0].mxu0
      %v543 = vpop.f32.mrb[0].mxu0
      %v544 = vadd.f32 0.0, %v543
      %v545 = vpop.f32.mrb[0].mxu0
      %546 = vmatprep.mubr.bf16.mxu0 0
      %547 = vmatmul.mubr.bf16.gmra.mrb[0].mxu0 %v395
      %v548 = vpop.f32.mrb[0].mxu0
      %v549 = vadd.f32 0.0, %v548
      %v550 = vpop.f32.mrb[0].mxu0
      %v551 = vpop.f32.mrb[0].mxu0
      %v552 = vadd.f32 0.0, %v551
      %v553 = vpop.f32.mrb[0].mxu0
      %554 = vmatprep.mubr.bf16.mxu0 0
      %555 = vmatmul.mubr.bf16.gmra.mrb[0].mxu0 %v396
      %v556 = vpop.f32.mrb[0].mxu0
      %v557 = vadd.f32 0.0, %v556
      %v558 = vpop.f32.mrb[0].mxu0
      %v559 = vpop.f32.mrb[0].mxu0
      %v560 = vadd.f32 0.0, %v559
      %v561 = vpop.f32.mrb[0].mxu0
      %562 = vmatprep.mubr.bf16.mxu0 0
      %563 = vmatmul.mubr.bf16.gmra.mrb[0].mxu0 %v397
      %v564 = vpop.f32.mrb[0].mxu0
      %v565 = vadd.f32 0.0, %v564
      %v566 = vpop.f32.mrb[0].mxu0
      %v567 = vpop.f32.mrb[0].mxu0
      %v568 = vadd.f32 0.0, %v567
      %v569 = vpop.f32.mrb[0].mxu0
      %570 = vmatprep.mubr.bf16.mxu0 0
      %571 = vmatmul.mubr.bf16.gmra.mrb[0].mxu0 %v398
      %v572 = vpop.f32.mrb[0].mxu0
      %v573 = vadd.f32 0.0, %v572
      %v574 = vpop.f32.mrb[0].mxu0
      %v575 = vpop.f32.mrb[0].mxu0
      %v576 = vadd.f32 0.0, %v575
      %v577 = vpop.f32.mrb[0].mxu0
      %578 = vmatprep.mubr.bf16.mxu0 0
      %579 = vmatmul.mubr.bf16.gmra.mrb[0].mxu0 %v399
      %v580 = vpop.f32.mrb[0].mxu0
      %v581 = vadd.f32 0.0, %v580
      %v582 = vpop.f32.mrb[0].mxu0
      %v583 = vpop.f32.mrb[0].mxu0
      %v584 = vadd.f32 0.0, %v583
      %v585 = vpop.f32.mrb[0].mxu0
      %586 = vmatprep.mubr.bf16.mxu0 0
      %587 = vmatmul.mubr.bf16.gmra.mrb[0].mxu0 %v400
      %v588 = vpop.f32.mrb[0].mxu0
      %v589 = vadd.f32 0.0, %v588
      %v590 = vpop.f32.mrb[0].mxu0
      %v591 = vpop.f32.mrb[0].mxu0
      %v592 = vadd.f32 0.0, %v591
      %v593 = vpop.f32.mrb[0].mxu0
      %594 = vmatprep.mubr.bf16.mxu0 0
      %595 = vmatmul.mubr.bf16.gmra.mrb[0].mxu0 %v401
      %v596 = vpop.f32.mrb[0].mxu0
      %v597 = vadd.f32 0.0, %v596
      %v598 = vpop.f32.mrb[0].mxu0
      %v599 = vpop.f32.mrb[0].mxu0
      %v600 = vadd.f32 0.0, %v599
      %v601 = vpop.f32.mrb[0].mxu0
      %602 = vmatprep.mubr.bf16.mxu0 0
      %603 = vmatmul.mubr.bf16.gmra.mrb[0].mxu0 %v402
      %v604 = vpop.f32.mrb[0].mxu0
      %v605 = vadd.f32 0.0, %v604
      %v606 = vpop.f32.mrb[0].mxu0
      %v607 = vpop.f32.mrb[0].mxu0
      %v608 = vadd.f32 0.0, %v607
      %v609 = vpop.f32.mrb[0].mxu0
      %610 = vmatprep.mubr.bf16.mxu0 0
      %611 = vmatmul.mubr.bf16.gmra.mrb[0].mxu0 %v403
      %v612 = vpop.f32.mrb[0].mxu0
      %v613 = vadd.f32 0.0, %v612
      %v614 = vpop.f32.mrb[0].mxu0
      %v615 = vpop.f32.mrb[0].mxu0
      %v616 = vadd.f32 0.0, %v615
      %v617 = vpop.f32.mrb[0].mxu0
      %618 = vmatprep.mubr.bf16.mxu0 0
      %619 = vmatmul.mubr.bf16.gmra.mrb[0].mxu0 %v404
      %v620 = vpop.f32.mrb[0].mxu0
      %v621 = vadd.f32 0.0, %v620
      %v622 = vpop.f32.mrb[0].mxu0
      %v623 = vpop.f32.mrb[0].mxu0
      %v624 = vadd.f32 0.0, %v623
      %v625 = vpop.f32.mrb[0].mxu0
      %626 = vmatprep.mubr.bf16.mxu0 0
      %627 = vmatmul.mubr.bf16.gmra.mrb[0].mxu0 %v405
      %v628 = vpop.f32.mrb[0].mxu0
      %v629 = vadd.f32 0.0, %v628
      %v630 = vpop.f32.mrb[0].mxu0
      %v631 = vpop.f32.mrb[0].mxu0
      %v632 = vadd.f32 0.0, %v631
      %v633 = vpop.f32.mrb[0].mxu0
      %634 = vmatprep.mubr.bf16.mxu0 0
      %635 = vmatmul.mubr.bf16.gmra.mrb[0].mxu0 %v406
      %v636 = vpop.f32.mrb[0].mxu0
      %v637 = vadd.f32 0.0, %v636
      %v638 = vpop.f32.mrb[0].mxu0
      %v639 = vpop.f32.mrb[0].mxu0
      %v640 = vadd.f32 0.0, %v639
      %v641 = vpop.f32.mrb[0].mxu0
      %642 = vmatprep.mubr.bf16.mxu0 0
      %643 = vmatmul.mubr.bf16.gmra.mrb[0].mxu0 %v407
      %v644 = vpop.f32.mrb[0].mxu0
      %v645 = vadd.f32 0.0, %v644
      %v646 = vpop.f32.mrb[0].mxu0
      %v647 = vpop.f32.mrb[0].mxu0
      %v648 = vadd.f32 0.0, %v647
      %v649 = vpop.f32.mrb[0].mxu0
      %650 = vmatprep.mubr.bf16.mxu0 0
      %651 = vmatmul.mubr.bf16.gmra.mrb[0].mxu0 %v408
      %v652 = vpop.f32.mrb[0].mxu0
      %v653 = vadd.f32 0.0, %v652
      %v654 = vpop.f32.mrb[0].mxu0
      %v655 = vpop.f32.mrb[0].mxu0
      %v656 = vadd.f32 0.0, %v655
      %v657 = vpop.f32.mrb[0].mxu0
      %658 = vmatprep.mubr.bf16.mxu0 0
      %659 = vmatmul.mubr.bf16.gmra.mrb[0].mxu0 %v409
      %v660 = vpop.f32.mrb[0].mxu0
      %v661 = vadd.f32 0.0, %v660
      %v662 = vpop.f32.mrb[0].mxu0
      %v663 = vpop.f32.mrb[0].mxu0
      %v664 = vadd.f32 0.0, %v663
      %v665 = vpop.f32.mrb[0].mxu0
      %666 = vmatprep.mubr.bf16.mxu0 0
      %667 = vmatmul.mubr.bf16.gmra.mrb[0].mxu0 %v410
      %v668 = vpop.f32.mrb[0].mxu0
      %v669 = vadd.f32 0.0, %v668
      %v670 = vpop.f32.mrb[0].mxu0
      %v671 = vpop.f32.mrb[0].mxu0
      %v672 = vadd.f32 0.0, %v671
      %v673 = vpop.f32.mrb[0].mxu0
      %674 = vmatprep.mubr.bf16.mxu0 0
      %675 = vmatmul.mubr.bf16.gmra.mrb[0].mxu0 %v411
      %v676 = vpop.f32.mrb[0].mxu0
      %v677 = vadd.f32 0.0, %v676
      %v678 = vpop.f32.mrb[0].mxu0
      %v679 = vpop.f32.mrb[0].mxu0
      %v680 = vadd.f32 0.0, %v679
      %v681 = vpop.f32.mrb[0].mxu0
      %682 = vmatprep.mubr.bf16.mxu0 0
      %683 = vmatmul.mubr.bf16.gmra.mrb[0].mxu0 %v412
      %v684 = vpop.f32.mrb[0].mxu0
      %v685 = vadd.f32 0.0, %v684
      %v686 = vpop.f32.mrb[0].mxu0
      %v687 = vpop.f32.mrb[0].mxu0
      %v688 = vadd.f32 0.0, %v687
      %v689 = vpop.f32.mrb[0].mxu0
      %690 = vmatprep.mubr.bf16.mxu0 0
      %691 = vmatmul.mubr.bf16.gmra.mrb[0].mxu0 %v413
      %v692 = vpop.f32.mrb[0].mxu0
      %v693 = vadd.f32 0.0, %v692
      %v694 = vpop.f32.mrb[0].mxu0
      %v695 = vpop.f32.mrb[0].mxu0
      %v696 = vadd.f32 0.0, %v695
      %v697 = vpop.f32.mrb[0].mxu0
      %698 = vmatprep.mubr.bf16.mxu0 0
      %699 = vmatmul.mubr.bf16.gmra.mrb[0].mxu0 %v414
      %v700 = vpop.f32.mrb[0].mxu0
      %v701 = vadd.f32 0.0, %v700
      %v702 = vpop.f32.mrb[0].mxu0
      %v703 = vpop.f32.mrb[0].mxu0
      %v704 = vadd.f32 0.0, %v703
      %v705 = vpop.f32.mrb[0].mxu0
      %706 = vmatprep.mubr.bf16.mxu0 0
      %707 = vmatmul.mubr.bf16.gmra.mrb[0].mxu0 %v415
      %v708 = vpop.f32.mrb[0].mxu0
      %v709 = vadd.f32 0.0, %v708
      %v710 = vpop.f32.mrb[0].mxu0
      %v711 = vpop.f32.mrb[0].mxu0
      %v712 = vadd.f32 0.0, %v711
      %v713 = vpop.f32.mrb[0].mxu0
      %714 = vmatprep.mubr.bf16.mxu0 0
      %715 = vmatmul.mubr.bf16.gmra.mrb[0].mxu0 %v416
      %v716 = vpop.f32.mrb[0].mxu0
      %v717 = vadd.f32 0.0, %v716
      %v718 = vpop.f32.mrb[0].mxu0
      %v719 = vpop.f32.mrb[0].mxu0
      %v720 = vadd.f32 0.0, %v719
      %v721 = vpop.f32.mrb[0].mxu0
      %722 = vmatprep.mubr.bf16.mxu0 0
      %723 = vmatmul.mubr.bf16.gmra.mrb[0].mxu0 %v417
      %v724 = vpop.f32.mrb[0].mxu0
      %v725 = vadd.f32 0.0, %v724
      %v726 = vpop.f32.mrb[0].mxu0
      %v727 = vpop.f32.mrb[0].mxu0
      %v728 = vadd.f32 0.0, %v727
      %v729 = vpop.f32.mrb[0].mxu0
      %730 = vmatprep.mubr.bf16.mxu0 0
      %731 = vmatmul.mubr.bf16.gmra.mrb[0].mxu0 %v418
      %v732 = vpop.f32.mrb[0].mxu0
      %v733 = vadd.f32 0.0, %v732
      %v734 = vpop.f32.mrb[0].mxu0
      %v735 = vpop.f32.mrb[0].mxu0
      %v736 = vadd.f32 0.0, %v735
      %v737 = vpop.f32.mrb[0].mxu0
      %738 = vmatprep.mubr.bf16.mxu0 0
      %739 = vmatmul.mubr.bf16.gmra.mrb[0].mxu0 %v419
      %v740 = vpop.f32.mrb[0].mxu0
      %v741 = vadd.f32 0.0, %v740
      %v742 = vpop.f32.mrb[0].mxu0
      %v743 = vpop.f32.mrb[0].mxu0
      %v744 = vadd.f32 0.0, %v743
      %v745 = vpop.f32.mrb[0].mxu0
      %746 = vmatprep.mubr.bf16.mxu0 0
      %747 = vmatmul.mubr.bf16.gmra.mrb[0].mxu0 %v420
      %v748 = vpop.f32.mrb[0].mxu0
      %v749 = vadd.f32 0.0, %v748
      %v750 = vpop.f32.mrb[0].mxu0
      %v751 = vpop.f32.mrb[0].mxu0
      %v752 = vadd.f32 0.0, %v751
      %v753 = vpop.f32.mrb[0].mxu0
      %754 = vmatprep.mubr.bf16.mxu0 0
      %755 = vmatmul.mubr.bf16.gmra.mrb[0].mxu0 %v421
      %v756 = vpop.f32.mrb[0].mxu0
      %v757 = vadd.f32 0.0, %v756
      %v758 = vpop.f32.mrb[0].mxu0
      %v759 = vpop.f32.mrb[0].mxu0
      %v760 = vadd.f32 0.0, %v759
      %v761 = vpop.f32.mrb[0].mxu0
      %762 = vmatprep.mubr.bf16.mxu0 0
      %763 = vmatmul.mubr.bf16.gmra.mrb[0].mxu0 %v422
      %v764 = vpop.f32.mrb[0].mxu0
      %v765 = vadd.f32 0.0, %v764
      %v766 = vpop.f32.mrb[0].mxu0
      %v767 = vpop.f32.mrb[0].mxu0
      %v768 = vadd.f32 0.0, %v767
      %v769 = vpop.f32.mrb[0].mxu0
      %770 = vmatprep.mubr.bf16.mxu0 0
      %771 = vmatmul.mubr.bf16.gmra.mrb[0].mxu0 %v423
      %v772 = vpop.f32.mrb[0].mxu0
      %v773 = vadd.f32 0.0, %v772
      %v774 = vpop.f32.mrb[0].mxu0
      %v775 = vpop.f32.mrb[0].mxu0
      %v776 = vadd.f32 0.0, %v775
      %v777 = vpop.f32.mrb[0].mxu0
      %778 = vmatprep.mubr.bf16.mxu0 0
      %779 = vmatmul.mubr.bf16.gmra.mrb[0].mxu0 %v424
      %v780 = vpop.f32.mrb[0].mxu0
      %v781 = vadd.f32 0.0, %v780
      %v782 = vpop.f32.mrb[0].mxu0
      %v783 = vpop.f32.mrb[0].mxu0
      %v784 = vadd.f32 0.0, %v783
      %v785 = vpop.f32.mrb[0].mxu0
      %786 = vmatprep.mubr.bf16.mxu0 0
      %787 = vmatmul.mubr.bf16.gmra.mrb[0].mxu0 %v425
      %v788 = vpop.f32.mrb[0].mxu0
      %v789 = vadd.f32 0.0, %v788
      %v790 = vpop.f32.mrb[0].mxu0
      %v791 = vpop.f32.mrb[0].mxu0
      %v792 = vadd.f32 0.0, %v791
      %v793 = vpop.f32.mrb[0].mxu0
      %794 = vdwg.mxu0
      %795 = vst [vmem:[%s179] sm:$0xff] %v541
      %796 = vst [vmem:[%s179 + $0x8] sm:$0xff] %v544
      %797 = vst [vmem:[%s179 + $0x10] sm:$0xff] %v549
      %798 = vst [vmem:[%s179 + $0x18] sm:$0xff] %v552
      %799 = vst [vmem:[%s179 + $0x20] sm:$0xff] %v557
      %800 = vst [vmem:[%s179 + $0x28] sm:$0xff] %v560
      %801 = vst [vmem:[%s179 + $0x30] sm:$0xff] %v565
      %802 = vst [vmem:[%s179 + $0x38] sm:$0xff] %v568
      %803 = vst [vmem:[%s179 + $0x40] sm:$0xff] %v573
      %804 = vst [vmem:[%s179 + $0x48] sm:$0xff] %v576
      %805 = vst [vmem:[%s179 + $0x50] sm:$0xff] %v581
      %806 = vst [vmem:[%s179 + $0x58] sm:$0xff] %v584
      %807 = vst [vmem:[%s179 + $0x60] sm:$0xff] %v589
      %808 = vst [vmem:[%s179 + $0x68] sm:$0xff] %v592
      %809 = vst [vmem:[%s179 + $0x70] sm:$0xff] %v597
      %810 = vst [vmem:[%s179 + $0x78] sm:$0xff] %v600
      %811 = vst [vmem:[%s179 + $0x80] sm:$0xff] %v605
      %812 = vst [vmem:[%s179 + $0x88] sm:$0xff] %v608
      %813 = vst [vmem:[%s179 + $0x90] sm:$0xff] %v613
      %814 = vst [vmem:[%s179 + $0x98] sm:$0xff] %v616
      %815 = vst [vmem:[%s179 + $0xa0] sm:$0xff] %v621
      %816 = vst [vmem:[%s179 + $0xa8] sm:$0xff] %v624
      %817 = vst [vmem:[%s179 + $0xb0] sm:$0xff] %v629
      %818 = vst [vmem:[%s179 + $0xb8] sm:$0xff] %v632
      %819 = vst [vmem:[%s179 + $0xc0] sm:$0xff] %v637
      %820 = vst [vmem:[%s179 + $0xc8] sm:$0xff] %v640
      %821 = vst [vmem:[%s179 + $0xd0] sm:$0xff] %v645
      %822 = vst [vmem:[%s179 + $0xd8] sm:$0xff] %v648
      %823 = vst [vmem:[%s179 + $0xe0] sm:$0xff] %v653
      %824 = vst [vmem:[%s179 + $0xe8] sm:$0xff] %v656
      %825 = vst [vmem:[%s179 + $0xf0] sm:$0xff] %v661
      %826 = vst [vmem:[%s179 + $0xf8] sm:$0xff] %v664
      %827 = vst [vmem:[%s179 + $0x100] sm:$0xff] %v669
      %828 = vst [vmem:[%s179 + $0x108] sm:$0xff] %v672
      %829 = vst [vmem:[%s179 + $0x110] sm:$0xff] %v677
      %830 = vst [vmem:[%s179 + $0x118] sm:$0xff] %v680
      %831 = vst [vmem:[%s179 + $0x120] sm:$0xff] %v685
      %832 = vst [vmem:[%s179 + $0x128] sm:$0xff] %v688
      %833 = vst [vmem:[%s179 + $0x130] sm:$0xff] %v693
      %834 = vst [vmem:[%s179 + $0x138] sm:$0xff] %v696
      %835 = vst [vmem:[%s179 + $0x140] sm:$0xff] %v701
      %836 = vst [vmem:[%s179 + $0x148] sm:$0xff] %v704
      %837 = vst [vmem:[%s179 + $0x150] sm:$0xff] %v709
      %838 = vst [vmem:[%s179 + $0x158] sm:$0xff] %v712
      %839 = vst [vmem:[%s179 + $0x160] sm:$0xff] %v717
      %840 = vst [vmem:[%s179 + $0x168] sm:$0xff] %v720
      %841 = vst [vmem:[%s179 + $0x170] sm:$0xff] %v725
      %842 = vst [vmem:[%s179 + $0x178] sm:$0xff] %v728
      %843 = vst [vmem:[%s179 + $0x180] sm:$0xff] %v733
      %844 = vst [vmem:[%s179 + $0x188] sm:$0xff] %v736
      %845 = vst [vmem:[%s179 + $0x190] sm:$0xff] %v741
      %846 = vst [vmem:[%s179 + $0x198] sm:$0xff] %v744
      %847 = vst [vmem:[%s179 + $0x1a0] sm:$0xff] %v749
      %848 = vst [vmem:[%s179 + $0x1a8] sm:$0xff] %v752
      %849 = vst [vmem:[%s179 + $0x1b0] sm:$0xff] %v757
      %850 = vst [vmem:[%s179 + $0x1b8] sm:$0xff] %v760
      %851 = vst [vmem:[%s179 + $0x1c0] sm:$0xff] %v765
      %852 = vst [vmem:[%s179 + $0x1c8] sm:$0xff] %v768
      %853 = vst [vmem:[%s179 + $0x1d0] sm:$0xff] %v773
      %854 = vst [vmem:[%s179 + $0x1d8] sm:$0xff] %v776
      %855 = vst [vmem:[%s179 + $0x1e0] sm:$0xff] %v781
      %856 = vst [vmem:[%s179 + $0x1e8] sm:$0xff] %v784
      %857 = vst [vmem:[%s179 + $0x1f0] sm:$0xff] %v789
      %858 = vst [vmem:[%s179 + $0x1f8] sm:$0xff] %v792
      %v859 = vadd.f32 %v541, %v544
      %v860 = vadd.f32 %v859, %v549
      %v861 = vadd.f32 %v860, %v552
      %v862 = vadd.f32 %v861, %v557
      %v863 = vadd.f32 %v862, %v560
      %v864 = vadd.f32 %v863, %v565
      %v865 = vadd.f32 %v864, %v568
      %v866 = vadd.f32 %v865, %v573
      %v867 = vadd.f32 %v866, %v576
      %v868 = vadd.f32 %v867, %v581
      %v869 = vadd.f32 %v868, %v584
      %v870 = vadd.f32 %v869, %v589
      %v871 = vadd.f32 %v870, %v592
      %v872 = vadd.f32 %v871, %v597
      %v873 = vadd.f32 %v872, %v600
      %v874 = vadd.f32 %v873, %v605
      %v875 = vadd.f32 %v874, %v608
      %v876 = vadd.f32 %v875, %v613
      %v877 = vadd.f32 %v876, %v616
      %v878 = vadd.f32 %v877, %v621
      %v879 = vadd.f32 %v878, %v624
      %v880 = vadd.f32 %v879, %v629
      %v881 = vadd.f32 %v880, %v632
      %v882 = vadd.f32 %v881, %v637
      %v883 = vadd.f32 %v882, %v640
      %v884 = vadd.f32 %v883, %v645
      %v885 = vadd.f32 %v884, %v648
      %v886 = vadd.f32 %v885, %v653
      %v887 = vadd.f32 %v886, %v656
      %v888 = vadd.f32 %v887, %v661
      %v889 = vadd.f32 %v888, %v664
      %v890 = vadd.f32 %v889, %v669
      %v891 = vadd.f32 %v890, %v672
      %v892 = vadd.f32 %v891, %v677
      %v893 = vadd.f32 %v892, %v680
      %v894 = vadd.f32 %v893, %v685
      %v895 = vadd.f32 %v894, %v688
      %v896 = vadd.f32 %v895, %v693
      %v897 = vadd.f32 %v896, %v696
      %v898 = vadd.f32 %v897, %v701
      %v899 = vadd.f32 %v898, %v704
      %v900 = vadd.f32 %v899, %v709
      %v901 = vadd.f32 %v900, %v712
      %v902 = vadd.f32 %v901, %v717
      %v903 = vadd.f32 %v902, %v720
      %v904 = vadd.f32 %v903, %v725
      %v905 = vadd.f32 %v904, %v728
      %v906 = vadd.f32 %v905, %v733
      %v907 = vadd.f32 %v906, %v736
      %v908 = vadd.f32 %v907, %v741
      %v909 = vadd.f32 %v908, %v744
      %v910 = vadd.f32 %v909, %v749
      %v911 = vadd.f32 %v910, %v752
      %v912 = vadd.f32 %v911, %v757
      %v913 = vadd.f32 %v912, %v760
      %v914 = vadd.f32 %v913, %v765
      %v915 = vadd.f32 %v914, %v768
      %v916 = vadd.f32 %v915, %v773
      %v917 = vadd.f32 %v916, %v776
      %v918 = vadd.f32 %v917, %v781
      %v919 = vadd.f32 %v918, %v784
      %v920 = vadd.f32 %v919, %v789
      %v921 = vadd.f32 %v920, %v792
      %v922 = vrot.slane %v921, 4
      %v923 = vadd.f32 %v921, %v922
      %v924 = vrot.slane %v923, 2
      %v925 = vadd.f32 %v923, %v924
      %v926 = vrot.slane %v925, 1
      %v927 = vadd.f32 %v925, %v926
      %v928 = vmul.f32 %v541, %v541
      %v929 = vmul.f32 %v544, %v544
      %v930 = vmul.f32 %v549, %v549
      %v931 = vmul.f32 %v552, %v552
      %v932 = vmul.f32 %v557, %v557
      %v933 = vmul.f32 %v560, %v560
      %v934 = vmul.f32 %v565, %v565
      %v935 = vmul.f32 %v568, %v568
      %v936 = vmul.f32 %v573, %v573
      %v937 = vmul.f32 %v576, %v576
      %v938 = vmul.f32 %v581, %v581
      %v939 = vmul.f32 %v584, %v584
      %v940 = vmul.f32 %v589, %v589
      %v941 = vmul.f32 %v592, %v592
      %v942 = vmul.f32 %v597, %v597
      %v943 = vmul.f32 %v600, %v600
      %v944 = vmul.f32 %v605, %v605
      %v945 = vmul.f32 %v608, %v608
      %v946 = vmul.f32 %v613, %v613
      %v947 = vmul.f32 %v616, %v616
      %v948 = vmul.f32 %v621, %v621
      %v949 = vmul.f32 %v624, %v624
      %v950 = vmul.f32 %v629, %v629
      %v951 = vmul.f32 %v632, %v632
      %v952 = vmul.f32 %v637, %v637
      %v953 = vmul.f32 %v640, %v640
      %v954 = vmul.f32 %v645, %v645
      %v955 = vmul.f32 %v648, %v648
      %v956 = vmul.f32 %v653, %v653
      %v957 = vmul.f32 %v656, %v656
      %v958 = vmul.f32 %v661, %v661
      %v959 = vmul.f32 %v664, %v664
      %v960 = vmul.f32 %v669, %v669
      %v961 = vmul.f32 %v672, %v672
      %v962 = vmul.f32 %v677, %v677
      %v963 = vmul.f32 %v680, %v680
      %v964 = vmul.f32 %v685, %v685
      %v965 = vmul.f32 %v688, %v688
      %v966 = vmul.f32 %v693, %v693
      %v967 = vmul.f32 %v696, %v696
      %v968 = vmul.f32 %v701, %v701
      %v969 = vmul.f32 %v704, %v704
      %v970 = vmul.f32 %v709, %v709
      %v971 = vmul.f32 %v712, %v712
      %v972 = vmul.f32 %v717, %v717
      %v973 = vmul.f32 %v720, %v720
      %v974 = vmul.f32 %v725, %v725
      %v975 = vmul.f32 %v728, %v728
      %v976 = vmul.f32 %v733, %v733
      %v977 = vmul.f32 %v736, %v736
      %v978 = vmul.f32 %v741, %v741
      %v979 = vmul.f32 %v744, %v744
      %v980 = vmul.f32 %v749, %v749
      %v981 = vmul.f32 %v752, %v752
      %v982 = vmul.f32 %v757, %v757
      %v983 = vmul.f32 %v760, %v760
      %v984 = vmul.f32 %v765, %v765
      %v985 = vmul.f32 %v768, %v768
      %v986 = vmul.f32 %v773, %v773
      %v987 = vmul.f32 %v776, %v776
      %v988 = vmul.f32 %v781, %v781
      %v989 = vmul.f32 %v784, %v784
      %v990 = vmul.f32 %v789, %v789
      %v991 = vmul.f32 %v792, %v792
      %v992 = vadd.f32 %v928, %v929
      %v993 = vadd.f32 %v992, %v930
      %v994 = vadd.f32 %v993, %v931
      %v995 = vadd.f32 %v994, %v932
      %v996 = vadd.f32 %v995, %v933
      %v997 = vadd.f32 %v996, %v934
      %v998 = vadd.f32 %v997, %v935
      %v999 = vadd.f32 %v998, %v936
      %v1000 = vadd.f32 %v999, %v937
      %v1001 = vadd.f32 %v1000, %v938
      %v1002 = vadd.f32 %v1001, %v939
      %v1003 = vadd.f32 %v1002, %v940
      %v1004 = vadd.f32 %v1003, %v941
      %v1005 = vadd.f32 %v1004, %v942
      %v1006 = vadd.f32 %v1005, %v943
      %v1007 = vadd.f32 %v1006, %v944
      %v1008 = vadd.f32 %v1007, %v945
      %v1009 = vadd.f32 %v1008, %v946
      %v1010 = vadd.f32 %v1009, %v947
      %v1011 = vadd.f32 %v1010, %v948
      %v1012 = vadd.f32 %v1011, %v949
      %v1013 = vadd.f32 %v1012, %v950
      %v1014 = vadd.f32 %v1013, %v951
      %v1015 = vadd.f32 %v1014, %v952
      %v1016 = vadd.f32 %v1015, %v953
      %v1017 = vadd.f32 %v1016, %v954
      %v1018 = vadd.f32 %v1017, %v955
      %v1019 = vadd.f32 %v1018, %v956
      %v1020 = vadd.f32 %v1019, %v957
      %v1021 = vadd.f32 %v1020, %v958
      %v1022 = vadd.f32 %v1021, %v959
      %v1023 = vadd.f32 %v1022, %v960
      %v1024 = vadd.f32 %v1023, %v961
      %v1025 = vadd.f32 %v1024, %v962
      %v1026 = vadd.f32 %v1025, %v963
      %v1027 = vadd.f32 %v1026, %v964
      %v1028 = vadd.f32 %v1027, %v965
      %v1029 = vadd.f32 %v1028, %v966
      %v1030 = vadd.f32 %v1029, %v967
      %v1031 = vadd.f32 %v1030, %v968
      %v1032 = vadd.f32 %v1031, %v969
      %v1033 = vadd.f32 %v1032, %v970
      %v1034 = vadd.f32 %v1033, %v971
      %v1035 = vadd.f32 %v1034, %v972
      %v1036 = vadd.f32 %v1035, %v973
      %v1037 = vadd.f32 %v1036, %v974
      %v1038 = vadd.f32 %v1037, %v975
      %v1039 = vadd.f32 %v1038, %v976
      %v1040 = vadd.f32 %v1039, %v977
      %v1041 = vadd.f32 %v1040, %v978
      %v1042 = vadd.f32 %v1041, %v979
      %v1043 = vadd.f32 %v1042, %v980
      %v1044 = vadd.f32 %v1043, %v981
      %v1045 = vadd.f32 %v1044, %v982
      %v1046 = vadd.f32 %v1045, %v983
      %v1047 = vadd.f32 %v1046, %v984
      %v1048 = vadd.f32 %v1047, %v985
      %v1049 = vadd.f32 %v1048, %v986
      %v1050 = vadd.f32 %v1049, %v987
      %v1051 = vadd.f32 %v1050, %v988
      %v1052 = vadd.f32 %v1051, %v989
      %v1053 = vadd.f32 %v1052, %v990
      %v1054 = vadd.f32 %v1053, %v991
      %v1055 = vrot.slane %v1054, 4
      %v1056 = vadd.f32 %v1054, %v1055
      %v1057 = vrot.slane %v1056, 2
      %v1058 = vadd.f32 %v1056, %v1057
      %v1059 = vrot.slane %v1058, 1
      %v1060 = vadd.f32 %v1058, %v1059
      %vm1061 = vcmask 1040384
      %v1062 = vsel %vm1061, %v927, %v1060
      %1063 = vst [vmem:[%s184] sm:$0x3] %v1062
      %s1064 = smul.u32 64, %s15
      %p1065 = scmp.lt.s32.totalorder %s1064, 127
      %s1066 = scalar_select %p1065, %s1064, 127
      %s1067 = smul.addr %s1066, 8
      %s1068 = scalar_lea.vmem %s2, %s1067
      %p1069 = scmp.lt.s32.totalorder %s15, 1
      %s1070 = scalar_select %p1069, %s15, 1
      %s1071 = smul.addr %s1070, 2
      %s1072 = scalar_lea.vmem %s3, %s1071
      // Predicated region
      $region29: #{bottleneck_forward.5} parent=27 // pred_check
        %p1073 = pneg %p80
      $region30: #{bottleneck_forward.5} parent=27 // pred_check_branch
        %1075 = sbr.rel (%p1073) target = $region32
      $region31: #{bottleneck_forward.5} parent=27 // pred_region
        %s1076 = smul.u32 64, %s15
      $region32: #{bottleneck_forward.5} parent=27 // pred_fallthru
        _
      // Predicated region
      $region33: #{bottleneck_forward.5} parent=27 // pred_check
        %p1077 = pneg %p106
      $region34: #{bottleneck_forward.5} parent=27 // pred_check_branch
        %1079 = sbr.rel (%p1077) target = $region36
      $region35: #{bottleneck_forward.5} parent=27 // pred_region
        _
      $region36: #{bottleneck_forward.5} parent=27 // pred_fallthru
        _
    $region28: #{bottleneck_forward.5} parent=5 // pred_fallthru
      _
    %p1080 = scmp.le.s32.totalorder 2, %s10
    // Predicated region
    $region37: #{bottleneck_forward.5} parent=5 // pred_check
      %p1081 = pneg %p1080
    $region38: #{bottleneck_forward.5} parent=5 // pred_check_branch
      %1083 = sbr.rel (%p1081) target = $region40
    $region39: #{bottleneck_forward.5} parent=5 // pred_region
      %s1084 = ssub.s32 %s10, 2
      // Predicated region
      $region41: #{bottleneck_forward.5} parent=39 // pred_check
        %p1085 = pneg %p86
      $region42: #{bottleneck_forward.5} parent=39 // pred_check_branch
        %1087 = sbr.rel (%p1085) target = $region44
      $region43: #{bottleneck_forward.5} parent=39 // pred_region
        %s1088 = smul.u32 64, %s16
        %p1089 = scmp.lt.s32.totalorder %s1088, 127
        %s1090 = scalar_select %p1089, %s1088, 127
        %s1091 = smul.addr %s1090, 8
        %s1092 = scalar_lea.vmem %s2, %s1091
      $region44: #{bottleneck_forward.5} parent=39 // pred_fallthru
        _
      // Predicated region
      $region45: #{bottleneck_forward.5} parent=39 // pred_check
        %p1093 = pneg %p112
      $region46: #{bottleneck_forward.5} parent=39 // pred_check_branch
        %1095 = sbr.rel (%p1093) target = $region48
      $region47: #{bottleneck_forward.5} parent=39 // pred_region
        %p1096 = scmp.lt.s32.totalorder %s16, 1
        %s1097 = scalar_select %p1096, %s16, 1
        %s1098 = smul.addr %s1097, 2
        %s1099 = scalar_lea.vmem %s3, %s1098
      $region48: #{bottleneck_forward.5} parent=39 // pred_fallthru
        _
    $region40: #{bottleneck_forward.5} parent=5 // pred_fallthru
      _
  $region6: #{bottleneck_forward.5} parent=0 // loop_footer
    %s14 = sadd.s32 1, %s10
  $region7: #{bottleneck_forward.5} parent=0 // loop_footer_branch
    %9 = sbr.rel target = $region3
  $region8: #{bottleneck_forward.5} parent=0 // loop_exit
    _

// kernel: bottleneck_forward.9
$region0: #{bottleneck_forward.9}
  #allocation0 [shape = 'u32[]', space=smem, size = 0x4, offset = 0x4, fixed_abs, tag = 'smem constant byte address 0x4 - core index']
  #allocation1 [shape = 'u32[144,128]{1,0:T(1,128)}', space=vmem, size = 0x12000, scoped, tag = 'internal scratch']
  %s0 = inlined_call_operand.vmem [shape: f32[1024,128], index: 0, kind: input, shape index: {}]
  %s1 = inlined_call_operand.vmem [shape: f32[1,128], index: 1, kind: input, shape index: {}]
  %s2 = inlined_call_operand.vmem [shape: f32[1,128], index: 2, kind: input, shape index: {}]
  %s3 = inlined_call_operand.vmem [shape: f32[1024,128], index: 3, kind: input, shape index: {}]
  %s4 = inlined_call_operand.hbm [shape: f32[1024,128], index: 4, kind: output, shape index: {}]
  %s5 = sld [smem:[#allocation0]]
  $region49: #{bottleneck_forward.9} parent=0
    _
  %s7 = ssub.s32 1, %s5
  %s8 = scalar_select 0, %s7, %s5
  $region1: #{bottleneck_forward.9} parent=0
    #allocation2 [shape = 'u8[524288]{0}', space=vmem, size = 0x80000, scoped, tag = 'output window, operand 0']
    #allocation3 [shape = 's32[2]{0}', space=sflag, size = 0x8, scoped, tag = 'scoped memory for bottleneck_forward.9']
    %9 = vsyncpa [#allocation3], 0
    %s10 = scalar_lea.sflag [#allocation3], 1
    %11 = vsyncpa %s10, 0
    loop: start=0, step=1, limit=4
    $region2: #{bottleneck_forward.9} parent=1 // loop_pre_header
      _
    $region3: #{bottleneck_forward.9} parent=1 // loop_header
      %s13 = sphi 0, %s17
      %p14 = scmp.ge.s32.totalorder %s13, 4
      %s23 = sphi 0, %s25
      %s26 = sphi 0, %s23
      %s27 = sphi 0, %s26
      %s43 = sphi 0, %s27
      %s47 = sphi 0, %s47
      %s49 = sphi 0, %s47
      %s50 = sphi 0, %s49
      %s64 = sphi 0, %s50
      %s68 = sphi 0, %s68
      %s70 = sphi 0, %s68
      %s71 = sphi 0, %s70
      %s85 = sphi 0, %s71
      %s91 = sphi 0, %s93
      %s94 = sphi 0, %s91
      %s95 = sphi 0, %s94
      %s111 = sphi 0, %s95
      %s117 = sphi 0, %s119
      %s120 = sphi 0, %s117
      %s121 = sphi 0, %s120
      %s137 = sphi 0, %s121
    $region4: #{bottleneck_forward.9} parent=1 // loop_header_branch
      %16 = sbr.rel (%p14) target = $region8
    $region5: #{bottleneck_forward.9} parent=1 // loop_body
      %s18 = ssub.s32 %s13, 1
      %s19 = ssub.s32 %s13, 2
      %s20 = sadd.s32 %s13, 1
      %s21 = ssub.s32 %s13, %s20
      %p22 = scmp.eq.s32.totalorder %s21, 0
      %s24 = sadd.s32 %s23, 1
      %s25 = scalar_select %p22, %s23, %s24
      %p28 = pneg %p22
      %p29 = scmp.eq.s32.totalorder %s13, 1
      %p30 = por %p28, %p29
      %p31 = scmp.ne.s32.totalorder %s23, %s26
      %p32 = scmp.eq.s32.totalorder %s13, 0
      %p33 = por %p31, %p32
      %p34 = scmp.ne.s32.totalorder %s23, %s26
      %p35 = scmp.eq.s32.totalorder %s18, 1
      %p36 = por %p34, %p35
      %p37 = scmp.ne.s32.totalorder %s26, %s27
      %p38 = scmp.eq.s32.totalorder %s18, 0
      %p39 = por %p37, %p38
      %p40 = scmp.ne.s32.totalorder %s26, %s27
      %p41 = scmp.eq.s32.totalorder %s19, 1
      %p42 = por %p40, %p41
      %p44 = scmp.ne.s32.totalorder %s27, %s43
      %p45 = scmp.eq.s32.totalorder %s19, 0
      %p46 = por %p44, %p45
      %s48 = sadd.s32 %s47, 1
      %p51 = scmp.eq.s32.totalorder %s13, 1
      %p52 = scmp.ne.s32.totalorder %s47, %s49
      %p53 = scmp.eq.s32.totalorder %s13, 0
      %p54 = por %p52, %p53
      %p55 = scmp.ne.s32.totalorder %s47, %s49
      %p56 = scmp.eq.s32.totalorder %s18, 1
      %p57 = por %p55, %p56
      %p58 = scmp.ne.s32.totalorder %s49, %s50
      %p59 = scmp.eq.s32.totalorder %s18, 0
      %p60 = por %p58, %p59
      %p61 = scmp.ne.s32.totalorder %s49, %s50
      %p62 = scmp.eq.s32.totalorder %s19, 1
      %p63 = por %p61, %p62
      %p65 = scmp.ne.s32.totalorder %s50, %s64
      %p66 = scmp.eq.s32.totalorder %s19, 0
      %p67 = por %p65, %p66
      %s69 = sadd.s32 %s68, 1
      %p72 = scmp.eq.s32.totalorder %s13, 1
      %p73 = scmp.ne.s32.totalorder %s68, %s70
      %p74 = scmp.eq.s32.totalorder %s13, 0
      %p75 = por %p73, %p74
      %p76 = scmp.ne.s32.totalorder %s68, %s70
      %p77 = scmp.eq.s32.totalorder %s18, 1
      %p78 = por %p76, %p77
      %p79 = scmp.ne.s32.totalorder %s70, %s71
      %p80 = scmp.eq.s32.totalorder %s18, 0
      %p81 = por %p79, %p80
      %p82 = scmp.ne.s32.totalorder %s70, %s71
      %p83 = scmp.eq.s32.totalorder %s19, 1
      %p84 = por %p82, %p83
      %p86 = scmp.ne.s32.totalorder %s71, %s85
      %p87 = scmp.eq.s32.totalorder %s19, 0
      %p88 = por %p86, %p87
      %s89 = ssub.s32 %s13, %s20
      %p90 = scmp.eq.s32.totalorder %s89, 0
      %s92 = sadd.s32 %s91, 1
      %s93 = scalar_select %p90, %s91, %s92
      %p96 = pneg %p90
      %p97 = scmp.eq.s32.totalorder %s13, 1
      %p98 = por %p96, %p97
      %p99 = scmp.ne.s32.totalorder %s91, %s94
      %p100 = scmp.eq.s32.totalorder %s13, 0
      %p101 = por %p99, %p100
      %p102 = scmp.ne.s32.totalorder %s91, %s94
      %p103 = scmp.eq.s32.totalorder %s18, 1
      %p104 = por %p102, %p103
      %p105 = scmp.ne.s32.totalorder %s94, %s95
      %p106 = scmp.eq.s32.totalorder %s18, 0
      %p107 = por %p105, %p106
      %p108 = scmp.ne.s32.totalorder %s94, %s95
      %p109 = scmp.eq.s32.totalorder %s19, 1
      %p110 = por %p108, %p109
      %p112 = scmp.ne.s32.totalorder %s95, %s111
      %p113 = scmp.eq.s32.totalorder %s19, 0
      %p114 = por %p112, %p113
      %s115 = ssub.s32 %s13, %s20
      %p116 = scmp.eq.s32.totalorder %s115, 0
      %s118 = sadd.s32 %s117, 1
      %s119 = scalar_select %p116, %s117, %s118
      %p122 = pneg %p116
      %p123 = scmp.eq.s32.totalorder %s13, 1
      %p124 = por %p122, %p123
      %p125 = scmp.ne.s32.totalorder %s117, %s120
      %p126 = scmp.eq.s32.totalorder %s13, 0
      %p127 = por %p125, %p126
      %p128 = scmp.ne.s32.totalorder %s117, %s120
      %p129 = scmp.eq.s32.totalorder %s18, 1
      %p130 = por %p128, %p129
      %p131 = scmp.ne.s32.totalorder %s120, %s121
      %p132 = scmp.eq.s32.totalorder %s18, 0
      %p133 = por %p131, %p132
      %p134 = scmp.ne.s32.totalorder %s120, %s121
      %p135 = scmp.eq.s32.totalorder %s19, 1
      %p136 = por %p134, %p135
      %p138 = scmp.ne.s32.totalorder %s121, %s137
      %p139 = scmp.eq.s32.totalorder %s19, 0
      %p140 = por %p138, %p139
      %p141 = scmp.le.s32.totalorder 1, %s13
      %p142 = scmp.lt.s32.totalorder %s13, 3
      %p143 = pnand %p141, %p142
      %p144 = pneg %p143
      // Predicated region
      $region9: #{bottleneck_forward.9} parent=5 // pred_check
        _
      $region10: #{bottleneck_forward.9} parent=5 // pred_check_branch
        %146 = sbr.rel (%p143) target = $region12
      $region11: #{bottleneck_forward.9} parent=5 // pred_region
        %s147 = ssub.s32 %s13, 1
        // Predicated region
        $region13: #{bottleneck_forward.9} parent=11 // pred_check
          %p148 = pneg %p60
        $region14: #{bottleneck_forward.9} parent=11 // pred_check_branch
          %150 = sbr.rel (%p148) target = $region16
        $region15: #{bottleneck_forward.9} parent=11 // pred_region
          _
        $region16: #{bottleneck_forward.9} parent=11 // pred_fallthru
          _
        // Predicated region
        $region17: #{bottleneck_forward.9} parent=11 // pred_check
          %p151 = pneg %p81
        $region18: #{bottleneck_forward.9} parent=11 // pred_check_branch
          %153 = sbr.rel (%p151) target = $region20
        $region19: #{bottleneck_forward.9} parent=11 // pred_region
          _
        $region20: #{bottleneck_forward.9} parent=11 // pred_fallthru
          _
      $region12: #{bottleneck_forward.9} parent=5 // pred_fallthru
        _
      %p154 = scmp.lt.s32.totalorder %s13, 2
      // Predicated region
      $region21: #{bottleneck_forward.9} parent=5 // pred_check
        %p155 = pneg %p154
      $region22: #{bottleneck_forward.9} parent=5 // pred_check_branch
        %157 = sbr.rel (%p155) target = $region24
      $region23: #{bottleneck_forward.9} parent=5 // pred_region
        // Predicated region
        $region25: #{bottleneck_forward.9} parent=23 // pred_check
          %p158 = pneg %p33
        $region26: #{bottleneck_forward.9} parent=23 // pred_check_branch
          %160 = sbr.rel (%p158) target = $region28
        $region27: #{bottleneck_forward.9} parent=23 // pred_region
          %s161 = smul.u32 64, %s13
          %p162 = scmp.lt.s32.totalorder %s161, 127
          %s163 = scalar_select %p162, %s161, 127
          %s164 = smul.addr %s163, 8
          %s165 = scalar_lea.vmem %s0, %s164
          %s166 = smul.u32 64, %s13
        $region28: #{bottleneck_forward.9} parent=23 // pred_fallthru
          _
        // Predicated region
        $region29: #{bottleneck_forward.9} parent=23 // pred_check
          %p167 = pneg %p101
        $region30: #{bottleneck_forward.9} parent=23 // pred_check_branch
          %169 = sbr.rel (%p167) target = $region32
        $region31: #{bottleneck_forward.9} parent=23 // pred_region
          %s170 = smul.u32 64, %s13
          %p171 = scmp.lt.s32.totalorder %s170, 127
          %s172 = scalar_select %p171, %s170, 127
          %s173 = smul.addr %s172, 8
          %s174 = scalar_lea.vmem %s3, %s173
          %s175 = smul.u32 64, %s13
        $region32: #{bottleneck_forward.9} parent=23 // pred_fallthru
          _
      $region24: #{bottleneck_forward.9} parent=5 // pred_fallthru
        _
      %p176 = scmp.le.s32.totalorder 1, %s13
      %p177 = scmp.lt.s32.totalorder %s13, 3
      %p178 = pnand %p176, %p177
      %p179 = pneg %p178
      // Predicated region
      $region33: #{bottleneck_forward.9} parent=5 // pred_check
        _
      $region34: #{bottleneck_forward.9} parent=5 // pred_check_branch
        %181 = sbr.rel (%p178) target = $region36
      $region35: #{bottleneck_forward.9} parent=5 // pred_region
        %s182 = ssub.s32 %s13, 1
        %s183 = smul.u32 64, %s18
        %p184 = scmp.lt.s32.totalorder %s183, 127
        %s185 = scalar_select %p184, %s183, 127
        %s186 = smul.addr %s185, 8
        %s187 = scalar_lea.vmem %s0, %s186
        %p188 = pneg %p39
        %p189 = pneg %p36
        %p190 = pneg %p60
        %p191 = pneg %p57
        %p192 = pneg %p81
        %p193 = pneg %p78
        %s194 = smul.u32 64, %s18
        %p195 = scmp.lt.s32.totalorder %s194, 127
        %s196 = scalar_select %p195, %s194, 127
        %s197 = smul.addr %s196, 8
        %s198 = scalar_lea.vmem %s3, %s197
        %p199 = pneg %p107
        %p200 = pneg %p104
        %p201 = pneg %p133
        %p202 = pneg %p130
        %s203 = sand.u32 %s120, 1
        %s204 = scalar_lea.sflag [#allocation3], %s203
        %s205 = sand.u32 %s120, 1
        %s206 = smul.addr %s205, 512
        %s207 = scalar_lea.vmem [#allocation2], %s206
        %s208 = smul.u32 64, %s18
        %p209 = scmp.lt.s32.totalorder %s208, 127
        %s210 = scalar_select %p209, %s208, 127
        %s211 = smul.addr %s210, 8
        %s212 = scalar_lea.vmem %s0, %s211
        %s213 = smul.u32 64, %s18
        %s214 = smul.u32 64, %s18
        %p215 = scmp.lt.s32.totalorder %s214, 127
        %s216 = scalar_select %p215, %s214, 127
        %s217 = smul.addr %s216, 8
        %s218 = scalar_lea.vmem %s3, %s217
        %s219 = smul.u32 64, %s18
        %s220 = smul.u32 64, %s18
        %v221 = vld [vmem:[%s212] sm:$0xff]
        %v222 = vld [vmem:[%s212 + $0x8] sm:$0xff]
        %v223 = vld [vmem:[%s212 + $0x10] sm:$0xff]
        %v224 = vld [vmem:[%s212 + $0x18] sm:$0xff]
        %v225 = vld [vmem:[%s212 + $0x20] sm:$0xff]
        %v226 = vld [vmem:[%s212 + $0x28] sm:$0xff]
        %v227 = vld [vmem:[%s212 + $0x30] sm:$0xff]
        %v228 = vld [vmem:[%s212 + $0x38] sm:$0xff]
        %v229 = vld [vmem:[%s212 + $0x40] sm:$0xff]
        %v230 = vld [vmem:[%s212 + $0x48] sm:$0xff]
        %v231 = vld [vmem:[%s212 + $0x50] sm:$0xff]
        %v232 = vld [vmem:[%s212 + $0x58] sm:$0xff]
        %v233 = vld [vmem:[%s212 + $0x60] sm:$0xff]
        %v234 = vld [vmem:[%s212 + $0x68] sm:$0xff]
        %v235 = vld [vmem:[%s212 + $0x70] sm:$0xff]
        %v236 = vld [vmem:[%s212 + $0x78] sm:$0xff]
        %v237 = vld [vmem:[%s212 + $0x80] sm:$0xff]
        %v238 = vld [vmem:[%s212 + $0x88] sm:$0xff]
        %v239 = vld [vmem:[%s212 + $0x90] sm:$0xff]
        %v240 = vld [vmem:[%s212 + $0x98] sm:$0xff]
        %v241 = vld [vmem:[%s212 + $0xa0] sm:$0xff]
        %v242 = vld [vmem:[%s212 + $0xa8] sm:$0xff]
        %v243 = vld [vmem:[%s212 + $0xb0] sm:$0xff]
        %v244 = vld [vmem:[%s212 + $0xb8] sm:$0xff]
        %v245 = vld [vmem:[%s212 + $0xc0] sm:$0xff]
        %v246 = vld [vmem:[%s212 + $0xc8] sm:$0xff]
        %v247 = vld [vmem:[%s212 + $0xd0] sm:$0xff]
        %v248 = vld [vmem:[%s212 + $0xd8] sm:$0xff]
        %v249 = vld [vmem:[%s212 + $0xe0] sm:$0xff]
        %v250 = vld [vmem:[%s212 + $0xe8] sm:$0xff]
        %v251 = vld [vmem:[%s212 + $0xf0] sm:$0xff]
        %v252 = vld [vmem:[%s212 + $0xf8] sm:$0xff]
        %v253 = vld [vmem:[%s212 + $0x100] sm:$0xff]
        %v254 = vld [vmem:[%s212 + $0x108] sm:$0xff]
        %v255 = vld [vmem:[%s212 + $0x110] sm:$0xff]
        %v256 = vld [vmem:[%s212 + $0x118] sm:$0xff]
        %v257 = vld [vmem:[%s212 + $0x120] sm:$0xff]
        %v258 = vld [vmem:[%s212 + $0x128] sm:$0xff]
        %v259 = vld [vmem:[%s212 + $0x130] sm:$0xff]
        %v260 = vld [vmem:[%s212 + $0x138] sm:$0xff]
        %v261 = vld [vmem:[%s212 + $0x140] sm:$0xff]
        %v262 = vld [vmem:[%s212 + $0x148] sm:$0xff]
        %v263 = vld [vmem:[%s212 + $0x150] sm:$0xff]
        %v264 = vld [vmem:[%s212 + $0x158] sm:$0xff]
        %v265 = vld [vmem:[%s212 + $0x160] sm:$0xff]
        %v266 = vld [vmem:[%s212 + $0x168] sm:$0xff]
        %v267 = vld [vmem:[%s212 + $0x170] sm:$0xff]
        %v268 = vld [vmem:[%s212 + $0x178] sm:$0xff]
        %v269 = vld [vmem:[%s212 + $0x180] sm:$0xff]
        %v270 = vld [vmem:[%s212 + $0x188] sm:$0xff]
        %v271 = vld [vmem:[%s212 + $0x190] sm:$0xff]
        %v272 = vld [vmem:[%s212 + $0x198] sm:$0xff]
        %v273 = vld [vmem:[%s212 + $0x1a0] sm:$0xff]
        %v274 = vld [vmem:[%s212 + $0x1a8] sm:$0xff]
        %v275 = vld [vmem:[%s212 + $0x1b0] sm:$0xff]
        %v276 = vld [vmem:[%s212 + $0x1b8] sm:$0xff]
        %v277 = vld [vmem:[%s212 + $0x1c0] sm:$0xff]
        %v278 = vld [vmem:[%s212 + $0x1c8] sm:$0xff]
        %v279 = vld [vmem:[%s212 + $0x1d0] sm:$0xff]
        %v280 = vld [vmem:[%s212 + $0x1d8] sm:$0xff]
        %v281 = vld [vmem:[%s212 + $0x1e0] sm:$0xff]
        %v282 = vld [vmem:[%s212 + $0x1e8] sm:$0xff]
        %v283 = vld [vmem:[%s212 + $0x1f0] sm:$0xff]
        %v284 = vld [vmem:[%s212 + $0x1f8] sm:$0xff]
        %v285 = vld [vmem:[%s1] sm:$0x1]
        %v287 = vlaneseq
        %v288 = vshrl.u32 %v287, 7
        %v289 = vsub.s32 0, %v288
        %v290 = vrot.slane %v285, %v289
        %v292 = vmul.f32 %v221, %v290
        %v293 = vmul.f32 %v222, %v290
        %v294 = vmul.f32 %v223, %v290
        %v295 = vmul.f32 %v224, %v290
        %v296 = vmul.f32 %v225, %v290
        %v297 = vmul.f32 %v226, %v290
        %v298 = vmul.f32 %v227, %v290
        %v299 = vmul.f32 %v228, %v290
        %v300 = vmul.f32 %v229, %v290
        %v301 = vmul.f32 %v230, %v290
        %v302 = vmul.f32 %v231, %v290
        %v303 = vmul.f32 %v232, %v290
        %v304 = vmul.f32 %v233, %v290
        %v305 = vmul.f32 %v234, %v290
        %v306 = vmul.f32 %v235, %v290
        %v307 = vmul.f32 %v236, %v290
        %v308 = vmul.f32 %v237, %v290
        %v309 = vmul.f32 %v238, %v290
        %v310 = vmul.f32 %v239, %v290
        %v311 = vmul.f32 %v240, %v290
        %v312 = vmul.f32 %v241, %v290
        %v313 = vmul.f32 %v242, %v290
        %v314 = vmul.f32 %v243, %v290
        %v315 = vmul.f32 %v244, %v290
        %v316 = vmul.f32 %v245, %v290
        %v317 = vmul.f32 %v246, %v290
        %v318 = vmul.f32 %v247, %v290
        %v319 = vmul.f32 %v248, %v290
        %v320 = vmul.f32 %v249, %v290
        %v321 = vmul.f32 %v250, %v290
        %v322 = vmul.f32 %v251, %v290
        %v323 = vmul.f32 %v252, %v290
        %v324 = vmul.f32 %v253, %v290
        %v325 = vmul.f32 %v254, %v290
        %v326 = vmul.f32 %v255, %v290
        %v327 = vmul.f32 %v256, %v290
        %v328 = vmul.f32 %v257, %v290
        %v329 = vmul.f32 %v258, %v290
        %v330 = vmul.f32 %v259, %v290
        %v331 = vmul.f32 %v260, %v290
        %v332 = vmul.f32 %v261, %v290
        %v333 = vmul.f32 %v262, %v290
        %v334 = vmul.f32 %v263, %v290
        %v335 = vmul.f32 %v264, %v290
        %v336 = vmul.f32 %v265, %v290
        %v337 = vmul.f32 %v266, %v290
        %v338 = vmul.f32 %v267, %v290
        %v339 = vmul.f32 %v268, %v290
        %v340 = vmul.f32 %v269, %v290
        %v341 = vmul.f32 %v270, %v290
        %v342 = vmul.f32 %v271, %v290
        %v343 = vmul.f32 %v272, %v290
        %v344 = vmul.f32 %v273, %v290
        %v345 = vmul.f32 %v274, %v290
        %v346 = vmul.f32 %v275, %v290
        %v347 = vmul.f32 %v276, %v290
        %v348 = vmul.f32 %v277, %v290
        %v349 = vmul.f32 %v278, %v290
        %v350 = vmul.f32 %v279, %v290
        %v351 = vmul.f32 %v280, %v290
        %v352 = vmul.f32 %v281, %v290
        %v353 = vmul.f32 %v282, %v290
        %v354 = vmul.f32 %v283, %v290
        %v355 = vmul.f32 %v284, %v290
        %v356 = vld [vmem:[%s2] sm:$0x1]
        %v358 = vlaneseq
        %v359 = vshrl.u32 %v358, 7
        %v360 = vsub.s32 0, %v359
        %v361 = vrot.slane %v356, %v360
        %v363 = vadd.f32 %v292, %v361
        %v364 = vadd.f32 %v293, %v361
        %v365 = vadd.f32 %v294, %v361
        %v366 = vadd.f32 %v295, %v361
        %v367 = vadd.f32 %v296, %v361
        %v368 = vadd.f32 %v297, %v361
        %v369 = vadd.f32 %v298, %v361
        %v370 = vadd.f32 %v299, %v361
        %v371 = vadd.f32 %v300, %v361
        %v372 = vadd.f32 %v301, %v361
        %v373 = vadd.f32 %v302, %v361
        %v374 = vadd.f32 %v303, %v361
        %v375 = vadd.f32 %v304, %v361
        %v376 = vadd.f32 %v305, %v361
        %v377 = vadd.f32 %v306, %v361
        %v378 = vadd.f32 %v307, %v361
        %v379 = vadd.f32 %v308, %v361
        %v380 = vadd.f32 %v309, %v361
        %v381 = vadd.f32 %v310, %v361
        %v382 = vadd.f32 %v311, %v361
        %v383 = vadd.f32 %v312, %v361
        %v384 = vadd.f32 %v313, %v361
        %v385 = vadd.f32 %v314, %v361
        %v386 = vadd.f32 %v315, %v361
        %v387 = vadd.f32 %v316, %v361
        %v388 = vadd.f32 %v317, %v361
        %v389 = vadd.f32 %v318, %v361
        %v390 = vadd.f32 %v319, %v361
        %v391 = vadd.f32 %v320, %v361
        %v392 = vadd.f32 %v321, %v361
        %v393 = vadd.f32 %v322, %v361
        %v394 = vadd.f32 %v323, %v361
        %v395 = vadd.f32 %v324, %v361
        %v396 = vadd.f32 %v325, %v361
        %v397 = vadd.f32 %v326, %v361
        %v398 = vadd.f32 %v327, %v361
        %v399 = vadd.f32 %v328, %v361
        %v400 = vadd.f32 %v329, %v361
        %v401 = vadd.f32 %v330, %v361
        %v402 = vadd.f32 %v331, %v361
        %v403 = vadd.f32 %v332, %v361
        %v404 = vadd.f32 %v333, %v361
        %v405 = vadd.f32 %v334, %v361
        %v406 = vadd.f32 %v335, %v361
        %v407 = vadd.f32 %v336, %v361
        %v408 = vadd.f32 %v337, %v361
        %v409 = vadd.f32 %v338, %v361
        %v410 = vadd.f32 %v339, %v361
        %v411 = vadd.f32 %v340, %v361
        %v412 = vadd.f32 %v341, %v361
        %v413 = vadd.f32 %v342, %v361
        %v414 = vadd.f32 %v343, %v361
        %v415 = vadd.f32 %v344, %v361
        %v416 = vadd.f32 %v345, %v361
        %v417 = vadd.f32 %v346, %v361
        %v418 = vadd.f32 %v347, %v361
        %v419 = vadd.f32 %v348, %v361
        %v420 = vadd.f32 %v349, %v361
        %v421 = vadd.f32 %v350, %v361
        %v422 = vadd.f32 %v351, %v361
        %v423 = vadd.f32 %v352, %v361
        %v424 = vadd.f32 %v353, %v361
        %v425 = vadd.f32 %v354, %v361
        %v426 = vadd.f32 %v355, %v361
        %v427 = vld [vmem:[%s218] sm:$0xff]
        %v428 = vld [vmem:[%s218 + $0x8] sm:$0xff]
        %v429 = vld [vmem:[%s218 + $0x10] sm:$0xff]
        %v430 = vld [vmem:[%s218 + $0x18] sm:$0xff]
        %v431 = vld [vmem:[%s218 + $0x20] sm:$0xff]
        %v432 = vld [vmem:[%s218 + $0x28] sm:$0xff]
        %v433 = vld [vmem:[%s218 + $0x30] sm:$0xff]
        %v434 = vld [vmem:[%s218 + $0x38] sm:$0xff]
        %v435 = vld [vmem:[%s218 + $0x40] sm:$0xff]
        %v436 = vld [vmem:[%s218 + $0x48] sm:$0xff]
        %v437 = vld [vmem:[%s218 + $0x50] sm:$0xff]
        %v438 = vld [vmem:[%s218 + $0x58] sm:$0xff]
        %v439 = vld [vmem:[%s218 + $0x60] sm:$0xff]
        %v440 = vld [vmem:[%s218 + $0x68] sm:$0xff]
        %v441 = vld [vmem:[%s218 + $0x70] sm:$0xff]
        %v442 = vld [vmem:[%s218 + $0x78] sm:$0xff]
        %v443 = vld [vmem:[%s218 + $0x80] sm:$0xff]
        %v444 = vld [vmem:[%s218 + $0x88] sm:$0xff]
        %v445 = vld [vmem:[%s218 + $0x90] sm:$0xff]
        %v446 = vld [vmem:[%s218 + $0x98] sm:$0xff]
        %v447 = vld [vmem:[%s218 + $0xa0] sm:$0xff]
        %v448 = vld [vmem:[%s218 + $0xa8] sm:$0xff]
        %v449 = vld [vmem:[%s218 + $0xb0] sm:$0xff]
        %v450 = vld [vmem:[%s218 + $0xb8] sm:$0xff]
        %v451 = vld [vmem:[%s218 + $0xc0] sm:$0xff]
        %v452 = vld [vmem:[%s218 + $0xc8] sm:$0xff]
        %v453 = vld [vmem:[%s218 + $0xd0] sm:$0xff]
        %v454 = vld [vmem:[%s218 + $0xd8] sm:$0xff]
        %v455 = vld [vmem:[%s218 + $0xe0] sm:$0xff]
        %v456 = vld [vmem:[%s218 + $0xe8] sm:$0xff]
        %v457 = vld [vmem:[%s218 + $0xf0] sm:$0xff]
        %v458 = vld [vmem:[%s218 + $0xf8] sm:$0xff]
        %v459 = vld [vmem:[%s218 + $0x100] sm:$0xff]
        %v460 = vld [vmem:[%s218 + $0x108] sm:$0xff]
        %v461 = vld [vmem:[%s218 + $0x110] sm:$0xff]
        %v462 = vld [vmem:[%s218 + $0x118] sm:$0xff]
        %v463 = vld [vmem:[%s218 + $0x120] sm:$0xff]
        %v464 = vld [vmem:[%s218 + $0x128] sm:$0xff]
        %v465 = vld [vmem:[%s218 + $0x130] sm:$0xff]
        %v466 = vld [vmem:[%s218 + $0x138] sm:$0xff]
        %v467 = vld [vmem:[%s218 + $0x140] sm:$0xff]
        %v468 = vld [vmem:[%s218 + $0x148] sm:$0xff]
        %v469 = vld [vmem:[%s218 + $0x150] sm:$0xff]
        %v470 = vld [vmem:[%s218 + $0x158] sm:$0xff]
        %v471 = vld [vmem:[%s218 + $0x160] sm:$0xff]
        %v472 = vld [vmem:[%s218 + $0x168] sm:$0xff]
        %v473 = vld [vmem:[%s218 + $0x170] sm:$0xff]
        %v474 = vld [vmem:[%s218 + $0x178] sm:$0xff]
        %v475 = vld [vmem:[%s218 + $0x180] sm:$0xff]
        %v476 = vld [vmem:[%s218 + $0x188] sm:$0xff]
        %v477 = vld [vmem:[%s218 + $0x190] sm:$0xff]
        %v478 = vld [vmem:[%s218 + $0x198] sm:$0xff]
        %v479 = vld [vmem:[%s218 + $0x1a0] sm:$0xff]
        %v480 = vld [vmem:[%s218 + $0x1a8] sm:$0xff]
        %v481 = vld [vmem:[%s218 + $0x1b0] sm:$0xff]
        %v482 = vld [vmem:[%s218 + $0x1b8] sm:$0xff]
        %v483 = vld [vmem:[%s218 + $0x1c0] sm:$0xff]
        %v484 = vld [vmem:[%s218 + $0x1c8] sm:$0xff]
        %v485 = vld [vmem:[%s218 + $0x1d0] sm:$0xff]
        %v486 = vld [vmem:[%s218 + $0x1d8] sm:$0xff]
        %v487 = vld [vmem:[%s218 + $0x1e0] sm:$0xff]
        %v488 = vld [vmem:[%s218 + $0x1e8] sm:$0xff]
        %v489 = vld [vmem:[%s218 + $0x1f0] sm:$0xff]
        %v490 = vld [vmem:[%s218 + $0x1f8] sm:$0xff]
        %v491 = vadd.f32 %v363, %v427
        %v492 = vadd.f32 %v364, %v428
        %v493 = vadd.f32 %v365, %v429
        %v494 = vadd.f32 %v366, %v430
        %v495 = vadd.f32 %v367, %v431
        %v496 = vadd.f32 %v368, %v432
        %v497 = vadd.f32 %v369, %v433
        %v498 = vadd.f32 %v370, %v434
        %v499 = vadd.f32 %v371, %v435
        %v500 = vadd.f32 %v372, %v436
        %v501 = vadd.f32 %v373, %v437
        %v502 = vadd.f32 %v374, %v438
        %v503 = vadd.f32 %v375, %v439
        %v504 = vadd.f32 %v376, %v440
        %v505 = vadd.f32 %v377, %v441
        %v506 = vadd.f32 %v378, %v442
        %v507 = vadd.f32 %v379, %v443
        %v508 = vadd.f32 %v380, %v444
        %v509 = vadd.f32 %v381, %v445
        %v510 = vadd.f32 %v382, %v446
        %v511 = vadd.f32 %v383, %v447
        %v512 = vadd.f32 %v384, %v448
        %v513 = vadd.f32 %v385, %v449
        %v514 = vadd.f32 %v386, %v450
        %v515 = vadd.f32 %v387, %v451
        %v516 = vadd.f32 %v388, %v452
        %v517 = vadd.f32 %v389, %v453
        %v518 = vadd.f32 %v390, %v454
        %v519 = vadd.f32 %v391, %v455
        %v520 = vadd.f32 %v392, %v456
        %v521 = vadd.f32 %v393, %v457
        %v522 = vadd.f32 %v394, %v458
        %v523 = vadd.f32 %v395, %v459
        %v524 = vadd.f32 %v396, %v460
        %v525 = vadd.f32 %v397, %v461
        %v526 = vadd.f32 %v398, %v462
        %v527 = vadd.f32 %v399, %v463
        %v528 = vadd.f32 %v400, %v464
        %v529 = vadd.f32 %v401, %v465
        %v530 = vadd.f32 %v402, %v466
        %v531 = vadd.f32 %v403, %v467
        %v532 = vadd.f32 %v404, %v468
        %v533 = vadd.f32 %v405, %v469
        %v534 = vadd.f32 %v406, %v470
        %v535 = vadd.f32 %v407, %v471
        %v536 = vadd.f32 %v408, %v472
        %v537 = vadd.f32 %v409, %v473
        %v538 = vadd.f32 %v410, %v474
        %v539 = vadd.f32 %v411, %v475
        %v540 = vadd.f32 %v412, %v476
        %v541 = vadd.f32 %v413, %v477
        %v542 = vadd.f32 %v414, %v478
        %v543 = vadd.f32 %v415, %v479
        %v544 = vadd.f32 %v416, %v480
        %v545 = vadd.f32 %v417, %v481
        %v546 = vadd.f32 %v418, %v482
        %v547 = vadd.f32 %v419, %v483
        %v548 = vadd.f32 %v420, %v484
        %v549 = vadd.f32 %v421, %v485
        %v550 = vadd.f32 %v422, %v486
        %v551 = vadd.f32 %v423, %v487
        %v552 = vadd.f32 %v424, %v488
        %v553 = vadd.f32 %v425, %v489
        %v554 = vadd.f32 %v426, %v490
        %v555 = vmax.f32 %v491, 0.0
        %v556 = vmax.f32 %v492, 0.0
        %v557 = vmax.f32 %v493, 0.0
        %v558 = vmax.f32 %v494, 0.0
        %v559 = vmax.f32 %v495, 0.0
        %v560 = vmax.f32 %v496, 0.0
        %v561 = vmax.f32 %v497, 0.0
        %v562 = vmax.f32 %v498, 0.0
        %v563 = vmax.f32 %v499, 0.0
        %v564 = vmax.f32 %v500, 0.0
        %v565 = vmax.f32 %v501, 0.0
        %v566 = vmax.f32 %v502, 0.0
        %v567 = vmax.f32 %v503, 0.0
        %v568 = vmax.f32 %v504, 0.0
        %v569 = vmax.f32 %v505, 0.0
        %v570 = vmax.f32 %v506, 0.0
        %v571 = vmax.f32 %v507, 0.0
        %v572 = vmax.f32 %v508, 0.0
        %v573 = vmax.f32 %v509, 0.0
        %v574 = vmax.f32 %v510, 0.0
        %v575 = vmax.f32 %v511, 0.0
        %v576 = vmax.f32 %v512, 0.0
        %v577 = vmax.f32 %v513, 0.0
        %v578 = vmax.f32 %v514, 0.0
        %v579 = vmax.f32 %v515, 0.0
        %v580 = vmax.f32 %v516, 0.0
        %v581 = vmax.f32 %v517, 0.0
        %v582 = vmax.f32 %v518, 0.0
        %v583 = vmax.f32 %v519, 0.0
        %v584 = vmax.f32 %v520, 0.0
        %v585 = vmax.f32 %v521, 0.0
        %v586 = vmax.f32 %v522, 0.0
        %v587 = vmax.f32 %v523, 0.0
        %v588 = vmax.f32 %v524, 0.0
        %v589 = vmax.f32 %v525, 0.0
        %v590 = vmax.f32 %v526, 0.0
        %v591 = vmax.f32 %v527, 0.0
        %v592 = vmax.f32 %v528, 0.0
        %v593 = vmax.f32 %v529, 0.0
        %v594 = vmax.f32 %v530, 0.0
        %v595 = vmax.f32 %v531, 0.0
        %v596 = vmax.f32 %v532, 0.0
        %v597 = vmax.f32 %v533, 0.0
        %v598 = vmax.f32 %v534, 0.0
        %v599 = vmax.f32 %v535, 0.0
        %v600 = vmax.f32 %v536, 0.0
        %v601 = vmax.f32 %v537, 0.0
        %v602 = vmax.f32 %v538, 0.0
        %v603 = vmax.f32 %v539, 0.0
        %v604 = vmax.f32 %v540, 0.0
        %v605 = vmax.f32 %v541, 0.0
        %v606 = vmax.f32 %v542, 0.0
        %v607 = vmax.f32 %v543, 0.0
        %v608 = vmax.f32 %v544, 0.0
        %v609 = vmax.f32 %v545, 0.0
        %v610 = vmax.f32 %v546, 0.0
        %v611 = vmax.f32 %v547, 0.0
        %v612 = vmax.f32 %v548, 0.0
        %v613 = vmax.f32 %v549, 0.0
        %v614 = vmax.f32 %v550, 0.0
        %v615 = vmax.f32 %v551, 0.0
        %v616 = vmax.f32 %v552, 0.0
        %v617 = vmax.f32 %v553, 0.0
        %v618 = vmax.f32 %v554, 0.0
        %619 = vst [vmem:[%s207] sm:$0xff] %v555
        %620 = vst [vmem:[%s207 + $0x8] sm:$0xff] %v556
        %621 = vst [vmem:[%s207 + $0x10] sm:$0xff] %v557
        %622 = vst [vmem:[%s207 + $0x18] sm:$0xff] %v558
        %623 = vst [vmem:[%s207 + $0x20] sm:$0xff] %v559
        %624 = vst [vmem:[%s207 + $0x28] sm:$0xff] %v560
        %625 = vst [vmem:[%s207 + $0x30] sm:$0xff] %v561
        %626 = vst [vmem:[%s207 + $0x38] sm:$0xff] %v562
        %627 = vst [vmem:[%s207 + $0x40] sm:$0xff] %v563
        %628 = vst [vmem:[%s207 + $0x48] sm:$0xff] %v564
        %629 = vst [vmem:[%s207 + $0x50] sm:$0xff] %v565
        %630 = vst [vmem:[%s207 + $0x58] sm:$0xff] %v566
        %631 = vst [vmem:[%s207 + $0x60] sm:$0xff] %v567
        %632 = vst [vmem:[%s207 + $0x68] sm:$0xff] %v568
        %633 = vst [vmem:[%s207 + $0x70] sm:$0xff] %v569
        %634 = vst [vmem:[%s207 + $0x78] sm:$0xff] %v570
        %635 = vst [vmem:[%s207 + $0x80] sm:$0xff] %v571
        %636 = vst [vmem:[%s207 + $0x88] sm:$0xff] %v572
        %637 = vst [vmem:[%s207 + $0x90] sm:$0xff] %v573
        %638 = vst [vmem:[%s207 + $0x98] sm:$0xff] %v574
        %639 = vst [vmem:[%s207 + $0xa0] sm:$0xff] %v575
        %640 = vst [vmem:[%s207 + $0xa8] sm:$0xff] %v576
        %641 = vst [vmem:[%s207 + $0xb0] sm:$0xff] %v577
        %642 = vst [vmem:[%s207 + $0xb8] sm:$0xff] %v578
        %643 = vst [vmem:[%s207 + $0xc0] sm:$0xff] %v579
        %644 = vst [vmem:[%s207 + $0xc8] sm:$0xff] %v580
        %645 = vst [vmem:[%s207 + $0xd0] sm:$0xff] %v581
        %646 = vst [vmem:[%s207 + $0xd8] sm:$0xff] %v582
        %647 = vst [vmem:[%s207 + $0xe0] sm:$0xff] %v583
        %648 = vst [vmem:[%s207 + $0xe8] sm:$0xff] %v584
        %649 = vst [vmem:[%s207 + $0xf0] sm:$0xff] %v585
        %650 = vst [vmem:[%s207 + $0xf8] sm:$0xff] %v586
        %651 = vst [vmem:[%s207 + $0x100] sm:$0xff] %v587
        %652 = vst [vmem:[%s207 + $0x108] sm:$0xff] %v588
        %653 = vst [vmem:[%s207 + $0x110] sm:$0xff] %v589
        %654 = vst [vmem:[%s207 + $0x118] sm:$0xff] %v590
        %655 = vst [vmem:[%s207 + $0x120] sm:$0xff] %v591
        %656 = vst [vmem:[%s207 + $0x128] sm:$0xff] %v592
        %657 = vst [vmem:[%s207 + $0x130] sm:$0xff] %v593
        %658 = vst [vmem:[%s207 + $0x138] sm:$0xff] %v594
        %659 = vst [vmem:[%s207 + $0x140] sm:$0xff] %v595
        %660 = vst [vmem:[%s207 + $0x148] sm:$0xff] %v596
        %661 = vst [vmem:[%s207 + $0x150] sm:$0xff] %v597
        %662 = vst [vmem:[%s207 + $0x158] sm:$0xff] %v598
        %663 = vst [vmem:[%s207 + $0x160] sm:$0xff] %v599
        %664 = vst [vmem:[%s207 + $0x168] sm:$0xff] %v600
        %665 = vst [vmem:[%s207 + $0x170] sm:$0xff] %v601
        %666 = vst [vmem:[%s207 + $0x178] sm:$0xff] %v602
        %667 = vst [vmem:[%s207 + $0x180] sm:$0xff] %v603
        %668 = vst [vmem:[%s207 + $0x188] sm:$0xff] %v604
        %669 = vst [vmem:[%s207 + $0x190] sm:$0xff] %v605
        %670 = vst [vmem:[%s207 + $0x198] sm:$0xff] %v606
        %671 = vst [vmem:[%s207 + $0x1a0] sm:$0xff] %v607
        %672 = vst [vmem:[%s207 + $0x1a8] sm:$0xff] %v608
        %673 = vst [vmem:[%s207 + $0x1b0] sm:$0xff] %v609
        %674 = vst [vmem:[%s207 + $0x1b8] sm:$0xff] %v610
        %675 = vst [vmem:[%s207 + $0x1c0] sm:$0xff] %v611
        %676 = vst [vmem:[%s207 + $0x1c8] sm:$0xff] %v612
        %677 = vst [vmem:[%s207 + $0x1d0] sm:$0xff] %v613
        %678 = vst [vmem:[%s207 + $0x1d8] sm:$0xff] %v614
        %679 = vst [vmem:[%s207 + $0x1e0] sm:$0xff] %v615
        %680 = vst [vmem:[%s207 + $0x1e8] sm:$0xff] %v616
        %681 = vst [vmem:[%s207 + $0x1f0] sm:$0xff] %v617
        %682 = vst [vmem:[%s207 + $0x1f8] sm:$0xff] %v618
        %s683 = sand.u32 %s120, 1
        %s684 = scalar_lea.sflag [#allocation3], %s683
        %s685 = sand.u32 %s120, 1
        %s686 = smul.addr %s685, 512
        %s687 = scalar_lea.vmem [#allocation2], %s686
        // Predicated region
        $region37: #{bottleneck_forward.9} parent=35 // pred_check
          %p688 = pneg %p130
        $region38: #{bottleneck_forward.9} parent=35 // pred_check_branch
          %690 = sbr.rel (%p688) target = $region40
        $region39: #{bottleneck_forward.9} parent=35 // pred_region
          %s691 = smul.u32 64, %s18
          %s693 = ssub.s32 8192, 8192
          %694 = vsyncadd %s684, %s693
          %s695 = smul.addr %s691, 128
          %s696 = scalar_lea.hbm %s4, %s695
          %s697 = sshll.u32 %s687, 4
          %s698 = int_to_ptr.vmem [resolvable:$true] %s697
          %703 = dma.vmem_to_hbm [thread:$0]  %s698, 8192, %s696, %s684, 128, 128, 8
        $region40: #{bottleneck_forward.9} parent=35 // pred_fallthru
          _
      $region36: #{bottleneck_forward.9} parent=5 // pred_fallthru
        _
      %p704 = scmp.le.s32.totalorder 2, %s13
      // Predicated region
      $region41: #{bottleneck_forward.9} parent=5 // pred_check
        %p705 = pneg %p704
      $region42: #{bottleneck_forward.9} parent=5 // pred_check_branch
        %707 = sbr.rel (%p705) target = $region44
      $region43: #{bottleneck_forward.9} parent=5 // pred_region
        %s708 = ssub.s32 %s13, 2
        // Predicated region
        $region45: #{bottleneck_forward.9} parent=43 // pred_check
          %p709 = pneg %p136
        $region46: #{bottleneck_forward.9} parent=43 // pred_check_branch
          %711 = sbr.rel (%p709) target = $region48
        $region47: #{bottleneck_forward.9} parent=43 // pred_region
          %s712 = sand.u32 %s121, 1
          %s713 = scalar_lea.sflag [#allocation3], %s712
          %s714 = sand.u32 %s121, 1
          %s715 = smul.addr %s714, 512
          %s716 = scalar_lea.vmem [#allocation2], %s715
          %717 = dma.done %s713, 8192
        $region48: #{bottleneck_forward.9} parent=43 // pred_fallthru
          _
      $region44: #{bottleneck_forward.9} parent=5 // pred_fallthru
        _
    $region6: #{bottleneck_forward.9} parent=1 // loop_footer
      %s17 = sadd.s32 1, %s13
    $region7: #{bottleneck_forward.9} parent=1 // loop_footer_branch
      %12 = sbr.rel target = $region3
    $region8: #{bottleneck_forward.9} parent=1 // loop_exit
      _
    %718 = vsyncpa [#allocation3], 1
    %s719 = scalar_lea.sflag [#allocation3], 1
    %720 = vsyncpa %s719, 1

// kernel: bottleneck_forward.8
$region0: #{bottleneck_forward.8}
  #allocation0 [shape = 'u32[]', space=smem, size = 0x4, offset = 0x4, fixed_abs, tag = 'smem constant byte address 0x4 - core index']
  #allocation1 [shape = 'u32[144,128]{1,0:T(1,128)}', space=vmem, size = 0x12000, scoped, tag = 'internal scratch']
  %s0 = inlined_call_operand.vmem [shape: f32[1024,128], index: 0, kind: input, shape index: {}]
  %s1 = inlined_call_operand.vmem [shape: f32[1,128], index: 1, kind: input, shape index: {}]
  %s2 = inlined_call_operand.vmem [shape: f32[1,128], index: 2, kind: input, shape index: {}]
  %s3 = inlined_call_operand.vmem [shape: bf16[128,128], index: 3, kind: input, shape index: {}]
  %s4 = inlined_call_operand.vmem [shape: f32[1024,128], index: 4, kind: output, shape index: {0}]
  %s5 = inlined_call_operand.vmem [shape: f32[2,2,128], index: 5, kind: output, shape index: {1}]
  %6 = xla_tuple %s4, %s5
  %s7 = sld [smem:[#allocation0]]
  $region57: #{bottleneck_forward.8} parent=0
    _
  %s9 = ssub.s32 1, %s7
  %s10 = scalar_select 0, %s9, %s7
  loop: start=0, step=1, limit=4
  $region2: #{bottleneck_forward.8} parent=0 // loop_pre_header
    _
  $region3: #{bottleneck_forward.8} parent=0 // loop_header
    %s12 = sphi 0, %s16
    %p13 = scmp.ge.s32.totalorder %s12, 4
    %s22 = sphi 0, %s24
    %s25 = sphi 0, %s22
    %s26 = sphi 0, %s25
    %s42 = sphi 0, %s26
    %s46 = sphi 0, %s46
    %s48 = sphi 0, %s46
    %s49 = sphi 0, %s48
    %s63 = sphi 0, %s49
    %s67 = sphi 0, %s67
    %s69 = sphi 0, %s67
    %s70 = sphi 0, %s69
    %s84 = sphi 0, %s70
    %s88 = sphi 0, %s88
    %s90 = sphi 0, %s88
    %s91 = sphi 0, %s90
    %s105 = sphi 0, %s91
    %s111 = sphi 0, %s113
    %s114 = sphi 0, %s111
    %s115 = sphi 0, %s114
    %s131 = sphi 0, %s115
    %s137 = sphi 0, %s139
    %s140 = sphi 0, %s137
    %s141 = sphi 0, %s140
    %s157 = sphi 0, %s141
  $region4: #{bottleneck_forward.8} parent=0 // loop_header_branch
    %15 = sbr.rel (%p13) target = $region8
  $region5: #{bottleneck_forward.8} parent=0 // loop_body
    %s17 = ssub.s32 %s12, 1
    %s18 = ssub.s32 %s12, 2
    %s19 = sadd.s32 %s12, 1
    %s20 = ssub.s32 %s12, %s19
    %p21 = scmp.eq.s32.totalorder %s20, 0
    %s23 = sadd.s32 %s22, 1
    %s24 = scalar_select %p21, %s22, %s23
    %p27 = pneg %p21
    %p28 = scmp.eq.s32.totalorder %s12, 1
    %p29 = por %p27, %p28
    %p30 = scmp.ne.s32.totalorder %s22, %s25
    %p31 = scmp.eq.s32.totalorder %s12, 0
    %p32 = por %p30, %p31
    %p33 = scmp.ne.s32.totalorder %s22, %s25
    %p34 = scmp.eq.s32.totalorder %s17, 1
    %p35 = por %p33, %p34
    %p36 = scmp.ne.s32.totalorder %s25, %s26
    %p37 = scmp.eq.s32.totalorder %s17, 0
    %p38 = por %p36, %p37
    %p39 = scmp.ne.s32.totalorder %s25, %s26
    %p40 = scmp.eq.s32.totalorder %s18, 1
    %p41 = por %p39, %p40
    %p43 = scmp.ne.s32.totalorder %s26, %s42
    %p44 = scmp.eq.s32.totalorder %s18, 0
    %p45 = por %p43, %p44
    %s47 = sadd.s32 %s46, 1
    %p50 = scmp.eq.s32.totalorder %s12, 1
    %p51 = scmp.ne.s32.totalorder %s46, %s48
    %p52 = scmp.eq.s32.totalorder %s12, 0
    %p53 = por %p51, %p52
    %p54 = scmp.ne.s32.totalorder %s46, %s48
    %p55 = scmp.eq.s32.totalorder %s17, 1
    %p56 = por %p54, %p55
    %p57 = scmp.ne.s32.totalorder %s48, %s49
    %p58 = scmp.eq.s32.totalorder %s17, 0
    %p59 = por %p57, %p58
    %p60 = scmp.ne.s32.totalorder %s48, %s49
    %p61 = scmp.eq.s32.totalorder %s18, 1
    %p62 = por %p60, %p61
    %p64 = scmp.ne.s32.totalorder %s49, %s63
    %p65 = scmp.eq.s32.totalorder %s18, 0
    %p66 = por %p64, %p65
    %s68 = sadd.s32 %s67, 1
    %p71 = scmp.eq.s32.totalorder %s12, 1
    %p72 = scmp.ne.s32.totalorder %s67, %s69
    %p73 = scmp.eq.s32.totalorder %s12, 0
    %p74 = por %p72, %p73
    %p75 = scmp.ne.s32.totalorder %s67, %s69
    %p76 = scmp.eq.s32.totalorder %s17, 1
    %p77 = por %p75, %p76
    %p78 = scmp.ne.s32.totalorder %s69, %s70
    %p79 = scmp.eq.s32.totalorder %s17, 0
    %p80 = por %p78, %p79
    %p81 = scmp.ne.s32.totalorder %s69, %s70
    %p82 = scmp.eq.s32.totalorder %s18, 1
    %p83 = por %p81, %p82
    %p85 = scmp.ne.s32.totalorder %s70, %s84
    %p86 = scmp.eq.s32.totalorder %s18, 0
    %p87 = por %p85, %p86
    %s89 = sadd.s32 %s88, 1
    %p92 = scmp.eq.s32.totalorder %s12, 1
    %p93 = scmp.ne.s32.totalorder %s88, %s90
    %p94 = scmp.eq.s32.totalorder %s12, 0
    %p95 = por %p93, %p94
    %p96 = scmp.ne.s32.totalorder %s88, %s90
    %p97 = scmp.eq.s32.totalorder %s17, 1
    %p98 = por %p96, %p97
    %p99 = scmp.ne.s32.totalorder %s90, %s91
    %p100 = scmp.eq.s32.totalorder %s17, 0
    %p101 = por %p99, %p100
    %p102 = scmp.ne.s32.totalorder %s90, %s91
    %p103 = scmp.eq.s32.totalorder %s18, 1
    %p104 = por %p102, %p103
    %p106 = scmp.ne.s32.totalorder %s91, %s105
    %p107 = scmp.eq.s32.totalorder %s18, 0
    %p108 = por %p106, %p107
    %s109 = ssub.s32 %s12, %s19
    %p110 = scmp.eq.s32.totalorder %s109, 0
    %s112 = sadd.s32 %s111, 1
    %s113 = scalar_select %p110, %s111, %s112
    %p116 = pneg %p110
    %p117 = scmp.eq.s32.totalorder %s12, 1
    %p118 = por %p116, %p117
    %p119 = scmp.ne.s32.totalorder %s111, %s114
    %p120 = scmp.eq.s32.totalorder %s12, 0
    %p121 = por %p119, %p120
    %p122 = scmp.ne.s32.totalorder %s111, %s114
    %p123 = scmp.eq.s32.totalorder %s17, 1
    %p124 = por %p122, %p123
    %p125 = scmp.ne.s32.totalorder %s114, %s115
    %p126 = scmp.eq.s32.totalorder %s17, 0
    %p127 = por %p125, %p126
    %p128 = scmp.ne.s32.totalorder %s114, %s115
    %p129 = scmp.eq.s32.totalorder %s18, 1
    %p130 = por %p128, %p129
    %p132 = scmp.ne.s32.totalorder %s115, %s131
    %p133 = scmp.eq.s32.totalorder %s18, 0
    %p134 = por %p132, %p133
    %s135 = ssub.s32 %s12, %s19
    %p136 = scmp.eq.s32.totalorder %s135, 0
    %s138 = sadd.s32 %s137, 1
    %s139 = scalar_select %p136, %s137, %s138
    %p142 = pneg %p136
    %p143 = scmp.eq.s32.totalorder %s12, 1
    %p144 = por %p142, %p143
    %p145 = scmp.ne.s32.totalorder %s137, %s140
    %p146 = scmp.eq.s32.totalorder %s12, 0
    %p147 = por %p145, %p146
    %p148 = scmp.ne.s32.totalorder %s137, %s140
    %p149 = scmp.eq.s32.totalorder %s17, 1
    %p150 = por %p148, %p149
    %p151 = scmp.ne.s32.totalorder %s140, %s141
    %p152 = scmp.eq.s32.totalorder %s17, 0
    %p153 = por %p151, %p152
    %p154 = scmp.ne.s32.totalorder %s140, %s141
    %p155 = scmp.eq.s32.totalorder %s18, 1
    %p156 = por %p154, %p155
    %p158 = scmp.ne.s32.totalorder %s141, %s157
    %p159 = scmp.eq.s32.totalorder %s18, 0
    %p160 = por %p158, %p159
    %p161 = scmp.le.s32.totalorder 1, %s12
    %p162 = scmp.lt.s32.totalorder %s12, 3
    %p163 = pnand %p161, %p162
    %p164 = pneg %p163
    // Predicated region
    $region9: #{bottleneck_forward.8} parent=5 // pred_check
      _
    $region10: #{bottleneck_forward.8} parent=5 // pred_check_branch
      %166 = sbr.rel (%p163) target = $region12
    $region11: #{bottleneck_forward.8} parent=5 // pred_region
      %s167 = ssub.s32 %s12, 1
      // Predicated region
      $region13: #{bottleneck_forward.8} parent=11 // pred_check
        %p168 = pneg %p59
      $region14: #{bottleneck_forward.8} parent=11 // pred_check_branch
        %170 = sbr.rel (%p168) target = $region16
      $region15: #{bottleneck_forward.8} parent=11 // pred_region
        _
      $region16: #{bottleneck_forward.8} parent=11 // pred_fallthru
        _
      // Predicated region
      $region17: #{bottleneck_forward.8} parent=11 // pred_check
        %p171 = pneg %p80
      $region18: #{bottleneck_forward.8} parent=11 // pred_check_branch
        %173 = sbr.rel (%p171) target = $region20
      $region19: #{bottleneck_forward.8} parent=11 // pred_region
        _
      $region20: #{bottleneck_forward.8} parent=11 // pred_fallthru
        _
      // Predicated region
      $region21: #{bottleneck_forward.8} parent=11 // pred_check
        %p174 = pneg %p101
      $region22: #{bottleneck_forward.8} parent=11 // pred_check_branch
        %176 = sbr.rel (%p174) target = $region24
      $region23: #{bottleneck_forward.8} parent=11 // pred_region
        _
      $region24: #{bottleneck_forward.8} parent=11 // pred_fallthru
        _
    $region12: #{bottleneck_forward.8} parent=5 // pred_fallthru
      _
    %p177 = scmp.lt.s32.totalorder %s12, 2
    // Predicated region
    $region25: #{bottleneck_forward.8} parent=5 // pred_check
      %p178 = pneg %p177
    $region26: #{bottleneck_forward.8} parent=5 // pred_check_branch
      %180 = sbr.rel (%p178) target = $region28
    $region27: #{bottleneck_forward.8} parent=5 // pred_region
      // Predicated region
      $region29: #{bottleneck_forward.8} parent=27 // pred_check
        %p181 = pneg %p32
      $region30: #{bottleneck_forward.8} parent=27 // pred_check_branch
        %183 = sbr.rel (%p181) target = $region32
      $region31: #{bottleneck_forward.8} parent=27 // pred_region
        %s184 = smul.u32 64, %s12
        %p185 = scmp.lt.s32.totalorder %s184, 127
        %s186 = scalar_select %p185, %s184, 127
        %s187 = smul.addr %s186, 8
        %s188 = scalar_lea.vmem %s0, %s187
        %s189 = smul.u32 64, %s12
      $region32: #{bottleneck_forward.8} parent=27 // pred_fallthru
        _
    $region28: #{bottleneck_forward.8} parent=5 // pred_fallthru
      _
    %p190 = scmp.le.s32.totalorder 1, %s12
    %p191 = scmp.lt.s32.totalorder %s12, 3
    %p192 = pnand %p190, %p191
    %p193 = pneg %p192
    // Predicated region
    $region33: #{bottleneck_forward.8} parent=5 // pred_check
      _
    $region34: #{bottleneck_forward.8} parent=5 // pred_check_branch
      %195 = sbr.rel (%p192) target = $region36
    $region35: #{bottleneck_forward.8} parent=5 // pred_region
      %s196 = ssub.s32 %s12, 1
      %s197 = smul.u32 64, %s17
      %p198 = scmp.lt.s32.totalorder %s197, 127
      %s199 = scalar_select %p198, %s197, 127
      %s200 = smul.addr %s199, 8
      %s201 = scalar_lea.vmem %s0, %s200
      %p202 = pneg %p38
      %p203 = pneg %p35
      %p204 = pneg %p59
      %p205 = pneg %p56
      %p206 = pneg %p80
      %p207 = pneg %p77
      %p208 = pneg %p101
      %p209 = pneg %p98
      %p210 = pneg %p127
      %p211 = pneg %p124
      %s212 = smul.u32 64, %s17
      %p213 = scmp.lt.s32.totalorder %s212, 127
      %s214 = scalar_select %p213, %s212, 127
      %s215 = smul.addr %s214, 8
      %s216 = scalar_lea.vmem %s4, %s215
      %p217 = pneg %p153
      %p218 = pneg %p150
      %p219 = scmp.lt.s32.totalorder %s17, 1
      %s220 = scalar_select %p219, %s17, 1
      %s221 = smul.addr %s220, 2
      %s222 = scalar_lea.vmem %s5, %s221
      %s223 = smul.u32 64, %s17
      %p224 = scmp.lt.s32.totalorder %s223, 127
      %s225 = scalar_select %p224, %s223, 127
      %s226 = smul.addr %s225, 8
      %s227 = scalar_lea.vmem %s0, %s226
      %s228 = smul.u32 64, %s17
      %s229 = smul.u32 64, %s17
      %p230 = scmp.lt.s32.totalorder %s229, 127
      %s231 = scalar_select %p230, %s229, 127
      %s232 = smul.addr %s231, 8
      %s233 = scalar_lea.vmem %s4, %s232
      %s234 = smul.u32 64, %s17
      %p235 = scmp.lt.s32.totalorder %s17, 1
      %s236 = scalar_select %p235, %s17, 1
      %s237 = smul.addr %s236, 2
      %s238 = scalar_lea.vmem %s5, %s237
      %v240 = vld [vmem:[%s227] sm:$0xff]
      %v241 = vld [vmem:[%s227 + $0x8] sm:$0xff]
      %v242 = vld [vmem:[%s227 + $0x10] sm:$0xff]
      %v243 = vld [vmem:[%s227 + $0x18] sm:$0xff]
      %v244 = vld [vmem:[%s227 + $0x20] sm:$0xff]
      %v245 = vld [vmem:[%s227 + $0x28] sm:$0xff]
      %v246 = vld [vmem:[%s227 + $0x30] sm:$0xff]
      %v247 = vld [vmem:[%s227 + $0x38] sm:$0xff]
      %v248 = vld [vmem:[%s227 + $0x40] sm:$0xff]
      %v249 = vld [vmem:[%s227 + $0x48] sm:$0xff]
      %v250 = vld [vmem:[%s227 + $0x50] sm:$0xff]
      %v251 = vld [vmem:[%s227 + $0x58] sm:$0xff]
      %v252 = vld [vmem:[%s227 + $0x60] sm:$0xff]
      %v253 = vld [vmem:[%s227 + $0x68] sm:$0xff]
      %v254 = vld [vmem:[%s227 + $0x70] sm:$0xff]
      %v255 = vld [vmem:[%s227 + $0x78] sm:$0xff]
      %v256 = vld [vmem:[%s227 + $0x80] sm:$0xff]
      %v257 = vld [vmem:[%s227 + $0x88] sm:$0xff]
      %v258 = vld [vmem:[%s227 + $0x90] sm:$0xff]
      %v259 = vld [vmem:[%s227 + $0x98] sm:$0xff]
      %v260 = vld [vmem:[%s227 + $0xa0] sm:$0xff]
      %v261 = vld [vmem:[%s227 + $0xa8] sm:$0xff]
      %v262 = vld [vmem:[%s227 + $0xb0] sm:$0xff]
      %v263 = vld [vmem:[%s227 + $0xb8] sm:$0xff]
      %v264 = vld [vmem:[%s227 + $0xc0] sm:$0xff]
      %v265 = vld [vmem:[%s227 + $0xc8] sm:$0xff]
      %v266 = vld [vmem:[%s227 + $0xd0] sm:$0xff]
      %v267 = vld [vmem:[%s227 + $0xd8] sm:$0xff]
      %v268 = vld [vmem:[%s227 + $0xe0] sm:$0xff]
      %v269 = vld [vmem:[%s227 + $0xe8] sm:$0xff]
      %v270 = vld [vmem:[%s227 + $0xf0] sm:$0xff]
      %v271 = vld [vmem:[%s227 + $0xf8] sm:$0xff]
      %v272 = vld [vmem:[%s227 + $0x100] sm:$0xff]
      %v273 = vld [vmem:[%s227 + $0x108] sm:$0xff]
      %v274 = vld [vmem:[%s227 + $0x110] sm:$0xff]
      %v275 = vld [vmem:[%s227 + $0x118] sm:$0xff]
      %v276 = vld [vmem:[%s227 + $0x120] sm:$0xff]
      %v277 = vld [vmem:[%s227 + $0x128] sm:$0xff]
      %v278 = vld [vmem:[%s227 + $0x130] sm:$0xff]
      %v279 = vld [vmem:[%s227 + $0x138] sm:$0xff]
      %v280 = vld [vmem:[%s227 + $0x140] sm:$0xff]
      %v281 = vld [vmem:[%s227 + $0x148] sm:$0xff]
      %v282 = vld [vmem:[%s227 + $0x150] sm:$0xff]
      %v283 = vld [vmem:[%s227 + $0x158] sm:$0xff]
      %v284 = vld [vmem:[%s227 + $0x160] sm:$0xff]
      %v285 = vld [vmem:[%s227 + $0x168] sm:$0xff]
      %v286 = vld [vmem:[%s227 + $0x170] sm:$0xff]
      %v287 = vld [vmem:[%s227 + $0x178] sm:$0xff]
      %v288 = vld [vmem:[%s227 + $0x180] sm:$0xff]
      %v289 = vld [vmem:[%s227 + $0x188] sm:$0xff]
      %v290 = vld [vmem:[%s227 + $0x190] sm:$0xff]
      %v291 = vld [vmem:[%s227 + $0x198] sm:$0xff]
      %v292 = vld [vmem:[%s227 + $0x1a0] sm:$0xff]
      %v293 = vld [vmem:[%s227 + $0x1a8] sm:$0xff]
      %v294 = vld [vmem:[%s227 + $0x1b0] sm:$0xff]
      %v295 = vld [vmem:[%s227 + $0x1b8] sm:$0xff]
      %v296 = vld [vmem:[%s227 + $0x1c0] sm:$0xff]
      %v297 = vld [vmem:[%s227 + $0x1c8] sm:$0xff]
      %v298 = vld [vmem:[%s227 + $0x1d0] sm:$0xff]
      %v299 = vld [vmem:[%s227 + $0x1d8] sm:$0xff]
      %v300 = vld [vmem:[%s227 + $0x1e0] sm:$0xff]
      %v301 = vld [vmem:[%s227 + $0x1e8] sm:$0xff]
      %v302 = vld [vmem:[%s227 + $0x1f0] sm:$0xff]
      %v303 = vld [vmem:[%s227 + $0x1f8] sm:$0xff]
      %v304 = vld [vmem:[%s1] sm:$0x1]
      %v306 = vlaneseq
      %v307 = vshrl.u32 %v306, 7
      %v308 = vsub.s32 0, %v307
      %v309 = vrot.slane %v304, %v308
      %v311 = vmul.f32 %v240, %v309
      %v312 = vmul.f32 %v241, %v309
      %v313 = vmul.f32 %v242, %v309
      %v314 = vmul.f32 %v243, %v309
      %v315 = vmul.f32 %v244, %v309
      %v316 = vmul.f32 %v245, %v309
      %v317 = vmul.f32 %v246, %v309
      %v318 = vmul.f32 %v247, %v309
      %v319 = vmul.f32 %v248, %v309
      %v320 = vmul.f32 %v249, %v309
      %v321 = vmul.f32 %v250, %v309
      %v322 = vmul.f32 %v251, %v309
      %v323 = vmul.f32 %v252, %v309
      %v324 = vmul.f32 %v253, %v309
      %v325 = vmul.f32 %v254, %v309
      %v326 = vmul.f32 %v255, %v309
      %v327 = vmul.f32 %v256, %v309
      %v328 = vmul.f32 %v257, %v309
      %v329 = vmul.f32 %v258, %v309
      %v330 = vmul.f32 %v259, %v309
      %v331 = vmul.f32 %v260, %v309
      %v332 = vmul.f32 %v261, %v309
      %v333 = vmul.f32 %v262, %v309
      %v334 = vmul.f32 %v263, %v309
      %v335 = vmul.f32 %v264, %v309
      %v336 = vmul.f32 %v265, %v309
      %v337 = vmul.f32 %v266, %v309
      %v338 = vmul.f32 %v267, %v309
      %v339 = vmul.f32 %v268, %v309
      %v340 = vmul.f32 %v269, %v309
      %v341 = vmul.f32 %v270, %v309
      %v342 = vmul.f32 %v271, %v309
      %v343 = vmul.f32 %v272, %v309
      %v344 = vmul.f32 %v273, %v309
      %v345 = vmul.f32 %v274, %v309
      %v346 = vmul.f32 %v275, %v309
      %v347 = vmul.f32 %v276, %v309
      %v348 = vmul.f32 %v277, %v309
      %v349 = vmul.f32 %v278, %v309
      %v350 = vmul.f32 %v279, %v309
      %v351 = vmul.f32 %v280, %v309
      %v352 = vmul.f32 %v281, %v309
      %v353 = vmul.f32 %v282, %v309
      %v354 = vmul.f32 %v283, %v309
      %v355 = vmul.f32 %v284, %v309
      %v356 = vmul.f32 %v285, %v309
      %v357 = vmul.f32 %v286, %v309
      %v358 = vmul.f32 %v287, %v309
      %v359 = vmul.f32 %v288, %v309
      %v360 = vmul.f32 %v289, %v309
      %v361 = vmul.f32 %v290, %v309
      %v362 = vmul.f32 %v291, %v309
      %v363 = vmul.f32 %v292, %v309
      %v364 = vmul.f32 %v293, %v309
      %v365 = vmul.f32 %v294, %v309
      %v366 = vmul.f32 %v295, %v309
      %v367 = vmul.f32 %v296, %v309
      %v368 = vmul.f32 %v297, %v309
      %v369 = vmul.f32 %v298, %v309
      %v370 = vmul.f32 %v299, %v309
      %v371 = vmul.f32 %v300, %v309
      %v372 = vmul.f32 %v301, %v309
      %v373 = vmul.f32 %v302, %v309
      %v374 = vmul.f32 %v303, %v309
      %v375 = vld [vmem:[%s2] sm:$0x1]
      %v377 = vlaneseq
      %v378 = vshrl.u32 %v377, 7
      %v379 = vsub.s32 0, %v378
      %v380 = vrot.slane %v375, %v379
      %v382 = vadd.f32 %v311, %v380
      %v383 = vadd.f32 %v312, %v380
      %v384 = vadd.f32 %v313, %v380
      %v385 = vadd.f32 %v314, %v380
      %v386 = vadd.f32 %v315, %v380
      %v387 = vadd.f32 %v316, %v380
      %v388 = vadd.f32 %v317, %v380
      %v389 = vadd.f32 %v318, %v380
      %v390 = vadd.f32 %v319, %v380
      %v391 = vadd.f32 %v320, %v380
      %v392 = vadd.f32 %v321, %v380
      %v393 = vadd.f32 %v322, %v380
      %v394 = vadd.f32 %v323, %v380
      %v395 = vadd.f32 %v324, %v380
      %v396 = vadd.f32 %v325, %v380
      %v397 = vadd.f32 %v326, %v380
      %v398 = vadd.f32 %v327, %v380
      %v399 = vadd.f32 %v328, %v380
      %v400 = vadd.f32 %v329, %v380
      %v401 = vadd.f32 %v330, %v380
      %v402 = vadd.f32 %v331, %v380
      %v403 = vadd.f32 %v332, %v380
      %v404 = vadd.f32 %v333, %v380
      %v405 = vadd.f32 %v334, %v380
      %v406 = vadd.f32 %v335, %v380
      %v407 = vadd.f32 %v336, %v380
      %v408 = vadd.f32 %v337, %v380
      %v409 = vadd.f32 %v338, %v380
      %v410 = vadd.f32 %v339, %v380
      %v411 = vadd.f32 %v340, %v380
      %v412 = vadd.f32 %v341, %v380
      %v413 = vadd.f32 %v342, %v380
      %v414 = vadd.f32 %v343, %v380
      %v415 = vadd.f32 %v344, %v380
      %v416 = vadd.f32 %v345, %v380
      %v417 = vadd.f32 %v346, %v380
      %v418 = vadd.f32 %v347, %v380
      %v419 = vadd.f32 %v348, %v380
      %v420 = vadd.f32 %v349, %v380
      %v421 = vadd.f32 %v350, %v380
      %v422 = vadd.f32 %v351, %v380
      %v423 = vadd.f32 %v352, %v380
      %v424 = vadd.f32 %v353, %v380
      %v425 = vadd.f32 %v354, %v380
      %v426 = vadd.f32 %v355, %v380
      %v427 = vadd.f32 %v356, %v380
      %v428 = vadd.f32 %v357, %v380
      %v429 = vadd.f32 %v358, %v380
      %v430 = vadd.f32 %v359, %v380
      %v431 = vadd.f32 %v360, %v380
      %v432 = vadd.f32 %v361, %v380
      %v433 = vadd.f32 %v362, %v380
      %v434 = vadd.f32 %v363, %v380
      %v435 = vadd.f32 %v364, %v380
      %v436 = vadd.f32 %v365, %v380
      %v437 = vadd.f32 %v366, %v380
      %v438 = vadd.f32 %v367, %v380
      %v439 = vadd.f32 %v368, %v380
      %v440 = vadd.f32 %v369, %v380
      %v441 = vadd.f32 %v370, %v380
      %v442 = vadd.f32 %v371, %v380
      %v443 = vadd.f32 %v372, %v380
      %v444 = vadd.f32 %v373, %v380
      %v445 = vadd.f32 %v374, %v380
      %v446 = vmax.f32 %v382, 0.0
      %v447 = vmax.f32 %v383, 0.0
      %v448 = vmax.f32 %v384, 0.0
      %v449 = vmax.f32 %v385, 0.0
      %v450 = vmax.f32 %v386, 0.0
      %v451 = vmax.f32 %v387, 0.0
      %v452 = vmax.f32 %v388, 0.0
      %v453 = vmax.f32 %v389, 0.0
      %v454 = vmax.f32 %v390, 0.0
      %v455 = vmax.f32 %v391, 0.0
      %v456 = vmax.f32 %v392, 0.0
      %v457 = vmax.f32 %v393, 0.0
      %v458 = vmax.f32 %v394, 0.0
      %v459 = vmax.f32 %v395, 0.0
      %v460 = vmax.f32 %v396, 0.0
      %v461 = vmax.f32 %v397, 0.0
      %v462 = vmax.f32 %v398, 0.0
      %v463 = vmax.f32 %v399, 0.0
      %v464 = vmax.f32 %v400, 0.0
      %v465 = vmax.f32 %v401, 0.0
      %v466 = vmax.f32 %v402, 0.0
      %v467 = vmax.f32 %v403, 0.0
      %v468 = vmax.f32 %v404, 0.0
      %v469 = vmax.f32 %v405, 0.0
      %v470 = vmax.f32 %v406, 0.0
      %v471 = vmax.f32 %v407, 0.0
      %v472 = vmax.f32 %v408, 0.0
      %v473 = vmax.f32 %v409, 0.0
      %v474 = vmax.f32 %v410, 0.0
      %v475 = vmax.f32 %v411, 0.0
      %v476 = vmax.f32 %v412, 0.0
      %v477 = vmax.f32 %v413, 0.0
      %v478 = vmax.f32 %v414, 0.0
      %v479 = vmax.f32 %v415, 0.0
      %v480 = vmax.f32 %v416, 0.0
      %v481 = vmax.f32 %v417, 0.0
      %v482 = vmax.f32 %v418, 0.0
      %v483 = vmax.f32 %v419, 0.0
      %v484 = vmax.f32 %v420, 0.0
      %v485 = vmax.f32 %v421, 0.0
      %v486 = vmax.f32 %v422, 0.0
      %v487 = vmax.f32 %v423, 0.0
      %v488 = vmax.f32 %v424, 0.0
      %v489 = vmax.f32 %v425, 0.0
      %v490 = vmax.f32 %v426, 0.0
      %v491 = vmax.f32 %v427, 0.0
      %v492 = vmax.f32 %v428, 0.0
      %v493 = vmax.f32 %v429, 0.0
      %v494 = vmax.f32 %v430, 0.0
      %v495 = vmax.f32 %v431, 0.0
      %v496 = vmax.f32 %v432, 0.0
      %v497 = vmax.f32 %v433, 0.0
      %v498 = vmax.f32 %v434, 0.0
      %v499 = vmax.f32 %v435, 0.0
      %v500 = vmax.f32 %v436, 0.0
      %v501 = vmax.f32 %v437, 0.0
      %v502 = vmax.f32 %v438, 0.0
      %v503 = vmax.f32 %v439, 0.0
      %v504 = vmax.f32 %v440, 0.0
      %v505 = vmax.f32 %v441, 0.0
      %v506 = vmax.f32 %v442, 0.0
      %v507 = vmax.f32 %v443, 0.0
      %v508 = vmax.f32 %v444, 0.0
      %v509 = vmax.f32 %v445, 0.0
      %v510 = vpack.c.bf16 %v447, %v446
      %v511 = vpack.c.bf16 %v449, %v448
      %v512 = vpack.c.bf16 %v451, %v450
      %v513 = vpack.c.bf16 %v453, %v452
      %v514 = vpack.c.bf16 %v455, %v454
      %v515 = vpack.c.bf16 %v457, %v456
      %v516 = vpack.c.bf16 %v459, %v458
      %v517 = vpack.c.bf16 %v461, %v460
      %v518 = vpack.c.bf16 %v463, %v462
      %v519 = vpack.c.bf16 %v465, %v464
      %v520 = vpack.c.bf16 %v467, %v466
      %v521 = vpack.c.bf16 %v469, %v468
      %v522 = vpack.c.bf16 %v471, %v470
      %v523 = vpack.c.bf16 %v473, %v472
      %v524 = vpack.c.bf16 %v475, %v474
      %v525 = vpack.c.bf16 %v477, %v476
      %v526 = vpack.c.bf16 %v479, %v478
      %v527 = vpack.c.bf16 %v481, %v480
      %v528 = vpack.c.bf16 %v483, %v482
      %v529 = vpack.c.bf16 %v485, %v484
      %v530 = vpack.c.bf16 %v487, %v486
      %v531 = vpack.c.bf16 %v489, %v488
      %v532 = vpack.c.bf16 %v491, %v490
      %v533 = vpack.c.bf16 %v493, %v492
      %v534 = vpack.c.bf16 %v495, %v494
      %v535 = vpack.c.bf16 %v497, %v496
      %v536 = vpack.c.bf16 %v499, %v498
      %v537 = vpack.c.bf16 %v501, %v500
      %v538 = vpack.c.bf16 %v503, %v502
      %v539 = vpack.c.bf16 %v505, %v504
      %v540 = vpack.c.bf16 %v507, %v506
      %v541 = vpack.c.bf16 %v509, %v508
      %v542 = vld [vmem:[%s3] sm:$0xf]
      %v543 = vld [vmem:[%s3 + $0x4] sm:$0xf]
      %v544 = vld [vmem:[%s3 + $0x8] sm:$0xf]
      %v545 = vld [vmem:[%s3 + $0xc] sm:$0xf]
      %v546 = vld [vmem:[%s3 + $0x10] sm:$0xf]
      %v547 = vld [vmem:[%s3 + $0x14] sm:$0xf]
      %v548 = vld [vmem:[%s3 + $0x18] sm:$0xf]
      %v549 = vld [vmem:[%s3 + $0x1c] sm:$0xf]
      %v550 = vld [vmem:[%s3 + $0x20] sm:$0xf]
      %v551 = vld [vmem:[%s3 + $0x24] sm:$0xf]
      %v552 = vld [vmem:[%s3 + $0x28] sm:$0xf]
      %v553 = vld [vmem:[%s3 + $0x2c] sm:$0xf]
      %v554 = vld [vmem:[%s3 + $0x30] sm:$0xf]
      %v555 = vld [vmem:[%s3 + $0x34] sm:$0xf]
      %v556 = vld [vmem:[%s3 + $0x38] sm:$0xf]
      %v557 = vld [vmem:[%s3 + $0x3c] sm:$0xf]
      %v574 = vunpack.c.l.b16 %v542
      %v575 = vunpack.c.l.b16 %v543
      %v576 = vunpack.c.l.b16 %v544
      %v577 = vunpack.c.l.b16 %v545
      %v578 = vunpack.c.l.b16 %v546
      %v579 = vunpack.c.l.b16 %v547
      %v580 = vunpack.c.l.b16 %v548
      %v581 = vunpack.c.l.b16 %v549
      %v582 = vunpack.c.l.b16 %v550
      %v583 = vunpack.c.l.b16 %v551
      %v584 = vunpack.c.l.b16 %v552
      %v585 = vunpack.c.l.b16 %v553
      %v586 = vunpack.c.l.b16 %v554
      %v587 = vunpack.c.l.b16 %v555
      %v588 = vunpack.c.l.b16 %v556
      %v589 = vunpack.c.l.b16 %v557
      %v590 = vpack.c.b16 %v575, %v574
      %v591 = vpack.c.b16 %v577, %v576
      %v592 = vpack.c.b16 %v579, %v578
      %v593 = vpack.c.b16 %v581, %v580
      %v594 = vpack.c.b16 %v583, %v582
      %v595 = vpack.c.b16 %v585, %v584
      %v596 = vpack.c.b16 %v587, %v586
      %v597 = vpack.c.b16 %v589, %v588
      %606 = vmatprep.subr.bf16.mxu0 0
      %607 = vmatpush1.bf16.msra.mxu0 %v590
      %608 = vmatprep.subr.bf16.mxu0 0
      %609 = vmatpush1.bf16.msra.mxu0 %v591
      %610 = vmatprep.subr.bf16.mxu0 0
      %611 = vmatpush1.bf16.msra.mxu0 %v592
      %612 = vmatprep.subr.bf16.mxu0 0
      %613 = vmatpush1.bf16.msra.mxu0 %v593
      %614 = vmatprep.subr.bf16.mxu0 0
      %615 = vmatpush1.bf16.msra.mxu0 %v594
      %616 = vmatprep.subr.bf16.mxu0 0
      %617 = vmatpush1.bf16.msra.mxu0 %v595
      %618 = vmatprep.subr.bf16.mxu0 0
      %619 = vmatpush1.bf16.msra.mxu0 %v596
      %620 = vmatprep.subr.bf16.mxu0 0
      %621 = vmatpush1.bf16.msra.mxu0 %v597
      %622 = vmatprep.subr.bf16.mxu0 0
      %623 = vmatpush1.bf16.msra.mxu0 0
      %624 = vmatprep.subr.bf16.mxu0 0
      %625 = vmatpush1.bf16.msra.mxu0 0
      %626 = vmatprep.subr.bf16.mxu0 0
      %627 = vmatpush1.bf16.msra.mxu0 0
      %628 = vmatprep.subr.bf16.mxu0 0
      %629 = vmatpush1.bf16.msra.mxu0 0
      %630 = vmatprep.subr.bf16.mxu0 0
      %631 = vmatpush1.bf16.msra.mxu0 0
      %632 = vmatprep.subr.bf16.mxu0 0
      %633 = vmatpush1.bf16.msra.mxu0 0
      %634 = vmatprep.subr.bf16.mxu0 0
      %635 = vmatpush1.bf16.msra.mxu0 0
      %636 = vmatprep.subr.bf16.mxu0 0
      %637 = vmatpush1.bf16.msra.mxu0 0
      %638 = vmatprep.mubr.bf16.mxu0 0
      %639 = vmatmul.mubr.bf16.gmra.mrb[0].mxu0 %v510
      %v640 = vpop.f32.mrb[0].mxu0
      %v641 = vadd.f32 0.0, %v640
      %v642 = vpop.f32.mrb[0].mxu0
      %v643 = vpop.f32.mrb[0].mxu0
      %v644 = vadd.f32 0.0, %v643
      %v645 = vpop.f32.mrb[0].mxu0
      %646 = vmatprep.mubr.bf16.mxu0 0
      %647 = vmatmul.mubr.bf16.gmra.mrb[0].mxu0 %v511
      %v648 = vpop.f32.mrb[0].mxu0
      %v649 = vadd.f32 0.0, %v648
      %v650 = vpop.f32.mrb[0].mxu0
      %v651 = vpop.f32.mrb[0].mxu0
      %v652 = vadd.f32 0.0, %v651
      %v653 = vpop.f32.mrb[0].mxu0
      %654 = vmatprep.mubr.bf16.mxu0 0
      %655 = vmatmul.mubr.bf16.gmra.mrb[0].mxu0 %v512
      %v656 = vpop.f32.mrb[0].mxu0
      %v657 = vadd.f32 0.0, %v656
      %v658 = vpop.f32.mrb[0].mxu0
      %v659 = vpop.f32.mrb[0].mxu0
      %v660 = vadd.f32 0.0, %v659
      %v661 = vpop.f32.mrb[0].mxu0
      %662 = vmatprep.mubr.bf16.mxu0 0
      %663 = vmatmul.mubr.bf16.gmra.mrb[0].mxu0 %v513
      %v664 = vpop.f32.mrb[0].mxu0
      %v665 = vadd.f32 0.0, %v664
      %v666 = vpop.f32.mrb[0].mxu0
      %v667 = vpop.f32.mrb[0].mxu0
      %v668 = vadd.f32 0.0, %v667
      %v669 = vpop.f32.mrb[0].mxu0
      %670 = vmatprep.mubr.bf16.mxu0 0
      %671 = vmatmul.mubr.bf16.gmra.mrb[0].mxu0 %v514
      %v672 = vpop.f32.mrb[0].mxu0
      %v673 = vadd.f32 0.0, %v672
      %v674 = vpop.f32.mrb[0].mxu0
      %v675 = vpop.f32.mrb[0].mxu0
      %v676 = vadd.f32 0.0, %v675
      %v677 = vpop.f32.mrb[0].mxu0
      %678 = vmatprep.mubr.bf16.mxu0 0
      %679 = vmatmul.mubr.bf16.gmra.mrb[0].mxu0 %v515
      %v680 = vpop.f32.mrb[0].mxu0
      %v681 = vadd.f32 0.0, %v680
      %v682 = vpop.f32.mrb[0].mxu0
      %v683 = vpop.f32.mrb[0].mxu0
      %v684 = vadd.f32 0.0, %v683
      %v685 = vpop.f32.mrb[0].mxu0
      %686 = vmatprep.mubr.bf16.mxu0 0
      %687 = vmatmul.mubr.bf16.gmra.mrb[0].mxu0 %v516
      %v688 = vpop.f32.mrb[0].mxu0
      %v689 = vadd.f32 0.0, %v688
      %v690 = vpop.f32.mrb[0].mxu0
      %v691 = vpop.f32.mrb[0].mxu0
      %v692 = vadd.f32 0.0, %v691
      %v693 = vpop.f32.mrb[0].mxu0
      %694 = vmatprep.mubr.bf16.mxu0 0
      %695 = vmatmul.mubr.bf16.gmra.mrb[0].mxu0 %v517
      %v696 = vpop.f32.mrb[0].mxu0
      %v697 = vadd.f32 0.0, %v696
      %v698 = vpop.f32.mrb[0].mxu0
      %v699 = vpop.f32.mrb[0].mxu0
      %v700 = vadd.f32 0.0, %v699
      %v701 = vpop.f32.mrb[0].mxu0
      %702 = vmatprep.mubr.bf16.mxu0 0
      %703 = vmatmul.mubr.bf16.gmra.mrb[0].mxu0 %v518
      %v704 = vpop.f32.mrb[0].mxu0
      %v705 = vadd.f32 0.0, %v704
      %v706 = vpop.f32.mrb[0].mxu0
      %v707 = vpop.f32.mrb[0].mxu0
      %v708 = vadd.f32 0.0, %v707
      %v709 = vpop.f32.mrb[0].mxu0
      %710 = vmatprep.mubr.bf16.mxu0 0
      %711 = vmatmul.mubr.bf16.gmra.mrb[0].mxu0 %v519
      %v712 = vpop.f32.mrb[0].mxu0
      %v713 = vadd.f32 0.0, %v712
      %v714 = vpop.f32.mrb[0].mxu0
      %v715 = vpop.f32.mrb[0].mxu0
      %v716 = vadd.f32 0.0, %v715
      %v717 = vpop.f32.mrb[0].mxu0
      %718 = vmatprep.mubr.bf16.mxu0 0
      %719 = vmatmul.mubr.bf16.gmra.mrb[0].mxu0 %v520
      %v720 = vpop.f32.mrb[0].mxu0
      %v721 = vadd.f32 0.0, %v720
      %v722 = vpop.f32.mrb[0].mxu0
      %v723 = vpop.f32.mrb[0].mxu0
      %v724 = vadd.f32 0.0, %v723
      %v725 = vpop.f32.mrb[0].mxu0
      %726 = vmatprep.mubr.bf16.mxu0 0
      %727 = vmatmul.mubr.bf16.gmra.mrb[0].mxu0 %v521
      %v728 = vpop.f32.mrb[0].mxu0
      %v729 = vadd.f32 0.0, %v728
      %v730 = vpop.f32.mrb[0].mxu0
      %v731 = vpop.f32.mrb[0].mxu0
      %v732 = vadd.f32 0.0, %v731
      %v733 = vpop.f32.mrb[0].mxu0
      %734 = vmatprep.mubr.bf16.mxu0 0
      %735 = vmatmul.mubr.bf16.gmra.mrb[0].mxu0 %v522
      %v736 = vpop.f32.mrb[0].mxu0
      %v737 = vadd.f32 0.0, %v736
      %v738 = vpop.f32.mrb[0].mxu0
      %v739 = vpop.f32.mrb[0].mxu0
      %v740 = vadd.f32 0.0, %v739
      %v741 = vpop.f32.mrb[0].mxu0
      %742 = vmatprep.mubr.bf16.mxu0 0
      %743 = vmatmul.mubr.bf16.gmra.mrb[0].mxu0 %v523
      %v744 = vpop.f32.mrb[0].mxu0
      %v745 = vadd.f32 0.0, %v744
      %v746 = vpop.f32.mrb[0].mxu0
      %v747 = vpop.f32.mrb[0].mxu0
      %v748 = vadd.f32 0.0, %v747
      %v749 = vpop.f32.mrb[0].mxu0
      %750 = vmatprep.mubr.bf16.mxu0 0
      %751 = vmatmul.mubr.bf16.gmra.mrb[0].mxu0 %v524
      %v752 = vpop.f32.mrb[0].mxu0
      %v753 = vadd.f32 0.0, %v752
      %v754 = vpop.f32.mrb[0].mxu0
      %v755 = vpop.f32.mrb[0].mxu0
      %v756 = vadd.f32 0.0, %v755
      %v757 = vpop.f32.mrb[0].mxu0
      %758 = vmatprep.mubr.bf16.mxu0 0
      %759 = vmatmul.mubr.bf16.gmra.mrb[0].mxu0 %v525
      %v760 = vpop.f32.mrb[0].mxu0
      %v761 = vadd.f32 0.0, %v760
      %v762 = vpop.f32.mrb[0].mxu0
      %v763 = vpop.f32.mrb[0].mxu0
      %v764 = vadd.f32 0.0, %v763
      %v765 = vpop.f32.mrb[0].mxu0
      %766 = vmatprep.mubr.bf16.mxu0 0
      %767 = vmatmul.mubr.bf16.gmra.mrb[0].mxu0 %v526
      %v768 = vpop.f32.mrb[0].mxu0
      %v769 = vadd.f32 0.0, %v768
      %v770 = vpop.f32.mrb[0].mxu0
      %v771 = vpop.f32.mrb[0].mxu0
      %v772 = vadd.f32 0.0, %v771
      %v773 = vpop.f32.mrb[0].mxu0
      %774 = vmatprep.mubr.bf16.mxu0 0
      %775 = vmatmul.mubr.bf16.gmra.mrb[0].mxu0 %v527
      %v776 = vpop.f32.mrb[0].mxu0
      %v777 = vadd.f32 0.0, %v776
      %v778 = vpop.f32.mrb[0].mxu0
      %v779 = vpop.f32.mrb[0].mxu0
      %v780 = vadd.f32 0.0, %v779
      %v781 = vpop.f32.mrb[0].mxu0
      %782 = vmatprep.mubr.bf16.mxu0 0
      %783 = vmatmul.mubr.bf16.gmra.mrb[0].mxu0 %v528
      %v784 = vpop.f32.mrb[0].mxu0
      %v785 = vadd.f32 0.0, %v784
      %v786 = vpop.f32.mrb[0].mxu0
      %v787 = vpop.f32.mrb[0].mxu0
      %v788 = vadd.f32 0.0, %v787
      %v789 = vpop.f32.mrb[0].mxu0
      %790 = vmatprep.mubr.bf16.mxu0 0
      %791 = vmatmul.mubr.bf16.gmra.mrb[0].mxu0 %v529
      %v792 = vpop.f32.mrb[0].mxu0
      %v793 = vadd.f32 0.0, %v792
      %v794 = vpop.f32.mrb[0].mxu0
      %v795 = vpop.f32.mrb[0].mxu0
      %v796 = vadd.f32 0.0, %v795
      %v797 = vpop.f32.mrb[0].mxu0
      %798 = vmatprep.mubr.bf16.mxu0 0
      %799 = vmatmul.mubr.bf16.gmra.mrb[0].mxu0 %v530
      %v800 = vpop.f32.mrb[0].mxu0
      %v801 = vadd.f32 0.0, %v800
      %v802 = vpop.f32.mrb[0].mxu0
      %v803 = vpop.f32.mrb[0].mxu0
      %v804 = vadd.f32 0.0, %v803
      %v805 = vpop.f32.mrb[0].mxu0
      %806 = vmatprep.mubr.bf16.mxu0 0
      %807 = vmatmul.mubr.bf16.gmra.mrb[0].mxu0 %v531
      %v808 = vpop.f32.mrb[0].mxu0
      %v809 = vadd.f32 0.0, %v808
      %v810 = vpop.f32.mrb[0].mxu0
      %v811 = vpop.f32.mrb[0].mxu0
      %v812 = vadd.f32 0.0, %v811
      %v813 = vpop.f32.mrb[0].mxu0
      %814 = vmatprep.mubr.bf16.mxu0 0
      %815 = vmatmul.mubr.bf16.gmra.mrb[0].mxu0 %v532
      %v816 = vpop.f32.mrb[0].mxu0
      %v817 = vadd.f32 0.0, %v816
      %v818 = vpop.f32.mrb[0].mxu0
      %v819 = vpop.f32.mrb[0].mxu0
      %v820 = vadd.f32 0.0, %v819
      %v821 = vpop.f32.mrb[0].mxu0
      %822 = vmatprep.mubr.bf16.mxu0 0
      %823 = vmatmul.mubr.bf16.gmra.mrb[0].mxu0 %v533
      %v824 = vpop.f32.mrb[0].mxu0
      %v825 = vadd.f32 0.0, %v824
      %v826 = vpop.f32.mrb[0].mxu0
      %v827 = vpop.f32.mrb[0].mxu0
      %v828 = vadd.f32 0.0, %v827
      %v829 = vpop.f32.mrb[0].mxu0
      %830 = vmatprep.mubr.bf16.mxu0 0
      %831 = vmatmul.mubr.bf16.gmra.mrb[0].mxu0 %v534
      %v832 = vpop.f32.mrb[0].mxu0
      %v833 = vadd.f32 0.0, %v832
      %v834 = vpop.f32.mrb[0].mxu0
      %v835 = vpop.f32.mrb[0].mxu0
      %v836 = vadd.f32 0.0, %v835
      %v837 = vpop.f32.mrb[0].mxu0
      %838 = vmatprep.mubr.bf16.mxu0 0
      %839 = vmatmul.mubr.bf16.gmra.mrb[0].mxu0 %v535
      %v840 = vpop.f32.mrb[0].mxu0
      %v841 = vadd.f32 0.0, %v840
      %v842 = vpop.f32.mrb[0].mxu0
      %v843 = vpop.f32.mrb[0].mxu0
      %v844 = vadd.f32 0.0, %v843
      %v845 = vpop.f32.mrb[0].mxu0
      %846 = vmatprep.mubr.bf16.mxu0 0
      %847 = vmatmul.mubr.bf16.gmra.mrb[0].mxu0 %v536
      %v848 = vpop.f32.mrb[0].mxu0
      %v849 = vadd.f32 0.0, %v848
      %v850 = vpop.f32.mrb[0].mxu0
      %v851 = vpop.f32.mrb[0].mxu0
      %v852 = vadd.f32 0.0, %v851
      %v853 = vpop.f32.mrb[0].mxu0
      %854 = vmatprep.mubr.bf16.mxu0 0
      %855 = vmatmul.mubr.bf16.gmra.mrb[0].mxu0 %v537
      %v856 = vpop.f32.mrb[0].mxu0
      %v857 = vadd.f32 0.0, %v856
      %v858 = vpop.f32.mrb[0].mxu0
      %v859 = vpop.f32.mrb[0].mxu0
      %v860 = vadd.f32 0.0, %v859
      %v861 = vpop.f32.mrb[0].mxu0
      %862 = vmatprep.mubr.bf16.mxu0 0
      %863 = vmatmul.mubr.bf16.gmra.mrb[0].mxu0 %v538
      %v864 = vpop.f32.mrb[0].mxu0
      %v865 = vadd.f32 0.0, %v864
      %v866 = vpop.f32.mrb[0].mxu0
      %v867 = vpop.f32.mrb[0].mxu0
      %v868 = vadd.f32 0.0, %v867
      %v869 = vpop.f32.mrb[0].mxu0
      %870 = vmatprep.mubr.bf16.mxu0 0
      %871 = vmatmul.mubr.bf16.gmra.mrb[0].mxu0 %v539
      %v872 = vpop.f32.mrb[0].mxu0
      %v873 = vadd.f32 0.0, %v872
      %v874 = vpop.f32.mrb[0].mxu0
      %v875 = vpop.f32.mrb[0].mxu0
      %v876 = vadd.f32 0.0, %v875
      %v877 = vpop.f32.mrb[0].mxu0
      %878 = vmatprep.mubr.bf16.mxu0 0
      %879 = vmatmul.mubr.bf16.gmra.mrb[0].mxu0 %v540
      %v880 = vpop.f32.mrb[0].mxu0
      %v881 = vadd.f32 0.0, %v880
      %v882 = vpop.f32.mrb[0].mxu0
      %v883 = vpop.f32.mrb[0].mxu0
      %v884 = vadd.f32 0.0, %v883
      %v885 = vpop.f32.mrb[0].mxu0
      %886 = vmatprep.mubr.bf16.mxu0 0
      %887 = vmatmul.mubr.bf16.gmra.mrb[0].mxu0 %v541
      %v888 = vpop.f32.mrb[0].mxu0
      %v889 = vadd.f32 0.0, %v888
      %v890 = vpop.f32.mrb[0].mxu0
      %v891 = vpop.f32.mrb[0].mxu0
      %v892 = vadd.f32 0.0, %v891
      %v893 = vpop.f32.mrb[0].mxu0
      %894 = vdwg.mxu0
      %895 = vst [vmem:[%s233] sm:$0xff] %v641
      %896 = vst [vmem:[%s233 + $0x8] sm:$0xff] %v644
      %897 = vst [vmem:[%s233 + $0x10] sm:$0xff] %v649
      %898 = vst [vmem:[%s233 + $0x18] sm:$0xff] %v652
      %899 = vst [vmem:[%s233 + $0x20] sm:$0xff] %v657
      %900 = vst [vmem:[%s233 + $0x28] sm:$0xff] %v660
      %901 = vst [vmem:[%s233 + $0x30] sm:$0xff] %v665
      %902 = vst [vmem:[%s233 + $0x38] sm:$0xff] %v668
      %903 = vst [vmem:[%s233 + $0x40] sm:$0xff] %v673
      %904 = vst [vmem:[%s233 + $0x48] sm:$0xff] %v676
      %905 = vst [vmem:[%s233 + $0x50] sm:$0xff] %v681
      %906 = vst [vmem:[%s233 + $0x58] sm:$0xff] %v684
      %907 = vst [vmem:[%s233 + $0x60] sm:$0xff] %v689
      %908 = vst [vmem:[%s233 + $0x68] sm:$0xff] %v692
      %909 = vst [vmem:[%s233 + $0x70] sm:$0xff] %v697
      %910 = vst [vmem:[%s233 + $0x78] sm:$0xff] %v700
      %911 = vst [vmem:[%s233 + $0x80] sm:$0xff] %v705
      %912 = vst [vmem:[%s233 + $0x88] sm:$0xff] %v708
      %913 = vst [vmem:[%s233 + $0x90] sm:$0xff] %v713
      %914 = vst [vmem:[%s233 + $0x98] sm:$0xff] %v716
      %915 = vst [vmem:[%s233 + $0xa0] sm:$0xff] %v721
      %916 = vst [vmem:[%s233 + $0xa8] sm:$0xff] %v724
      %917 = vst [vmem:[%s233 + $0xb0] sm:$0xff] %v729
      %918 = vst [vmem:[%s233 + $0xb8] sm:$0xff] %v732
      %919 = vst [vmem:[%s233 + $0xc0] sm:$0xff] %v737
      %920 = vst [vmem:[%s233 + $0xc8] sm:$0xff] %v740
      %921 = vst [vmem:[%s233 + $0xd0] sm:$0xff] %v745
      %922 = vst [vmem:[%s233 + $0xd8] sm:$0xff] %v748
      %923 = vst [vmem:[%s233 + $0xe0] sm:$0xff] %v753
      %924 = vst [vmem:[%s233 + $0xe8] sm:$0xff] %v756
      %925 = vst [vmem:[%s233 + $0xf0] sm:$0xff] %v761
      %926 = vst [vmem:[%s233 + $0xf8] sm:$0xff] %v764
      %927 = vst [vmem:[%s233 + $0x100] sm:$0xff] %v769
      %928 = vst [vmem:[%s233 + $0x108] sm:$0xff] %v772
      %929 = vst [vmem:[%s233 + $0x110] sm:$0xff] %v777
      %930 = vst [vmem:[%s233 + $0x118] sm:$0xff] %v780
      %931 = vst [vmem:[%s233 + $0x120] sm:$0xff] %v785
      %932 = vst [vmem:[%s233 + $0x128] sm:$0xff] %v788
      %933 = vst [vmem:[%s233 + $0x130] sm:$0xff] %v793
      %934 = vst [vmem:[%s233 + $0x138] sm:$0xff] %v796
      %935 = vst [vmem:[%s233 + $0x140] sm:$0xff] %v801
      %936 = vst [vmem:[%s233 + $0x148] sm:$0xff] %v804
      %937 = vst [vmem:[%s233 + $0x150] sm:$0xff] %v809
      %938 = vst [vmem:[%s233 + $0x158] sm:$0xff] %v812
      %939 = vst [vmem:[%s233 + $0x160] sm:$0xff] %v817
      %940 = vst [vmem:[%s233 + $0x168] sm:$0xff] %v820
      %941 = vst [vmem:[%s233 + $0x170] sm:$0xff] %v825
      %942 = vst [vmem:[%s233 + $0x178] sm:$0xff] %v828
      %943 = vst [vmem:[%s233 + $0x180] sm:$0xff] %v833
      %944 = vst [vmem:[%s233 + $0x188] sm:$0xff] %v836
      %945 = vst [vmem:[%s233 + $0x190] sm:$0xff] %v841
      %946 = vst [vmem:[%s233 + $0x198] sm:$0xff] %v844
      %947 = vst [vmem:[%s233 + $0x1a0] sm:$0xff] %v849
      %948 = vst [vmem:[%s233 + $0x1a8] sm:$0xff] %v852
      %949 = vst [vmem:[%s233 + $0x1b0] sm:$0xff] %v857
      %950 = vst [vmem:[%s233 + $0x1b8] sm:$0xff] %v860
      %951 = vst [vmem:[%s233 + $0x1c0] sm:$0xff] %v865
      %952 = vst [vmem:[%s233 + $0x1c8] sm:$0xff] %v868
      %953 = vst [vmem:[%s233 + $0x1d0] sm:$0xff] %v873
      %954 = vst [vmem:[%s233 + $0x1d8] sm:$0xff] %v876
      %955 = vst [vmem:[%s233 + $0x1e0] sm:$0xff] %v881
      %956 = vst [vmem:[%s233 + $0x1e8] sm:$0xff] %v884
      %957 = vst [vmem:[%s233 + $0x1f0] sm:$0xff] %v889
      %958 = vst [vmem:[%s233 + $0x1f8] sm:$0xff] %v892
      %v959 = vadd.f32 %v641, %v644
      %v960 = vadd.f32 %v959, %v649
      %v961 = vadd.f32 %v960, %v652
      %v962 = vadd.f32 %v961, %v657
      %v963 = vadd.f32 %v962, %v660
      %v964 = vadd.f32 %v963, %v665
      %v965 = vadd.f32 %v964, %v668
      %v966 = vadd.f32 %v965, %v673
      %v967 = vadd.f32 %v966, %v676
      %v968 = vadd.f32 %v967, %v681
      %v969 = vadd.f32 %v968, %v684
      %v970 = vadd.f32 %v969, %v689
      %v971 = vadd.f32 %v970, %v692
      %v972 = vadd.f32 %v971, %v697
      %v973 = vadd.f32 %v972, %v700
      %v974 = vadd.f32 %v973, %v705
      %v975 = vadd.f32 %v974, %v708
      %v976 = vadd.f32 %v975, %v713
      %v977 = vadd.f32 %v976, %v716
      %v978 = vadd.f32 %v977, %v721
      %v979 = vadd.f32 %v978, %v724
      %v980 = vadd.f32 %v979, %v729
      %v981 = vadd.f32 %v980, %v732
      %v982 = vadd.f32 %v981, %v737
      %v983 = vadd.f32 %v982, %v740
      %v984 = vadd.f32 %v983, %v745
      %v985 = vadd.f32 %v984, %v748
      %v986 = vadd.f32 %v985, %v753
      %v987 = vadd.f32 %v986, %v756
      %v988 = vadd.f32 %v987, %v761
      %v989 = vadd.f32 %v988, %v764
      %v990 = vadd.f32 %v989, %v769
      %v991 = vadd.f32 %v990, %v772
      %v992 = vadd.f32 %v991, %v777
      %v993 = vadd.f32 %v992, %v780
      %v994 = vadd.f32 %v993, %v785
      %v995 = vadd.f32 %v994, %v788
      %v996 = vadd.f32 %v995, %v793
      %v997 = vadd.f32 %v996, %v796
      %v998 = vadd.f32 %v997, %v801
      %v999 = vadd.f32 %v998, %v804
      %v1000 = vadd.f32 %v999, %v809
      %v1001 = vadd.f32 %v1000, %v812
      %v1002 = vadd.f32 %v1001, %v817
      %v1003 = vadd.f32 %v1002, %v820
      %v1004 = vadd.f32 %v1003, %v825
      %v1005 = vadd.f32 %v1004, %v828
      %v1006 = vadd.f32 %v1005, %v833
      %v1007 = vadd.f32 %v1006, %v836
      %v1008 = vadd.f32 %v1007, %v841
      %v1009 = vadd.f32 %v1008, %v844
      %v1010 = vadd.f32 %v1009, %v849
      %v1011 = vadd.f32 %v1010, %v852
      %v1012 = vadd.f32 %v1011, %v857
      %v1013 = vadd.f32 %v1012, %v860
      %v1014 = vadd.f32 %v1013, %v865
      %v1015 = vadd.f32 %v1014, %v868
      %v1016 = vadd.f32 %v1015, %v873
      %v1017 = vadd.f32 %v1016, %v876
      %v1018 = vadd.f32 %v1017, %v881
      %v1019 = vadd.f32 %v1018, %v884
      %v1020 = vadd.f32 %v1019, %v889
      %v1021 = vadd.f32 %v1020, %v892
      %v1022 = vrot.slane %v1021, 4
      %v1023 = vadd.f32 %v1021, %v1022
      %v1024 = vrot.slane %v1023, 2
      %v1025 = vadd.f32 %v1023, %v1024
      %v1026 = vrot.slane %v1025, 1
      %v1027 = vadd.f32 %v1025, %v1026
      %v1028 = vmul.f32 %v641, %v641
      %v1029 = vmul.f32 %v644, %v644
      %v1030 = vmul.f32 %v649, %v649
      %v1031 = vmul.f32 %v652, %v652
      %v1032 = vmul.f32 %v657, %v657
      %v1033 = vmul.f32 %v660, %v660
      %v1034 = vmul.f32 %v665, %v665
      %v1035 = vmul.f32 %v668, %v668
      %v1036 = vmul.f32 %v673, %v673
      %v1037 = vmul.f32 %v676, %v676
      %v1038 = vmul.f32 %v681, %v681
      %v1039 = vmul.f32 %v684, %v684
      %v1040 = vmul.f32 %v689, %v689
      %v1041 = vmul.f32 %v692, %v692
      %v1042 = vmul.f32 %v697, %v697
      %v1043 = vmul.f32 %v700, %v700
      %v1044 = vmul.f32 %v705, %v705
      %v1045 = vmul.f32 %v708, %v708
      %v1046 = vmul.f32 %v713, %v713
      %v1047 = vmul.f32 %v716, %v716
      %v1048 = vmul.f32 %v721, %v721
      %v1049 = vmul.f32 %v724, %v724
      %v1050 = vmul.f32 %v729, %v729
      %v1051 = vmul.f32 %v732, %v732
      %v1052 = vmul.f32 %v737, %v737
      %v1053 = vmul.f32 %v740, %v740
      %v1054 = vmul.f32 %v745, %v745
      %v1055 = vmul.f32 %v748, %v748
      %v1056 = vmul.f32 %v753, %v753
      %v1057 = vmul.f32 %v756, %v756
      %v1058 = vmul.f32 %v761, %v761
      %v1059 = vmul.f32 %v764, %v764
      %v1060 = vmul.f32 %v769, %v769
      %v1061 = vmul.f32 %v772, %v772
      %v1062 = vmul.f32 %v777, %v777
      %v1063 = vmul.f32 %v780, %v780
      %v1064 = vmul.f32 %v785, %v785
      %v1065 = vmul.f32 %v788, %v788
      %v1066 = vmul.f32 %v793, %v793
      %v1067 = vmul.f32 %v796, %v796
      %v1068 = vmul.f32 %v801, %v801
      %v1069 = vmul.f32 %v804, %v804
      %v1070 = vmul.f32 %v809, %v809
      %v1071 = vmul.f32 %v812, %v812
      %v1072 = vmul.f32 %v817, %v817
      %v1073 = vmul.f32 %v820, %v820
      %v1074 = vmul.f32 %v825, %v825
      %v1075 = vmul.f32 %v828, %v828
      %v1076 = vmul.f32 %v833, %v833
      %v1077 = vmul.f32 %v836, %v836
      %v1078 = vmul.f32 %v841, %v841
      %v1079 = vmul.f32 %v844, %v844
      %v1080 = vmul.f32 %v849, %v849
      %v1081 = vmul.f32 %v852, %v852
      %v1082 = vmul.f32 %v857, %v857
      %v1083 = vmul.f32 %v860, %v860
      %v1084 = vmul.f32 %v865, %v865
      %v1085 = vmul.f32 %v868, %v868
      %v1086 = vmul.f32 %v873, %v873
      %v1087 = vmul.f32 %v876, %v876
      %v1088 = vmul.f32 %v881, %v881
      %v1089 = vmul.f32 %v884, %v884
      %v1090 = vmul.f32 %v889, %v889
      %v1091 = vmul.f32 %v892, %v892
      %v1092 = vadd.f32 %v1028, %v1029
      %v1093 = vadd.f32 %v1092, %v1030
      %v1094 = vadd.f32 %v1093, %v1031
      %v1095 = vadd.f32 %v1094, %v1032
      %v1096 = vadd.f32 %v1095, %v1033
      %v1097 = vadd.f32 %v1096, %v1034
      %v1098 = vadd.f32 %v1097, %v1035
      %v1099 = vadd.f32 %v1098, %v1036
      %v1100 = vadd.f32 %v1099, %v1037
      %v1101 = vadd.f32 %v1100, %v1038
      %v1102 = vadd.f32 %v1101, %v1039
      %v1103 = vadd.f32 %v1102, %v1040
      %v1104 = vadd.f32 %v1103, %v1041
      %v1105 = vadd.f32 %v1104, %v1042
      %v1106 = vadd.f32 %v1105, %v1043
      %v1107 = vadd.f32 %v1106, %v1044
      %v1108 = vadd.f32 %v1107, %v1045
      %v1109 = vadd.f32 %v1108, %v1046
      %v1110 = vadd.f32 %v1109, %v1047
      %v1111 = vadd.f32 %v1110, %v1048
      %v1112 = vadd.f32 %v1111, %v1049
      %v1113 = vadd.f32 %v1112, %v1050
      %v1114 = vadd.f32 %v1113, %v1051
      %v1115 = vadd.f32 %v1114, %v1052
      %v1116 = vadd.f32 %v1115, %v1053
      %v1117 = vadd.f32 %v1116, %v1054
      %v1118 = vadd.f32 %v1117, %v1055
      %v1119 = vadd.f32 %v1118, %v1056
      %v1120 = vadd.f32 %v1119, %v1057
      %v1121 = vadd.f32 %v1120, %v1058
      %v1122 = vadd.f32 %v1121, %v1059
      %v1123 = vadd.f32 %v1122, %v1060
      %v1124 = vadd.f32 %v1123, %v1061
      %v1125 = vadd.f32 %v1124, %v1062
      %v1126 = vadd.f32 %v1125, %v1063
      %v1127 = vadd.f32 %v1126, %v1064
      %v1128 = vadd.f32 %v1127, %v1065
      %v1129 = vadd.f32 %v1128, %v1066
      %v1130 = vadd.f32 %v1129, %v1067
      %v1131 = vadd.f32 %v1130, %v1068
      %v1132 = vadd.f32 %v1131, %v1069
      %v1133 = vadd.f32 %v1132, %v1070
      %v1134 = vadd.f32 %v1133, %v1071
      %v1135 = vadd.f32 %v1134, %v1072
      %v1136 = vadd.f32 %v1135, %v1073
      %v1137 = vadd.f32 %v1136, %v1074
      %v1138 = vadd.f32 %v1137, %v1075
      %v1139 = vadd.f32 %v1138, %v1076
      %v1140 = vadd.f32 %v1139, %v1077
      %v1141 = vadd.f32 %v1140, %v1078
      %v1142 = vadd.f32 %v1141, %v1079
      %v1143 = vadd.f32 %v1142, %v1080
      %v1144 = vadd.f32 %v1143, %v1081
      %v1145 = vadd.f32 %v1144, %v1082
      %v1146 = vadd.f32 %v1145, %v1083
      %v1147 = vadd.f32 %v1146, %v1084
      %v1148 = vadd.f32 %v1147, %v1085
      %v1149 = vadd.f32 %v1148, %v1086
      %v1150 = vadd.f32 %v1149, %v1087
      %v1151 = vadd.f32 %v1150, %v1088
      %v1152 = vadd.f32 %v1151, %v1089
      %v1153 = vadd.f32 %v1152, %v1090
      %v1154 = vadd.f32 %v1153, %v1091
      %v1155 = vrot.slane %v1154, 4
      %v1156 = vadd.f32 %v1154, %v1155
      %v1157 = vrot.slane %v1156, 2
      %v1158 = vadd.f32 %v1156, %v1157
      %v1159 = vrot.slane %v1158, 1
      %v1160 = vadd.f32 %v1158, %v1159
      %vm1161 = vcmask 1040384
      %v1162 = vsel %vm1161, %v1027, %v1160
      %1163 = vst [vmem:[%s238] sm:$0x3] %v1162
      %s1164 = smul.u32 64, %s17
      %p1165 = scmp.lt.s32.totalorder %s1164, 127
      %s1166 = scalar_select %p1165, %s1164, 127
      %s1167 = smul.addr %s1166, 8
      %s1168 = scalar_lea.vmem %s4, %s1167
      %p1169 = scmp.lt.s32.totalorder %s17, 1
      %s1170 = scalar_select %p1169, %s17, 1
      %s1171 = smul.addr %s1170, 2
      %s1172 = scalar_lea.vmem %s5, %s1171
      // Predicated region
      $region37: #{bottleneck_forward.8} parent=35 // pred_check
        %p1173 = pneg %p124
      $region38: #{bottleneck_forward.8} parent=35 // pred_check_branch
        %1175 = sbr.rel (%p1173) target = $region40
      $region39: #{bottleneck_forward.8} parent=35 // pred_region
        %s1176 = smul.u32 64, %s17
      $region40: #{bottleneck_forward.8} parent=35 // pred_fallthru
        _
      // Predicated region
      $region41: #{bottleneck_forward.8} parent=35 // pred_check
        %p1177 = pneg %p150
      $region42: #{bottleneck_forward.8} parent=35 // pred_check_branch
        %1179 = sbr.rel (%p1177) target = $region44
      $region43: #{bottleneck_forward.8} parent=35 // pred_region
        _
      $region44: #{bottleneck_forward.8} parent=35 // pred_fallthru
        _
    $region36: #{bottleneck_forward.8} parent=5 // pred_fallthru
      _
    %p1180 = scmp.le.s32.totalorder 2, %s12
    // Predicated region
    $region45: #{bottleneck_forward.8} parent=5 // pred_check
      %p1181 = pneg %p1180
    $region46: #{bottleneck_forward.8} parent=5 // pred_check_branch
      %1183 = sbr.rel (%p1181) target = $region48
    $region47: #{bottleneck_forward.8} parent=5 // pred_region
      %s1184 = ssub.s32 %s12, 2
      // Predicated region
      $region49: #{bottleneck_forward.8} parent=47 // pred_check
        %p1185 = pneg %p130
      $region50: #{bottleneck_forward.8} parent=47 // pred_check_branch
        %1187 = sbr.rel (%p1185) target = $region52
      $region51: #{bottleneck_forward.8} parent=47 // pred_region
        %s1188 = smul.u32 64, %s18
        %p1189 = scmp.lt.s32.totalorder %s1188, 127
        %s1190 = scalar_select %p1189, %s1188, 127
        %s1191 = smul.addr %s1190, 8
        %s1192 = scalar_lea.vmem %s4, %s1191
      $region52: #{bottleneck_forward.8} parent=47 // pred_fallthru
        _
      // Predicated region
      $region53: #{bottleneck_forward.8} parent=47 // pred_check
        %p1193 = pneg %p156
      $region54: #{bottleneck_forward.8} parent=47 // pred_check_branch
        %1195 = sbr.rel (%p1193) target = $region56
      $region55: #{bottleneck_forward.8} parent=47 // pred_region
        %p1196 = scmp.lt.s32.totalorder %s18, 1
        %s1197 = scalar_select %p1196, %s18, 1
        %s1198 = smul.addr %s1197, 2
        %s1199 = scalar_lea.vmem %s5, %s1198
      $region56: #{bottleneck_forward.8} parent=47 // pred_fallthru
        _
    $region48: #{bottleneck_forward.8} parent=5 // pred_fallthru
      _
  $region6: #{bottleneck_forward.8} parent=0 // loop_footer
    %s16 = sadd.s32 1, %s12
  $region7: #{bottleneck_forward.8} parent=0 // loop_footer_branch
    %11 = sbr.rel target = $region3
  $region8: #{bottleneck_forward.8} parent=0 // loop_exit
    _

// kernel: bottleneck_forward.7
$region0: #{bottleneck_forward.7}
  #allocation0 [shape = 'u32[]', space=smem, size = 0x4, offset = 0x4, fixed_abs, tag = 'smem constant byte address 0x4 - core index']
  #allocation1 [shape = 'u32[144,128]{1,0:T(1,128)}', space=vmem, size = 0x12000, scoped, tag = 'internal scratch']
  %s0 = inlined_call_operand.vmem [shape: bf16[2,10,10,10,128], index: 0, kind: input, shape index: {}]
  %s1 = inlined_call_operand.vmem [shape: bf16[27,128,128], index: 1, kind: input, shape index: {}]
  %s2 = inlined_call_operand.vmem [shape: f32[2,8,8,8,128], index: 2, kind: output, shape index: {0}]
  %s3 = inlined_call_operand.vmem [shape: f32[2,8,2,128], index: 3, kind: output, shape index: {1}]
  %4 = xla_tuple %s2, %s3
  %s5 = sld [smem:[#allocation0]]
  $region49: #{bottleneck_forward.7} parent=0
    _
  %s7 = ssub.s32 1, %s5
  %s8 = scalar_select 0, %s7, %s5
  loop: start=0, step=1, limit=18
  $region2: #{bottleneck_forward.7} parent=0 // loop_pre_header
    _
  $region3: #{bottleneck_forward.7} parent=0 // loop_header
    %s10 = sphi 0, %s14
    %p11 = scmp.ge.s32.totalorder %s10, 18
    %s17 = sphi 0, %s29
    %s18 = sphi 0, %s25
    %s19 = sphi 0, %s17
    %s20 = sphi 0, %s18
    %s21 = sphi 0, %s19
    %s22 = sphi 0, %s20
    %s32 = sphi 0, %s34
    %s35 = sphi 0, %s32
    %s36 = sphi 0, %s35
    %s52 = sphi 0, %s36
    %s56 = sphi 0, %s56
    %s58 = sphi 0, %s56
    %s59 = sphi 0, %s58
    %s73 = sphi 0, %s59
    %s81 = sphi 0, %s83
    %s84 = sphi 0, %s81
    %s85 = sphi 0, %s84
    %s101 = sphi 0, %s85
    %s109 = sphi 0, %s111
    %s112 = sphi 0, %s109
    %s113 = sphi 0, %s112
    %s129 = sphi 0, %s113
  $region4: #{bottleneck_forward.7} parent=0 // loop_header_branch
    %13 = sbr.rel (%p11) target = $region8
  $region5: #{bottleneck_forward.7} parent=0 // loop_body
    %s15 = ssub.s32 %s10, 1
    %s16 = ssub.s32 %s10, 2
    %s23 = sadd.s32 1, %s18
    %p24 = scmp.ge.s32.totalorder %s23, 8
    %s25 = scalar_select %p24, 0, %s23
    %s26 = sadd.s32 1, %s17
    %s27 = scalar_select %p24, %s26, %s17
    %p28 = scmp.ge.s32.totalorder %s27, 2
    %s29 = scalar_select %p28, 0, %s27
    %s30 = ssub.s32 %s17, %s29
    %p31 = scmp.eq.s32.totalorder %s30, 0
    %s33 = sadd.s32 %s32, 1
    %s34 = scalar_select %p31, %s32, %s33
    %p37 = pneg %p31
    %p38 = scmp.eq.s32.totalorder %s10, 15
    %p39 = por %p37, %p38
    %p40 = scmp.ne.s32.totalorder %s32, %s35
    %p41 = scmp.eq.s32.totalorder %s10, 0
    %p42 = por %p40, %p41
    %p43 = scmp.ne.s32.totalorder %s32, %s35
    %p44 = scmp.eq.s32.totalorder %s15, 15
    %p45 = por %p43, %p44
    %p46 = scmp.ne.s32.totalorder %s35, %s36
    %p47 = scmp.eq.s32.totalorder %s15, 0
    %p48 = por %p46, %p47
    %p49 = scmp.ne.s32.totalorder %s35, %s36
    %p50 = scmp.eq.s32.totalorder %s16, 15
    %p51 = por %p49, %p50
    %p53 = scmp.ne.s32.totalorder %s36, %s52
    %p54 = scmp.eq.s32.totalorder %s16, 0
    %p55 = por %p53, %p54
    %s57 = sadd.s32 %s56, 1
    %p60 = scmp.eq.s32.totalorder %s10, 15
    %p61 = scmp.ne.s32.totalorder %s56, %s58
    %p62 = scmp.eq.s32.totalorder %s10, 0
    %p63 = por %p61, %p62
    %p64 = scmp.ne.s32.totalorder %s56, %s58
    %p65 = scmp.eq.s32.totalorder %s15, 15
    %p66 = por %p64, %p65
    %p67 = scmp.ne.s32.totalorder %s58, %s59
    %p68 = scmp.eq.s32.totalorder %s15, 0
    %p69 = por %p67, %p68
    %p70 = scmp.ne.s32.totalorder %s58, %s59
    %p71 = scmp.eq.s32.totalorder %s16, 15
    %p72 = por %p70, %p71
    %p74 = scmp.ne.s32.totalorder %s59, %s73
    %p75 = scmp.eq.s32.totalorder %s16, 0
    %p76 = por %p74, %p75
    %s77 = ssub.s32 %s17, %s29
    %s78 = ssub.s32 %s18, %s25
    %s79 = sor.u32 %s77, %s78
    %p80 = scmp.eq.s32.totalorder %s79, 0
    %s82 = sadd.s32 %s81, 1
    %s83 = scalar_select %p80, %s81, %s82
    %p86 = pneg %p80
    %p87 = scmp.eq.s32.totalorder %s10, 15
    %p88 = por %p86, %p87
    %p89 = scmp.ne.s32.totalorder %s81, %s84
    %p90 = scmp.eq.s32.totalorder %s10, 0
    %p91 = por %p89, %p90
    %p92 = scmp.ne.s32.totalorder %s81, %s84
    %p93 = scmp.eq.s32.totalorder %s15, 15
    %p94 = por %p92, %p93
    %p95 = scmp.ne.s32.totalorder %s84, %s85
    %p96 = scmp.eq.s32.totalorder %s15, 0
    %p97 = por %p95, %p96
    %p98 = scmp.ne.s32.totalorder %s84, %s85
    %p99 = scmp.eq.s32.totalorder %s16, 15
    %p100 = por %p98, %p99
    %p102 = scmp.ne.s32.totalorder %s85, %s101
    %p103 = scmp.eq.s32.totalorder %s16, 0
    %p104 = por %p102, %p103
    %s105 = ssub.s32 %s17, %s29
    %s106 = ssub.s32 %s18, %s25
    %s107 = sor.u32 %s105, %s106
    %p108 = scmp.eq.s32.totalorder %s107, 0
    %s110 = sadd.s32 %s109, 1
    %s111 = scalar_select %p108, %s109, %s110
    %p114 = pneg %p108
    %p115 = scmp.eq.s32.totalorder %s10, 15
    %p116 = por %p114, %p115
    %p117 = scmp.ne.s32.totalorder %s109, %s112
    %p118 = scmp.eq.s32.totalorder %s10, 0
    %p119 = por %p117, %p118
    %p120 = scmp.ne.s32.totalorder %s109, %s112
    %p121 = scmp.eq.s32.totalorder %s15, 15
    %p122 = por %p120, %p121
    %p123 = scmp.ne.s32.totalorder %s112, %s113
    %p124 = scmp.eq.s32.totalorder %s15, 0
    %p125 = por %p123, %p124
    %p126 = scmp.ne.s32.totalorder %s112, %s113
    %p127 = scmp.eq.s32.totalorder %s16, 15
    %p128 = por %p126, %p127
    %p130 = scmp.ne.s32.totalorder %s113, %s129
    %p131 = scmp.eq.s32.totalorder %s16, 0
    %p132 = por %p130, %p131
    %p133 = scmp.le.s32.totalorder 1, %s10
    %p134 = scmp.lt.s32.totalorder %s10, 17
    %p135 = pnand %p133, %p134
    %p136 = pneg %p135
    // Predicated region
    $region9: #{bottleneck_forward.7} parent=5 // pred_check
      _
    $region10: #{bottleneck_forward.7} parent=5 // pred_check_branch
      %138 = sbr.rel (%p135) target = $region12
    $region11: #{bottleneck_forward.7} parent=5 // pred_region
      %s139 = ssub.s32 %s10, 1
      // Predicated region
      $region13: #{bottleneck_forward.7} parent=11 // pred_check
        %p140 = pneg %p69
      $region14: #{bottleneck_forward.7} parent=11 // pred_check_branch
        %142 = sbr.rel (%p140) target = $region16
      $region15: #{bottleneck_forward.7} parent=11 // pred_region
        _
      $region16: #{bottleneck_forward.7} parent=11 // pred_fallthru
        _
    $region12: #{bottleneck_forward.7} parent=5 // pred_fallthru
      _
    %p143 = scmp.lt.s32.totalorder %s10, 16
    // Predicated region
    $region17: #{bottleneck_forward.7} parent=5 // pred_check
      %p144 = pneg %p143
    $region18: #{bottleneck_forward.7} parent=5 // pred_check_branch
      %146 = sbr.rel (%p144) target = $region20
    $region19: #{bottleneck_forward.7} parent=5 // pred_region
      // Predicated region
      $region21: #{bottleneck_forward.7} parent=19 // pred_check
        %p147 = pneg %p42
      $region22: #{bottleneck_forward.7} parent=19 // pred_check_branch
        %149 = sbr.rel (%p147) target = $region24
      $region23: #{bottleneck_forward.7} parent=19 // pred_region
        %p150 = scmp.lt.s32.totalorder %s17, 1
        %s151 = scalar_select %p150, %s17, 1
        %s152 = smul.addr %s151, 200
        %s153 = smul.addr %s152, 4
        %s154 = scalar_lea.vmem %s0, %s153
      $region24: #{bottleneck_forward.7} parent=19 // pred_fallthru
        _
    $region20: #{bottleneck_forward.7} parent=5 // pred_fallthru
      _
    %p155 = scmp.le.s32.totalorder 1, %s10
    %p156 = scmp.lt.s32.totalorder %s10, 17
    %p157 = pnand %p155, %p156
    %p158 = pneg %p157
    // Predicated region
    $region25: #{bottleneck_forward.7} parent=5 // pred_check
      _
    $region26: #{bottleneck_forward.7} parent=5 // pred_check_branch
      %160 = sbr.rel (%p157) target = $region28
    $region27: #{bottleneck_forward.7} parent=5 // pred_region
      %s161 = ssub.s32 %s10, 1
      %p162 = scmp.lt.s32.totalorder %s19, 1
      %s163 = scalar_select %p162, %s19, 1
      %s164 = smul.addr %s163, 200
      %s165 = smul.addr %s164, 4
      %s166 = scalar_lea.vmem %s0, %s165
      %p167 = pneg %p48
      %p168 = pneg %p45
      %p169 = pneg %p69
      %p170 = pneg %p66
      %p171 = pneg %p97
      %p172 = pneg %p94
      %p173 = scmp.lt.s32.totalorder %s19, 1
      %s174 = scalar_select %p173, %s19, 1
      %p175 = scmp.lt.s32.totalorder %s20, 7
      %s176 = scalar_select %p175, %s20, 7
      %s177 = smul.addr %s176, 8
      %s178 = smul.addr %s174, 64
      %s179 = sadd.s32 %s177, %s178
      %s180 = smul.addr %s179, 8
      %s181 = scalar_lea.vmem %s2, %s180
      %p182 = pneg %p125
      %p183 = pneg %p122
      %p184 = scmp.lt.s32.totalorder %s19, 1
      %s185 = scalar_select %p184, %s19, 1
      %p186 = scmp.lt.s32.totalorder %s20, 7
      %s187 = scalar_select %p186, %s20, 7
      %s188 = smul.addr %s185, 8
      %s189 = sadd.s32 %s187, %s188
      %s190 = smul.addr %s189, 2
      %s191 = scalar_lea.vmem %s3, %s190
      %p192 = scmp.lt.s32.totalorder %s19, 1
      %s193 = scalar_select %p192, %s19, 1
      %s194 = smul.addr %s193, 200
      %s195 = smul.addr %s194, 4
      %s196 = scalar_lea.vmem %s0, %s195
      %p197 = scmp.lt.s32.totalorder %s19, 1
      %s198 = scalar_select %p197, %s19, 1
      %p199 = scmp.lt.s32.totalorder %s20, 7
      %s200 = scalar_select %p199, %s20, 7
      %s201 = smul.addr %s200, 8
      %s202 = smul.addr %s198, 64
      %s203 = sadd.s32 %s201, %s202
      %s204 = smul.addr %s203, 8
      %s205 = scalar_lea.vmem %s2, %s204
      %p206 = scmp.lt.s32.totalorder %s19, 1
      %s207 = scalar_select %p206, %s19, 1
      %p208 = scmp.lt.s32.totalorder %s20, 7
      %s209 = scalar_select %p208, %s20, 7
      %s210 = smul.addr %s207, 8
      %s211 = sadd.s32 %s209, %s210
      %s212 = smul.addr %s211, 2
      %s213 = scalar_lea.vmem %s3, %s212
      %s215 = smul.u32 %s20, 20
      %s216 = smul.addr %s215, 4
      %s217 = scalar_lea.vmem %s196, %s216
      %v218 = vld [vmem:[%s217] sm:$0xf]
      %v219 = vld [vmem:[%s217 + $0x4] sm:$0x1]
      %v220 = vld [vmem:[%s217 + $0x8] sm:$0xf]
      %v221 = vld [vmem:[%s217 + $0xc] sm:$0x1]
      %v222 = vld [vmem:[%s217 + $0x10] sm:$0xf]
      %v223 = vld [vmem:[%s217 + $0x14] sm:$0x1]
      %v224 = vld [vmem:[%s217 + $0x18] sm:$0xf]
      %v225 = vld [vmem:[%s217 + $0x1c] sm:$0x1]
      %v226 = vld [vmem:[%s217 + $0x20] sm:$0xf]
      %v227 = vld [vmem:[%s217 + $0x24] sm:$0x1]
      %v228 = vld [vmem:[%s217 + $0x28] sm:$0xf]
      %v229 = vld [vmem:[%s217 + $0x2c] sm:$0x1]
      %v230 = vld [vmem:[%s217 + $0x30] sm:$0xf]
      %v231 = vld [vmem:[%s217 + $0x34] sm:$0x1]
      %v232 = vld [vmem:[%s217 + $0x38] sm:$0xf]
      %v233 = vld [vmem:[%s217 + $0x3c] sm:$0x1]
      %v234 = vld [vmem:[%s217 + $0x40] sm:$0xf]
      %v235 = vld [vmem:[%s217 + $0x44] sm:$0x1]
      %v236 = vld [vmem:[%s217 + $0x48] sm:$0xf]
      %v237 = vld [vmem:[%s217 + $0x4c] sm:$0x1]
      %v238 = vunpack.c.l.bf16 %v218
      %v239 = vunpack.c.l.bf16 %v219
      %v240 = vunpack.c.l.bf16 %v220
      %v241 = vunpack.c.l.bf16 %v221
      %v242 = vunpack.c.l.bf16 %v222
      %v243 = vunpack.c.l.bf16 %v223
      %v244 = vunpack.c.l.bf16 %v224
      %v245 = vunpack.c.l.bf16 %v225
      %v246 = vunpack.c.l.bf16 %v226
      %v247 = vunpack.c.l.bf16 %v227
      %v248 = vunpack.c.l.bf16 %v228
      %v249 = vunpack.c.l.bf16 %v229
      %v250 = vunpack.c.l.bf16 %v230
      %v251 = vunpack.c.l.bf16 %v231
      %v252 = vunpack.c.l.bf16 %v232
      %v253 = vunpack.c.l.bf16 %v233
      %v254 = vunpack.c.l.bf16 %v234
      %v255 = vunpack.c.l.bf16 %v235
      %v256 = vunpack.c.l.bf16 %v236
      %v257 = vunpack.c.l.bf16 %v237
      %v258 = vld [vmem:[%s1] sm:$0xf]
      %v259 = vld [vmem:[%s1 + $0x4] sm:$0xf]
      %v260 = vld [vmem:[%s1 + $0x8] sm:$0xf]
      %v261 = vld [vmem:[%s1 + $0xc] sm:$0xf]
      %v262 = vld [vmem:[%s1 + $0x10] sm:$0xf]
      %v263 = vld [vmem:[%s1 + $0x14] sm:$0xf]
      %v264 = vld [vmem:[%s1 + $0x18] sm:$0xf]
      %v265 = vld [vmem:[%s1 + $0x1c] sm:$0xf]
      %v266 = vld [vmem:[%s1 + $0x20] sm:$0xf]
      %v267 = vld [vmem:[%s1 + $0x24] sm:$0xf]
      %v268 = vld [vmem:[%s1 + $0x28] sm:$0xf]
      %v269 = vld [vmem:[%s1 + $0x2c] sm:$0xf]
      %v270 = vld [vmem:[%s1 + $0x30] sm:$0xf]
      %v271 = vld [vmem:[%s1 + $0x34] sm:$0xf]
      %v272 = vld [vmem:[%s1 + $0x38] sm:$0xf]
      %v273 = vld [vmem:[%s1 + $0x3c] sm:$0xf]
      %v274 = vpack.c.bf16 %v240, %v238
      %v275 = vpack.c.bf16 %v244, %v242
      %v276 = vpack.c.bf16 %v248, %v246
      %v277 = vpack.c.bf16 %v252, %v250
      %vm294 = vcmask 1046528
      %v295 = vrot.slane %v238, 1
      %v296 = vrot.slane %v239, 1
      %v297 = vsel %vm294, %v295, %v296
      %v298 = vrot.slane %v240, 1
      %v299 = vrot.slane %v241, 1
      %v300 = vsel %vm294, %v298, %v299
      %v301 = vrot.slane %v242, 1
      %v302 = vrot.slane %v243, 1
      %v303 = vsel %vm294, %v301, %v302
      %v304 = vrot.slane %v244, 1
      %v305 = vrot.slane %v245, 1
      %v306 = vsel %vm294, %v304, %v305
      %v307 = vrot.slane %v246, 1
      %v308 = vrot.slane %v247, 1
      %v309 = vsel %vm294, %v307, %v308
      %v310 = vrot.slane %v248, 1
      %v311 = vrot.slane %v249, 1
      %v312 = vsel %vm294, %v310, %v311
      %v313 = vrot.slane %v250, 1
      %v314 = vrot.slane %v251, 1
      %v315 = vsel %vm294, %v313, %v314
      %v316 = vrot.slane %v252, 1
      %v317 = vrot.slane %v253, 1
      %v318 = vsel %vm294, %v316, %v317
      %s327 = scalar_lea.vmem %s1, 64
      %v328 = vld [vmem:[%s327] sm:$0xf]
      %v329 = vld [vmem:[%s327 + $0x4] sm:$0xf]
      %v330 = vld [vmem:[%s327 + $0x8] sm:$0xf]
      %v331 = vld [vmem:[%s327 + $0xc] sm:$0xf]
      %v332 = vld [vmem:[%s327 + $0x10] sm:$0xf]
      %v333 = vld [vmem:[%s327 + $0x14] sm:$0xf]
      %v334 = vld [vmem:[%s327 + $0x18] sm:$0xf]
      %v335 = vld [vmem:[%s327 + $0x1c] sm:$0xf]
      %v336 = vld [vmem:[%s327 + $0x20] sm:$0xf]
      %v337 = vld [vmem:[%s327 + $0x24] sm:$0xf]
      %v338 = vld [vmem:[%s327 + $0x28] sm:$0xf]
      %v339 = vld [vmem:[%s327 + $0x2c] sm:$0xf]
      %v340 = vld [vmem:[%s327 + $0x30] sm:$0xf]
      %v341 = vld [vmem:[%s327 + $0x34] sm:$0xf]
      %v342 = vld [vmem:[%s327 + $0x38] sm:$0xf]
      %v343 = vld [vmem:[%s327 + $0x3c] sm:$0xf]
      %v344 = vpack.c.bf16 %v300, %v297
      %v345 = vpack.c.bf16 %v306, %v303
      %v346 = vpack.c.bf16 %v312, %v309
      %v347 = vpack.c.bf16 %v318, %v315
      %v364 = vunpack.c.l.b16 %v328
      %v365 = vunpack.c.l.b16 %v329
      %v366 = vunpack.c.l.b16 %v330
      %v367 = vunpack.c.l.b16 %v331
      %v368 = vunpack.c.l.b16 %v332
      %v369 = vunpack.c.l.b16 %v333
      %v370 = vunpack.c.l.b16 %v334
      %v371 = vunpack.c.l.b16 %v335
      %v372 = vunpack.c.l.b16 %v336
      %v373 = vunpack.c.l.b16 %v337
      %v374 = vunpack.c.l.b16 %v338
      %v375 = vunpack.c.l.b16 %v339
      %v376 = vunpack.c.l.b16 %v340
      %v377 = vunpack.c.l.b16 %v341
      %v378 = vunpack.c.l.b16 %v342
      %v379 = vunpack.c.l.b16 %v343
      %v380 = vpack.c.b16 %v365, %v364
      %v381 = vpack.c.b16 %v367, %v366
      %v382 = vpack.c.b16 %v369, %v368
      %v383 = vpack.c.b16 %v371, %v370
      %v384 = vpack.c.b16 %v373, %v372
      %v385 = vpack.c.b16 %v375, %v374
      %v386 = vpack.c.b16 %v377, %v376
      %v387 = vpack.c.b16 %v379, %v378
      %396 = vmatprep.subr.bf16.mxu0 0
      %397 = vmatpush1.bf16.msra.mxu0 %v380
      %398 = vmatprep.subr.bf16.mxu0 0
      %399 = vmatpush1.bf16.msra.mxu0 %v381
      %400 = vmatprep.subr.bf16.mxu0 0
      %401 = vmatpush1.bf16.msra.mxu0 %v382
      %402 = vmatprep.subr.bf16.mxu0 0
      %403 = vmatpush1.bf16.msra.mxu0 %v383
      %404 = vmatprep.subr.bf16.mxu0 0
      %405 = vmatpush1.bf16.msra.mxu0 %v384
      %406 = vmatprep.subr.bf16.mxu0 0
      %407 = vmatpush1.bf16.msra.mxu0 %v385
      %408 = vmatprep.subr.bf16.mxu0 0
      %409 = vmatpush1.bf16.msra.mxu0 %v386
      %410 = vmatprep.subr.bf16.mxu0 0
      %411 = vmatpush1.bf16.msra.mxu0 %v387
      %412 = vmatprep.subr.bf16.mxu0 0
      %413 = vmatpush1.bf16.msra.mxu0 0
      %414 = vmatprep.subr.bf16.mxu0 0
      %415 = vmatpush1.bf16.msra.mxu0 0
      %416 = vmatprep.subr.bf16.mxu0 0
      %417 = vmatpush1.bf16.msra.mxu0 0
      %418 = vmatprep.subr.bf16.mxu0 0
      %419 = vmatpush1.bf16.msra.mxu0 0
      %420 = vmatprep.subr.bf16.mxu0 0
      %421 = vmatpush1.bf16.msra.mxu0 0
      %422 = vmatprep.subr.bf16.mxu0 0
      %423 = vmatpush1.bf16.msra.mxu0 0
      %424 = vmatprep.subr.bf16.mxu0 0
      %425 = vmatpush1.bf16.msra.mxu0 0
      %426 = vmatprep.subr.bf16.mxu0 0
      %427 = vmatpush1.bf16.msra.mxu0 0
      %428 = vmatprep.mubr.bf16.mxu0 0
      %429 = vmatmul.mubr.bf16.gmra.mrb[0].mxu0 %v344
      %v430 = vpop.f32.mrb[0].mxu0
      %v431 = vadd.f32 0.0, %v430
      %v432 = vpop.f32.mrb[0].mxu0
      %v433 = vpop.f32.mrb[0].mxu0
      %v434 = vadd.f32 0.0, %v433
      %v435 = vpop.f32.mrb[0].mxu0
      %436 = vmatprep.mubr.bf16.mxu0 0
      %437 = vmatmul.mubr.bf16.gmra.mrb[0].mxu0 %v345
      %v438 = vpop.f32.mrb[0].mxu0
      %v439 = vadd.f32 0.0, %v438
      %v440 = vpop.f32.mrb[0].mxu0
      %v441 = vpop.f32.mrb[0].mxu0
      %v442 = vadd.f32 0.0, %v441
      %v443 = vpop.f32.mrb[0].mxu0
      %444 = vmatprep.mubr.bf16.mxu0 0
      %445 = vmatmul.mubr.bf16.gmra.mrb[0].mxu0 %v346
      %v446 = vpop.f32.mrb[0].mxu0
      %v447 = vadd.f32 0.0, %v446
      %v448 = vpop.f32.mrb[0].mxu0
      %v449 = vpop.f32.mrb[0].mxu0
      %v450 = vadd.f32 0.0, %v449
      %v451 = vpop.f32.mrb[0].mxu0
      %452 = vmatprep.mubr.bf16.mxu0 0
      %453 = vmatmul.mubr.bf16.gmra.mrb[0].mxu0 %v347
      %v454 = vpop.f32.mrb[0].mxu0
      %v455 = vadd.f32 0.0, %v454
      %v456 = vpop.f32.mrb[0].mxu0
      %v457 = vpop.f32.mrb[0].mxu0
      %v458 = vadd.f32 0.0, %v457
      %v459 = vpop.f32.mrb[0].mxu0
      %460 = vdwg.mxu0
      %v477 = vunpack.c.l.b16 %v258
      %v478 = vunpack.c.l.b16 %v259
      %v479 = vunpack.c.l.b16 %v260
      %v480 = vunpack.c.l.b16 %v261
      %v481 = vunpack.c.l.b16 %v262
      %v482 = vunpack.c.l.b16 %v263
      %v483 = vunpack.c.l.b16 %v264
      %v484 = vunpack.c.l.b16 %v265
      %v485 = vunpack.c.l.b16 %v266
      %v486 = vunpack.c.l.b16 %v267
      %v487 = vunpack.c.l.b16 %v268
      %v488 = vunpack.c.l.b16 %v269
      %v489 = vunpack.c.l.b16 %v270
      %v490 = vunpack.c.l.b16 %v271
      %v491 = vunpack.c.l.b16 %v272
      %v492 = vunpack.c.l.b16 %v273
      %v493 = vpack.c.b16 %v478, %v477
      %v494 = vpack.c.b16 %v480, %v479
      %v495 = vpack.c.b16 %v482, %v481
      %v496 = vpack.c.b16 %v484, %v483
      %v497 = vpack.c.b16 %v486, %v485
      %v498 = vpack.c.b16 %v488, %v487
      %v499 = vpack.c.b16 %v490, %v489
      %v500 = vpack.c.b16 %v492, %v491
      %509 = vmatprep.subr.bf16.mxu0 0
      %510 = vmatpush1.bf16.msra.mxu0 %v493
      %511 = vmatprep.subr.bf16.mxu0 0
      %512 = vmatpush1.bf16.msra.mxu0 %v494
      %513 = vmatprep.subr.bf16.mxu0 0
      %514 = vmatpush1.bf16.msra.mxu0 %v495
      %515 = vmatprep.subr.bf16.mxu0 0
      %516 = vmatpush1.bf16.msra.mxu0 %v496
      %517 = vmatprep.subr.bf16.mxu0 0
      %518 = vmatpush1.bf16.msra.mxu0 %v497
      %519 = vmatprep.subr.bf16.mxu0 0
      %520 = vmatpush1.bf16.msra.mxu0 %v498
      %521 = vmatprep.subr.bf16.mxu0 0
      %522 = vmatpush1.bf16.msra.mxu0 %v499
      %523 = vmatprep.subr.bf16.mxu0 0
      %524 = vmatpush1.bf16.msra.mxu0 %v500
      %525 = vmatprep.subr.bf16.mxu0 0
      %526 = vmatpush1.bf16.msra.mxu0 0
      %527 = vmatprep.subr.bf16.mxu0 0
      %528 = vmatpush1.bf16.msra.mxu0 0
      %529 = vmatprep.subr.bf16.mxu0 0
      %530 = vmatpush1.bf16.msra.mxu0 0
      %531 = vmatprep.subr.bf16.mxu0 0
      %532 = vmatpush1.bf16.msra.mxu0 0
      %533 = vmatprep.subr.bf16.mxu0 0
      %534 = vmatpush1.bf16.msra.mxu0 0
      %535 = vmatprep.subr.bf16.mxu0 0
      %536 = vmatpush1.bf16.msra.mxu0 0
      %537 = vmatprep.subr.bf16.mxu0 0
      %538 = vmatpush1.bf16.msra.mxu0 0
      %539 = vmatprep.subr.bf16.mxu0 0
      %540 = vmatpush1.bf16.msra.mxu0 0
      %541 = vmatprep.mubr.bf16.mxu0 0
      %542 = vmatmul.mubr.bf16.gmra.mrb[0].mxu0 %v274
      %v543 = vpop.f32.mrb[0].mxu0
      %v544 = vadd.f32 %v431, %v543
      %v545 = vpop.f32.mrb[0].mxu0
      %v546 = vpop.f32.mrb[0].mxu0
      %v547 = vadd.f32 %v434, %v546
      %v548 = vpop.f32.mrb[0].mxu0
      %549 = vmatprep.mubr.bf16.mxu0 0
      %550 = vmatmul.mubr.bf16.gmra.mrb[0].mxu0 %v275
      %v551 = vpop.f32.mrb[0].mxu0
      %v552 = vadd.f32 %v439, %v551
      %v553 = vpop.f32.mrb[0].mxu0
      %v554 = vpop.f32.mrb[0].mxu0
      %v555 = vadd.f32 %v442, %v554
      %v556 = vpop.f32.mrb[0].mxu0
      %557 = vmatprep.mubr.bf16.mxu0 0
      %558 = vmatmul.mubr.bf16.gmra.mrb[0].mxu0 %v276
      %v559 = vpop.f32.mrb[0].mxu0
      %v560 = vadd.f32 %v447, %v559
      %v561 = vpop.f32.mrb[0].mxu0
      %v562 = vpop.f32.mrb[0].mxu0
      %v563 = vadd.f32 %v450, %v562
      %v564 = vpop.f32.mrb[0].mxu0
      %565 = vmatprep.mubr.bf16.mxu0 0
      %566 = vmatmul.mubr.bf16.gmra.mrb[0].mxu0 %v277
      %v567 = vpop.f32.mrb[0].mxu0
      %v568 = vadd.f32 %v455, %v567
      %v569 = vpop.f32.mrb[0].mxu0
      %v570 = vpop.f32.mrb[0].mxu0
      %v571 = vadd.f32 %v458, %v570
      %v572 = vpop.f32.mrb[0].mxu0
      %573 = vdwg.mxu0
      %vm574 = vcmask 1045504
      %v575 = vrot.slane %v238, 2
      %v576 = vrot.slane %v239, 2
      %v577 = vsel %vm574, %v575, %v576
      %v578 = vrot.slane %v240, 2
      %v579 = vrot.slane %v241, 2
      %v580 = vsel %vm574, %v578, %v579
      %v581 = vrot.slane %v242, 2
      %v582 = vrot.slane %v243, 2
      %v583 = vsel %vm574, %v581, %v582
      %v584 = vrot.slane %v244, 2
      %v585 = vrot.slane %v245, 2
      %v586 = vsel %vm574, %v584, %v585
      %v587 = vrot.slane %v246, 2
      %v588 = vrot.slane %v247, 2
      %v589 = vsel %vm574, %v587, %v588
      %v590 = vrot.slane %v248, 2
      %v591 = vrot.slane %v249, 2
      %v592 = vsel %vm574, %v590, %v591
      %v593 = vrot.slane %v250, 2
      %v594 = vrot.slane %v251, 2
      %v595 = vsel %vm574, %v593, %v594
      %v596 = vrot.slane %v252, 2
      %v597 = vrot.slane %v253, 2
      %v598 = vsel %vm574, %v596, %v597
      %s607 = scalar_lea.vmem %s1, 128
      %v608 = vld [vmem:[%s607] sm:$0xf]
      %v609 = vld [vmem:[%s607 + $0x4] sm:$0xf]
      %v610 = vld [vmem:[%s607 + $0x8] sm:$0xf]
      %v611 = vld [vmem:[%s607 + $0xc] sm:$0xf]
      %v612 = vld [vmem:[%s607 + $0x10] sm:$0xf]
      %v613 = vld [vmem:[%s607 + $0x14] sm:$0xf]
      %v614 = vld [vmem:[%s607 + $0x18] sm:$0xf]
      %v615 = vld [vmem:[%s607 + $0x1c] sm:$0xf]
      %v616 = vld [vmem:[%s607 + $0x20] sm:$0xf]
      %v617 = vld [vmem:[%s607 + $0x24] sm:$0xf]
      %v618 = vld [vmem:[%s607 + $0x28] sm:$0xf]
      %v619 = vld [vmem:[%s607 + $0x2c] sm:$0xf]
      %v620 = vld [vmem:[%s607 + $0x30] sm:$0xf]
      %v621 = vld [vmem:[%s607 + $0x34] sm:$0xf]
      %v622 = vld [vmem:[%s607 + $0x38] sm:$0xf]
      %v623 = vld [vmem:[%s607 + $0x3c] sm:$0xf]
      %v624 = vpack.c.bf16 %v580, %v577
      %v625 = vpack.c.bf16 %v586, %v583
      %v626 = vpack.c.bf16 %v592, %v589
      %v627 = vpack.c.bf16 %v598, %v595
      %v644 = vunpack.c.l.b16 %v608
      %v645 = vunpack.c.l.b16 %v609
      %v646 = vunpack.c.l.b16 %v610
      %v647 = vunpack.c.l.b16 %v611
      %v648 = vunpack.c.l.b16 %v612
      %v649 = vunpack.c.l.b16 %v613
      %v650 = vunpack.c.l.b16 %v614
      %v651 = vunpack.c.l.b16 %v615
      %v652 = vunpack.c.l.b16 %v616
      %v653 = vunpack.c.l.b16 %v617
      %v654 = vunpack.c.l.b16 %v618
      %v655 = vunpack.c.l.b16 %v619
      %v656 = vunpack.c.l.b16 %v620
      %v657 = vunpack.c.l.b16 %v621
      %v658 = vunpack.c.l.b16 %v622
      %v659 = vunpack.c.l.b16 %v623
      %v660 = vpack.c.b16 %v645, %v644
      %v661 = vpack.c.b16 %v647, %v646
      %v662 = vpack.c.b16 %v649, %v648
      %v663 = vpack.c.b16 %v651, %v650
      %v664 = vpack.c.b16 %v653, %v652
      %v665 = vpack.c.b16 %v655, %v654
      %v666 = vpack.c.b16 %v657, %v656
      %v667 = vpack.c.b16 %v659, %v658
      %676 = vmatprep.subr.bf16.mxu0 0
      %677 = vmatpush1.bf16.msra.mxu0 %v660
      %678 = vmatprep.subr.bf16.mxu0 0
      %679 = vmatpush1.bf16.msra.mxu0 %v661
      %680 = vmatprep.subr.bf16.mxu0 0
      %681 = vmatpush1.bf16.msra.mxu0 %v662
      %682 = vmatprep.subr.bf16.mxu0 0
      %683 = vmatpush1.bf16.msra.mxu0 %v663
      %684 = vmatprep.subr.bf16.mxu0 0
      %685 = vmatpush1.bf16.msra.mxu0 %v664
      %686 = vmatprep.subr.bf16.mxu0 0
      %687 = vmatpush1.bf16.msra.mxu0 %v665
      %688 = vmatprep.subr.bf16.mxu0 0
      %689 = vmatpush1.bf16.msra.mxu0 %v666
      %690 = vmatprep.subr.bf16.mxu0 0
      %691 = vmatpush1.bf16.msra.mxu0 %v667
      %692 = vmatprep.subr.bf16.mxu0 0
      %693 = vmatpush1.bf16.msra.mxu0 0
      %694 = vmatprep.subr.bf16.mxu0 0
      %695 = vmatpush1.bf16.msra.mxu0 0
      %696 = vmatprep.subr.bf16.mxu0 0
      %697 = vmatpush1.bf16.msra.mxu0 0
      %698 = vmatprep.subr.bf16.mxu0 0
      %699 = vmatpush1.bf16.msra.mxu0 0
      %700 = vmatprep.subr.bf16.mxu0 0
      %701 = vmatpush1.bf16.msra.mxu0 0
      %702 = vmatprep.subr.bf16.mxu0 0
      %703 = vmatpush1.bf16.msra.mxu0 0
      %704 = vmatprep.subr.bf16.mxu0 0
      %705 = vmatpush1.bf16.msra.mxu0 0
      %706 = vmatprep.subr.bf16.mxu0 0
      %707 = vmatpush1.bf16.msra.mxu0 0
      %708 = vmatprep.mubr.bf16.mxu0 0
      %709 = vmatmul.mubr.bf16.gmra.mrb[0].mxu0 %v624
      %v710 = vpop.f32.mrb[0].mxu0
      %v711 = vadd.f32 0.0, %v710
      %v712 = vpop.f32.mrb[0].mxu0
      %v713 = vpop.f32.mrb[0].mxu0
      %v714 = vadd.f32 0.0, %v713
      %v715 = vpop.f32.mrb[0].mxu0
      %716 = vmatprep.mubr.bf16.mxu0 0
      %717 = vmatmul.mubr.bf16.gmra.mrb[0].mxu0 %v625
      %v718 = vpop.f32.mrb[0].mxu0
      %v719 = vadd.f32 0.0, %v718
      %v720 = vpop.f32.mrb[0].mxu0
      %v721 = vpop.f32.mrb[0].mxu0
      %v722 = vadd.f32 0.0, %v721
      %v723 = vpop.f32.mrb[0].mxu0
      %724 = vmatprep.mubr.bf16.mxu0 0
      %725 = vmatmul.mubr.bf16.gmra.mrb[0].mxu0 %v626
      %v726 = vpop.f32.mrb[0].mxu0
      %v727 = vadd.f32 0.0, %v726
      %v728 = vpop.f32.mrb[0].mxu0
      %v729 = vpop.f32.mrb[0].mxu0
      %v730 = vadd.f32 0.0, %v729
      %v731 = vpop.f32.mrb[0].mxu0
      %732 = vmatprep.mubr.bf16.mxu0 0
      %733 = vmatmul.mubr.bf16.gmra.mrb[0].mxu0 %v627
      %v734 = vpop.f32.mrb[0].mxu0
      %v735 = vadd.f32 0.0, %v734
      %v736 = vpop.f32.mrb[0].mxu0
      %v737 = vpop.f32.mrb[0].mxu0
      %v738 = vadd.f32 0.0, %v737
      %v739 = vpop.f32.mrb[0].mxu0
      %740 = vdwg.mxu0
      %v741 = vadd.f32 %v544, %v711
      %v742 = vadd.f32 %v547, %v714
      %v743 = vadd.f32 %v552, %v719
      %v744 = vadd.f32 %v555, %v722
      %v745 = vadd.f32 %v560, %v727
      %v746 = vadd.f32 %v563, %v730
      %v747 = vadd.f32 %v568, %v735
      %v748 = vadd.f32 %v571, %v738
      %s749 = scalar_lea.vmem %s1, 192
      %v750 = vld [vmem:[%s749] sm:$0xf]
      %v751 = vld [vmem:[%s749 + $0x4] sm:$0xf]
      %v752 = vld [vmem:[%s749 + $0x8] sm:$0xf]
      %v753 = vld [vmem:[%s749 + $0xc] sm:$0xf]
      %v754 = vld [vmem:[%s749 + $0x10] sm:$0xf]
      %v755 = vld [vmem:[%s749 + $0x14] sm:$0xf]
      %v756 = vld [vmem:[%s749 + $0x18] sm:$0xf]
      %v757 = vld [vmem:[%s749 + $0x1c] sm:$0xf]
      %v758 = vld [vmem:[%s749 + $0x20] sm:$0xf]
      %v759 = vld [vmem:[%s749 + $0x24] sm:$0xf]
      %v760 = vld [vmem:[%s749 + $0x28] sm:$0xf]
      %v761 = vld [vmem:[%s749 + $0x2c] sm:$0xf]
      %v762 = vld [vmem:[%s749 + $0x30] sm:$0xf]
      %v763 = vld [vmem:[%s749 + $0x34] sm:$0xf]
      %v764 = vld [vmem:[%s749 + $0x38] sm:$0xf]
      %v765 = vld [vmem:[%s749 + $0x3c] sm:$0xf]
      %v766 = vpack.c.bf16 %v242, %v240
      %v767 = vpack.c.bf16 %v246, %v244
      %v768 = vpack.c.bf16 %v250, %v248
      %v769 = vpack.c.bf16 %v254, %v252
      %v786 = vunpack.c.l.b16 %v750
      %v787 = vunpack.c.l.b16 %v751
      %v788 = vunpack.c.l.b16 %v752
      %v789 = vunpack.c.l.b16 %v753
      %v790 = vunpack.c.l.b16 %v754
      %v791 = vunpack.c.l.b16 %v755
      %v792 = vunpack.c.l.b16 %v756
      %v793 = vunpack.c.l.b16 %v757
      %v794 = vunpack.c.l.b16 %v758
      %v795 = vunpack.c.l.b16 %v759
      %v796 = vunpack.c.l.b16 %v760
      %v797 = vunpack.c.l.b16 %v761
      %v798 = vunpack.c.l.b16 %v762
      %v799 = vunpack.c.l.b16 %v763
      %v800 = vunpack.c.l.b16 %v764
      %v801 = vunpack.c.l.b16 %v765
      %v802 = vpack.c.b16 %v787, %v786
      %v803 = vpack.c.b16 %v789, %v788
      %v804 = vpack.c.b16 %v791, %v790
      %v805 = vpack.c.b16 %v793, %v792
      %v806 = vpack.c.b16 %v795, %v794
      %v807 = vpack.c.b16 %v797, %v796
      %v808 = vpack.c.b16 %v799, %v798
      %v809 = vpack.c.b16 %v801, %v800
      %818 = vmatprep.subr.bf16.mxu0 0
      %819 = vmatpush1.bf16.msra.mxu0 %v802
      %820 = vmatprep.subr.bf16.mxu0 0
      %821 = vmatpush1.bf16.msra.mxu0 %v803
      %822 = vmatprep.subr.bf16.mxu0 0
      %823 = vmatpush1.bf16.msra.mxu0 %v804
      %824 = vmatprep.subr.bf16.mxu0 0
      %825 = vmatpush1.bf16.msra.mxu0 %v805
      %826 = vmatprep.subr.bf16.mxu0 0
      %827 = vmatpush1.bf16.msra.mxu0 %v806
      %828 = vmatprep.subr.bf16.mxu0 0
      %829 = vmatpush1.bf16.msra.mxu0 %v807
      %830 = vmatprep.subr.bf16.mxu0 0
      %831 = vmatpush1.bf16.msra.mxu0 %v808
      %832 = vmatprep.subr.bf16.mxu0 0
      %833 = vmatpush1.bf16.msra.mxu0 %v809
      %834 = vmatprep.subr.bf16.mxu0 0
      %835 = vmatpush1.bf16.msra.mxu0 0
      %836 = vmatprep.subr.bf16.mxu0 0
      %837 = vmatpush1.bf16.msra.mxu0 0
      %838 = vmatprep.subr.bf16.mxu0 0
      %839 = vmatpush1.bf16.msra.mxu0 0
      %840 = vmatprep.subr.bf16.mxu0 0
      %841 = vmatpush1.bf16.msra.mxu0 0
      %842 = vmatprep.subr.bf16.mxu0 0
      %843 = vmatpush1.bf16.msra.mxu0 0
      %844 = vmatprep.subr.bf16.mxu0 0
      %845 = vmatpush1.bf16.msra.mxu0 0
      %846 = vmatprep.subr.bf16.mxu0 0
      %847 = vmatpush1.bf16.msra.mxu0 0
      %848 = vmatprep.subr.bf16.mxu0 0
      %849 = vmatpush1.bf16.msra.mxu0 0
      %850 = vmatprep.mubr.bf16.mxu0 0
      %851 = vmatmul.mubr.bf16.gmra.mrb[0].mxu0 %v766
      %v852 = vpop.f32.mrb[0].mxu0
      %v853 = vadd.f32 0.0, %v852
      %v854 = vpop.f32.mrb[0].mxu0
      %v855 = vpop.f32.mrb[0].mxu0
      %v856 = vadd.f32 0.0, %v855
      %v857 = vpop.f32.mrb[0].mxu0
      %858 = vmatprep.mubr.bf16.mxu0 0
      %859 = vmatmul.mubr.bf16.gmra.mrb[0].mxu0 %v767
      %v860 = vpop.f32.mrb[0].mxu0
      %v861 = vadd.f32 0.0, %v860
      %v862 = vpop.f32.mrb[0].mxu0
      %v863 = vpop.f32.mrb[0].mxu0
      %v864 = vadd.f32 0.0, %v863
      %v865 = vpop.f32.mrb[0].mxu0
      %866 = vmatprep.mubr.bf16.mxu0 0
      %867 = vmatmul.mubr.bf16.gmra.mrb[0].mxu0 %v768
      %v868 = vpop.f32.mrb[0].mxu0
      %v869 = vadd.f32 0.0, %v868
      %v870 = vpop.f32.mrb[0].mxu0
      %v871 = vpop.f32.mrb[0].mxu0
      %v872 = vadd.f32 0.0, %v871
      %v873 = vpop.f32.mrb[0].mxu0
      %874 = vmatprep.mubr.bf16.mxu0 0
      %875 = vmatmul.mubr.bf16.gmra.mrb[0].mxu0 %v769
      %v876 = vpop.f32.mrb[0].mxu0
      %v877 = vadd.f32 0.0, %v876
      %v878 = vpop.f32.mrb[0].mxu0
      %v879 = vpop.f32.mrb[0].mxu0
      %v880 = vadd.f32 0.0, %v879
      %v881 = vpop.f32.mrb[0].mxu0
      %882 = vdwg.mxu0
      %v883 = vadd.f32 %v741, %v853
      %v884 = vadd.f32 %v742, %v856
      %v885 = vadd.f32 %v743, %v861
      %v886 = vadd.f32 %v744, %v864
      %v887 = vadd.f32 %v745, %v869
      %v888 = vadd.f32 %v746, %v872
      %v889 = vadd.f32 %v747, %v877
      %v890 = vadd.f32 %v748, %v880
      %v893 = vrot.slane %v254, 1
      %v894 = vrot.slane %v255, 1
      %v895 = vsel %vm294, %v893, %v894
      %s897 = scalar_lea.vmem %s1, 256
      %v898 = vld [vmem:[%s897] sm:$0xf]
      %v899 = vld [vmem:[%s897 + $0x4] sm:$0xf]
      %v900 = vld [vmem:[%s897 + $0x8] sm:$0xf]
      %v901 = vld [vmem:[%s897 + $0xc] sm:$0xf]
      %v902 = vld [vmem:[%s897 + $0x10] sm:$0xf]
      %v903 = vld [vmem:[%s897 + $0x14] sm:$0xf]
      %v904 = vld [vmem:[%s897 + $0x18] sm:$0xf]
      %v905 = vld [vmem:[%s897 + $0x1c] sm:$0xf]
      %v906 = vld [vmem:[%s897 + $0x20] sm:$0xf]
      %v907 = vld [vmem:[%s897 + $0x24] sm:$0xf]
      %v908 = vld [vmem:[%s897 + $0x28] sm:$0xf]
      %v909 = vld [vmem:[%s897 + $0x2c] sm:$0xf]
      %v910 = vld [vmem:[%s897 + $0x30] sm:$0xf]
      %v911 = vld [vmem:[%s897 + $0x34] sm:$0xf]
      %v912 = vld [vmem:[%s897 + $0x38] sm:$0xf]
      %v913 = vld [vmem:[%s897 + $0x3c] sm:$0xf]
      %v914 = vpack.c.bf16 %v303, %v300
      %v915 = vpack.c.bf16 %v309, %v306
      %v916 = vpack.c.bf16 %v315, %v312
      %v917 = vpack.c.bf16 %v895, %v318
      %v934 = vunpack.c.l.b16 %v898
      %v935 = vunpack.c.l.b16 %v899
      %v936 = vunpack.c.l.b16 %v900
      %v937 = vunpack.c.l.b16 %v901
      %v938 = vunpack.c.l.b16 %v902
      %v939 = vunpack.c.l.b16 %v903
      %v940 = vunpack.c.l.b16 %v904
      %v941 = vunpack.c.l.b16 %v905
      %v942 = vunpack.c.l.b16 %v906
      %v943 = vunpack.c.l.b16 %v907
      %v944 = vunpack.c.l.b16 %v908
      %v945 = vunpack.c.l.b16 %v909
      %v946 = vunpack.c.l.b16 %v910
      %v947 = vunpack.c.l.b16 %v911
      %v948 = vunpack.c.l.b16 %v912
      %v949 = vunpack.c.l.b16 %v913
      %v950 = vpack.c.b16 %v935, %v934
      %v951 = vpack.c.b16 %v937, %v936
      %v952 = vpack.c.b16 %v939, %v938
      %v953 = vpack.c.b16 %v941, %v940
      %v954 = vpack.c.b16 %v943, %v942
      %v955 = vpack.c.b16 %v945, %v944
      %v956 = vpack.c.b16 %v947, %v946
      %v957 = vpack.c.b16 %v949, %v948
      %966 = vmatprep.subr.bf16.mxu0 0
      %967 = vmatpush1.bf16.msra.mxu0 %v950
      %968 = vmatprep.subr.bf16.mxu0 0
      %969 = vmatpush1.bf16.msra.mxu0 %v951
      %970 = vmatprep.subr.bf16.mxu0 0
      %971 = vmatpush1.bf16.msra.mxu0 %v952
      %972 = vmatprep.subr.bf16.mxu0 0
      %973 = vmatpush1.bf16.msra.mxu0 %v953
      %974 = vmatprep.subr.bf16.mxu0 0
      %975 = vmatpush1.bf16.msra.mxu0 %v954
      %976 = vmatprep.subr.bf16.mxu0 0
      %977 = vmatpush1.bf16.msra.mxu0 %v955
      %978 = vmatprep.subr.bf16.mxu0 0
      %979 = vmatpush1.bf16.msra.mxu0 %v956
      %980 = vmatprep.subr.bf16.mxu0 0
      %981 = vmatpush1.bf16.msra.mxu0 %v957
      %982 = vmatprep.subr.bf16.mxu0 0
      %983 = vmatpush1.bf16.msra.mxu0 0
      %984 = vmatprep.subr.bf16.mxu0 0
      %985 = vmatpush1.bf16.msra.mxu0 0
      %986 = vmatprep.subr.bf16.mxu0 0
      %987 = vmatpush1.bf16.msra.mxu0 0
      %988 = vmatprep.subr.bf16.mxu0 0
      %989 = vmatpush1.bf16.msra.mxu0 0
      %990 = vmatprep.subr.bf16.mxu0 0
      %991 = vmatpush1.bf16.msra.mxu0 0
      %992 = vmatprep.subr.bf16.mxu0 0
      %993 = vmatpush1.bf16.msra.mxu0 0
      %994 = vmatprep.subr.bf16.mxu0 0
      %995 = vmatpush1.bf16.msra.mxu0 0
      %996 = vmatprep.subr.bf16.mxu0 0
      %997 = vmatpush1.bf16.msra.mxu0 0
      %998 = vmatprep.mubr.bf16.mxu0 0
      %999 = vmatmul.mubr.bf16.gmra.mrb[0].mxu0 %v914
      %v1000 = vpop.f32.mrb[0].mxu0
      %v1001 = vadd.f32 0.0, %v1000
      %v1002 = vpop.f32.mrb[0].mxu0
      %v1003 = vpop.f32.mrb[0].mxu0
      %v1004 = vadd.f32 0.0, %v1003
      %v1005 = vpop.f32.mrb[0].mxu0
      %1006 = vmatprep.mubr.bf16.mxu0 0
      %1007 = vmatmul.mubr.bf16.gmra.mrb[0].mxu0 %v915
      %v1008 = vpop.f32.mrb[0].mxu0
      %v1009 = vadd.f32 0.0, %v1008
      %v1010 = vpop.f32.mrb[0].mxu0
      %v1011 = vpop.f32.mrb[0].mxu0
      %v1012 = vadd.f32 0.0, %v1011
      %v1013 = vpop.f32.mrb[0].mxu0
      %1014 = vmatprep.mubr.bf16.mxu0 0
      %1015 = vmatmul.mubr.bf16.gmra.mrb[0].mxu0 %v916
      %v1016 = vpop.f32.mrb[0].mxu0
      %v1017 = vadd.f32 0.0, %v1016
      %v1018 = vpop.f32.mrb[0].mxu0
      %v1019 = vpop.f32.mrb[0].mxu0
      %v1020 = vadd.f32 0.0, %v1019
      %v1021 = vpop.f32.mrb[0].mxu0
      %1022 = vmatprep.mubr.bf16.mxu0 0
      %1023 = vmatmul.mubr.bf16.gmra.mrb[0].mxu0 %v917
      %v1024 = vpop.f32.mrb[0].mxu0
      %v1025 = vadd.f32 0.0, %v1024
      %v1026 = vpop.f32.mrb[0].mxu0
      %v1027 = vpop.f32.mrb[0].mxu0
      %v1028 = vadd.f32 0.0, %v1027
      %v1029 = vpop.f32.mrb[0].mxu0
      %1030 = vdwg.mxu0
      %v1031 = vadd.f32 %v883, %v1001
      %v1032 = vadd.f32 %v884, %v1004
      %v1033 = vadd.f32 %v885, %v1009
      %v1034 = vadd.f32 %v886, %v1012
      %v1035 = vadd.f32 %v887, %v1017
      %v1036 = vadd.f32 %v888, %v1020
      %v1037 = vadd.f32 %v889, %v1025
      %v1038 = vadd.f32 %v890, %v1028
      %v1039 = vrot.slane %v254, 2
      %v1040 = vrot.slane %v255, 2
      %v1041 = vsel %vm574, %v1039, %v1040
      %s1043 = scalar_lea.vmem %s1, 320
      %v1044 = vld [vmem:[%s1043] sm:$0xf]
      %v1045 = vld [vmem:[%s1043 + $0x4] sm:$0xf]
      %v1046 = vld [vmem:[%s1043 + $0x8] sm:$0xf]
      %v1047 = vld [vmem:[%s1043 + $0xc] sm:$0xf]
      %v1048 = vld [vmem:[%s1043 + $0x10] sm:$0xf]
      %v1049 = vld [vmem:[%s1043 + $0x14] sm:$0xf]
      %v1050 = vld [vmem:[%s1043 + $0x18] sm:$0xf]
      %v1051 = vld [vmem:[%s1043 + $0x1c] sm:$0xf]
      %v1052 = vld [vmem:[%s1043 + $0x20] sm:$0xf]
      %v1053 = vld [vmem:[%s1043 + $0x24] sm:$0xf]
      %v1054 = vld [vmem:[%s1043 + $0x28] sm:$0xf]
      %v1055 = vld [vmem:[%s1043 + $0x2c] sm:$0xf]
      %v1056 = vld [vmem:[%s1043 + $0x30] sm:$0xf]
      %v1057 = vld [vmem:[%s1043 + $0x34] sm:$0xf]
      %v1058 = vld [vmem:[%s1043 + $0x38] sm:$0xf]
      %v1059 = vld [vmem:[%s1043 + $0x3c] sm:$0xf]
      %v1060 = vpack.c.bf16 %v583, %v580
      %v1061 = vpack.c.bf16 %v589, %v586
      %v1062 = vpack.c.bf16 %v595, %v592
      %v1063 = vpack.c.bf16 %v1041, %v598
      %v1080 = vunpack.c.l.b16 %v1044
      %v1081 = vunpack.c.l.b16 %v1045
      %v1082 = vunpack.c.l.b16 %v1046
      %v1083 = vunpack.c.l.b16 %v1047
      %v1084 = vunpack.c.l.b16 %v1048
      %v1085 = vunpack.c.l.b16 %v1049
      %v1086 = vunpack.c.l.b16 %v1050
      %v1087 = vunpack.c.l.b16 %v1051
      %v1088 = vunpack.c.l.b16 %v1052
      %v1089 = vunpack.c.l.b16 %v1053
      %v1090 = vunpack.c.l.b16 %v1054
      %v1091 = vunpack.c.l.b16 %v1055
      %v1092 = vunpack.c.l.b16 %v1056
      %v1093 = vunpack.c.l.b16 %v1057
      %v1094 = vunpack.c.l.b16 %v1058
      %v1095 = vunpack.c.l.b16 %v1059
      %v1096 = vpack.c.b16 %v1081, %v1080
      %v1097 = vpack.c.b16 %v1083, %v1082
      %v1098 = vpack.c.b16 %v1085, %v1084
      %v1099 = vpack.c.b16 %v1087, %v1086
      %v1100 = vpack.c.b16 %v1089, %v1088
      %v1101 = vpack.c.b16 %v1091, %v1090
      %v1102 = vpack.c.b16 %v1093, %v1092
      %v1103 = vpack.c.b16 %v1095, %v1094
      %1112 = vmatprep.subr.bf16.mxu0 0
      %1113 = vmatpush1.bf16.msra.mxu0 %v1096
      %1114 = vmatprep.subr.bf16.mxu0 0
      %1115 = vmatpush1.bf16.msra.mxu0 %v1097
      %1116 = vmatprep.subr.bf16.mxu0 0
      %1117 = vmatpush1.bf16.msra.mxu0 %v1098
      %1118 = vmatprep.subr.bf16.mxu0 0
      %1119 = vmatpush1.bf16.msra.mxu0 %v1099
      %1120 = vmatprep.subr.bf16.mxu0 0
      %1121 = vmatpush1.bf16.msra.mxu0 %v1100
      %1122 = vmatprep.subr.bf16.mxu0 0
      %1123 = vmatpush1.bf16.msra.mxu0 %v1101
      %1124 = vmatprep.subr.bf16.mxu0 0
      %1125 = vmatpush1.bf16.msra.mxu0 %v1102
      %1126 = vmatprep.subr.bf16.mxu0 0
      %1127 = vmatpush1.bf16.msra.mxu0 %v1103
      %1128 = vmatprep.subr.bf16.mxu0 0
      %1129 = vmatpush1.bf16.msra.mxu0 0
      %1130 = vmatprep.subr.bf16.mxu0 0
      %1131 = vmatpush1.bf16.msra.mxu0 0
      %1132 = vmatprep.subr.bf16.mxu0 0
      %1133 = vmatpush1.bf16.msra.mxu0 0
      %1134 = vmatprep.subr.bf16.mxu0 0
      %1135 = vmatpush1.bf16.msra.mxu0 0
      %1136 = vmatprep.subr.bf16.mxu0 0
      %1137 = vmatpush1.bf16.msra.mxu0 0
      %1138 = vmatprep.subr.bf16.mxu0 0
      %1139 = vmatpush1.bf16.msra.mxu0 0
      %1140 = vmatprep.subr.bf16.mxu0 0
      %1141 = vmatpush1.bf16.msra.mxu0 0
      %1142 = vmatprep.subr.bf16.mxu0 0
      %1143 = vmatpush1.bf16.msra.mxu0 0
      %1144 = vmatprep.mubr.bf16.mxu0 0
      %1145 = vmatmul.mubr.bf16.gmra.mrb[0].mxu0 %v1060
      %v1146 = vpop.f32.mrb[0].mxu0
      %v1147 = vadd.f32 0.0, %v1146
      %v1148 = vpop.f32.mrb[0].mxu0
      %v1149 = vpop.f32.mrb[0].mxu0
      %v1150 = vadd.f32 0.0, %v1149
      %v1151 = vpop.f32.mrb[0].mxu0
      %1152 = vmatprep.mubr.bf16.mxu0 0
      %1153 = vmatmul.mubr.bf16.gmra.mrb[0].mxu0 %v1061
      %v1154 = vpop.f32.mrb[0].mxu0
      %v1155 = vadd.f32 0.0, %v1154
      %v1156 = vpop.f32.mrb[0].mxu0
      %v1157 = vpop.f32.mrb[0].mxu0
      %v1158 = vadd.f32 0.0, %v1157
      %v1159 = vpop.f32.mrb[0].mxu0
      %1160 = vmatprep.mubr.bf16.mxu0 0
      %1161 = vmatmul.mubr.bf16.gmra.mrb[0].mxu0 %v1062
      %v1162 = vpop.f32.mrb[0].mxu0
      %v1163 = vadd.f32 0.0, %v1162
      %v1164 = vpop.f32.mrb[0].mxu0
      %v1165 = vpop.f32.mrb[0].mxu0
      %v1166 = vadd.f32 0.0, %v1165
      %v1167 = vpop.f32.mrb[0].mxu0
      %1168 = vmatprep.mubr.bf16.mxu0 0
      %1169 = vmatmul.mubr.bf16.gmra.mrb[0].mxu0 %v1063
      %v1170 = vpop.f32.mrb[0].mxu0
      %v1171 = vadd.f32 0.0, %v1170
      %v1172 = vpop.f32.mrb[0].mxu0
      %v1173 = vpop.f32.mrb[0].mxu0
      %v1174 = vadd.f32 0.0, %v1173
      %v1175 = vpop.f32.mrb[0].mxu0
      %1176 = vdwg.mxu0
      %v1177 = vadd.f32 %v1031, %v1147
      %v1178 = vadd.f32 %v1032, %v1150
      %v1179 = vadd.f32 %v1033, %v1155
      %v1180 = vadd.f32 %v1034, %v1158
      %v1181 = vadd.f32 %v1035, %v1163
      %v1182 = vadd.f32 %v1036, %v1166
      %v1183 = vadd.f32 %v1037, %v1171
      %v1184 = vadd.f32 %v1038, %v1174
      %s1185 = scalar_lea.vmem %s1, 384
      %v1186 = vld [vmem:[%s1185] sm:$0xf]
      %v1187 = vld [vmem:[%s1185 + $0x4] sm:$0xf]
      %v1188 = vld [vmem:[%s1185 + $0x8] sm:$0xf]
      %v1189 = vld [vmem:[%s1185 + $0xc] sm:$0xf]
      %v1190 = vld [vmem:[%s1185 + $0x10] sm:$0xf]
      %v1191 = vld [vmem:[%s1185 + $0x14] sm:$0xf]
      %v1192 = vld [vmem:[%s1185 + $0x18] sm:$0xf]
      %v1193 = vld [vmem:[%s1185 + $0x1c] sm:$0xf]
      %v1194 = vld [vmem:[%s1185 + $0x20] sm:$0xf]
      %v1195 = vld [vmem:[%s1185 + $0x24] sm:$0xf]
      %v1196 = vld [vmem:[%s1185 + $0x28] sm:$0xf]
      %v1197 = vld [vmem:[%s1185 + $0x2c] sm:$0xf]
      %v1198 = vld [vmem:[%s1185 + $0x30] sm:$0xf]
      %v1199 = vld [vmem:[%s1185 + $0x34] sm:$0xf]
      %v1200 = vld [vmem:[%s1185 + $0x38] sm:$0xf]
      %v1201 = vld [vmem:[%s1185 + $0x3c] sm:$0xf]
      %v1202 = vpack.c.bf16 %v256, %v254
      %v1219 = vunpack.c.l.b16 %v1186
      %v1220 = vunpack.c.l.b16 %v1187
      %v1221 = vunpack.c.l.b16 %v1188
      %v1222 = vunpack.c.l.b16 %v1189
      %v1223 = vunpack.c.l.b16 %v1190
      %v1224 = vunpack.c.l.b16 %v1191
      %v1225 = vunpack.c.l.b16 %v1192
      %v1226 = vunpack.c.l.b16 %v1193
      %v1227 = vunpack.c.l.b16 %v1194
      %v1228 = vunpack.c.l.b16 %v1195
      %v1229 = vunpack.c.l.b16 %v1196
      %v1230 = vunpack.c.l.b16 %v1197
      %v1231 = vunpack.c.l.b16 %v1198
      %v1232 = vunpack.c.l.b16 %v1199
      %v1233 = vunpack.c.l.b16 %v1200
      %v1234 = vunpack.c.l.b16 %v1201
      %v1235 = vpack.c.b16 %v1220, %v1219
      %v1236 = vpack.c.b16 %v1222, %v1221
      %v1237 = vpack.c.b16 %v1224, %v1223
      %v1238 = vpack.c.b16 %v1226, %v1225
      %v1239 = vpack.c.b16 %v1228, %v1227
      %v1240 = vpack.c.b16 %v1230, %v1229
      %v1241 = vpack.c.b16 %v1232, %v1231
      %v1242 = vpack.c.b16 %v1234, %v1233
      %1251 = vmatprep.subr.bf16.mxu0 0
      %1252 = vmatpush1.bf16.msra.mxu0 %v1235
      %1253 = vmatprep.subr.bf16.mxu0 0
      %1254 = vmatpush1.bf16.msra.mxu0 %v1236
      %1255 = vmatprep.subr.bf16.mxu0 0
      %1256 = vmatpush1.bf16.msra.mxu0 %v1237
      %1257 = vmatprep.subr.bf16.mxu0 0
      %1258 = vmatpush1.bf16.msra.mxu0 %v1238
      %1259 = vmatprep.subr.bf16.mxu0 0
      %1260 = vmatpush1.bf16.msra.mxu0 %v1239
      %1261 = vmatprep.subr.bf16.mxu0 0
      %1262 = vmatpush1.bf16.msra.mxu0 %v1240
      %1263 = vmatprep.subr.bf16.mxu0 0
      %1264 = vmatpush1.bf16.msra.mxu0 %v1241
      %1265 = vmatprep.subr.bf16.mxu0 0
      %1266 = vmatpush1.bf16.msra.mxu0 %v1242
      %1267 = vmatprep.subr.bf16.mxu0 0
      %1268 = vmatpush1.bf16.msra.mxu0 0
      %1269 = vmatprep.subr.bf16.mxu0 0
      %1270 = vmatpush1.bf16.msra.mxu0 0
      %1271 = vmatprep.subr.bf16.mxu0 0
      %1272 = vmatpush1.bf16.msra.mxu0 0
      %1273 = vmatprep.subr.bf16.mxu0 0
      %1274 = vmatpush1.bf16.msra.mxu0 0
      %1275 = vmatprep.subr.bf16.mxu0 0
      %1276 = vmatpush1.bf16.msra.mxu0 0
      %1277 = vmatprep.subr.bf16.mxu0 0
      %1278 = vmatpush1.bf16.msra.mxu0 0
      %1279 = vmatprep.subr.bf16.mxu0 0
      %1280 = vmatpush1.bf16.msra.mxu0 0
      %1281 = vmatprep.subr.bf16.mxu0 0
      %1282 = vmatpush1.bf16.msra.mxu0 0
      %1283 = vmatprep.mubr.bf16.mxu0 0
      %1284 = vmatmul.mubr.bf16.gmra.mrb[0].mxu0 %v275
      %v1285 = vpop.f32.mrb[0].mxu0
      %v1286 = vadd.f32 0.0, %v1285
      %v1287 = vpop.f32.mrb[0].mxu0
      %v1288 = vpop.f32.mrb[0].mxu0
      %v1289 = vadd.f32 0.0, %v1288
      %v1290 = vpop.f32.mrb[0].mxu0
      %1291 = vmatprep.mubr.bf16.mxu0 0
      %1292 = vmatmul.mubr.bf16.gmra.mrb[0].mxu0 %v276
      %v1293 = vpop.f32.mrb[0].mxu0
      %v1294 = vadd.f32 0.0, %v1293
      %v1295 = vpop.f32.mrb[0].mxu0
      %v1296 = vpop.f32.mrb[0].mxu0
      %v1297 = vadd.f32 0.0, %v1296
      %v1298 = vpop.f32.mrb[0].mxu0
      %1299 = vmatprep.mubr.bf16.mxu0 0
      %1300 = vmatmul.mubr.bf16.gmra.mrb[0].mxu0 %v277
      %v1301 = vpop.f32.mrb[0].mxu0
      %v1302 = vadd.f32 0.0, %v1301
      %v1303 = vpop.f32.mrb[0].mxu0
      %v1304 = vpop.f32.mrb[0].mxu0
      %v1305 = vadd.f32 0.0, %v1304
      %v1306 = vpop.f32.mrb[0].mxu0
      %1307 = vmatprep.mubr.bf16.mxu0 0
      %1308 = vmatmul.mubr.bf16.gmra.mrb[0].mxu0 %v1202
      %v1309 = vpop.f32.mrb[0].mxu0
      %v1310 = vadd.f32 0.0, %v1309
      %v1311 = vpop.f32.mrb[0].mxu0
      %v1312 = vpop.f32.mrb[0].mxu0
      %v1313 = vadd.f32 0.0, %v1312
      %v1314 = vpop.f32.mrb[0].mxu0
      %1315 = vdwg.mxu0
      %v1316 = vadd.f32 %v1177, %v1286
      %v1317 = vadd.f32 %v1178, %v1289
      %v1318 = vadd.f32 %v1179, %v1294
      %v1319 = vadd.f32 %v1180, %v1297
      %v1320 = vadd.f32 %v1181, %v1302
      %v1321 = vadd.f32 %v1182, %v1305
      %v1322 = vadd.f32 %v1183, %v1310
      %v1323 = vadd.f32 %v1184, %v1313
      %v1326 = vrot.slane %v256, 1
      %v1327 = vrot.slane %v257, 1
      %v1328 = vsel %vm294, %v1326, %v1327
      %s1330 = scalar_lea.vmem %s1, 448
      %v1331 = vld [vmem:[%s1330] sm:$0xf]
      %v1332 = vld [vmem:[%s1330 + $0x4] sm:$0xf]
      %v1333 = vld [vmem:[%s1330 + $0x8] sm:$0xf]
      %v1334 = vld [vmem:[%s1330 + $0xc] sm:$0xf]
      %v1335 = vld [vmem:[%s1330 + $0x10] sm:$0xf]
      %v1336 = vld [vmem:[%s1330 + $0x14] sm:$0xf]
      %v1337 = vld [vmem:[%s1330 + $0x18] sm:$0xf]
      %v1338 = vld [vmem:[%s1330 + $0x1c] sm:$0xf]
      %v1339 = vld [vmem:[%s1330 + $0x20] sm:$0xf]
      %v1340 = vld [vmem:[%s1330 + $0x24] sm:$0xf]
      %v1341 = vld [vmem:[%s1330 + $0x28] sm:$0xf]
      %v1342 = vld [vmem:[%s1330 + $0x2c] sm:$0xf]
      %v1343 = vld [vmem:[%s1330 + $0x30] sm:$0xf]
      %v1344 = vld [vmem:[%s1330 + $0x34] sm:$0xf]
      %v1345 = vld [vmem:[%s1330 + $0x38] sm:$0xf]
      %v1346 = vld [vmem:[%s1330 + $0x3c] sm:$0xf]
      %v1347 = vpack.c.bf16 %v1328, %v895
      %v1364 = vunpack.c.l.b16 %v1331
      %v1365 = vunpack.c.l.b16 %v1332
      %v1366 = vunpack.c.l.b16 %v1333
      %v1367 = vunpack.c.l.b16 %v1334
      %v1368 = vunpack.c.l.b16 %v1335
      %v1369 = vunpack.c.l.b16 %v1336
      %v1370 = vunpack.c.l.b16 %v1337
      %v1371 = vunpack.c.l.b16 %v1338
      %v1372 = vunpack.c.l.b16 %v1339
      %v1373 = vunpack.c.l.b16 %v1340
      %v1374 = vunpack.c.l.b16 %v1341
      %v1375 = vunpack.c.l.b16 %v1342
      %v1376 = vunpack.c.l.b16 %v1343
      %v1377 = vunpack.c.l.b16 %v1344
      %v1378 = vunpack.c.l.b16 %v1345
      %v1379 = vunpack.c.l.b16 %v1346
      %v1380 = vpack.c.b16 %v1365, %v1364
      %v1381 = vpack.c.b16 %v1367, %v1366
      %v1382 = vpack.c.b16 %v1369, %v1368
      %v1383 = vpack.c.b16 %v1371, %v1370
      %v1384 = vpack.c.b16 %v1373, %v1372
      %v1385 = vpack.c.b16 %v1375, %v1374
      %v1386 = vpack.c.b16 %v1377, %v1376
      %v1387 = vpack.c.b16 %v1379, %v1378
      %1396 = vmatprep.subr.bf16.mxu0 0
      %1397 = vmatpush1.bf16.msra.mxu0 %v1380
      %1398 = vmatprep.subr.bf16.mxu0 0
      %1399 = vmatpush1.bf16.msra.mxu0 %v1381
      %1400 = vmatprep.subr.bf16.mxu0 0
      %1401 = vmatpush1.bf16.msra.mxu0 %v1382
      %1402 = vmatprep.subr.bf16.mxu0 0
      %1403 = vmatpush1.bf16.msra.mxu0 %v1383
      %1404 = vmatprep.subr.bf16.mxu0 0
      %1405 = vmatpush1.bf16.msra.mxu0 %v1384
      %1406 = vmatprep.subr.bf16.mxu0 0
      %1407 = vmatpush1.bf16.msra.mxu0 %v1385
      %1408 = vmatprep.subr.bf16.mxu0 0
      %1409 = vmatpush1.bf16.msra.mxu0 %v1386
      %1410 = vmatprep.subr.bf16.mxu0 0
      %1411 = vmatpush1.bf16.msra.mxu0 %v1387
      %1412 = vmatprep.subr.bf16.mxu0 0
      %1413 = vmatpush1.bf16.msra.mxu0 0
      %1414 = vmatprep.subr.bf16.mxu0 0
      %1415 = vmatpush1.bf16.msra.mxu0 0
      %1416 = vmatprep.subr.bf16.mxu0 0
      %1417 = vmatpush1.bf16.msra.mxu0 0
      %1418 = vmatprep.subr.bf16.mxu0 0
      %1419 = vmatpush1.bf16.msra.mxu0 0
      %1420 = vmatprep.subr.bf16.mxu0 0
      %1421 = vmatpush1.bf16.msra.mxu0 0
      %1422 = vmatprep.subr.bf16.mxu0 0
      %1423 = vmatpush1.bf16.msra.mxu0 0
      %1424 = vmatprep.subr.bf16.mxu0 0
      %1425 = vmatpush1.bf16.msra.mxu0 0
      %1426 = vmatprep.subr.bf16.mxu0 0
      %1427 = vmatpush1.bf16.msra.mxu0 0
      %1428 = vmatprep.mubr.bf16.mxu0 0
      %1429 = vmatmul.mubr.bf16.gmra.mrb[0].mxu0 %v345
      %v1430 = vpop.f32.mrb[0].mxu0
      %v1431 = vadd.f32 0.0, %v1430
      %v1432 = vpop.f32.mrb[0].mxu0
      %v1433 = vpop.f32.mrb[0].mxu0
      %v1434 = vadd.f32 0.0, %v1433
      %v1435 = vpop.f32.mrb[0].mxu0
      %1436 = vmatprep.mubr.bf16.mxu0 0
      %1437 = vmatmul.mubr.bf16.gmra.mrb[0].mxu0 %v346
      %v1438 = vpop.f32.mrb[0].mxu0
      %v1439 = vadd.f32 0.0, %v1438
      %v1440 = vpop.f32.mrb[0].mxu0
      %v1441 = vpop.f32.mrb[0].mxu0
      %v1442 = vadd.f32 0.0, %v1441
      %v1443 = vpop.f32.mrb[0].mxu0
      %1444 = vmatprep.mubr.bf16.mxu0 0
      %1445 = vmatmul.mubr.bf16.gmra.mrb[0].mxu0 %v347
      %v1446 = vpop.f32.mrb[0].mxu0
      %v1447 = vadd.f32 0.0, %v1446
      %v1448 = vpop.f32.mrb[0].mxu0
      %v1449 = vpop.f32.mrb[0].mxu0
      %v1450 = vadd.f32 0.0, %v1449
      %v1451 = vpop.f32.mrb[0].mxu0
      %1452 = vmatprep.mubr.bf16.mxu0 0
      %1453 = vmatmul.mubr.bf16.gmra.mrb[0].mxu0 %v1347
      %v1454 = vpop.f32.mrb[0].mxu0
      %v1455 = vadd.f32 0.0, %v1454
      %v1456 = vpop.f32.mrb[0].mxu0
      %v1457 = vpop.f32.mrb[0].mxu0
      %v1458 = vadd.f32 0.0, %v1457
      %v1459 = vpop.f32.mrb[0].mxu0
      %1460 = vdwg.mxu0
      %v1461 = vadd.f32 %v1316, %v1431
      %v1462 = vadd.f32 %v1317, %v1434
      %v1463 = vadd.f32 %v1318, %v1439
      %v1464 = vadd.f32 %v1319, %v1442
      %v1465 = vadd.f32 %v1320, %v1447
      %v1466 = vadd.f32 %v1321, %v1450
      %v1467 = vadd.f32 %v1322, %v1455
      %v1468 = vadd.f32 %v1323, %v1458
      %v1469 = vrot.slane %v256, 2
      %v1470 = vrot.slane %v257, 2
      %v1471 = vsel %vm574, %v1469, %v1470
      %s1473 = scalar_lea.vmem %s1, 512
      %v1474 = vld [vmem:[%s1473] sm:$0xf]
      %v1475 = vld [vmem:[%s1473 + $0x4] sm:$0xf]
      %v1476 = vld [vmem:[%s1473 + $0x8] sm:$0xf]
      %v1477 = vld [vmem:[%s1473 + $0xc] sm:$0xf]
      %v1478 = vld [vmem:[%s1473 + $0x10] sm:$0xf]
      %v1479 = vld [vmem:[%s1473 + $0x14] sm:$0xf]
      %v1480 = vld [vmem:[%s1473 + $0x18] sm:$0xf]
      %v1481 = vld [vmem:[%s1473 + $0x1c] sm:$0xf]
      %v1482 = vld [vmem:[%s1473 + $0x20] sm:$0xf]
      %v1483 = vld [vmem:[%s1473 + $0x24] sm:$0xf]
      %v1484 = vld [vmem:[%s1473 + $0x28] sm:$0xf]
      %v1485 = vld [vmem:[%s1473 + $0x2c] sm:$0xf]
      %v1486 = vld [vmem:[%s1473 + $0x30] sm:$0xf]
      %v1487 = vld [vmem:[%s1473 + $0x34] sm:$0xf]
      %v1488 = vld [vmem:[%s1473 + $0x38] sm:$0xf]
      %v1489 = vld [vmem:[%s1473 + $0x3c] sm:$0xf]
      %v1490 = vpack.c.bf16 %v1471, %v1041
      %v1507 = vunpack.c.l.b16 %v1474
      %v1508 = vunpack.c.l.b16 %v1475
      %v1509 = vunpack.c.l.b16 %v1476
      %v1510 = vunpack.c.l.b16 %v1477
      %v1511 = vunpack.c.l.b16 %v1478
      %v1512 = vunpack.c.l.b16 %v1479
      %v1513 = vunpack.c.l.b16 %v1480
      %v1514 = vunpack.c.l.b16 %v1481
      %v1515 = vunpack.c.l.b16 %v1482
      %v1516 = vunpack.c.l.b16 %v1483
      %v1517 = vunpack.c.l.b16 %v1484
      %v1518 = vunpack.c.l.b16 %v1485
      %v1519 = vunpack.c.l.b16 %v1486
      %v1520 = vunpack.c.l.b16 %v1487
      %v1521 = vunpack.c.l.b16 %v1488
      %v1522 = vunpack.c.l.b16 %v1489
      %v1523 = vpack.c.b16 %v1508, %v1507
      %v1524 = vpack.c.b16 %v1510, %v1509
      %v1525 = vpack.c.b16 %v1512, %v1511
      %v1526 = vpack.c.b16 %v1514, %v1513
      %v1527 = vpack.c.b16 %v1516, %v1515
      %v1528 = vpack.c.b16 %v1518, %v1517
      %v1529 = vpack.c.b16 %v1520, %v1519
      %v1530 = vpack.c.b16 %v1522, %v1521
      %1539 = vmatprep.subr.bf16.mxu0 0
      %1540 = vmatpush1.bf16.msra.mxu0 %v1523
      %1541 = vmatprep.subr.bf16.mxu0 0
      %1542 = vmatpush1.bf16.msra.mxu0 %v1524
      %1543 = vmatprep.subr.bf16.mxu0 0
      %1544 = vmatpush1.bf16.msra.mxu0 %v1525
      %1545 = vmatprep.subr.bf16.mxu0 0
      %1546 = vmatpush1.bf16.msra.mxu0 %v1526
      %1547 = vmatprep.subr.bf16.mxu0 0
      %1548 = vmatpush1.bf16.msra.mxu0 %v1527
      %1549 = vmatprep.subr.bf16.mxu0 0
      %1550 = vmatpush1.bf16.msra.mxu0 %v1528
      %1551 = vmatprep.subr.bf16.mxu0 0
      %1552 = vmatpush1.bf16.msra.mxu0 %v1529
      %1553 = vmatprep.subr.bf16.mxu0 0
      %1554 = vmatpush1.bf16.msra.mxu0 %v1530
      %1555 = vmatprep.subr.bf16.mxu0 0
      %1556 = vmatpush1.bf16.msra.mxu0 0
      %1557 = vmatprep.subr.bf16.mxu0 0
      %1558 = vmatpush1.bf16.msra.mxu0 0
      %1559 = vmatprep.subr.bf16.mxu0 0
      %1560 = vmatpush1.bf16.msra.mxu0 0
      %1561 = vmatprep.subr.bf16.mxu0 0
      %1562 = vmatpush1.bf16.msra.mxu0 0
      %1563 = vmatprep.subr.bf16.mxu0 0
      %1564 = vmatpush1.bf16.msra.mxu0 0
      %1565 = vmatprep.subr.bf16.mxu0 0
      %1566 = vmatpush1.bf16.msra.mxu0 0
      %1567 = vmatprep.subr.bf16.mxu0 0
      %1568 = vmatpush1.bf16.msra.mxu0 0
      %1569 = vmatprep.subr.bf16.mxu0 0
      %1570 = vmatpush1.bf16.msra.mxu0 0
      %1571 = vmatprep.mubr.bf16.mxu0 0
      %1572 = vmatmul.mubr.bf16.gmra.mrb[0].mxu0 %v625
      %v1573 = vpop.f32.mrb[0].mxu0
      %v1574 = vadd.f32 0.0, %v1573
      %v1575 = vpop.f32.mrb[0].mxu0
      %v1576 = vpop.f32.mrb[0].mxu0
      %v1577 = vadd.f32 0.0, %v1576
      %v1578 = vpop.f32.mrb[0].mxu0
      %1579 = vmatprep.mubr.bf16.mxu0 0
      %1580 = vmatmul.mubr.bf16.gmra.mrb[0].mxu0 %v626
      %v1581 = vpop.f32.mrb[0].mxu0
      %v1582 = vadd.f32 0.0, %v1581
      %v1583 = vpop.f32.mrb[0].mxu0
      %v1584 = vpop.f32.mrb[0].mxu0
      %v1585 = vadd.f32 0.0, %v1584
      %v1586 = vpop.f32.mrb[0].mxu0
      %1587 = vmatprep.mubr.bf16.mxu0 0
      %1588 = vmatmul.mubr.bf16.gmra.mrb[0].mxu0 %v627
      %v1589 = vpop.f32.mrb[0].mxu0
      %v1590 = vadd.f32 0.0, %v1589
      %v1591 = vpop.f32.mrb[0].mxu0
      %v1592 = vpop.f32.mrb[0].mxu0
      %v1593 = vadd.f32 0.0, %v1592
      %v1594 = vpop.f32.mrb[0].mxu0
      %1595 = vmatprep.mubr.bf16.mxu0 0
      %1596 = vmatmul.mubr.bf16.gmra.mrb[0].mxu0 %v1490
      %v1597 = vpop.f32.mrb[0].mxu0
      %v1598 = vadd.f32 0.0, %v1597
      %v1599 = vpop.f32.mrb[0].mxu0
      %v1600 = vpop.f32.mrb[0].mxu0
      %v1601 = vadd.f32 0.0, %v1600
      %v1602 = vpop.f32.mrb[0].mxu0
      %1603 = vdwg.mxu0
      %v1604 = vadd.f32 %v1461, %v1574
      %v1605 = vadd.f32 %v1462, %v1577
      %v1606 = vadd.f32 %v1463, %v1582
      %v1607 = vadd.f32 %v1464, %v1585
      %v1608 = vadd.f32 %v1465, %v1590
      %v1609 = vadd.f32 %v1466, %v1593
      %v1610 = vadd.f32 %v1467, %v1598
      %v1611 = vadd.f32 %v1468, %v1601
      %s1612 = sadd.s32 %s20, 1
      %s1613 = smul.u32 %s1612, 20
      %s1614 = smul.addr %s1613, 4
      %s1615 = scalar_lea.vmem %s196, %s1614
      %v1616 = vld [vmem:[%s1615] sm:$0xf]
      %v1617 = vld [vmem:[%s1615 + $0x4] sm:$0x1]
      %v1618 = vld [vmem:[%s1615 + $0x8] sm:$0xf]
      %v1619 = vld [vmem:[%s1615 + $0xc] sm:$0x1]
      %v1620 = vld [vmem:[%s1615 + $0x10] sm:$0xf]
      %v1621 = vld [vmem:[%s1615 + $0x14] sm:$0x1]
      %v1622 = vld [vmem:[%s1615 + $0x18] sm:$0xf]
      %v1623 = vld [vmem:[%s1615 + $0x1c] sm:$0x1]
      %v1624 = vld [vmem:[%s1615 + $0x20] sm:$0xf]
      %v1625 = vld [vmem:[%s1615 + $0x24] sm:$0x1]
      %v1626 = vld [vmem:[%s1615 + $0x28] sm:$0xf]
      %v1627 = vld [vmem:[%s1615 + $0x2c] sm:$0x1]
      %v1628 = vld [vmem:[%s1615 + $0x30] sm:$0xf]
      %v1629 = vld [vmem:[%s1615 + $0x34] sm:$0x1]
      %v1630 = vld [vmem:[%s1615 + $0x38] sm:$0xf]
      %v1631 = vld [vmem:[%s1615 + $0x3c] sm:$0x1]
      %v1632 = vld [vmem:[%s1615 + $0x40] sm:$0xf]
      %v1633 = vld [vmem:[%s1615 + $0x44] sm:$0x1]
      %v1634 = vld [vmem:[%s1615 + $0x48] sm:$0xf]
      %v1635 = vld [vmem:[%s1615 + $0x4c] sm:$0x1]
      %v1636 = vunpack.c.l.bf16 %v1616
      %v1637 = vunpack.c.l.bf16 %v1617
      %v1638 = vunpack.c.l.bf16 %v1618
      %v1639 = vunpack.c.l.bf16 %v1619
      %v1640 = vunpack.c.l.bf16 %v1620
      %v1641 = vunpack.c.l.bf16 %v1621
      %v1642 = vunpack.c.l.bf16 %v1622
      %v1643 = vunpack.c.l.bf16 %v1623
      %v1644 = vunpack.c.l.bf16 %v1624
      %v1645 = vunpack.c.l.bf16 %v1625
      %v1646 = vunpack.c.l.bf16 %v1626
      %v1647 = vunpack.c.l.bf16 %v1627
      %v1648 = vunpack.c.l.bf16 %v1628
      %v1649 = vunpack.c.l.bf16 %v1629
      %v1650 = vunpack.c.l.bf16 %v1630
      %v1651 = vunpack.c.l.bf16 %v1631
      %v1652 = vunpack.c.l.bf16 %v1632
      %v1653 = vunpack.c.l.bf16 %v1633
      %v1654 = vunpack.c.l.bf16 %v1634
      %v1655 = vunpack.c.l.bf16 %v1635
      %s1656 = scalar_lea.vmem %s1, 576
      %v1657 = vld [vmem:[%s1656] sm:$0xf]
      %v1658 = vld [vmem:[%s1656 + $0x4] sm:$0xf]
      %v1659 = vld [vmem:[%s1656 + $0x8] sm:$0xf]
      %v1660 = vld [vmem:[%s1656 + $0xc] sm:$0xf]
      %v1661 = vld [vmem:[%s1656 + $0x10] sm:$0xf]
      %v1662 = vld [vmem:[%s1656 + $0x14] sm:$0xf]
      %v1663 = vld [vmem:[%s1656 + $0x18] sm:$0xf]
      %v1664 = vld [vmem:[%s1656 + $0x1c] sm:$0xf]
      %v1665 = vld [vmem:[%s1656 + $0x20] sm:$0xf]
      %v1666 = vld [vmem:[%s1656 + $0x24] sm:$0xf]
      %v1667 = vld [vmem:[%s1656 + $0x28] sm:$0xf]
      %v1668 = vld [vmem:[%s1656 + $0x2c] sm:$0xf]
      %v1669 = vld [vmem:[%s1656 + $0x30] sm:$0xf]
      %v1670 = vld [vmem:[%s1656 + $0x34] sm:$0xf]
      %v1671 = vld [vmem:[%s1656 + $0x38] sm:$0xf]
      %v1672 = vld [vmem:[%s1656 + $0x3c] sm:$0xf]
      %v1673 = vpack.c.bf16 %v1638, %v1636
      %v1674 = vpack.c.bf16 %v1642, %v1640
      %v1675 = vpack.c.bf16 %v1646, %v1644
      %v1676 = vpack.c.bf16 %v1650, %v1648
      %v1693 = vunpack.c.l.b16 %v1657
      %v1694 = vunpack.c.l.b16 %v1658
      %v1695 = vunpack.c.l.b16 %v1659
      %v1696 = vunpack.c.l.b16 %v1660
      %v1697 = vunpack.c.l.b16 %v1661
      %v1698 = vunpack.c.l.b16 %v1662
      %v1699 = vunpack.c.l.b16 %v1663
      %v1700 = vunpack.c.l.b16 %v1664
      %v1701 = vunpack.c.l.b16 %v1665
      %v1702 = vunpack.c.l.b16 %v1666
      %v1703 = vunpack.c.l.b16 %v1667
      %v1704 = vunpack.c.l.b16 %v1668
      %v1705 = vunpack.c.l.b16 %v1669
      %v1706 = vunpack.c.l.b16 %v1670
      %v1707 = vunpack.c.l.b16 %v1671
      %v1708 = vunpack.c.l.b16 %v1672
      %v1709 = vpack.c.b16 %v1694, %v1693
      %v1710 = vpack.c.b16 %v1696, %v1695
      %v1711 = vpack.c.b16 %v1698, %v1697
      %v1712 = vpack.c.b16 %v1700, %v1699
      %v1713 = vpack.c.b16 %v1702, %v1701
      %v1714 = vpack.c.b16 %v1704, %v1703
      %v1715 = vpack.c.b16 %v1706, %v1705
      %v1716 = vpack.c.b16 %v1708, %v1707
      %1725 = vmatprep.subr.bf16.mxu0 0
      %1726 = vmatpush1.bf16.msra.mxu0 %v1709
      %1727 = vmatprep.subr.bf16.mxu0 0
      %1728 = vmatpush1.bf16.msra.mxu0 %v1710
      %1729 = vmatprep.subr.bf16.mxu0 0
      %1730 = vmatpush1.bf16.msra.mxu0 %v1711
      %1731 = vmatprep.subr.bf16.mxu0 0
      %1732 = vmatpush1.bf16.msra.mxu0 %v1712
      %1733 = vmatprep.subr.bf16.mxu0 0
      %1734 = vmatpush1.bf16.msra.mxu0 %v1713
      %1735 = vmatprep.subr.bf16.mxu0 0
      %1736 = vmatpush1.bf16.msra.mxu0 %v1714
      %1737 = vmatprep.subr.bf16.mxu0 0
      %1738 = vmatpush1.bf16.msra.mxu0 %v1715
      %1739 = vmatprep.subr.bf16.mxu0 0
      %1740 = vmatpush1.bf16.msra.mxu0 %v1716
      %1741 = vmatprep.subr.bf16.mxu0 0
      %1742 = vmatpush1.bf16.msra.mxu0 0
      %1743 = vmatprep.subr.bf16.mxu0 0
      %1744 = vmatpush1.bf16.msra.mxu0 0
      %1745 = vmatprep.subr.bf16.mxu0 0
      %1746 = vmatpush1.bf16.msra.mxu0 0
      %1747 = vmatprep.subr.bf16.mxu0 0
      %1748 = vmatpush1.bf16.msra.mxu0 0
      %1749 = vmatprep.subr.bf16.mxu0 0
      %1750 = vmatpush1.bf16.msra.mxu0 0
      %1751 = vmatprep.subr.bf16.mxu0 0
      %1752 = vmatpush1.bf16.msra.mxu0 0
      %1753 = vmatprep.subr.bf16.mxu0 0
      %1754 = vmatpush1.bf16.msra.mxu0 0
      %1755 = vmatprep.subr.bf16.mxu0 0
      %1756 = vmatpush1.bf16.msra.mxu0 0
      %1757 = vmatprep.mubr.bf16.mxu0 0
      %1758 = vmatmul.mubr.bf16.gmra.mrb[0].mxu0 %v1673
      %v1759 = vpop.f32.mrb[0].mxu0
      %v1760 = vadd.f32 0.0, %v1759
      %v1761 = vpop.f32.mrb[0].mxu0
      %v1762 = vpop.f32.mrb[0].mxu0
      %v1763 = vadd.f32 0.0, %v1762
      %v1764 = vpop.f32.mrb[0].mxu0
      %1765 = vmatprep.mubr.bf16.mxu0 0
      %1766 = vmatmul.mubr.bf16.gmra.mrb[0].mxu0 %v1674
      %v1767 = vpop.f32.mrb[0].mxu0
      %v1768 = vadd.f32 0.0, %v1767
      %v1769 = vpop.f32.mrb[0].mxu0
      %v1770 = vpop.f32.mrb[0].mxu0
      %v1771 = vadd.f32 0.0, %v1770
      %v1772 = vpop.f32.mrb[0].mxu0
      %1773 = vmatprep.mubr.bf16.mxu0 0
      %1774 = vmatmul.mubr.bf16.gmra.mrb[0].mxu0 %v1675
      %v1775 = vpop.f32.mrb[0].mxu0
      %v1776 = vadd.f32 0.0, %v1775
      %v1777 = vpop.f32.mrb[0].mxu0
      %v1778 = vpop.f32.mrb[0].mxu0
      %v1779 = vadd.f32 0.0, %v1778
      %v1780 = vpop.f32.mrb[0].mxu0
      %1781 = vmatprep.mubr.bf16.mxu0 0
      %1782 = vmatmul.mubr.bf16.gmra.mrb[0].mxu0 %v1676
      %v1783 = vpop.f32.mrb[0].mxu0
      %v1784 = vadd.f32 0.0, %v1783
      %v1785 = vpop.f32.mrb[0].mxu0
      %v1786 = vpop.f32.mrb[0].mxu0
      %v1787 = vadd.f32 0.0, %v1786
      %v1788 = vpop.f32.mrb[0].mxu0
      %1789 = vdwg.mxu0
      %v1790 = vadd.f32 %v1604, %v1760
      %v1791 = vadd.f32 %v1605, %v1763
      %v1792 = vadd.f32 %v1606, %v1768
      %v1793 = vadd.f32 %v1607, %v1771
      %v1794 = vadd.f32 %v1608, %v1776
      %v1795 = vadd.f32 %v1609, %v1779
      %v1796 = vadd.f32 %v1610, %v1784
      %v1797 = vadd.f32 %v1611, %v1787
      %v1814 = vrot.slane %v1636, 1
      %v1815 = vrot.slane %v1637, 1
      %v1816 = vsel %vm294, %v1814, %v1815
      %v1817 = vrot.slane %v1638, 1
      %v1818 = vrot.slane %v1639, 1
      %v1819 = vsel %vm294, %v1817, %v1818
      %v1820 = vrot.slane %v1640, 1
      %v1821 = vrot.slane %v1641, 1
      %v1822 = vsel %vm294, %v1820, %v1821
      %v1823 = vrot.slane %v1642, 1
      %v1824 = vrot.slane %v1643, 1
      %v1825 = vsel %vm294, %v1823, %v1824
      %v1826 = vrot.slane %v1644, 1
      %v1827 = vrot.slane %v1645, 1
      %v1828 = vsel %vm294, %v1826, %v1827
      %v1829 = vrot.slane %v1646, 1
      %v1830 = vrot.slane %v1647, 1
      %v1831 = vsel %vm294, %v1829, %v1830
      %v1832 = vrot.slane %v1648, 1
      %v1833 = vrot.slane %v1649, 1
      %v1834 = vsel %vm294, %v1832, %v1833
      %v1835 = vrot.slane %v1650, 1
      %v1836 = vrot.slane %v1651, 1
      %v1837 = vsel %vm294, %v1835, %v1836
      %s1846 = scalar_lea.vmem %s1, 640
      %v1847 = vld [vmem:[%s1846] sm:$0xf]
      %v1848 = vld [vmem:[%s1846 + $0x4] sm:$0xf]
      %v1849 = vld [vmem:[%s1846 + $0x8] sm:$0xf]
      %v1850 = vld [vmem:[%s1846 + $0xc] sm:$0xf]
      %v1851 = vld [vmem:[%s1846 + $0x10] sm:$0xf]
      %v1852 = vld [vmem:[%s1846 + $0x14] sm:$0xf]
      %v1853 = vld [vmem:[%s1846 + $0x18] sm:$0xf]
      %v1854 = vld [vmem:[%s1846 + $0x1c] sm:$0xf]
      %v1855 = vld [vmem:[%s1846 + $0x20] sm:$0xf]
      %v1856 = vld [vmem:[%s1846 + $0x24] sm:$0xf]
      %v1857 = vld [vmem:[%s1846 + $0x28] sm:$0xf]
      %v1858 = vld [vmem:[%s1846 + $0x2c] sm:$0xf]
      %v1859 = vld [vmem:[%s1846 + $0x30] sm:$0xf]
      %v1860 = vld [vmem:[%s1846 + $0x34] sm:$0xf]
      %v1861 = vld [vmem:[%s1846 + $0x38] sm:$0xf]
      %v1862 = vld [vmem:[%s1846 + $0x3c] sm:$0xf]
      %v1863 = vpack.c.bf16 %v1819, %v1816
      %v1864 = vpack.c.bf16 %v1825, %v1822
      %v1865 = vpack.c.bf16 %v1831, %v1828
      %v1866 = vpack.c.bf16 %v1837, %v1834
      %v1883 = vunpack.c.l.b16 %v1847
      %v1884 = vunpack.c.l.b16 %v1848
      %v1885 = vunpack.c.l.b16 %v1849
      %v1886 = vunpack.c.l.b16 %v1850
      %v1887 = vunpack.c.l.b16 %v1851
      %v1888 = vunpack.c.l.b16 %v1852
      %v1889 = vunpack.c.l.b16 %v1853
      %v1890 = vunpack.c.l.b16 %v1854
      %v1891 = vunpack.c.l.b16 %v1855
      %v1892 = vunpack.c.l.b16 %v1856
      %v1893 = vunpack.c.l.b16 %v1857
      %v1894 = vunpack.c.l.b16 %v1858
      %v1895 = vunpack.c.l.b16 %v1859
      %v1896 = vunpack.c.l.b16 %v1860
      %v1897 = vunpack.c.l.b16 %v1861
      %v1898 = vunpack.c.l.b16 %v1862
      %v1899 = vpack.c.b16 %v1884, %v1883
      %v1900 = vpack.c.b16 %v1886, %v1885
      %v1901 = vpack.c.b16 %v1888, %v1887
      %v1902 = vpack.c.b16 %v1890, %v1889
      %v1903 = vpack.c.b16 %v1892, %v1891
      %v1904 = vpack.c.b16 %v1894, %v1893
      %v1905 = vpack.c.b16 %v1896, %v1895
      %v1906 = vpack.c.b16 %v1898, %v1897
      %1915 = vmatprep.subr.bf16.mxu0 0
      %1916 = vmatpush1.bf16.msra.mxu0 %v1899
      %1917 = vmatprep.subr.bf16.mxu0 0
      %1918 = vmatpush1.bf16.msra.mxu0 %v1900
      %1919 = vmatprep.subr.bf16.mxu0 0
      %1920 = vmatpush1.bf16.msra.mxu0 %v1901
      %1921 = vmatprep.subr.bf16.mxu0 0
      %1922 = vmatpush1.bf16.msra.mxu0 %v1902
      %1923 = vmatprep.subr.bf16.mxu0 0
      %1924 = vmatpush1.bf16.msra.mxu0 %v1903
      %1925 = vmatprep.subr.bf16.mxu0 0
      %1926 = vmatpush1.bf16.msra.mxu0 %v1904
      %1927 = vmatprep.subr.bf16.mxu0 0
      %1928 = vmatpush1.bf16.msra.mxu0 %v1905
      %1929 = vmatprep.subr.bf16.mxu0 0
      %1930 = vmatpush1.bf16.msra.mxu0 %v1906
      %1931 = vmatprep.subr.bf16.mxu0 0
      %1932 = vmatpush1.bf16.msra.mxu0 0
      %1933 = vmatprep.subr.bf16.mxu0 0
      %1934 = vmatpush1.bf16.msra.mxu0 0
      %1935 = vmatprep.subr.bf16.mxu0 0
      %1936 = vmatpush1.bf16.msra.mxu0 0
      %1937 = vmatprep.subr.bf16.mxu0 0
      %1938 = vmatpush1.bf16.msra.mxu0 0
      %1939 = vmatprep.subr.bf16.mxu0 0
      %1940 = vmatpush1.bf16.msra.mxu0 0
      %1941 = vmatprep.subr.bf16.mxu0 0
      %1942 = vmatpush1.bf16.msra.mxu0 0
      %1943 = vmatprep.subr.bf16.mxu0 0
      %1944 = vmatpush1.bf16.msra.mxu0 0
      %1945 = vmatprep.subr.bf16.mxu0 0
      %1946 = vmatpush1.bf16.msra.mxu0 0
      %1947 = vmatprep.mubr.bf16.mxu0 0
      %1948 = vmatmul.mubr.bf16.gmra.mrb[0].mxu0 %v1863
      %v1949 = vpop.f32.mrb[0].mxu0
      %v1950 = vadd.f32 0.0, %v1949
      %v1951 = vpop.f32.mrb[0].mxu0
      %v1952 = vpop.f32.mrb[0].mxu0
      %v1953 = vadd.f32 0.0, %v1952
      %v1954 = vpop.f32.mrb[0].mxu0
      %1955 = vmatprep.mubr.bf16.mxu0 0
      %1956 = vmatmul.mubr.bf16.gmra.mrb[0].mxu0 %v1864
      %v1957 = vpop.f32.mrb[0].mxu0
      %v1958 = vadd.f32 0.0, %v1957
      %v1959 = vpop.f32.mrb[0].mxu0
      %v1960 = vpop.f32.mrb[0].mxu0
      %v1961 = vadd.f32 0.0, %v1960
      %v1962 = vpop.f32.mrb[0].mxu0
      %1963 = vmatprep.mubr.bf16.mxu0 0
      %1964 = vmatmul.mubr.bf16.gmra.mrb[0].mxu0 %v1865
      %v1965 = vpop.f32.mrb[0].mxu0
      %v1966 = vadd.f32 0.0, %v1965
      %v1967 = vpop.f32.mrb[0].mxu0
      %v1968 = vpop.f32.mrb[0].mxu0
      %v1969 = vadd.f32 0.0, %v1968
      %v1970 = vpop.f32.mrb[0].mxu0
      %1971 = vmatprep.mubr.bf16.mxu0 0
      %1972 = vmatmul.mubr.bf16.gmra.mrb[0].mxu0 %v1866
      %v1973 = vpop.f32.mrb[0].mxu0
      %v1974 = vadd.f32 0.0, %v1973
      %v1975 = vpop.f32.mrb[0].mxu0
      %v1976 = vpop.f32.mrb[0].mxu0
      %v1977 = vadd.f32 0.0, %v1976
      %v1978 = vpop.f32.mrb[0].mxu0
      %1979 = vdwg.mxu0
      %v1980 = vadd.f32 %v1790, %v1950
      %v1981 = vadd.f32 %v1791, %v1953
      %v1982 = vadd.f32 %v1792, %v1958
      %v1983 = vadd.f32 %v1793, %v1961
      %v1984 = vadd.f32 %v1794, %v1966
      %v1985 = vadd.f32 %v1795, %v1969
      %v1986 = vadd.f32 %v1796, %v1974
      %v1987 = vadd.f32 %v1797, %v1977
      %v1988 = vrot.slane %v1636, 2
      %v1989 = vrot.slane %v1637, 2
      %v1990 = vsel %vm574, %v1988, %v1989
      %v1991 = vrot.slane %v1638, 2
      %v1992 = vrot.slane %v1639, 2
      %v1993 = vsel %vm574, %v1991, %v1992
      %v1994 = vrot.slane %v1640, 2
      %v1995 = vrot.slane %v1641, 2
      %v1996 = vsel %vm574, %v1994, %v1995
      %v1997 = vrot.slane %v1642, 2
      %v1998 = vrot.slane %v1643, 2
      %v1999 = vsel %vm574, %v1997, %v1998
      %v2000 = vrot.slane %v1644, 2
      %v2001 = vrot.slane %v1645, 2
      %v2002 = vsel %vm574, %v2000, %v2001
      %v2003 = vrot.slane %v1646, 2
      %v2004 = vrot.slane %v1647, 2
      %v2005 = vsel %vm574, %v2003, %v2004
      %v2006 = vrot.slane %v1648, 2
      %v2007 = vrot.slane %v1649, 2
      %v2008 = vsel %vm574, %v2006, %v2007
      %v2009 = vrot.slane %v1650, 2
      %v2010 = vrot.slane %v1651, 2
      %v2011 = vsel %vm574, %v2009, %v2010
      %s2020 = scalar_lea.vmem %s1, 704
      %v2021 = vld [vmem:[%s2020] sm:$0xf]
      %v2022 = vld [vmem:[%s2020 + $0x4] sm:$0xf]
      %v2023 = vld [vmem:[%s2020 + $0x8] sm:$0xf]
      %v2024 = vld [vmem:[%s2020 + $0xc] sm:$0xf]
      %v2025 = vld [vmem:[%s2020 + $0x10] sm:$0xf]
      %v2026 = vld [vmem:[%s2020 + $0x14] sm:$0xf]
      %v2027 = vld [vmem:[%s2020 + $0x18] sm:$0xf]
      %v2028 = vld [vmem:[%s2020 + $0x1c] sm:$0xf]
      %v2029 = vld [vmem:[%s2020 + $0x20] sm:$0xf]
      %v2030 = vld [vmem:[%s2020 + $0x24] sm:$0xf]
      %v2031 = vld [vmem:[%s2020 + $0x28] sm:$0xf]
      %v2032 = vld [vmem:[%s2020 + $0x2c] sm:$0xf]
      %v2033 = vld [vmem:[%s2020 + $0x30] sm:$0xf]
      %v2034 = vld [vmem:[%s2020 + $0x34] sm:$0xf]
      %v2035 = vld [vmem:[%s2020 + $0x38] sm:$0xf]
      %v2036 = vld [vmem:[%s2020 + $0x3c] sm:$0xf]
      %v2037 = vpack.c.bf16 %v1993, %v1990
      %v2038 = vpack.c.bf16 %v1999, %v1996
      %v2039 = vpack.c.bf16 %v2005, %v2002
      %v2040 = vpack.c.bf16 %v2011, %v2008
      %v2057 = vunpack.c.l.b16 %v2021
      %v2058 = vunpack.c.l.b16 %v2022
      %v2059 = vunpack.c.l.b16 %v2023
      %v2060 = vunpack.c.l.b16 %v2024
      %v2061 = vunpack.c.l.b16 %v2025
      %v2062 = vunpack.c.l.b16 %v2026
      %v2063 = vunpack.c.l.b16 %v2027
      %v2064 = vunpack.c.l.b16 %v2028
      %v2065 = vunpack.c.l.b16 %v2029
      %v2066 = vunpack.c.l.b16 %v2030
      %v2067 = vunpack.c.l.b16 %v2031
      %v2068 = vunpack.c.l.b16 %v2032
      %v2069 = vunpack.c.l.b16 %v2033
      %v2070 = vunpack.c.l.b16 %v2034
      %v2071 = vunpack.c.l.b16 %v2035
      %v2072 = vunpack.c.l.b16 %v2036
      %v2073 = vpack.c.b16 %v2058, %v2057
      %v2074 = vpack.c.b16 %v2060, %v2059
      %v2075 = vpack.c.b16 %v2062, %v2061
      %v2076 = vpack.c.b16 %v2064, %v2063
      %v2077 = vpack.c.b16 %v2066, %v2065
      %v2078 = vpack.c.b16 %v2068, %v2067
      %v2079 = vpack.c.b16 %v2070, %v2069
      %v2080 = vpack.c.b16 %v2072, %v2071
      %2089 = vmatprep.subr.bf16.mxu0 0
      %2090 = vmatpush1.bf16.msra.mxu0 %v2073
      %2091 = vmatprep.subr.bf16.mxu0 0
      %2092 = vmatpush1.bf16.msra.mxu0 %v2074
      %2093 = vmatprep.subr.bf16.mxu0 0
      %2094 = vmatpush1.bf16.msra.mxu0 %v2075
      %2095 = vmatprep.subr.bf16.mxu0 0
      %2096 = vmatpush1.bf16.msra.mxu0 %v2076
      %2097 = vmatprep.subr.bf16.mxu0 0
      %2098 = vmatpush1.bf16.msra.mxu0 %v2077
      %2099 = vmatprep.subr.bf16.mxu0 0
      %2100 = vmatpush1.bf16.msra.mxu0 %v2078
      %2101 = vmatprep.subr.bf16.mxu0 0
      %2102 = vmatpush1.bf16.msra.mxu0 %v2079
      %2103 = vmatprep.subr.bf16.mxu0 0
      %2104 = vmatpush1.bf16.msra.mxu0 %v2080
      %2105 = vmatprep.subr.bf16.mxu0 0
      %2106 = vmatpush1.bf16.msra.mxu0 0
      %2107 = vmatprep.subr.bf16.mxu0 0
      %2108 = vmatpush1.bf16.msra.mxu0 0
      %2109 = vmatprep.subr.bf16.mxu0 0
      %2110 = vmatpush1.bf16.msra.mxu0 0
      %2111 = vmatprep.subr.bf16.mxu0 0
      %2112 = vmatpush1.bf16.msra.mxu0 0
      %2113 = vmatprep.subr.bf16.mxu0 0
      %2114 = vmatpush1.bf16.msra.mxu0 0
      %2115 = vmatprep.subr.bf16.mxu0 0
      %2116 = vmatpush1.bf16.msra.mxu0 0
      %2117 = vmatprep.subr.bf16.mxu0 0
      %2118 = vmatpush1.bf16.msra.mxu0 0
      %2119 = vmatprep.subr.bf16.mxu0 0
      %2120 = vmatpush1.bf16.msra.mxu0 0
      %2121 = vmatprep.mubr.bf16.mxu0 0
      %2122 = vmatmul.mubr.bf16.gmra.mrb[0].mxu0 %v2037
      %v2123 = vpop.f32.mrb[0].mxu0
      %v2124 = vadd.f32 0.0, %v2123
      %v2125 = vpop.f32.mrb[0].mxu0
      %v2126 = vpop.f32.mrb[0].mxu0
      %v2127 = vadd.f32 0.0, %v2126
      %v2128 = vpop.f32.mrb[0].mxu0
      %2129 = vmatprep.mubr.bf16.mxu0 0
      %2130 = vmatmul.mubr.bf16.gmra.mrb[0].mxu0 %v2038
      %v2131 = vpop.f32.mrb[0].mxu0
      %v2132 = vadd.f32 0.0, %v2131
      %v2133 = vpop.f32.mrb[0].mxu0
      %v2134 = vpop.f32.mrb[0].mxu0
      %v2135 = vadd.f32 0.0, %v2134
      %v2136 = vpop.f32.mrb[0].mxu0
      %2137 = vmatprep.mubr.bf16.mxu0 0
      %2138 = vmatmul.mubr.bf16.gmra.mrb[0].mxu0 %v2039
      %v2139 = vpop.f32.mrb[0].mxu0
      %v2140 = vadd.f32 0.0, %v2139
      %v2141 = vpop.f32.mrb[0].mxu0
      %v2142 = vpop.f32.mrb[0].mxu0
      %v2143 = vadd.f32 0.0, %v2142
      %v2144 = vpop.f32.mrb[0].mxu0
      %2145 = vmatprep.mubr.bf16.mxu0 0
      %2146 = vmatmul.mubr.bf16.gmra.mrb[0].mxu0 %v2040
      %v2147 = vpop.f32.mrb[0].mxu0
      %v2148 = vadd.f32 0.0, %v2147
      %v2149 = vpop.f32.mrb[0].mxu0
      %v2150 = vpop.f32.mrb[0].mxu0
      %v2151 = vadd.f32 0.0, %v2150
      %v2152 = vpop.f32.mrb[0].mxu0
      %2153 = vdwg.mxu0
      %v2154 = vadd.f32 %v1980, %v2124
      %v2155 = vadd.f32 %v1981, %v2127
      %v2156 = vadd.f32 %v1982, %v2132
      %v2157 = vadd.f32 %v1983, %v2135
      %v2158 = vadd.f32 %v1984, %v2140
      %v2159 = vadd.f32 %v1985, %v2143
      %v2160 = vadd.f32 %v1986, %v2148
      %v2161 = vadd.f32 %v1987, %v2151
      %s2162 = scalar_lea.vmem %s1, 768
      %v2163 = vld [vmem:[%s2162] sm:$0xf]
      %v2164 = vld [vmem:[%s2162 + $0x4] sm:$0xf]
      %v2165 = vld [vmem:[%s2162 + $0x8] sm:$0xf]
      %v2166 = vld [vmem:[%s2162 + $0xc] sm:$0xf]
      %v2167 = vld [vmem:[%s2162 + $0x10] sm:$0xf]
      %v2168 = vld [vmem:[%s2162 + $0x14] sm:$0xf]
      %v2169 = vld [vmem:[%s2162 + $0x18] sm:$0xf]
      %v2170 = vld [vmem:[%s2162 + $0x1c] sm:$0xf]
      %v2171 = vld [vmem:[%s2162 + $0x20] sm:$0xf]
      %v2172 = vld [vmem:[%s2162 + $0x24] sm:$0xf]
      %v2173 = vld [vmem:[%s2162 + $0x28] sm:$0xf]
      %v2174 = vld [vmem:[%s2162 + $0x2c] sm:$0xf]
      %v2175 = vld [vmem:[%s2162 + $0x30] sm:$0xf]
      %v2176 = vld [vmem:[%s2162 + $0x34] sm:$0xf]
      %v2177 = vld [vmem:[%s2162 + $0x38] sm:$0xf]
      %v2178 = vld [vmem:[%s2162 + $0x3c] sm:$0xf]
      %v2179 = vpack.c.bf16 %v1640, %v1638
      %v2180 = vpack.c.bf16 %v1644, %v1642
      %v2181 = vpack.c.bf16 %v1648, %v1646
      %v2182 = vpack.c.bf16 %v1652, %v1650
      %v2199 = vunpack.c.l.b16 %v2163
      %v2200 = vunpack.c.l.b16 %v2164
      %v2201 = vunpack.c.l.b16 %v2165
      %v2202 = vunpack.c.l.b16 %v2166
      %v2203 = vunpack.c.l.b16 %v2167
      %v2204 = vunpack.c.l.b16 %v2168
      %v2205 = vunpack.c.l.b16 %v2169
      %v2206 = vunpack.c.l.b16 %v2170
      %v2207 = vunpack.c.l.b16 %v2171
      %v2208 = vunpack.c.l.b16 %v2172
      %v2209 = vunpack.c.l.b16 %v2173
      %v2210 = vunpack.c.l.b16 %v2174
      %v2211 = vunpack.c.l.b16 %v2175
      %v2212 = vunpack.c.l.b16 %v2176
      %v2213 = vunpack.c.l.b16 %v2177
      %v2214 = vunpack.c.l.b16 %v2178
      %v2215 = vpack.c.b16 %v2200, %v2199
      %v2216 = vpack.c.b16 %v2202, %v2201
      %v2217 = vpack.c.b16 %v2204, %v2203
      %v2218 = vpack.c.b16 %v2206, %v2205
      %v2219 = vpack.c.b16 %v2208, %v2207
      %v2220 = vpack.c.b16 %v2210, %v2209
      %v2221 = vpack.c.b16 %v2212, %v2211
      %v2222 = vpack.c.b16 %v2214, %v2213
      %2231 = vmatprep.subr.bf16.mxu0 0
      %2232 = vmatpush1.bf16.msra.mxu0 %v2215
      %2233 = vmatprep.subr.bf16.mxu0 0
      %2234 = vmatpush1.bf16.msra.mxu0 %v2216
      %2235 = vmatprep.subr.bf16.mxu0 0
      %2236 = vmatpush1.bf16.msra.mxu0 %v2217
      %2237 = vmatprep.subr.bf16.mxu0 0
      %2238 = vmatpush1.bf16.msra.mxu0 %v2218
      %2239 = vmatprep.subr.bf16.mxu0 0
      %2240 = vmatpush1.bf16.msra.mxu0 %v2219
      %2241 = vmatprep.subr.bf16.mxu0 0
      %2242 = vmatpush1.bf16.msra.mxu0 %v2220
      %2243 = vmatprep.subr.bf16.mxu0 0
      %2244 = vmatpush1.bf16.msra.mxu0 %v2221
      %2245 = vmatprep.subr.bf16.mxu0 0
      %2246 = vmatpush1.bf16.msra.mxu0 %v2222
      %2247 = vmatprep.subr.bf16.mxu0 0
      %2248 = vmatpush1.bf16.msra.mxu0 0
      %2249 = vmatprep.subr.bf16.mxu0 0
      %2250 = vmatpush1.bf16.msra.mxu0 0
      %2251 = vmatprep.subr.bf16.mxu0 0
      %2252 = vmatpush1.bf16.msra.mxu0 0
      %2253 = vmatprep.subr.bf16.mxu0 0
      %2254 = vmatpush1.bf16.msra.mxu0 0
      %2255 = vmatprep.subr.bf16.mxu0 0
      %2256 = vmatpush1.bf16.msra.mxu0 0
      %2257 = vmatprep.subr.bf16.mxu0 0
      %2258 = vmatpush1.bf16.msra.mxu0 0
      %2259 = vmatprep.subr.bf16.mxu0 0
      %2260 = vmatpush1.bf16.msra.mxu0 0
      %2261 = vmatprep.subr.bf16.mxu0 0
      %2262 = vmatpush1.bf16.msra.mxu0 0
      %2263 = vmatprep.mubr.bf16.mxu0 0
      %2264 = vmatmul.mubr.bf16.gmra.mrb[0].mxu0 %v2179
      %v2265 = vpop.f32.mrb[0].mxu0
      %v2266 = vadd.f32 0.0, %v2265
      %v2267 = vpop.f32.mrb[0].mxu0
      %v2268 = vpop.f32.mrb[0].mxu0
      %v2269 = vadd.f32 0.0, %v2268
      %v2270 = vpop.f32.mrb[0].mxu0
      %2271 = vmatprep.mubr.bf16.mxu0 0
      %2272 = vmatmul.mubr.bf16.gmra.mrb[0].mxu0 %v2180
      %v2273 = vpop.f32.mrb[0].mxu0
      %v2274 = vadd.f32 0.0, %v2273
      %v2275 = vpop.f32.mrb[0].mxu0
      %v2276 = vpop.f32.mrb[0].mxu0
      %v2277 = vadd.f32 0.0, %v2276
      %v2278 = vpop.f32.mrb[0].mxu0
      %2279 = vmatprep.mubr.bf16.mxu0 0
      %2280 = vmatmul.mubr.bf16.gmra.mrb[0].mxu0 %v2181
      %v2281 = vpop.f32.mrb[0].mxu0
      %v2282 = vadd.f32 0.0, %v2281
      %v2283 = vpop.f32.mrb[0].mxu0
      %v2284 = vpop.f32.mrb[0].mxu0
      %v2285 = vadd.f32 0.0, %v2284
      %v2286 = vpop.f32.mrb[0].mxu0
      %2287 = vmatprep.mubr.bf16.mxu0 0
      %2288 = vmatmul.mubr.bf16.gmra.mrb[0].mxu0 %v2182
      %v2289 = vpop.f32.mrb[0].mxu0
      %v2290 = vadd.f32 0.0, %v2289
      %v2291 = vpop.f32.mrb[0].mxu0
      %v2292 = vpop.f32.mrb[0].mxu0
      %v2293 = vadd.f32 0.0, %v2292
      %v2294 = vpop.f32.mrb[0].mxu0
      %2295 = vdwg.mxu0
      %v2296 = vadd.f32 %v2154, %v2266
      %v2297 = vadd.f32 %v2155, %v2269
      %v2298 = vadd.f32 %v2156, %v2274
      %v2299 = vadd.f32 %v2157, %v2277
      %v2300 = vadd.f32 %v2158, %v2282
      %v2301 = vadd.f32 %v2159, %v2285
      %v2302 = vadd.f32 %v2160, %v2290
      %v2303 = vadd.f32 %v2161, %v2293
      %v2306 = vrot.slane %v1652, 1
      %v2307 = vrot.slane %v1653, 1
      %v2308 = vsel %vm294, %v2306, %v2307
      %s2310 = scalar_lea.vmem %s1, 832
      %v2311 = vld [vmem:[%s2310] sm:$0xf]
      %v2312 = vld [vmem:[%s2310 + $0x4] sm:$0xf]
      %v2313 = vld [vmem:[%s2310 + $0x8] sm:$0xf]
      %v2314 = vld [vmem:[%s2310 + $0xc] sm:$0xf]
      %v2315 = vld [vmem:[%s2310 + $0x10] sm:$0xf]
      %v2316 = vld [vmem:[%s2310 + $0x14] sm:$0xf]
      %v2317 = vld [vmem:[%s2310 + $0x18] sm:$0xf]
      %v2318 = vld [vmem:[%s2310 + $0x1c] sm:$0xf]
      %v2319 = vld [vmem:[%s2310 + $0x20] sm:$0xf]
      %v2320 = vld [vmem:[%s2310 + $0x24] sm:$0xf]
      %v2321 = vld [vmem:[%s2310 + $0x28] sm:$0xf]
      %v2322 = vld [vmem:[%s2310 + $0x2c] sm:$0xf]
      %v2323 = vld [vmem:[%s2310 + $0x30] sm:$0xf]
      %v2324 = vld [vmem:[%s2310 + $0x34] sm:$0xf]
      %v2325 = vld [vmem:[%s2310 + $0x38] sm:$0xf]
      %v2326 = vld [vmem:[%s2310 + $0x3c] sm:$0xf]
      %v2327 = vpack.c.bf16 %v1822, %v1819
      %v2328 = vpack.c.bf16 %v1828, %v1825
      %v2329 = vpack.c.bf16 %v1834, %v1831
      %v2330 = vpack.c.bf16 %v2308, %v1837
      %v2347 = vunpack.c.l.b16 %v2311
      %v2348 = vunpack.c.l.b16 %v2312
      %v2349 = vunpack.c.l.b16 %v2313
      %v2350 = vunpack.c.l.b16 %v2314
      %v2351 = vunpack.c.l.b16 %v2315
      %v2352 = vunpack.c.l.b16 %v2316
      %v2353 = vunpack.c.l.b16 %v2317
      %v2354 = vunpack.c.l.b16 %v2318
      %v2355 = vunpack.c.l.b16 %v2319
      %v2356 = vunpack.c.l.b16 %v2320
      %v2357 = vunpack.c.l.b16 %v2321
      %v2358 = vunpack.c.l.b16 %v2322
      %v2359 = vunpack.c.l.b16 %v2323
      %v2360 = vunpack.c.l.b16 %v2324
      %v2361 = vunpack.c.l.b16 %v2325
      %v2362 = vunpack.c.l.b16 %v2326
      %v2363 = vpack.c.b16 %v2348, %v2347
      %v2364 = vpack.c.b16 %v2350, %v2349
      %v2365 = vpack.c.b16 %v2352, %v2351
      %v2366 = vpack.c.b16 %v2354, %v2353
      %v2367 = vpack.c.b16 %v2356, %v2355
      %v2368 = vpack.c.b16 %v2358, %v2357
      %v2369 = vpack.c.b16 %v2360, %v2359
      %v2370 = vpack.c.b16 %v2362, %v2361
      %2379 = vmatprep.subr.bf16.mxu0 0
      %2380 = vmatpush1.bf16.msra.mxu0 %v2363
      %2381 = vmatprep.subr.bf16.mxu0 0
      %2382 = vmatpush1.bf16.msra.mxu0 %v2364
      %2383 = vmatprep.subr.bf16.mxu0 0
      %2384 = vmatpush1.bf16.msra.mxu0 %v2365
      %2385 = vmatprep.subr.bf16.mxu0 0
      %2386 = vmatpush1.bf16.msra.mxu0 %v2366
      %2387 = vmatprep.subr.bf16.mxu0 0
      %2388 = vmatpush1.bf16.msra.mxu0 %v2367
      %2389 = vmatprep.subr.bf16.mxu0 0
      %2390 = vmatpush1.bf16.msra.mxu0 %v2368
      %2391 = vmatprep.subr.bf16.mxu0 0
      %2392 = vmatpush1.bf16.msra.mxu0 %v2369
      %2393 = vmatprep.subr.bf16.mxu0 0
      %2394 = vmatpush1.bf16.msra.mxu0 %v2370
      %2395 = vmatprep.subr.bf16.mxu0 0
      %2396 = vmatpush1.bf16.msra.mxu0 0
      %2397 = vmatprep.subr.bf16.mxu0 0
      %2398 = vmatpush1.bf16.msra.mxu0 0
      %2399 = vmatprep.subr.bf16.mxu0 0
      %2400 = vmatpush1.bf16.msra.mxu0 0
      %2401 = vmatprep.subr.bf16.mxu0 0
      %2402 = vmatpush1.bf16.msra.mxu0 0
      %2403 = vmatprep.subr.bf16.mxu0 0
      %2404 = vmatpush1.bf16.msra.mxu0 0
      %2405 = vmatprep.subr.bf16.mxu0 0
      %2406 = vmatpush1.bf16.msra.mxu0 0
      %2407 = vmatprep.subr.bf16.mxu0 0
      %2408 = vmatpush1.bf16.msra.mxu0 0
      %2409 = vmatprep.subr.bf16.mxu0 0
      %2410 = vmatpush1.bf16.msra.mxu0 0
      %2411 = vmatprep.mubr.bf16.mxu0 0
      %2412 = vmatmul.mubr.bf16.gmra.mrb[0].mxu0 %v2327
      %v2413 = vpop.f32.mrb[0].mxu0
      %v2414 = vadd.f32 0.0, %v2413
      %v2415 = vpop.f32.mrb[0].mxu0
      %v2416 = vpop.f32.mrb[0].mxu0
      %v2417 = vadd.f32 0.0, %v2416
      %v2418 = vpop.f32.mrb[0].mxu0
      %2419 = vmatprep.mubr.bf16.mxu0 0
      %2420 = vmatmul.mubr.bf16.gmra.mrb[0].mxu0 %v2328
      %v2421 = vpop.f32.mrb[0].mxu0
      %v2422 = vadd.f32 0.0, %v2421
      %v2423 = vpop.f32.mrb[0].mxu0
      %v2424 = vpop.f32.mrb[0].mxu0
      %v2425 = vadd.f32 0.0, %v2424
      %v2426 = vpop.f32.mrb[0].mxu0
      %2427 = vmatprep.mubr.bf16.mxu0 0
      %2428 = vmatmul.mubr.bf16.gmra.mrb[0].mxu0 %v2329
      %v2429 = vpop.f32.mrb[0].mxu0
      %v2430 = vadd.f32 0.0, %v2429
      %v2431 = vpop.f32.mrb[0].mxu0
      %v2432 = vpop.f32.mrb[0].mxu0
      %v2433 = vadd.f32 0.0, %v2432
      %v2434 = vpop.f32.mrb[0].mxu0
      %2435 = vmatprep.mubr.bf16.mxu0 0
      %2436 = vmatmul.mubr.bf16.gmra.mrb[0].mxu0 %v2330
      %v2437 = vpop.f32.mrb[0].mxu0
      %v2438 = vadd.f32 0.0, %v2437
      %v2439 = vpop.f32.mrb[0].mxu0
      %v2440 = vpop.f32.mrb[0].mxu0
      %v2441 = vadd.f32 0.0, %v2440
      %v2442 = vpop.f32.mrb[0].mxu0
      %2443 = vdwg.mxu0
      %v2444 = vadd.f32 %v2296, %v2414
      %v2445 = vadd.f32 %v2297, %v2417
      %v2446 = vadd.f32 %v2298, %v2422
      %v2447 = vadd.f32 %v2299, %v2425
      %v2448 = vadd.f32 %v2300, %v2430
      %v2449 = vadd.f32 %v2301, %v2433
      %v2450 = vadd.f32 %v2302, %v2438
      %v2451 = vadd.f32 %v2303, %v2441
      %v2452 = vrot.slane %v1652, 2
      %v2453 = vrot.slane %v1653, 2
      %v2454 = vsel %vm574, %v2452, %v2453
      %s2456 = scalar_lea.vmem %s1, 896
      %v2457 = vld [vmem:[%s2456] sm:$0xf]
      %v2458 = vld [vmem:[%s2456 + $0x4] sm:$0xf]
      %v2459 = vld [vmem:[%s2456 + $0x8] sm:$0xf]
      %v2460 = vld [vmem:[%s2456 + $0xc] sm:$0xf]
      %v2461 = vld [vmem:[%s2456 + $0x10] sm:$0xf]
      %v2462 = vld [vmem:[%s2456 + $0x14] sm:$0xf]
      %v2463 = vld [vmem:[%s2456 + $0x18] sm:$0xf]
      %v2464 = vld [vmem:[%s2456 + $0x1c] sm:$0xf]
      %v2465 = vld [vmem:[%s2456 + $0x20] sm:$0xf]
      %v2466 = vld [vmem:[%s2456 + $0x24] sm:$0xf]
      %v2467 = vld [vmem:[%s2456 + $0x28] sm:$0xf]
      %v2468 = vld [vmem:[%s2456 + $0x2c] sm:$0xf]
      %v2469 = vld [vmem:[%s2456 + $0x30] sm:$0xf]
      %v2470 = vld [vmem:[%s2456 + $0x34] sm:$0xf]
      %v2471 = vld [vmem:[%s2456 + $0x38] sm:$0xf]
      %v2472 = vld [vmem:[%s2456 + $0x3c] sm:$0xf]
      %v2473 = vpack.c.bf16 %v1996, %v1993
      %v2474 = vpack.c.bf16 %v2002, %v1999
      %v2475 = vpack.c.bf16 %v2008, %v2005
      %v2476 = vpack.c.bf16 %v2454, %v2011
      %v2493 = vunpack.c.l.b16 %v2457
      %v2494 = vunpack.c.l.b16 %v2458
      %v2495 = vunpack.c.l.b16 %v2459
      %v2496 = vunpack.c.l.b16 %v2460
      %v2497 = vunpack.c.l.b16 %v2461
      %v2498 = vunpack.c.l.b16 %v2462
      %v2499 = vunpack.c.l.b16 %v2463
      %v2500 = vunpack.c.l.b16 %v2464
      %v2501 = vunpack.c.l.b16 %v2465
      %v2502 = vunpack.c.l.b16 %v2466
      %v2503 = vunpack.c.l.b16 %v2467
      %v2504 = vunpack.c.l.b16 %v2468
      %v2505 = vunpack.c.l.b16 %v2469
      %v2506 = vunpack.c.l.b16 %v2470
      %v2507 = vunpack.c.l.b16 %v2471
      %v2508 = vunpack.c.l.b16 %v2472
      %v2509 = vpack.c.b16 %v2494, %v2493
      %v2510 = vpack.c.b16 %v2496, %v2495
      %v2511 = vpack.c.b16 %v2498, %v2497
      %v2512 = vpack.c.b16 %v2500, %v2499
      %v2513 = vpack.c.b16 %v2502, %v2501
      %v2514 = vpack.c.b16 %v2504, %v2503
      %v2515 = vpack.c.b16 %v2506, %v2505
      %v2516 = vpack.c.b16 %v2508, %v2507
      %2525 = vmatprep.subr.bf16.mxu0 0
      %2526 = vmatpush1.bf16.msra.mxu0 %v2509
      %2527 = vmatprep.subr.bf16.mxu0 0
      %2528 = vmatpush1.bf16.msra.mxu0 %v2510
      %2529 = vmatprep.subr.bf16.mxu0 0
      %2530 = vmatpush1.bf16.msra.mxu0 %v2511
      %2531 = vmatprep.subr.bf16.mxu0 0
      %2532 = vmatpush1.bf16.msra.mxu0 %v2512
      %2533 = vmatprep.subr.bf16.mxu0 0
      %2534 = vmatpush1.bf16.msra.mxu0 %v2513
      %2535 = vmatprep.subr.bf16.mxu0 0
      %2536 = vmatpush1.bf16.msra.mxu0 %v2514
      %2537 = vmatprep.subr.bf16.mxu0 0
      %2538 = vmatpush1.bf16.msra.mxu0 %v2515
      %2539 = vmatprep.subr.bf16.mxu0 0
      %2540 = vmatpush1.bf16.msra.mxu0 %v2516
      %2541 = vmatprep.subr.bf16.mxu0 0
      %2542 = vmatpush1.bf16.msra.mxu0 0
      %2543 = vmatprep.subr.bf16.mxu0 0
      %2544 = vmatpush1.bf16.msra.mxu0 0
      %2545 = vmatprep.subr.bf16.mxu0 0
      %2546 = vmatpush1.bf16.msra.mxu0 0
      %2547 = vmatprep.subr.bf16.mxu0 0
      %2548 = vmatpush1.bf16.msra.mxu0 0
      %2549 = vmatprep.subr.bf16.mxu0 0
      %2550 = vmatpush1.bf16.msra.mxu0 0
      %2551 = vmatprep.subr.bf16.mxu0 0
      %2552 = vmatpush1.bf16.msra.mxu0 0
      %2553 = vmatprep.subr.bf16.mxu0 0
      %2554 = vmatpush1.bf16.msra.mxu0 0
      %2555 = vmatprep.subr.bf16.mxu0 0
      %2556 = vmatpush1.bf16.msra.mxu0 0
      %2557 = vmatprep.mubr.bf16.mxu0 0
      %2558 = vmatmul.mubr.bf16.gmra.mrb[0].mxu0 %v2473
      %v2559 = vpop.f32.mrb[0].mxu0
      %v2560 = vadd.f32 0.0, %v2559
      %v2561 = vpop.f32.mrb[0].mxu0
      %v2562 = vpop.f32.mrb[0].mxu0
      %v2563 = vadd.f32 0.0, %v2562
      %v2564 = vpop.f32.mrb[0].mxu0
      %2565 = vmatprep.mubr.bf16.mxu0 0
      %2566 = vmatmul.mubr.bf16.gmra.mrb[0].mxu0 %v2474
      %v2567 = vpop.f32.mrb[0].mxu0
      %v2568 = vadd.f32 0.0, %v2567
      %v2569 = vpop.f32.mrb[0].mxu0
      %v2570 = vpop.f32.mrb[0].mxu0
      %v2571 = vadd.f32 0.0, %v2570
      %v2572 = vpop.f32.mrb[0].mxu0
      %2573 = vmatprep.mubr.bf16.mxu0 0
      %2574 = vmatmul.mubr.bf16.gmra.mrb[0].mxu0 %v2475
      %v2575 = vpop.f32.mrb[0].mxu0
      %v2576 = vadd.f32 0.0, %v2575
      %v2577 = vpop.f32.mrb[0].mxu0
      %v2578 = vpop.f32.mrb[0].mxu0
      %v2579 = vadd.f32 0.0, %v2578
      %v2580 = vpop.f32.mrb[0].mxu0
      %2581 = vmatprep.mubr.bf16.mxu0 0
      %2582 = vmatmul.mubr.bf16.gmra.mrb[0].mxu0 %v2476
      %v2583 = vpop.f32.mrb[0].mxu0
      %v2584 = vadd.f32 0.0, %v2583
      %v2585 = vpop.f32.mrb[0].mxu0
      %v2586 = vpop.f32.mrb[0].mxu0
      %v2587 = vadd.f32 0.0, %v2586
      %v2588 = vpop.f32.mrb[0].mxu0
      %2589 = vdwg.mxu0
      %v2590 = vadd.f32 %v2444, %v2560
      %v2591 = vadd.f32 %v2445, %v2563
      %v2592 = vadd.f32 %v2446, %v2568
      %v2593 = vadd.f32 %v2447, %v2571
      %v2594 = vadd.f32 %v2448, %v2576
      %v2595 = vadd.f32 %v2449, %v2579
      %v2596 = vadd.f32 %v2450, %v2584
      %v2597 = vadd.f32 %v2451, %v2587
      %s2598 = scalar_lea.vmem %s1, 960
      %v2599 = vld [vmem:[%s2598] sm:$0xf]
      %v2600 = vld [vmem:[%s2598 + $0x4] sm:$0xf]
      %v2601 = vld [vmem:[%s2598 + $0x8] sm:$0xf]
      %v2602 = vld [vmem:[%s2598 + $0xc] sm:$0xf]
      %v2603 = vld [vmem:[%s2598 + $0x10] sm:$0xf]
      %v2604 = vld [vmem:[%s2598 + $0x14] sm:$0xf]
      %v2605 = vld [vmem:[%s2598 + $0x18] sm:$0xf]
      %v2606 = vld [vmem:[%s2598 + $0x1c] sm:$0xf]
      %v2607 = vld [vmem:[%s2598 + $0x20] sm:$0xf]
      %v2608 = vld [vmem:[%s2598 + $0x24] sm:$0xf]
      %v2609 = vld [vmem:[%s2598 + $0x28] sm:$0xf]
      %v2610 = vld [vmem:[%s2598 + $0x2c] sm:$0xf]
      %v2611 = vld [vmem:[%s2598 + $0x30] sm:$0xf]
      %v2612 = vld [vmem:[%s2598 + $0x34] sm:$0xf]
      %v2613 = vld [vmem:[%s2598 + $0x38] sm:$0xf]
      %v2614 = vld [vmem:[%s2598 + $0x3c] sm:$0xf]
      %v2615 = vpack.c.bf16 %v1654, %v1652
      %v2632 = vunpack.c.l.b16 %v2599
      %v2633 = vunpack.c.l.b16 %v2600
      %v2634 = vunpack.c.l.b16 %v2601
      %v2635 = vunpack.c.l.b16 %v2602
      %v2636 = vunpack.c.l.b16 %v2603
      %v2637 = vunpack.c.l.b16 %v2604
      %v2638 = vunpack.c.l.b16 %v2605
      %v2639 = vunpack.c.l.b16 %v2606
      %v2640 = vunpack.c.l.b16 %v2607
      %v2641 = vunpack.c.l.b16 %v2608
      %v2642 = vunpack.c.l.b16 %v2609
      %v2643 = vunpack.c.l.b16 %v2610
      %v2644 = vunpack.c.l.b16 %v2611
      %v2645 = vunpack.c.l.b16 %v2612
      %v2646 = vunpack.c.l.b16 %v2613
      %v2647 = vunpack.c.l.b16 %v2614
      %v2648 = vpack.c.b16 %v2633, %v2632
      %v2649 = vpack.c.b16 %v2635, %v2634
      %v2650 = vpack.c.b16 %v2637, %v2636
      %v2651 = vpack.c.b16 %v2639, %v2638
      %v2652 = vpack.c.b16 %v2641, %v2640
      %v2653 = vpack.c.b16 %v2643, %v2642
      %v2654 = vpack.c.b16 %v2645, %v2644
      %v2655 = vpack.c.b16 %v2647, %v2646
      %2664 = vmatprep.subr.bf16.mxu0 0
      %2665 = vmatpush1.bf16.msra.mxu0 %v2648
      %2666 = vmatprep.subr.bf16.mxu0 0
      %2667 = vmatpush1.bf16.msra.mxu0 %v2649
      %2668 = vmatprep.subr.bf16.mxu0 0
      %2669 = vmatpush1.bf16.msra.mxu0 %v2650
      %2670 = vmatprep.subr.bf16.mxu0 0
      %2671 = vmatpush1.bf16.msra.mxu0 %v2651
      %2672 = vmatprep.subr.bf16.mxu0 0
      %2673 = vmatpush1.bf16.msra.mxu0 %v2652
      %2674 = vmatprep.subr.bf16.mxu0 0
      %2675 = vmatpush1.bf16.msra.mxu0 %v2653
      %2676 = vmatprep.subr.bf16.mxu0 0
      %2677 = vmatpush1.bf16.msra.mxu0 %v2654
      %2678 = vmatprep.subr.bf16.mxu0 0
      %2679 = vmatpush1.bf16.msra.mxu0 %v2655
      %2680 = vmatprep.subr.bf16.mxu0 0
      %2681 = vmatpush1.bf16.msra.mxu0 0
      %2682 = vmatprep.subr.bf16.mxu0 0
      %2683 = vmatpush1.bf16.msra.mxu0 0
      %2684 = vmatprep.subr.bf16.mxu0 0
      %2685 = vmatpush1.bf16.msra.mxu0 0
      %2686 = vmatprep.subr.bf16.mxu0 0
      %2687 = vmatpush1.bf16.msra.mxu0 0
      %2688 = vmatprep.subr.bf16.mxu0 0
      %2689 = vmatpush1.bf16.msra.mxu0 0
      %2690 = vmatprep.subr.bf16.mxu0 0
      %2691 = vmatpush1.bf16.msra.mxu0 0
      %2692 = vmatprep.subr.bf16.mxu0 0
      %2693 = vmatpush1.bf16.msra.mxu0 0
      %2694 = vmatprep.subr.bf16.mxu0 0
      %2695 = vmatpush1.bf16.msra.mxu0 0
      %2696 = vmatprep.mubr.bf16.mxu0 0
      %2697 = vmatmul.mubr.bf16.gmra.mrb[0].mxu0 %v1674
      %v2698 = vpop.f32.mrb[0].mxu0
      %v2699 = vadd.f32 0.0, %v2698
      %v2700 = vpop.f32.mrb[0].mxu0
      %v2701 = vpop.f32.mrb[0].mxu0
      %v2702 = vadd.f32 0.0, %v2701
      %v2703 = vpop.f32.mrb[0].mxu0
      %2704 = vmatprep.mubr.bf16.mxu0 0
      %2705 = vmatmul.mubr.bf16.gmra.mrb[0].mxu0 %v1675
      %v2706 = vpop.f32.mrb[0].mxu0
      %v2707 = vadd.f32 0.0, %v2706
      %v2708 = vpop.f32.mrb[0].mxu0
      %v2709 = vpop.f32.mrb[0].mxu0
      %v2710 = vadd.f32 0.0, %v2709
      %v2711 = vpop.f32.mrb[0].mxu0
      %2712 = vmatprep.mubr.bf16.mxu0 0
      %2713 = vmatmul.mubr.bf16.gmra.mrb[0].mxu0 %v1676
      %v2714 = vpop.f32.mrb[0].mxu0
      %v2715 = vadd.f32 0.0, %v2714
      %v2716 = vpop.f32.mrb[0].mxu0
      %v2717 = vpop.f32.mrb[0].mxu0
      %v2718 = vadd.f32 0.0, %v2717
      %v2719 = vpop.f32.mrb[0].mxu0
      %2720 = vmatprep.mubr.bf16.mxu0 0
      %2721 = vmatmul.mubr.bf16.gmra.mrb[0].mxu0 %v2615
      %v2722 = vpop.f32.mrb[0].mxu0
      %v2723 = vadd.f32 0.0, %v2722
      %v2724 = vpop.f32.mrb[0].mxu0
      %v2725 = vpop.f32.mrb[0].mxu0
      %v2726 = vadd.f32 0.0, %v2725
      %v2727 = vpop.f32.mrb[0].mxu0
      %2728 = vdwg.mxu0
      %v2729 = vadd.f32 %v2590, %v2699
      %v2730 = vadd.f32 %v2591, %v2702
      %v2731 = vadd.f32 %v2592, %v2707
      %v2732 = vadd.f32 %v2593, %v2710
      %v2733 = vadd.f32 %v2594, %v2715
      %v2734 = vadd.f32 %v2595, %v2718
      %v2735 = vadd.f32 %v2596, %v2723
      %v2736 = vadd.f32 %v2597, %v2726
      %v2739 = vrot.slane %v1654, 1
      %v2740 = vrot.slane %v1655, 1
      %v2741 = vsel %vm294, %v2739, %v2740
      %s2743 = scalar_lea.vmem %s1, 1024
      %v2744 = vld [vmem:[%s2743] sm:$0xf]
      %v2745 = vld [vmem:[%s2743 + $0x4] sm:$0xf]
      %v2746 = vld [vmem:[%s2743 + $0x8] sm:$0xf]
      %v2747 = vld [vmem:[%s2743 + $0xc] sm:$0xf]
      %v2748 = vld [vmem:[%s2743 + $0x10] sm:$0xf]
      %v2749 = vld [vmem:[%s2743 + $0x14] sm:$0xf]
      %v2750 = vld [vmem:[%s2743 + $0x18] sm:$0xf]
      %v2751 = vld [vmem:[%s2743 + $0x1c] sm:$0xf]
      %v2752 = vld [vmem:[%s2743 + $0x20] sm:$0xf]
      %v2753 = vld [vmem:[%s2743 + $0x24] sm:$0xf]
      %v2754 = vld [vmem:[%s2743 + $0x28] sm:$0xf]
      %v2755 = vld [vmem:[%s2743 + $0x2c] sm:$0xf]
      %v2756 = vld [vmem:[%s2743 + $0x30] sm:$0xf]
      %v2757 = vld [vmem:[%s2743 + $0x34] sm:$0xf]
      %v2758 = vld [vmem:[%s2743 + $0x38] sm:$0xf]
      %v2759 = vld [vmem:[%s2743 + $0x3c] sm:$0xf]
      %v2760 = vpack.c.bf16 %v2741, %v2308
      %v2777 = vunpack.c.l.b16 %v2744
      %v2778 = vunpack.c.l.b16 %v2745
      %v2779 = vunpack.c.l.b16 %v2746
      %v2780 = vunpack.c.l.b16 %v2747
      %v2781 = vunpack.c.l.b16 %v2748
      %v2782 = vunpack.c.l.b16 %v2749
      %v2783 = vunpack.c.l.b16 %v2750
      %v2784 = vunpack.c.l.b16 %v2751
      %v2785 = vunpack.c.l.b16 %v2752
      %v2786 = vunpack.c.l.b16 %v2753
      %v2787 = vunpack.c.l.b16 %v2754
      %v2788 = vunpack.c.l.b16 %v2755
      %v2789 = vunpack.c.l.b16 %v2756
      %v2790 = vunpack.c.l.b16 %v2757
      %v2791 = vunpack.c.l.b16 %v2758
      %v2792 = vunpack.c.l.b16 %v2759
      %v2793 = vpack.c.b16 %v2778, %v2777
      %v2794 = vpack.c.b16 %v2780, %v2779
      %v2795 = vpack.c.b16 %v2782, %v2781
      %v2796 = vpack.c.b16 %v2784, %v2783
      %v2797 = vpack.c.b16 %v2786, %v2785
      %v2798 = vpack.c.b16 %v2788, %v2787
      %v2799 = vpack.c.b16 %v2790, %v2789
      %v2800 = vpack.c.b16 %v2792, %v2791
      %2809 = vmatprep.subr.bf16.mxu0 0
      %2810 = vmatpush1.bf16.msra.mxu0 %v2793
      %2811 = vmatprep.subr.bf16.mxu0 0
      %2812 = vmatpush1.bf16.msra.mxu0 %v2794
      %2813 = vmatprep.subr.bf16.mxu0 0
      %2814 = vmatpush1.bf16.msra.mxu0 %v2795
      %2815 = vmatprep.subr.bf16.mxu0 0
      %2816 = vmatpush1.bf16.msra.mxu0 %v2796
      %2817 = vmatprep.subr.bf16.mxu0 0
      %2818 = vmatpush1.bf16.msra.mxu0 %v2797
      %2819 = vmatprep.subr.bf16.mxu0 0
      %2820 = vmatpush1.bf16.msra.mxu0 %v2798
      %2821 = vmatprep.subr.bf16.mxu0 0
      %2822 = vmatpush1.bf16.msra.mxu0 %v2799
      %2823 = vmatprep.subr.bf16.mxu0 0
      %2824 = vmatpush1.bf16.msra.mxu0 %v2800
      %2825 = vmatprep.subr.bf16.mxu0 0
      %2826 = vmatpush1.bf16.msra.mxu0 0
      %2827 = vmatprep.subr.bf16.mxu0 0
      %2828 = vmatpush1.bf16.msra.mxu0 0
      %2829 = vmatprep.subr.bf16.mxu0 0
      %2830 = vmatpush1.bf16.msra.mxu0 0
      %2831 = vmatprep.subr.bf16.mxu0 0
      %2832 = vmatpush1.bf16.msra.mxu0 0
      %2833 = vmatprep.subr.bf16.mxu0 0
      %2834 = vmatpush1.bf16.msra.mxu0 0
      %2835 = vmatprep.subr.bf16.mxu0 0
      %2836 = vmatpush1.bf16.msra.mxu0 0
      %2837 = vmatprep.subr.bf16.mxu0 0
      %2838 = vmatpush1.bf16.msra.mxu0 0
      %2839 = vmatprep.subr.bf16.mxu0 0
      %2840 = vmatpush1.bf16.msra.mxu0 0
      %2841 = vmatprep.mubr.bf16.mxu0 0
      %2842 = vmatmul.mubr.bf16.gmra.mrb[0].mxu0 %v1864
      %v2843 = vpop.f32.mrb[0].mxu0
      %v2844 = vadd.f32 0.0, %v2843
      %v2845 = vpop.f32.mrb[0].mxu0
      %v2846 = vpop.f32.mrb[0].mxu0
      %v2847 = vadd.f32 0.0, %v2846
      %v2848 = vpop.f32.mrb[0].mxu0
      %2849 = vmatprep.mubr.bf16.mxu0 0
      %2850 = vmatmul.mubr.bf16.gmra.mrb[0].mxu0 %v1865
      %v2851 = vpop.f32.mrb[0].mxu0
      %v2852 = vadd.f32 0.0, %v2851
      %v2853 = vpop.f32.mrb[0].mxu0
      %v2854 = vpop.f32.mrb[0].mxu0
      %v2855 = vadd.f32 0.0, %v2854
      %v2856 = vpop.f32.mrb[0].mxu0
      %2857 = vmatprep.mubr.bf16.mxu0 0
      %2858 = vmatmul.mubr.bf16.gmra.mrb[0].mxu0 %v1866
      %v2859 = vpop.f32.mrb[0].mxu0
      %v2860 = vadd.f32 0.0, %v2859
      %v2861 = vpop.f32.mrb[0].mxu0
      %v2862 = vpop.f32.mrb[0].mxu0
      %v2863 = vadd.f32 0.0, %v2862
      %v2864 = vpop.f32.mrb[0].mxu0
      %2865 = vmatprep.mubr.bf16.mxu0 0
      %2866 = vmatmul.mubr.bf16.gmra.mrb[0].mxu0 %v2760
      %v2867 = vpop.f32.mrb[0].mxu0
      %v2868 = vadd.f32 0.0, %v2867
      %v2869 = vpop.f32.mrb[0].mxu0
      %v2870 = vpop.f32.mrb[0].mxu0
      %v2871 = vadd.f32 0.0, %v2870
      %v2872 = vpop.f32.mrb[0].mxu0
      %2873 = vdwg.mxu0
      %v2874 = vadd.f32 %v2729, %v2844
      %v2875 = vadd.f32 %v2730, %v2847
      %v2876 = vadd.f32 %v2731, %v2852
      %v2877 = vadd.f32 %v2732, %v2855
      %v2878 = vadd.f32 %v2733, %v2860
      %v2879 = vadd.f32 %v2734, %v2863
      %v2880 = vadd.f32 %v2735, %v2868
      %v2881 = vadd.f32 %v2736, %v2871
      %v2882 = vrot.slane %v1654, 2
      %v2883 = vrot.slane %v1655, 2
      %v2884 = vsel %vm574, %v2882, %v2883
      %s2886 = scalar_lea.vmem %s1, 1088
      %v2887 = vld [vmem:[%s2886] sm:$0xf]
      %v2888 = vld [vmem:[%s2886 + $0x4] sm:$0xf]
      %v2889 = vld [vmem:[%s2886 + $0x8] sm:$0xf]
      %v2890 = vld [vmem:[%s2886 + $0xc] sm:$0xf]
      %v2891 = vld [vmem:[%s2886 + $0x10] sm:$0xf]
      %v2892 = vld [vmem:[%s2886 + $0x14] sm:$0xf]
      %v2893 = vld [vmem:[%s2886 + $0x18] sm:$0xf]
      %v2894 = vld [vmem:[%s2886 + $0x1c] sm:$0xf]
      %v2895 = vld [vmem:[%s2886 + $0x20] sm:$0xf]
      %v2896 = vld [vmem:[%s2886 + $0x24] sm:$0xf]
      %v2897 = vld [vmem:[%s2886 + $0x28] sm:$0xf]
      %v2898 = vld [vmem:[%s2886 + $0x2c] sm:$0xf]
      %v2899 = vld [vmem:[%s2886 + $0x30] sm:$0xf]
      %v2900 = vld [vmem:[%s2886 + $0x34] sm:$0xf]
      %v2901 = vld [vmem:[%s2886 + $0x38] sm:$0xf]
      %v2902 = vld [vmem:[%s2886 + $0x3c] sm:$0xf]
      %v2903 = vpack.c.bf16 %v2884, %v2454
      %v2920 = vunpack.c.l.b16 %v2887
      %v2921 = vunpack.c.l.b16 %v2888
      %v2922 = vunpack.c.l.b16 %v2889
      %v2923 = vunpack.c.l.b16 %v2890
      %v2924 = vunpack.c.l.b16 %v2891
      %v2925 = vunpack.c.l.b16 %v2892
      %v2926 = vunpack.c.l.b16 %v2893
      %v2927 = vunpack.c.l.b16 %v2894
      %v2928 = vunpack.c.l.b16 %v2895
      %v2929 = vunpack.c.l.b16 %v2896
      %v2930 = vunpack.c.l.b16 %v2897
      %v2931 = vunpack.c.l.b16 %v2898
      %v2932 = vunpack.c.l.b16 %v2899
      %v2933 = vunpack.c.l.b16 %v2900
      %v2934 = vunpack.c.l.b16 %v2901
      %v2935 = vunpack.c.l.b16 %v2902
      %v2936 = vpack.c.b16 %v2921, %v2920
      %v2937 = vpack.c.b16 %v2923, %v2922
      %v2938 = vpack.c.b16 %v2925, %v2924
      %v2939 = vpack.c.b16 %v2927, %v2926
      %v2940 = vpack.c.b16 %v2929, %v2928
      %v2941 = vpack.c.b16 %v2931, %v2930
      %v2942 = vpack.c.b16 %v2933, %v2932
      %v2943 = vpack.c.b16 %v2935, %v2934
      %2952 = vmatprep.subr.bf16.mxu0 0
      %2953 = vmatpush1.bf16.msra.mxu0 %v2936
      %2954 = vmatprep.subr.bf16.mxu0 0
      %2955 = vmatpush1.bf16.msra.mxu0 %v2937
      %2956 = vmatprep.subr.bf16.mxu0 0
      %2957 = vmatpush1.bf16.msra.mxu0 %v2938
      %2958 = vmatprep.subr.bf16.mxu0 0
      %2959 = vmatpush1.bf16.msra.mxu0 %v2939
      %2960 = vmatprep.subr.bf16.mxu0 0
      %2961 = vmatpush1.bf16.msra.mxu0 %v2940
      %2962 = vmatprep.subr.bf16.mxu0 0
      %2963 = vmatpush1.bf16.msra.mxu0 %v2941
      %2964 = vmatprep.subr.bf16.mxu0 0
      %2965 = vmatpush1.bf16.msra.mxu0 %v2942
      %2966 = vmatprep.subr.bf16.mxu0 0
      %2967 = vmatpush1.bf16.msra.mxu0 %v2943
      %2968 = vmatprep.subr.bf16.mxu0 0
      %2969 = vmatpush1.bf16.msra.mxu0 0
      %2970 = vmatprep.subr.bf16.mxu0 0
      %2971 = vmatpush1.bf16.msra.mxu0 0
      %2972 = vmatprep.subr.bf16.mxu0 0
      %2973 = vmatpush1.bf16.msra.mxu0 0
      %2974 = vmatprep.subr.bf16.mxu0 0
      %2975 = vmatpush1.bf16.msra.mxu0 0
      %2976 = vmatprep.subr.bf16.mxu0 0
      %2977 = vmatpush1.bf16.msra.mxu0 0
      %2978 = vmatprep.subr.bf16.mxu0 0
      %2979 = vmatpush1.bf16.msra.mxu0 0
      %2980 = vmatprep.subr.bf16.mxu0 0
      %2981 = vmatpush1.bf16.msra.mxu0 0
      %2982 = vmatprep.subr.bf16.mxu0 0
      %2983 = vmatpush1.bf16.msra.mxu0 0
      %2984 = vmatprep.mubr.bf16.mxu0 0
      %2985 = vmatmul.mubr.bf16.gmra.mrb[0].mxu0 %v2038
      %v2986 = vpop.f32.mrb[0].mxu0
      %v2987 = vadd.f32 0.0, %v2986
      %v2988 = vpop.f32.mrb[0].mxu0
      %v2989 = vpop.f32.mrb[0].mxu0
      %v2990 = vadd.f32 0.0, %v2989
      %v2991 = vpop.f32.mrb[0].mxu0
      %2992 = vmatprep.mubr.bf16.mxu0 0
      %2993 = vmatmul.mubr.bf16.gmra.mrb[0].mxu0 %v2039
      %v2994 = vpop.f32.mrb[0].mxu0
      %v2995 = vadd.f32 0.0, %v2994
      %v2996 = vpop.f32.mrb[0].mxu0
      %v2997 = vpop.f32.mrb[0].mxu0
      %v2998 = vadd.f32 0.0, %v2997
      %v2999 = vpop.f32.mrb[0].mxu0
      %3000 = vmatprep.mubr.bf16.mxu0 0
      %3001 = vmatmul.mubr.bf16.gmra.mrb[0].mxu0 %v2040
      %v3002 = vpop.f32.mrb[0].mxu0
      %v3003 = vadd.f32 0.0, %v3002
      %v3004 = vpop.f32.mrb[0].mxu0
      %v3005 = vpop.f32.mrb[0].mxu0
      %v3006 = vadd.f32 0.0, %v3005
      %v3007 = vpop.f32.mrb[0].mxu0
      %3008 = vmatprep.mubr.bf16.mxu0 0
      %3009 = vmatmul.mubr.bf16.gmra.mrb[0].mxu0 %v2903
      %v3010 = vpop.f32.mrb[0].mxu0
      %v3011 = vadd.f32 0.0, %v3010
      %v3012 = vpop.f32.mrb[0].mxu0
      %v3013 = vpop.f32.mrb[0].mxu0
      %v3014 = vadd.f32 0.0, %v3013
      %v3015 = vpop.f32.mrb[0].mxu0
      %3016 = vdwg.mxu0
      %v3017 = vadd.f32 %v2874, %v2987
      %v3018 = vadd.f32 %v2875, %v2990
      %v3019 = vadd.f32 %v2876, %v2995
      %v3020 = vadd.f32 %v2877, %v2998
      %v3021 = vadd.f32 %v2878, %v3003
      %v3022 = vadd.f32 %v2879, %v3006
      %v3023 = vadd.f32 %v2880, %v3011
      %v3024 = vadd.f32 %v2881, %v3014
      %s3025 = sadd.s32 %s20, 2
      %s3026 = smul.u32 %s3025, 20
      %s3027 = smul.addr %s3026, 4
      %s3028 = scalar_lea.vmem %s196, %s3027
      %v3029 = vld [vmem:[%s3028] sm:$0xf]
      %v3030 = vld [vmem:[%s3028 + $0x4] sm:$0x1]
      %v3031 = vld [vmem:[%s3028 + $0x8] sm:$0xf]
      %v3032 = vld [vmem:[%s3028 + $0xc] sm:$0x1]
      %v3033 = vld [vmem:[%s3028 + $0x10] sm:$0xf]
      %v3034 = vld [vmem:[%s3028 + $0x14] sm:$0x1]
      %v3035 = vld [vmem:[%s3028 + $0x18] sm:$0xf]
      %v3036 = vld [vmem:[%s3028 + $0x1c] sm:$0x1]
      %v3037 = vld [vmem:[%s3028 + $0x20] sm:$0xf]
      %v3038 = vld [vmem:[%s3028 + $0x24] sm:$0x1]
      %v3039 = vld [vmem:[%s3028 + $0x28] sm:$0xf]
      %v3040 = vld [vmem:[%s3028 + $0x2c] sm:$0x1]
      %v3041 = vld [vmem:[%s3028 + $0x30] sm:$0xf]
      %v3042 = vld [vmem:[%s3028 + $0x34] sm:$0x1]
      %v3043 = vld [vmem:[%s3028 + $0x38] sm:$0xf]
      %v3044 = vld [vmem:[%s3028 + $0x3c] sm:$0x1]
      %v3045 = vld [vmem:[%s3028 + $0x40] sm:$0xf]
      %v3046 = vld [vmem:[%s3028 + $0x44] sm:$0x1]
      %v3047 = vld [vmem:[%s3028 + $0x48] sm:$0xf]
      %v3048 = vld [vmem:[%s3028 + $0x4c] sm:$0x1]
      %v3049 = vunpack.c.l.bf16 %v3029
      %v3050 = vunpack.c.l.bf16 %v3030
      %v3051 = vunpack.c.l.bf16 %v3031
      %v3052 = vunpack.c.l.bf16 %v3032
      %v3053 = vunpack.c.l.bf16 %v3033
      %v3054 = vunpack.c.l.bf16 %v3034
      %v3055 = vunpack.c.l.bf16 %v3035
      %v3056 = vunpack.c.l.bf16 %v3036
      %v3057 = vunpack.c.l.bf16 %v3037
      %v3058 = vunpack.c.l.bf16 %v3038
      %v3059 = vunpack.c.l.bf16 %v3039
      %v3060 = vunpack.c.l.bf16 %v3040
      %v3061 = vunpack.c.l.bf16 %v3041
      %v3062 = vunpack.c.l.bf16 %v3042
      %v3063 = vunpack.c.l.bf16 %v3043
      %v3064 = vunpack.c.l.bf16 %v3044
      %v3065 = vunpack.c.l.bf16 %v3045
      %v3066 = vunpack.c.l.bf16 %v3046
      %v3067 = vunpack.c.l.bf16 %v3047
      %v3068 = vunpack.c.l.bf16 %v3048
      %s3069 = scalar_lea.vmem %s1, 1152
      %v3070 = vld [vmem:[%s3069] sm:$0xf]
      %v3071 = vld [vmem:[%s3069 + $0x4] sm:$0xf]
      %v3072 = vld [vmem:[%s3069 + $0x8] sm:$0xf]
      %v3073 = vld [vmem:[%s3069 + $0xc] sm:$0xf]
      %v3074 = vld [vmem:[%s3069 + $0x10] sm:$0xf]
      %v3075 = vld [vmem:[%s3069 + $0x14] sm:$0xf]
      %v3076 = vld [vmem:[%s3069 + $0x18] sm:$0xf]
      %v3077 = vld [vmem:[%s3069 + $0x1c] sm:$0xf]
      %v3078 = vld [vmem:[%s3069 + $0x20] sm:$0xf]
      %v3079 = vld [vmem:[%s3069 + $0x24] sm:$0xf]
      %v3080 = vld [vmem:[%s3069 + $0x28] sm:$0xf]
      %v3081 = vld [vmem:[%s3069 + $0x2c] sm:$0xf]
      %v3082 = vld [vmem:[%s3069 + $0x30] sm:$0xf]
      %v3083 = vld [vmem:[%s3069 + $0x34] sm:$0xf]
      %v3084 = vld [vmem:[%s3069 + $0x38] sm:$0xf]
      %v3085 = vld [vmem:[%s3069 + $0x3c] sm:$0xf]
      %v3086 = vpack.c.bf16 %v3051, %v3049
      %v3087 = vpack.c.bf16 %v3055, %v3053
      %v3088 = vpack.c.bf16 %v3059, %v3057
      %v3089 = vpack.c.bf16 %v3063, %v3061
      %v3106 = vunpack.c.l.b16 %v3070
      %v3107 = vunpack.c.l.b16 %v3071
      %v3108 = vunpack.c.l.b16 %v3072
      %v3109 = vunpack.c.l.b16 %v3073
      %v3110 = vunpack.c.l.b16 %v3074
      %v3111 = vunpack.c.l.b16 %v3075
      %v3112 = vunpack.c.l.b16 %v3076
      %v3113 = vunpack.c.l.b16 %v3077
      %v3114 = vunpack.c.l.b16 %v3078
      %v3115 = vunpack.c.l.b16 %v3079
      %v3116 = vunpack.c.l.b16 %v3080
      %v3117 = vunpack.c.l.b16 %v3081
      %v3118 = vunpack.c.l.b16 %v3082
      %v3119 = vunpack.c.l.b16 %v3083
      %v3120 = vunpack.c.l.b16 %v3084
      %v3121 = vunpack.c.l.b16 %v3085
      %v3122 = vpack.c.b16 %v3107, %v3106
      %v3123 = vpack.c.b16 %v3109, %v3108
      %v3124 = vpack.c.b16 %v3111, %v3110
      %v3125 = vpack.c.b16 %v3113, %v3112
      %v3126 = vpack.c.b16 %v3115, %v3114
      %v3127 = vpack.c.b16 %v3117, %v3116
      %v3128 = vpack.c.b16 %v3119, %v3118
      %v3129 = vpack.c.b16 %v3121, %v3120
      %3138 = vmatprep.subr.bf16.mxu0 0
      %3139 = vmatpush1.bf16.msra.mxu0 %v3122
      %3140 = vmatprep.subr.bf16.mxu0 0
      %3141 = vmatpush1.bf16.msra.mxu0 %v3123
      %3142 = vmatprep.subr.bf16.mxu0 0
      %3143 = vmatpush1.bf16.msra.mxu0 %v3124
      %3144 = vmatprep.subr.bf16.mxu0 0
      %3145 = vmatpush1.bf16.msra.mxu0 %v3125
      %3146 = vmatprep.subr.bf16.mxu0 0
      %3147 = vmatpush1.bf16.msra.mxu0 %v3126
      %3148 = vmatprep.subr.bf16.mxu0 0
      %3149 = vmatpush1.bf16.msra.mxu0 %v3127
      %3150 = vmatprep.subr.bf16.mxu0 0
      %3151 = vmatpush1.bf16.msra.mxu0 %v3128
      %3152 = vmatprep.subr.bf16.mxu0 0
      %3153 = vmatpush1.bf16.msra.mxu0 %v3129
      %3154 = vmatprep.subr.bf16.mxu0 0
      %3155 = vmatpush1.bf16.msra.mxu0 0
      %3156 = vmatprep.subr.bf16.mxu0 0
      %3157 = vmatpush1.bf16.msra.mxu0 0
      %3158 = vmatprep.subr.bf16.mxu0 0
      %3159 = vmatpush1.bf16.msra.mxu0 0
      %3160 = vmatprep.subr.bf16.mxu0 0
      %3161 = vmatpush1.bf16.msra.mxu0 0
      %3162 = vmatprep.subr.bf16.mxu0 0
      %3163 = vmatpush1.bf16.msra.mxu0 0
      %3164 = vmatprep.subr.bf16.mxu0 0
      %3165 = vmatpush1.bf16.msra.mxu0 0
      %3166 = vmatprep.subr.bf16.mxu0 0
      %3167 = vmatpush1.bf16.msra.mxu0 0
      %3168 = vmatprep.subr.bf16.mxu0 0
      %3169 = vmatpush1.bf16.msra.mxu0 0
      %3170 = vmatprep.mubr.bf16.mxu0 0
      %3171 = vmatmul.mubr.bf16.gmra.mrb[0].mxu0 %v3086
      %v3172 = vpop.f32.mrb[0].mxu0
      %v3173 = vadd.f32 0.0, %v3172
      %v3174 = vpop.f32.mrb[0].mxu0
      %v3175 = vpop.f32.mrb[0].mxu0
      %v3176 = vadd.f32 0.0, %v3175
      %v3177 = vpop.f32.mrb[0].mxu0
      %3178 = vmatprep.mubr.bf16.mxu0 0
      %3179 = vmatmul.mubr.bf16.gmra.mrb[0].mxu0 %v3087
      %v3180 = vpop.f32.mrb[0].mxu0
      %v3181 = vadd.f32 0.0, %v3180
      %v3182 = vpop.f32.mrb[0].mxu0
      %v3183 = vpop.f32.mrb[0].mxu0
      %v3184 = vadd.f32 0.0, %v3183
      %v3185 = vpop.f32.mrb[0].mxu0
      %3186 = vmatprep.mubr.bf16.mxu0 0
      %3187 = vmatmul.mubr.bf16.gmra.mrb[0].mxu0 %v3088
      %v3188 = vpop.f32.mrb[0].mxu0
      %v3189 = vadd.f32 0.0, %v3188
      %v3190 = vpop.f32.mrb[0].mxu0
      %v3191 = vpop.f32.mrb[0].mxu0
      %v3192 = vadd.f32 0.0, %v3191
      %v3193 = vpop.f32.mrb[0].mxu0
      %3194 = vmatprep.mubr.bf16.mxu0 0
      %3195 = vmatmul.mubr.bf16.gmra.mrb[0].mxu0 %v3089
      %v3196 = vpop.f32.mrb[0].mxu0
      %v3197 = vadd.f32 0.0, %v3196
      %v3198 = vpop.f32.mrb[0].mxu0
      %v3199 = vpop.f32.mrb[0].mxu0
      %v3200 = vadd.f32 0.0, %v3199
      %v3201 = vpop.f32.mrb[0].mxu0
      %3202 = vdwg.mxu0
      %v3203 = vadd.f32 %v3017, %v3173
      %v3204 = vadd.f32 %v3018, %v3176
      %v3205 = vadd.f32 %v3019, %v3181
      %v3206 = vadd.f32 %v3020, %v3184
      %v3207 = vadd.f32 %v3021, %v3189
      %v3208 = vadd.f32 %v3022, %v3192
      %v3209 = vadd.f32 %v3023, %v3197
      %v3210 = vadd.f32 %v3024, %v3200
      %v3227 = vrot.slane %v3049, 1
      %v3228 = vrot.slane %v3050, 1
      %v3229 = vsel %vm294, %v3227, %v3228
      %v3230 = vrot.slane %v3051, 1
      %v3231 = vrot.slane %v3052, 1
      %v3232 = vsel %vm294, %v3230, %v3231
      %v3233 = vrot.slane %v3053, 1
      %v3234 = vrot.slane %v3054, 1
      %v3235 = vsel %vm294, %v3233, %v3234
      %v3236 = vrot.slane %v3055, 1
      %v3237 = vrot.slane %v3056, 1
      %v3238 = vsel %vm294, %v3236, %v3237
      %v3239 = vrot.slane %v3057, 1
      %v3240 = vrot.slane %v3058, 1
      %v3241 = vsel %vm294, %v3239, %v3240
      %v3242 = vrot.slane %v3059, 1
      %v3243 = vrot.slane %v3060, 1
      %v3244 = vsel %vm294, %v3242, %v3243
      %v3245 = vrot.slane %v3061, 1
      %v3246 = vrot.slane %v3062, 1
      %v3247 = vsel %vm294, %v3245, %v3246
      %v3248 = vrot.slane %v3063, 1
      %v3249 = vrot.slane %v3064, 1
      %v3250 = vsel %vm294, %v3248, %v3249
      %s3259 = scalar_lea.vmem %s1, 1216
      %v3260 = vld [vmem:[%s3259] sm:$0xf]
      %v3261 = vld [vmem:[%s3259 + $0x4] sm:$0xf]
      %v3262 = vld [vmem:[%s3259 + $0x8] sm:$0xf]
      %v3263 = vld [vmem:[%s3259 + $0xc] sm:$0xf]
      %v3264 = vld [vmem:[%s3259 + $0x10] sm:$0xf]
      %v3265 = vld [vmem:[%s3259 + $0x14] sm:$0xf]
      %v3266 = vld [vmem:[%s3259 + $0x18] sm:$0xf]
      %v3267 = vld [vmem:[%s3259 + $0x1c] sm:$0xf]
      %v3268 = vld [vmem:[%s3259 + $0x20] sm:$0xf]
      %v3269 = vld [vmem:[%s3259 + $0x24] sm:$0xf]
      %v3270 = vld [vmem:[%s3259 + $0x28] sm:$0xf]
      %v3271 = vld [vmem:[%s3259 + $0x2c] sm:$0xf]
      %v3272 = vld [vmem:[%s3259 + $0x30] sm:$0xf]
      %v3273 = vld [vmem:[%s3259 + $0x34] sm:$0xf]
      %v3274 = vld [vmem:[%s3259 + $0x38] sm:$0xf]
      %v3275 = vld [vmem:[%s3259 + $0x3c] sm:$0xf]
      %v3276 = vpack.c.bf16 %v3232, %v3229
      %v3277 = vpack.c.bf16 %v3238, %v3235
      %v3278 = vpack.c.bf16 %v3244, %v3241
      %v3279 = vpack.c.bf16 %v3250, %v3247
      %v3296 = vunpack.c.l.b16 %v3260
      %v3297 = vunpack.c.l.b16 %v3261
      %v3298 = vunpack.c.l.b16 %v3262
      %v3299 = vunpack.c.l.b16 %v3263
      %v3300 = vunpack.c.l.b16 %v3264
      %v3301 = vunpack.c.l.b16 %v3265
      %v3302 = vunpack.c.l.b16 %v3266
      %v3303 = vunpack.c.l.b16 %v3267
      %v3304 = vunpack.c.l.b16 %v3268
      %v3305 = vunpack.c.l.b16 %v3269
      %v3306 = vunpack.c.l.b16 %v3270
      %v3307 = vunpack.c.l.b16 %v3271
      %v3308 = vunpack.c.l.b16 %v3272
      %v3309 = vunpack.c.l.b16 %v3273
      %v3310 = vunpack.c.l.b16 %v3274
      %v3311 = vunpack.c.l.b16 %v3275
      %v3312 = vpack.c.b16 %v3297, %v3296
      %v3313 = vpack.c.b16 %v3299, %v3298
      %v3314 = vpack.c.b16 %v3301, %v3300
      %v3315 = vpack.c.b16 %v3303, %v3302
      %v3316 = vpack.c.b16 %v3305, %v3304
      %v3317 = vpack.c.b16 %v3307, %v3306
      %v3318 = vpack.c.b16 %v3309, %v3308
      %v3319 = vpack.c.b16 %v3311, %v3310
      %3328 = vmatprep.subr.bf16.mxu0 0
      %3329 = vmatpush1.bf16.msra.mxu0 %v3312
      %3330 = vmatprep.subr.bf16.mxu0 0
      %3331 = vmatpush1.bf16.msra.mxu0 %v3313
      %3332 = vmatprep.subr.bf16.mxu0 0
      %3333 = vmatpush1.bf16.msra.mxu0 %v3314
      %3334 = vmatprep.subr.bf16.mxu0 0
      %3335 = vmatpush1.bf16.msra.mxu0 %v3315
      %3336 = vmatprep.subr.bf16.mxu0 0
      %3337 = vmatpush1.bf16.msra.mxu0 %v3316
      %3338 = vmatprep.subr.bf16.mxu0 0
      %3339 = vmatpush1.bf16.msra.mxu0 %v3317
      %3340 = vmatprep.subr.bf16.mxu0 0
      %3341 = vmatpush1.bf16.msra.mxu0 %v3318
      %3342 = vmatprep.subr.bf16.mxu0 0
      %3343 = vmatpush1.bf16.msra.mxu0 %v3319
      %3344 = vmatprep.subr.bf16.mxu0 0
      %3345 = vmatpush1.bf16.msra.mxu0 0
      %3346 = vmatprep.subr.bf16.mxu0 0
      %3347 = vmatpush1.bf16.msra.mxu0 0
      %3348 = vmatprep.subr.bf16.mxu0 0
      %3349 = vmatpush1.bf16.msra.mxu0 0
      %3350 = vmatprep.subr.bf16.mxu0 0
      %3351 = vmatpush1.bf16.msra.mxu0 0
      %3352 = vmatprep.subr.bf16.mxu0 0
      %3353 = vmatpush1.bf16.msra.mxu0 0
      %3354 = vmatprep.subr.bf16.mxu0 0
      %3355 = vmatpush1.bf16.msra.mxu0 0
      %3356 = vmatprep.subr.bf16.mxu0 0
      %3357 = vmatpush1.bf16.msra.mxu0 0
      %3358 = vmatprep.subr.bf16.mxu0 0
      %3359 = vmatpush1.bf16.msra.mxu0 0
      %3360 = vmatprep.mubr.bf16.mxu0 0
      %3361 = vmatmul.mubr.bf16.gmra.mrb[0].mxu0 %v3276
      %v3362 = vpop.f32.mrb[0].mxu0
      %v3363 = vadd.f32 0.0, %v3362
      %v3364 = vpop.f32.mrb[0].mxu0
      %v3365 = vpop.f32.mrb[0].mxu0
      %v3366 = vadd.f32 0.0, %v3365
      %v3367 = vpop.f32.mrb[0].mxu0
      %3368 = vmatprep.mubr.bf16.mxu0 0
      %3369 = vmatmul.mubr.bf16.gmra.mrb[0].mxu0 %v3277
      %v3370 = vpop.f32.mrb[0].mxu0
      %v3371 = vadd.f32 0.0, %v3370
      %v3372 = vpop.f32.mrb[0].mxu0
      %v3373 = vpop.f32.mrb[0].mxu0
      %v3374 = vadd.f32 0.0, %v3373
      %v3375 = vpop.f32.mrb[0].mxu0
      %3376 = vmatprep.mubr.bf16.mxu0 0
      %3377 = vmatmul.mubr.bf16.gmra.mrb[0].mxu0 %v3278
      %v3378 = vpop.f32.mrb[0].mxu0
      %v3379 = vadd.f32 0.0, %v3378
      %v3380 = vpop.f32.mrb[0].mxu0
      %v3381 = vpop.f32.mrb[0].mxu0
      %v3382 = vadd.f32 0.0, %v3381
      %v3383 = vpop.f32.mrb[0].mxu0
      %3384 = vmatprep.mubr.bf16.mxu0 0
      %3385 = vmatmul.mubr.bf16.gmra.mrb[0].mxu0 %v3279
      %v3386 = vpop.f32.mrb[0].mxu0
      %v3387 = vadd.f32 0.0, %v3386
      %v3388 = vpop.f32.mrb[0].mxu0
      %v3389 = vpop.f32.mrb[0].mxu0
      %v3390 = vadd.f32 0.0, %v3389
      %v3391 = vpop.f32.mrb[0].mxu0
      %3392 = vdwg.mxu0
      %v3393 = vadd.f32 %v3203, %v3363
      %v3394 = vadd.f32 %v3204, %v3366
      %v3395 = vadd.f32 %v3205, %v3371
      %v3396 = vadd.f32 %v3206, %v3374
      %v3397 = vadd.f32 %v3207, %v3379
      %v3398 = vadd.f32 %v3208, %v3382
      %v3399 = vadd.f32 %v3209, %v3387
      %v3400 = vadd.f32 %v3210, %v3390
      %v3401 = vrot.slane %v3049, 2
      %v3402 = vrot.slane %v3050, 2
      %v3403 = vsel %vm574, %v3401, %v3402
      %v3404 = vrot.slane %v3051, 2
      %v3405 = vrot.slane %v3052, 2
      %v3406 = vsel %vm574, %v3404, %v3405
      %v3407 = vrot.slane %v3053, 2
      %v3408 = vrot.slane %v3054, 2
      %v3409 = vsel %vm574, %v3407, %v3408
      %v3410 = vrot.slane %v3055, 2
      %v3411 = vrot.slane %v3056, 2
      %v3412 = vsel %vm574, %v3410, %v3411
      %v3413 = vrot.slane %v3057, 2
      %v3414 = vrot.slane %v3058, 2
      %v3415 = vsel %vm574, %v3413, %v3414
      %v3416 = vrot.slane %v3059, 2
      %v3417 = vrot.slane %v3060, 2
      %v3418 = vsel %vm574, %v3416, %v3417
      %v3419 = vrot.slane %v3061, 2
      %v3420 = vrot.slane %v3062, 2
      %v3421 = vsel %vm574, %v3419, %v3420
      %v3422 = vrot.slane %v3063, 2
      %v3423 = vrot.slane %v3064, 2
      %v3424 = vsel %vm574, %v3422, %v3423
      %s3433 = scalar_lea.vmem %s1, 1280
      %v3434 = vld [vmem:[%s3433] sm:$0xf]
      %v3435 = vld [vmem:[%s3433 + $0x4] sm:$0xf]
      %v3436 = vld [vmem:[%s3433 + $0x8] sm:$0xf]
      %v3437 = vld [vmem:[%s3433 + $0xc] sm:$0xf]
      %v3438 = vld [vmem:[%s3433 + $0x10] sm:$0xf]
      %v3439 = vld [vmem:[%s3433 + $0x14] sm:$0xf]
      %v3440 = vld [vmem:[%s3433 + $0x18] sm:$0xf]
      %v3441 = vld [vmem:[%s3433 + $0x1c] sm:$0xf]
      %v3442 = vld [vmem:[%s3433 + $0x20] sm:$0xf]
      %v3443 = vld [vmem:[%s3433 + $0x24] sm:$0xf]
      %v3444 = vld [vmem:[%s3433 + $0x28] sm:$0xf]
      %v3445 = vld [vmem:[%s3433 + $0x2c] sm:$0xf]
      %v3446 = vld [vmem:[%s3433 + $0x30] sm:$0xf]
      %v3447 = vld [vmem:[%s3433 + $0x34] sm:$0xf]
      %v3448 = vld [vmem:[%s3433 + $0x38] sm:$0xf]
      %v3449 = vld [vmem:[%s3433 + $0x3c] sm:$0xf]
      %v3450 = vpack.c.bf16 %v3406, %v3403
      %v3451 = vpack.c.bf16 %v3412, %v3409
      %v3452 = vpack.c.bf16 %v3418, %v3415
      %v3453 = vpack.c.bf16 %v3424, %v3421
      %v3470 = vunpack.c.l.b16 %v3434
      %v3471 = vunpack.c.l.b16 %v3435
      %v3472 = vunpack.c.l.b16 %v3436
      %v3473 = vunpack.c.l.b16 %v3437
      %v3474 = vunpack.c.l.b16 %v3438
      %v3475 = vunpack.c.l.b16 %v3439
      %v3476 = vunpack.c.l.b16 %v3440
      %v3477 = vunpack.c.l.b16 %v3441
      %v3478 = vunpack.c.l.b16 %v3442
      %v3479 = vunpack.c.l.b16 %v3443
      %v3480 = vunpack.c.l.b16 %v3444
      %v3481 = vunpack.c.l.b16 %v3445
      %v3482 = vunpack.c.l.b16 %v3446
      %v3483 = vunpack.c.l.b16 %v3447
      %v3484 = vunpack.c.l.b16 %v3448
      %v3485 = vunpack.c.l.b16 %v3449
      %v3486 = vpack.c.b16 %v3471, %v3470
      %v3487 = vpack.c.b16 %v3473, %v3472
      %v3488 = vpack.c.b16 %v3475, %v3474
      %v3489 = vpack.c.b16 %v3477, %v3476
      %v3490 = vpack.c.b16 %v3479, %v3478
      %v3491 = vpack.c.b16 %v3481, %v3480
      %v3492 = vpack.c.b16 %v3483, %v3482
      %v3493 = vpack.c.b16 %v3485, %v3484
      %3502 = vmatprep.subr.bf16.mxu0 0
      %3503 = vmatpush1.bf16.msra.mxu0 %v3486
      %3504 = vmatprep.subr.bf16.mxu0 0
      %3505 = vmatpush1.bf16.msra.mxu0 %v3487
      %3506 = vmatprep.subr.bf16.mxu0 0
      %3507 = vmatpush1.bf16.msra.mxu0 %v3488
      %3508 = vmatprep.subr.bf16.mxu0 0
      %3509 = vmatpush1.bf16.msra.mxu0 %v3489
      %3510 = vmatprep.subr.bf16.mxu0 0
      %3511 = vmatpush1.bf16.msra.mxu0 %v3490
      %3512 = vmatprep.subr.bf16.mxu0 0
      %3513 = vmatpush1.bf16.msra.mxu0 %v3491
      %3514 = vmatprep.subr.bf16.mxu0 0
      %3515 = vmatpush1.bf16.msra.mxu0 %v3492
      %3516 = vmatprep.subr.bf16.mxu0 0
      %3517 = vmatpush1.bf16.msra.mxu0 %v3493
      %3518 = vmatprep.subr.bf16.mxu0 0
      %3519 = vmatpush1.bf16.msra.mxu0 0
      %3520 = vmatprep.subr.bf16.mxu0 0
      %3521 = vmatpush1.bf16.msra.mxu0 0
      %3522 = vmatprep.subr.bf16.mxu0 0
      %3523 = vmatpush1.bf16.msra.mxu0 0
      %3524 = vmatprep.subr.bf16.mxu0 0
      %3525 = vmatpush1.bf16.msra.mxu0 0
      %3526 = vmatprep.subr.bf16.mxu0 0
      %3527 = vmatpush1.bf16.msra.mxu0 0
      %3528 = vmatprep.subr.bf16.mxu0 0
      %3529 = vmatpush1.bf16.msra.mxu0 0
      %3530 = vmatprep.subr.bf16.mxu0 0
      %3531 = vmatpush1.bf16.msra.mxu0 0
      %3532 = vmatprep.subr.bf16.mxu0 0
      %3533 = vmatpush1.bf16.msra.mxu0 0
      %3534 = vmatprep.mubr.bf16.mxu0 0
      %3535 = vmatmul.mubr.bf16.gmra.mrb[0].mxu0 %v3450
      %v3536 = vpop.f32.mrb[0].mxu0
      %v3537 = vadd.f32 0.0, %v3536
      %v3538 = vpop.f32.mrb[0].mxu0
      %v3539 = vpop.f32.mrb[0].mxu0
      %v3540 = vadd.f32 0.0, %v3539
      %v3541 = vpop.f32.mrb[0].mxu0
      %3542 = vmatprep.mubr.bf16.mxu0 0
      %3543 = vmatmul.mubr.bf16.gmra.mrb[0].mxu0 %v3451
      %v3544 = vpop.f32.mrb[0].mxu0
      %v3545 = vadd.f32 0.0, %v3544
      %v3546 = vpop.f32.mrb[0].mxu0
      %v3547 = vpop.f32.mrb[0].mxu0
      %v3548 = vadd.f32 0.0, %v3547
      %v3549 = vpop.f32.mrb[0].mxu0
      %3550 = vmatprep.mubr.bf16.mxu0 0
      %3551 = vmatmul.mubr.bf16.gmra.mrb[0].mxu0 %v3452
      %v3552 = vpop.f32.mrb[0].mxu0
      %v3553 = vadd.f32 0.0, %v3552
      %v3554 = vpop.f32.mrb[0].mxu0
      %v3555 = vpop.f32.mrb[0].mxu0
      %v3556 = vadd.f32 0.0, %v3555
      %v3557 = vpop.f32.mrb[0].mxu0
      %3558 = vmatprep.mubr.bf16.mxu0 0
      %3559 = vmatmul.mubr.bf16.gmra.mrb[0].mxu0 %v3453
      %v3560 = vpop.f32.mrb[0].mxu0
      %v3561 = vadd.f32 0.0, %v3560
      %v3562 = vpop.f32.mrb[0].mxu0
      %v3563 = vpop.f32.mrb[0].mxu0
      %v3564 = vadd.f32 0.0, %v3563
      %v3565 = vpop.f32.mrb[0].mxu0
      %3566 = vdwg.mxu0
      %v3567 = vadd.f32 %v3393, %v3537
      %v3568 = vadd.f32 %v3394, %v3540
      %v3569 = vadd.f32 %v3395, %v3545
      %v3570 = vadd.f32 %v3396, %v3548
      %v3571 = vadd.f32 %v3397, %v3553
      %v3572 = vadd.f32 %v3398, %v3556
      %v3573 = vadd.f32 %v3399, %v3561
      %v3574 = vadd.f32 %v3400, %v3564
      %s3575 = scalar_lea.vmem %s1, 1344
      %v3576 = vld [vmem:[%s3575] sm:$0xf]
      %v3577 = vld [vmem:[%s3575 + $0x4] sm:$0xf]
      %v3578 = vld [vmem:[%s3575 + $0x8] sm:$0xf]
      %v3579 = vld [vmem:[%s3575 + $0xc] sm:$0xf]
      %v3580 = vld [vmem:[%s3575 + $0x10] sm:$0xf]
      %v3581 = vld [vmem:[%s3575 + $0x14] sm:$0xf]
      %v3582 = vld [vmem:[%s3575 + $0x18] sm:$0xf]
      %v3583 = vld [vmem:[%s3575 + $0x1c] sm:$0xf]
      %v3584 = vld [vmem:[%s3575 + $0x20] sm:$0xf]
      %v3585 = vld [vmem:[%s3575 + $0x24] sm:$0xf]
      %v3586 = vld [vmem:[%s3575 + $0x28] sm:$0xf]
      %v3587 = vld [vmem:[%s3575 + $0x2c] sm:$0xf]
      %v3588 = vld [vmem:[%s3575 + $0x30] sm:$0xf]
      %v3589 = vld [vmem:[%s3575 + $0x34] sm:$0xf]
      %v3590 = vld [vmem:[%s3575 + $0x38] sm:$0xf]
      %v3591 = vld [vmem:[%s3575 + $0x3c] sm:$0xf]
      %v3592 = vpack.c.bf16 %v3053, %v3051
      %v3593 = vpack.c.bf16 %v3057, %v3055
      %v3594 = vpack.c.bf16 %v3061, %v3059
      %v3595 = vpack.c.bf16 %v3065, %v3063
      %v3612 = vunpack.c.l.b16 %v3576
      %v3613 = vunpack.c.l.b16 %v3577
      %v3614 = vunpack.c.l.b16 %v3578
      %v3615 = vunpack.c.l.b16 %v3579
      %v3616 = vunpack.c.l.b16 %v3580
      %v3617 = vunpack.c.l.b16 %v3581
      %v3618 = vunpack.c.l.b16 %v3582
      %v3619 = vunpack.c.l.b16 %v3583
      %v3620 = vunpack.c.l.b16 %v3584
      %v3621 = vunpack.c.l.b16 %v3585
      %v3622 = vunpack.c.l.b16 %v3586
      %v3623 = vunpack.c.l.b16 %v3587
      %v3624 = vunpack.c.l.b16 %v3588
      %v3625 = vunpack.c.l.b16 %v3589
      %v3626 = vunpack.c.l.b16 %v3590
      %v3627 = vunpack.c.l.b16 %v3591
      %v3628 = vpack.c.b16 %v3613, %v3612
      %v3629 = vpack.c.b16 %v3615, %v3614
      %v3630 = vpack.c.b16 %v3617, %v3616
      %v3631 = vpack.c.b16 %v3619, %v3618
      %v3632 = vpack.c.b16 %v3621, %v3620
      %v3633 = vpack.c.b16 %v3623, %v3622
      %v3634 = vpack.c.b16 %v3625, %v3624
      %v3635 = vpack.c.b16 %v3627, %v3626
      %3644 = vmatprep.subr.bf16.mxu0 0
      %3645 = vmatpush1.bf16.msra.mxu0 %v3628
      %3646 = vmatprep.subr.bf16.mxu0 0
      %3647 = vmatpush1.bf16.msra.mxu0 %v3629
      %3648 = vmatprep.subr.bf16.mxu0 0
      %3649 = vmatpush1.bf16.msra.mxu0 %v3630
      %3650 = vmatprep.subr.bf16.mxu0 0
      %3651 = vmatpush1.bf16.msra.mxu0 %v3631
      %3652 = vmatprep.subr.bf16.mxu0 0
      %3653 = vmatpush1.bf16.msra.mxu0 %v3632
      %3654 = vmatprep.subr.bf16.mxu0 0
      %3655 = vmatpush1.bf16.msra.mxu0 %v3633
      %3656 = vmatprep.subr.bf16.mxu0 0
      %3657 = vmatpush1.bf16.msra.mxu0 %v3634
      %3658 = vmatprep.subr.bf16.mxu0 0
      %3659 = vmatpush1.bf16.msra.mxu0 %v3635
      %3660 = vmatprep.subr.bf16.mxu0 0
      %3661 = vmatpush1.bf16.msra.mxu0 0
      %3662 = vmatprep.subr.bf16.mxu0 0
      %3663 = vmatpush1.bf16.msra.mxu0 0
      %3664 = vmatprep.subr.bf16.mxu0 0
      %3665 = vmatpush1.bf16.msra.mxu0 0
      %3666 = vmatprep.subr.bf16.mxu0 0
      %3667 = vmatpush1.bf16.msra.mxu0 0
      %3668 = vmatprep.subr.bf16.mxu0 0
      %3669 = vmatpush1.bf16.msra.mxu0 0
      %3670 = vmatprep.subr.bf16.mxu0 0
      %3671 = vmatpush1.bf16.msra.mxu0 0
      %3672 = vmatprep.subr.bf16.mxu0 0
      %3673 = vmatpush1.bf16.msra.mxu0 0
      %3674 = vmatprep.subr.bf16.mxu0 0
      %3675 = vmatpush1.bf16.msra.mxu0 0
      %3676 = vmatprep.mubr.bf16.mxu0 0
      %3677 = vmatmul.mubr.bf16.gmra.mrb[0].mxu0 %v3592
      %v3678 = vpop.f32.mrb[0].mxu0
      %v3679 = vadd.f32 0.0, %v3678
      %v3680 = vpop.f32.mrb[0].mxu0
      %v3681 = vpop.f32.mrb[0].mxu0
      %v3682 = vadd.f32 0.0, %v3681
      %v3683 = vpop.f32.mrb[0].mxu0
      %3684 = vmatprep.mubr.bf16.mxu0 0
      %3685 = vmatmul.mubr.bf16.gmra.mrb[0].mxu0 %v3593
      %v3686 = vpop.f32.mrb[0].mxu0
      %v3687 = vadd.f32 0.0, %v3686
      %v3688 = vpop.f32.mrb[0].mxu0
      %v3689 = vpop.f32.mrb[0].mxu0
      %v3690 = vadd.f32 0.0, %v3689
      %v3691 = vpop.f32.mrb[0].mxu0
      %3692 = vmatprep.mubr.bf16.mxu0 0
      %3693 = vmatmul.mubr.bf16.gmra.mrb[0].mxu0 %v3594
      %v3694 = vpop.f32.mrb[0].mxu0
      %v3695 = vadd.f32 0.0, %v3694
      %v3696 = vpop.f32.mrb[0].mxu0
      %v3697 = vpop.f32.mrb[0].mxu0
      %v3698 = vadd.f32 0.0, %v3697
      %v3699 = vpop.f32.mrb[0].mxu0
      %3700 = vmatprep.mubr.bf16.mxu0 0
      %3701 = vmatmul.mubr.bf16.gmra.mrb[0].mxu0 %v3595
      %v3702 = vpop.f32.mrb[0].mxu0
      %v3703 = vadd.f32 0.0, %v3702
      %v3704 = vpop.f32.mrb[0].mxu0
      %v3705 = vpop.f32.mrb[0].mxu0
      %v3706 = vadd.f32 0.0, %v3705
      %v3707 = vpop.f32.mrb[0].mxu0
      %3708 = vdwg.mxu0
      %v3709 = vadd.f32 %v3567, %v3679
      %v3710 = vadd.f32 %v3568, %v3682
      %v3711 = vadd.f32 %v3569, %v3687
      %v3712 = vadd.f32 %v3570, %v3690
      %v3713 = vadd.f32 %v3571, %v3695
      %v3714 = vadd.f32 %v3572, %v3698
      %v3715 = vadd.f32 %v3573, %v3703
      %v3716 = vadd.f32 %v3574, %v3706
      %v3719 = vrot.slane %v3065, 1
      %v3720 = vrot.slane %v3066, 1
      %v3721 = vsel %vm294, %v3719, %v3720
      %s3723 = scalar_lea.vmem %s1, 1408
      %v3724 = vld [vmem:[%s3723] sm:$0xf]
      %v3725 = vld [vmem:[%s3723 + $0x4] sm:$0xf]
      %v3726 = vld [vmem:[%s3723 + $0x8] sm:$0xf]
      %v3727 = vld [vmem:[%s3723 + $0xc] sm:$0xf]
      %v3728 = vld [vmem:[%s3723 + $0x10] sm:$0xf]
      %v3729 = vld [vmem:[%s3723 + $0x14] sm:$0xf]
      %v3730 = vld [vmem:[%s3723 + $0x18] sm:$0xf]
      %v3731 = vld [vmem:[%s3723 + $0x1c] sm:$0xf]
      %v3732 = vld [vmem:[%s3723 + $0x20] sm:$0xf]
      %v3733 = vld [vmem:[%s3723 + $0x24] sm:$0xf]
      %v3734 = vld [vmem:[%s3723 + $0x28] sm:$0xf]
      %v3735 = vld [vmem:[%s3723 + $0x2c] sm:$0xf]
      %v3736 = vld [vmem:[%s3723 + $0x30] sm:$0xf]
      %v3737 = vld [vmem:[%s3723 + $0x34] sm:$0xf]
      %v3738 = vld [vmem:[%s3723 + $0x38] sm:$0xf]
      %v3739 = vld [vmem:[%s3723 + $0x3c] sm:$0xf]
      %v3740 = vpack.c.bf16 %v3235, %v3232
      %v3741 = vpack.c.bf16 %v3241, %v3238
      %v3742 = vpack.c.bf16 %v3247, %v3244
      %v3743 = vpack.c.bf16 %v3721, %v3250
      %v3760 = vunpack.c.l.b16 %v3724
      %v3761 = vunpack.c.l.b16 %v3725
      %v3762 = vunpack.c.l.b16 %v3726
      %v3763 = vunpack.c.l.b16 %v3727
      %v3764 = vunpack.c.l.b16 %v3728
      %v3765 = vunpack.c.l.b16 %v3729
      %v3766 = vunpack.c.l.b16 %v3730
      %v3767 = vunpack.c.l.b16 %v3731
      %v3768 = vunpack.c.l.b16 %v3732
      %v3769 = vunpack.c.l.b16 %v3733
      %v3770 = vunpack.c.l.b16 %v3734
      %v3771 = vunpack.c.l.b16 %v3735
      %v3772 = vunpack.c.l.b16 %v3736
      %v3773 = vunpack.c.l.b16 %v3737
      %v3774 = vunpack.c.l.b16 %v3738
      %v3775 = vunpack.c.l.b16 %v3739
      %v3776 = vpack.c.b16 %v3761, %v3760
      %v3777 = vpack.c.b16 %v3763, %v3762
      %v3778 = vpack.c.b16 %v3765, %v3764
      %v3779 = vpack.c.b16 %v3767, %v3766
      %v3780 = vpack.c.b16 %v3769, %v3768
      %v3781 = vpack.c.b16 %v3771, %v3770
      %v3782 = vpack.c.b16 %v3773, %v3772
      %v3783 = vpack.c.b16 %v3775, %v3774
      %3792 = vmatprep.subr.bf16.mxu0 0
      %3793 = vmatpush1.bf16.msra.mxu0 %v3776
      %3794 = vmatprep.subr.bf16.mxu0 0
      %3795 = vmatpush1.bf16.msra.mxu0 %v3777
      %3796 = vmatprep.subr.bf16.mxu0 0
      %3797 = vmatpush1.bf16.msra.mxu0 %v3778
      %3798 = vmatprep.subr.bf16.mxu0 0
      %3799 = vmatpush1.bf16.msra.mxu0 %v3779
      %3800 = vmatprep.subr.bf16.mxu0 0
      %3801 = vmatpush1.bf16.msra.mxu0 %v3780
      %3802 = vmatprep.subr.bf16.mxu0 0
      %3803 = vmatpush1.bf16.msra.mxu0 %v3781
      %3804 = vmatprep.subr.bf16.mxu0 0
      %3805 = vmatpush1.bf16.msra.mxu0 %v3782
      %3806 = vmatprep.subr.bf16.mxu0 0
      %3807 = vmatpush1.bf16.msra.mxu0 %v3783
      %3808 = vmatprep.subr.bf16.mxu0 0
      %3809 = vmatpush1.bf16.msra.mxu0 0
      %3810 = vmatprep.subr.bf16.mxu0 0
      %3811 = vmatpush1.bf16.msra.mxu0 0
      %3812 = vmatprep.subr.bf16.mxu0 0
      %3813 = vmatpush1.bf16.msra.mxu0 0
      %3814 = vmatprep.subr.bf16.mxu0 0
      %3815 = vmatpush1.bf16.msra.mxu0 0
      %3816 = vmatprep.subr.bf16.mxu0 0
      %3817 = vmatpush1.bf16.msra.mxu0 0
      %3818 = vmatprep.subr.bf16.mxu0 0
      %3819 = vmatpush1.bf16.msra.mxu0 0
      %3820 = vmatprep.subr.bf16.mxu0 0
      %3821 = vmatpush1.bf16.msra.mxu0 0
      %3822 = vmatprep.subr.bf16.mxu0 0
      %3823 = vmatpush1.bf16.msra.mxu0 0
      %3824 = vmatprep.mubr.bf16.mxu0 0
      %3825 = vmatmul.mubr.bf16.gmra.mrb[0].mxu0 %v3740
      %v3826 = vpop.f32.mrb[0].mxu0
      %v3827 = vadd.f32 0.0, %v3826
      %v3828 = vpop.f32.mrb[0].mxu0
      %v3829 = vpop.f32.mrb[0].mxu0
      %v3830 = vadd.f32 0.0, %v3829
      %v3831 = vpop.f32.mrb[0].mxu0
      %3832 = vmatprep.mubr.bf16.mxu0 0
      %3833 = vmatmul.mubr.bf16.gmra.mrb[0].mxu0 %v3741
      %v3834 = vpop.f32.mrb[0].mxu0
      %v3835 = vadd.f32 0.0, %v3834
      %v3836 = vpop.f32.mrb[0].mxu0
      %v3837 = vpop.f32.mrb[0].mxu0
      %v3838 = vadd.f32 0.0, %v3837
      %v3839 = vpop.f32.mrb[0].mxu0
      %3840 = vmatprep.mubr.bf16.mxu0 0
      %3841 = vmatmul.mubr.bf16.gmra.mrb[0].mxu0 %v3742
      %v3842 = vpop.f32.mrb[0].mxu0
      %v3843 = vadd.f32 0.0, %v3842
      %v3844 = vpop.f32.mrb[0].mxu0
      %v3845 = vpop.f32.mrb[0].mxu0
      %v3846 = vadd.f32 0.0, %v3845
      %v3847 = vpop.f32.mrb[0].mxu0
      %3848 = vmatprep.mubr.bf16.mxu0 0
      %3849 = vmatmul.mubr.bf16.gmra.mrb[0].mxu0 %v3743
      %v3850 = vpop.f32.mrb[0].mxu0
      %v3851 = vadd.f32 0.0, %v3850
      %v3852 = vpop.f32.mrb[0].mxu0
      %v3853 = vpop.f32.mrb[0].mxu0
      %v3854 = vadd.f32 0.0, %v3853
      %v3855 = vpop.f32.mrb[0].mxu0
      %3856 = vdwg.mxu0
      %v3857 = vadd.f32 %v3709, %v3827
      %v3858 = vadd.f32 %v3710, %v3830
      %v3859 = vadd.f32 %v3711, %v3835
      %v3860 = vadd.f32 %v3712, %v3838
      %v3861 = vadd.f32 %v3713, %v3843
      %v3862 = vadd.f32 %v3714, %v3846
      %v3863 = vadd.f32 %v3715, %v3851
      %v3864 = vadd.f32 %v3716, %v3854
      %v3865 = vrot.slane %v3065, 2
      %v3866 = vrot.slane %v3066, 2
      %v3867 = vsel %vm574, %v3865, %v3866
      %s3869 = scalar_lea.vmem %s1, 1472
      %v3870 = vld [vmem:[%s3869] sm:$0xf]
      %v3871 = vld [vmem:[%s3869 + $0x4] sm:$0xf]
      %v3872 = vld [vmem:[%s3869 + $0x8] sm:$0xf]
      %v3873 = vld [vmem:[%s3869 + $0xc] sm:$0xf]
      %v3874 = vld [vmem:[%s3869 + $0x10] sm:$0xf]
      %v3875 = vld [vmem:[%s3869 + $0x14] sm:$0xf]
      %v3876 = vld [vmem:[%s3869 + $0x18] sm:$0xf]
      %v3877 = vld [vmem:[%s3869 + $0x1c] sm:$0xf]
      %v3878 = vld [vmem:[%s3869 + $0x20] sm:$0xf]
      %v3879 = vld [vmem:[%s3869 + $0x24] sm:$0xf]
      %v3880 = vld [vmem:[%s3869 + $0x28] sm:$0xf]
      %v3881 = vld [vmem:[%s3869 + $0x2c] sm:$0xf]
      %v3882 = vld [vmem:[%s3869 + $0x30] sm:$0xf]
      %v3883 = vld [vmem:[%s3869 + $0x34] sm:$0xf]
      %v3884 = vld [vmem:[%s3869 + $0x38] sm:$0xf]
      %v3885 = vld [vmem:[%s3869 + $0x3c] sm:$0xf]
      %v3886 = vpack.c.bf16 %v3409, %v3406
      %v3887 = vpack.c.bf16 %v3415, %v3412
      %v3888 = vpack.c.bf16 %v3421, %v3418
      %v3889 = vpack.c.bf16 %v3867, %v3424
      %v3906 = vunpack.c.l.b16 %v3870
      %v3907 = vunpack.c.l.b16 %v3871
      %v3908 = vunpack.c.l.b16 %v3872
      %v3909 = vunpack.c.l.b16 %v3873
      %v3910 = vunpack.c.l.b16 %v3874
      %v3911 = vunpack.c.l.b16 %v3875
      %v3912 = vunpack.c.l.b16 %v3876
      %v3913 = vunpack.c.l.b16 %v3877
      %v3914 = vunpack.c.l.b16 %v3878
      %v3915 = vunpack.c.l.b16 %v3879
      %v3916 = vunpack.c.l.b16 %v3880
      %v3917 = vunpack.c.l.b16 %v3881
      %v3918 = vunpack.c.l.b16 %v3882
      %v3919 = vunpack.c.l.b16 %v3883
      %v3920 = vunpack.c.l.b16 %v3884
      %v3921 = vunpack.c.l.b16 %v3885
      %v3922 = vpack.c.b16 %v3907, %v3906
      %v3923 = vpack.c.b16 %v3909, %v3908
      %v3924 = vpack.c.b16 %v3911, %v3910
      %v3925 = vpack.c.b16 %v3913, %v3912
      %v3926 = vpack.c.b16 %v3915, %v3914
      %v3927 = vpack.c.b16 %v3917, %v3916
      %v3928 = vpack.c.b16 %v3919, %v3918
      %v3929 = vpack.c.b16 %v3921, %v3920
      %3938 = vmatprep.subr.bf16.mxu0 0
      %3939 = vmatpush1.bf16.msra.mxu0 %v3922
      %3940 = vmatprep.subr.bf16.mxu0 0
      %3941 = vmatpush1.bf16.msra.mxu0 %v3923
      %3942 = vmatprep.subr.bf16.mxu0 0
      %3943 = vmatpush1.bf16.msra.mxu0 %v3924
      %3944 = vmatprep.subr.bf16.mxu0 0
      %3945 = vmatpush1.bf16.msra.mxu0 %v3925
      %3946 = vmatprep.subr.bf16.mxu0 0
      %3947 = vmatpush1.bf16.msra.mxu0 %v3926
      %3948 = vmatprep.subr.bf16.mxu0 0
      %3949 = vmatpush1.bf16.msra.mxu0 %v3927
      %3950 = vmatprep.subr.bf16.mxu0 0
      %3951 = vmatpush1.bf16.msra.mxu0 %v3928
      %3952 = vmatprep.subr.bf16.mxu0 0
      %3953 = vmatpush1.bf16.msra.mxu0 %v3929
      %3954 = vmatprep.subr.bf16.mxu0 0
      %3955 = vmatpush1.bf16.msra.mxu0 0
      %3956 = vmatprep.subr.bf16.mxu0 0
      %3957 = vmatpush1.bf16.msra.mxu0 0
      %3958 = vmatprep.subr.bf16.mxu0 0
      %3959 = vmatpush1.bf16.msra.mxu0 0
      %3960 = vmatprep.subr.bf16.mxu0 0
      %3961 = vmatpush1.bf16.msra.mxu0 0
      %3962 = vmatprep.subr.bf16.mxu0 0
      %3963 = vmatpush1.bf16.msra.mxu0 0
      %3964 = vmatprep.subr.bf16.mxu0 0
      %3965 = vmatpush1.bf16.msra.mxu0 0
      %3966 = vmatprep.subr.bf16.mxu0 0
      %3967 = vmatpush1.bf16.msra.mxu0 0
      %3968 = vmatprep.subr.bf16.mxu0 0
      %3969 = vmatpush1.bf16.msra.mxu0 0
      %3970 = vmatprep.mubr.bf16.mxu0 0
      %3971 = vmatmul.mubr.bf16.gmra.mrb[0].mxu0 %v3886
      %v3972 = vpop.f32.mrb[0].mxu0
      %v3973 = vadd.f32 0.0, %v3972
      %v3974 = vpop.f32.mrb[0].mxu0
      %v3975 = vpop.f32.mrb[0].mxu0
      %v3976 = vadd.f32 0.0, %v3975
      %v3977 = vpop.f32.mrb[0].mxu0
      %3978 = vmatprep.mubr.bf16.mxu0 0
      %3979 = vmatmul.mubr.bf16.gmra.mrb[0].mxu0 %v3887
      %v3980 = vpop.f32.mrb[0].mxu0
      %v3981 = vadd.f32 0.0, %v3980
      %v3982 = vpop.f32.mrb[0].mxu0
      %v3983 = vpop.f32.mrb[0].mxu0
      %v3984 = vadd.f32 0.0, %v3983
      %v3985 = vpop.f32.mrb[0].mxu0
      %3986 = vmatprep.mubr.bf16.mxu0 0
      %3987 = vmatmul.mubr.bf16.gmra.mrb[0].mxu0 %v3888
      %v3988 = vpop.f32.mrb[0].mxu0
      %v3989 = vadd.f32 0.0, %v3988
      %v3990 = vpop.f32.mrb[0].mxu0
      %v3991 = vpop.f32.mrb[0].mxu0
      %v3992 = vadd.f32 0.0, %v3991
      %v3993 = vpop.f32.mrb[0].mxu0
      %3994 = vmatprep.mubr.bf16.mxu0 0
      %3995 = vmatmul.mubr.bf16.gmra.mrb[0].mxu0 %v3889
      %v3996 = vpop.f32.mrb[0].mxu0
      %v3997 = vadd.f32 0.0, %v3996
      %v3998 = vpop.f32.mrb[0].mxu0
      %v3999 = vpop.f32.mrb[0].mxu0
      %v4000 = vadd.f32 0.0, %v3999
      %v4001 = vpop.f32.mrb[0].mxu0
      %4002 = vdwg.mxu0
      %v4003 = vadd.f32 %v3857, %v3973
      %v4004 = vadd.f32 %v3858, %v3976
      %v4005 = vadd.f32 %v3859, %v3981
      %v4006 = vadd.f32 %v3860, %v3984
      %v4007 = vadd.f32 %v3861, %v3989
      %v4008 = vadd.f32 %v3862, %v3992
      %v4009 = vadd.f32 %v3863, %v3997
      %v4010 = vadd.f32 %v3864, %v4000
      %s4011 = scalar_lea.vmem %s1, 1536
      %v4012 = vld [vmem:[%s4011] sm:$0xf]
      %v4013 = vld [vmem:[%s4011 + $0x4] sm:$0xf]
      %v4014 = vld [vmem:[%s4011 + $0x8] sm:$0xf]
      %v4015 = vld [vmem:[%s4011 + $0xc] sm:$0xf]
      %v4016 = vld [vmem:[%s4011 + $0x10] sm:$0xf]
      %v4017 = vld [vmem:[%s4011 + $0x14] sm:$0xf]
      %v4018 = vld [vmem:[%s4011 + $0x18] sm:$0xf]
      %v4019 = vld [vmem:[%s4011 + $0x1c] sm:$0xf]
      %v4020 = vld [vmem:[%s4011 + $0x20] sm:$0xf]
      %v4021 = vld [vmem:[%s4011 + $0x24] sm:$0xf]
      %v4022 = vld [vmem:[%s4011 + $0x28] sm:$0xf]
      %v4023 = vld [vmem:[%s4011 + $0x2c] sm:$0xf]
      %v4024 = vld [vmem:[%s4011 + $0x30] sm:$0xf]
      %v4025 = vld [vmem:[%s4011 + $0x34] sm:$0xf]
      %v4026 = vld [vmem:[%s4011 + $0x38] sm:$0xf]
      %v4027 = vld [vmem:[%s4011 + $0x3c] sm:$0xf]
      %v4028 = vpack.c.bf16 %v3067, %v3065
      %v4045 = vunpack.c.l.b16 %v4012
      %v4046 = vunpack.c.l.b16 %v4013
      %v4047 = vunpack.c.l.b16 %v4014
      %v4048 = vunpack.c.l.b16 %v4015
      %v4049 = vunpack.c.l.b16 %v4016
      %v4050 = vunpack.c.l.b16 %v4017
      %v4051 = vunpack.c.l.b16 %v4018
      %v4052 = vunpack.c.l.b16 %v4019
      %v4053 = vunpack.c.l.b16 %v4020
      %v4054 = vunpack.c.l.b16 %v4021
      %v4055 = vunpack.c.l.b16 %v4022
      %v4056 = vunpack.c.l.b16 %v4023
      %v4057 = vunpack.c.l.b16 %v4024
      %v4058 = vunpack.c.l.b16 %v4025
      %v4059 = vunpack.c.l.b16 %v4026
      %v4060 = vunpack.c.l.b16 %v4027
      %v4061 = vpack.c.b16 %v4046, %v4045
      %v4062 = vpack.c.b16 %v4048, %v4047
      %v4063 = vpack.c.b16 %v4050, %v4049
      %v4064 = vpack.c.b16 %v4052, %v4051
      %v4065 = vpack.c.b16 %v4054, %v4053
      %v4066 = vpack.c.b16 %v4056, %v4055
      %v4067 = vpack.c.b16 %v4058, %v4057
      %v4068 = vpack.c.b16 %v4060, %v4059
      %4077 = vmatprep.subr.bf16.mxu0 0
      %4078 = vmatpush1.bf16.msra.mxu0 %v4061
      %4079 = vmatprep.subr.bf16.mxu0 0
      %4080 = vmatpush1.bf16.msra.mxu0 %v4062
      %4081 = vmatprep.subr.bf16.mxu0 0
      %4082 = vmatpush1.bf16.msra.mxu0 %v4063
      %4083 = vmatprep.subr.bf16.mxu0 0
      %4084 = vmatpush1.bf16.msra.mxu0 %v4064
      %4085 = vmatprep.subr.bf16.mxu0 0
      %4086 = vmatpush1.bf16.msra.mxu0 %v4065
      %4087 = vmatprep.subr.bf16.mxu0 0
      %4088 = vmatpush1.bf16.msra.mxu0 %v4066
      %4089 = vmatprep.subr.bf16.mxu0 0
      %4090 = vmatpush1.bf16.msra.mxu0 %v4067
      %4091 = vmatprep.subr.bf16.mxu0 0
      %4092 = vmatpush1.bf16.msra.mxu0 %v4068
      %4093 = vmatprep.subr.bf16.mxu0 0
      %4094 = vmatpush1.bf16.msra.mxu0 0
      %4095 = vmatprep.subr.bf16.mxu0 0
      %4096 = vmatpush1.bf16.msra.mxu0 0
      %4097 = vmatprep.subr.bf16.mxu0 0
      %4098 = vmatpush1.bf16.msra.mxu0 0
      %4099 = vmatprep.subr.bf16.mxu0 0
      %4100 = vmatpush1.bf16.msra.mxu0 0
      %4101 = vmatprep.subr.bf16.mxu0 0
      %4102 = vmatpush1.bf16.msra.mxu0 0
      %4103 = vmatprep.subr.bf16.mxu0 0
      %4104 = vmatpush1.bf16.msra.mxu0 0
      %4105 = vmatprep.subr.bf16.mxu0 0
      %4106 = vmatpush1.bf16.msra.mxu0 0
      %4107 = vmatprep.subr.bf16.mxu0 0
      %4108 = vmatpush1.bf16.msra.mxu0 0
      %4109 = vmatprep.mubr.bf16.mxu0 0
      %4110 = vmatmul.mubr.bf16.gmra.mrb[0].mxu0 %v3087
      %v4111 = vpop.f32.mrb[0].mxu0
      %v4112 = vadd.f32 0.0, %v4111
      %v4113 = vpop.f32.mrb[0].mxu0
      %v4114 = vpop.f32.mrb[0].mxu0
      %v4115 = vadd.f32 0.0, %v4114
      %v4116 = vpop.f32.mrb[0].mxu0
      %4117 = vmatprep.mubr.bf16.mxu0 0
      %4118 = vmatmul.mubr.bf16.gmra.mrb[0].mxu0 %v3088
      %v4119 = vpop.f32.mrb[0].mxu0
      %v4120 = vadd.f32 0.0, %v4119
      %v4121 = vpop.f32.mrb[0].mxu0
      %v4122 = vpop.f32.mrb[0].mxu0
      %v4123 = vadd.f32 0.0, %v4122
      %v4124 = vpop.f32.mrb[0].mxu0
      %4125 = vmatprep.mubr.bf16.mxu0 0
      %4126 = vmatmul.mubr.bf16.gmra.mrb[0].mxu0 %v3089
      %v4127 = vpop.f32.mrb[0].mxu0
      %v4128 = vadd.f32 0.0, %v4127
      %v4129 = vpop.f32.mrb[0].mxu0
      %v4130 = vpop.f32.mrb[0].mxu0
      %v4131 = vadd.f32 0.0, %v4130
      %v4132 = vpop.f32.mrb[0].mxu0
      %4133 = vmatprep.mubr.bf16.mxu0 0
      %4134 = vmatmul.mubr.bf16.gmra.mrb[0].mxu0 %v4028
      %v4135 = vpop.f32.mrb[0].mxu0
      %v4136 = vadd.f32 0.0, %v4135
      %v4137 = vpop.f32.mrb[0].mxu0
      %v4138 = vpop.f32.mrb[0].mxu0
      %v4139 = vadd.f32 0.0, %v4138
      %v4140 = vpop.f32.mrb[0].mxu0
      %4141 = vdwg.mxu0
      %v4142 = vadd.f32 %v4003, %v4112
      %v4143 = vadd.f32 %v4004, %v4115
      %v4144 = vadd.f32 %v4005, %v4120
      %v4145 = vadd.f32 %v4006, %v4123
      %v4146 = vadd.f32 %v4007, %v4128
      %v4147 = vadd.f32 %v4008, %v4131
      %v4148 = vadd.f32 %v4009, %v4136
      %v4149 = vadd.f32 %v4010, %v4139
      %v4152 = vrot.slane %v3067, 1
      %v4153 = vrot.slane %v3068, 1
      %v4154 = vsel %vm294, %v4152, %v4153
      %s4156 = scalar_lea.vmem %s1, 1600
      %v4157 = vld [vmem:[%s4156] sm:$0xf]
      %v4158 = vld [vmem:[%s4156 + $0x4] sm:$0xf]
      %v4159 = vld [vmem:[%s4156 + $0x8] sm:$0xf]
      %v4160 = vld [vmem:[%s4156 + $0xc] sm:$0xf]
      %v4161 = vld [vmem:[%s4156 + $0x10] sm:$0xf]
      %v4162 = vld [vmem:[%s4156 + $0x14] sm:$0xf]
      %v4163 = vld [vmem:[%s4156 + $0x18] sm:$0xf]
      %v4164 = vld [vmem:[%s4156 + $0x1c] sm:$0xf]
      %v4165 = vld [vmem:[%s4156 + $0x20] sm:$0xf]
      %v4166 = vld [vmem:[%s4156 + $0x24] sm:$0xf]
      %v4167 = vld [vmem:[%s4156 + $0x28] sm:$0xf]
      %v4168 = vld [vmem:[%s4156 + $0x2c] sm:$0xf]
      %v4169 = vld [vmem:[%s4156 + $0x30] sm:$0xf]
      %v4170 = vld [vmem:[%s4156 + $0x34] sm:$0xf]
      %v4171 = vld [vmem:[%s4156 + $0x38] sm:$0xf]
      %v4172 = vld [vmem:[%s4156 + $0x3c] sm:$0xf]
      %v4173 = vpack.c.bf16 %v4154, %v3721
      %v4190 = vunpack.c.l.b16 %v4157
      %v4191 = vunpack.c.l.b16 %v4158
      %v4192 = vunpack.c.l.b16 %v4159
      %v4193 = vunpack.c.l.b16 %v4160
      %v4194 = vunpack.c.l.b16 %v4161
      %v4195 = vunpack.c.l.b16 %v4162
      %v4196 = vunpack.c.l.b16 %v4163
      %v4197 = vunpack.c.l.b16 %v4164
      %v4198 = vunpack.c.l.b16 %v4165
      %v4199 = vunpack.c.l.b16 %v4166
      %v4200 = vunpack.c.l.b16 %v4167
      %v4201 = vunpack.c.l.b16 %v4168
      %v4202 = vunpack.c.l.b16 %v4169
      %v4203 = vunpack.c.l.b16 %v4170
      %v4204 = vunpack.c.l.b16 %v4171
      %v4205 = vunpack.c.l.b16 %v4172
      %v4206 = vpack.c.b16 %v4191, %v4190
      %v4207 = vpack.c.b16 %v4193, %v4192
      %v4208 = vpack.c.b16 %v4195, %v4194
      %v4209 = vpack.c.b16 %v4197, %v4196
      %v4210 = vpack.c.b16 %v4199, %v4198
      %v4211 = vpack.c.b16 %v4201, %v4200
      %v4212 = vpack.c.b16 %v4203, %v4202
      %v4213 = vpack.c.b16 %v4205, %v4204
      %4222 = vmatprep.subr.bf16.mxu0 0
      %4223 = vmatpush1.bf16.msra.mxu0 %v4206
      %4224 = vmatprep.subr.bf16.mxu0 0
      %4225 = vmatpush1.bf16.msra.mxu0 %v4207
      %4226 = vmatprep.subr.bf16.mxu0 0
      %4227 = vmatpush1.bf16.msra.mxu0 %v4208
      %4228 = vmatprep.subr.bf16.mxu0 0
      %4229 = vmatpush1.bf16.msra.mxu0 %v4209
      %4230 = vmatprep.subr.bf16.mxu0 0
      %4231 = vmatpush1.bf16.msra.mxu0 %v4210
      %4232 = vmatprep.subr.bf16.mxu0 0
      %4233 = vmatpush1.bf16.msra.mxu0 %v4211
      %4234 = vmatprep.subr.bf16.mxu0 0
      %4235 = vmatpush1.bf16.msra.mxu0 %v4212
      %4236 = vmatprep.subr.bf16.mxu0 0
      %4237 = vmatpush1.bf16.msra.mxu0 %v4213
      %4238 = vmatprep.subr.bf16.mxu0 0
      %4239 = vmatpush1.bf16.msra.mxu0 0
      %4240 = vmatprep.subr.bf16.mxu0 0
      %4241 = vmatpush1.bf16.msra.mxu0 0
      %4242 = vmatprep.subr.bf16.mxu0 0
      %4243 = vmatpush1.bf16.msra.mxu0 0
      %4244 = vmatprep.subr.bf16.mxu0 0
      %4245 = vmatpush1.bf16.msra.mxu0 0
      %4246 = vmatprep.subr.bf16.mxu0 0
      %4247 = vmatpush1.bf16.msra.mxu0 0
      %4248 = vmatprep.subr.bf16.mxu0 0
      %4249 = vmatpush1.bf16.msra.mxu0 0
      %4250 = vmatprep.subr.bf16.mxu0 0
      %4251 = vmatpush1.bf16.msra.mxu0 0
      %4252 = vmatprep.subr.bf16.mxu0 0
      %4253 = vmatpush1.bf16.msra.mxu0 0
      %4254 = vmatprep.mubr.bf16.mxu0 0
      %4255 = vmatmul.mubr.bf16.gmra.mrb[0].mxu0 %v3277
      %v4256 = vpop.f32.mrb[0].mxu0
      %v4257 = vadd.f32 0.0, %v4256
      %v4258 = vpop.f32.mrb[0].mxu0
      %v4259 = vpop.f32.mrb[0].mxu0
      %v4260 = vadd.f32 0.0, %v4259
      %v4261 = vpop.f32.mrb[0].mxu0
      %4262 = vmatprep.mubr.bf16.mxu0 0
      %4263 = vmatmul.mubr.bf16.gmra.mrb[0].mxu0 %v3278
      %v4264 = vpop.f32.mrb[0].mxu0
      %v4265 = vadd.f32 0.0, %v4264
      %v4266 = vpop.f32.mrb[0].mxu0
      %v4267 = vpop.f32.mrb[0].mxu0
      %v4268 = vadd.f32 0.0, %v4267
      %v4269 = vpop.f32.mrb[0].mxu0
      %4270 = vmatprep.mubr.bf16.mxu0 0
      %4271 = vmatmul.mubr.bf16.gmra.mrb[0].mxu0 %v3279
      %v4272 = vpop.f32.mrb[0].mxu0
      %v4273 = vadd.f32 0.0, %v4272
      %v4274 = vpop.f32.mrb[0].mxu0
      %v4275 = vpop.f32.mrb[0].mxu0
      %v4276 = vadd.f32 0.0, %v4275
      %v4277 = vpop.f32.mrb[0].mxu0
      %4278 = vmatprep.mubr.bf16.mxu0 0
      %4279 = vmatmul.mubr.bf16.gmra.mrb[0].mxu0 %v4173
      %v4280 = vpop.f32.mrb[0].mxu0
      %v4281 = vadd.f32 0.0, %v4280
      %v4282 = vpop.f32.mrb[0].mxu0
      %v4283 = vpop.f32.mrb[0].mxu0
      %v4284 = vadd.f32 0.0, %v4283
      %v4285 = vpop.f32.mrb[0].mxu0
      %4286 = vdwg.mxu0
      %v4287 = vadd.f32 %v4142, %v4257
      %v4288 = vadd.f32 %v4143, %v4260
      %v4289 = vadd.f32 %v4144, %v4265
      %v4290 = vadd.f32 %v4145, %v4268
      %v4291 = vadd.f32 %v4146, %v4273
      %v4292 = vadd.f32 %v4147, %v4276
      %v4293 = vadd.f32 %v4148, %v4281
      %v4294 = vadd.f32 %v4149, %v4284
      %v4295 = vrot.slane %v3067, 2
      %v4296 = vrot.slane %v3068, 2
      %v4297 = vsel %vm574, %v4295, %v4296
      %s4299 = scalar_lea.vmem %s1, 1664
      %v4300 = vld [vmem:[%s4299] sm:$0xf]
      %v4301 = vld [vmem:[%s4299 + $0x4] sm:$0xf]
      %v4302 = vld [vmem:[%s4299 + $0x8] sm:$0xf]
      %v4303 = vld [vmem:[%s4299 + $0xc] sm:$0xf]
      %v4304 = vld [vmem:[%s4299 + $0x10] sm:$0xf]
      %v4305 = vld [vmem:[%s4299 + $0x14] sm:$0xf]
      %v4306 = vld [vmem:[%s4299 + $0x18] sm:$0xf]
      %v4307 = vld [vmem:[%s4299 + $0x1c] sm:$0xf]
      %v4308 = vld [vmem:[%s4299 + $0x20] sm:$0xf]
      %v4309 = vld [vmem:[%s4299 + $0x24] sm:$0xf]
      %v4310 = vld [vmem:[%s4299 + $0x28] sm:$0xf]
      %v4311 = vld [vmem:[%s4299 + $0x2c] sm:$0xf]
      %v4312 = vld [vmem:[%s4299 + $0x30] sm:$0xf]
      %v4313 = vld [vmem:[%s4299 + $0x34] sm:$0xf]
      %v4314 = vld [vmem:[%s4299 + $0x38] sm:$0xf]
      %v4315 = vld [vmem:[%s4299 + $0x3c] sm:$0xf]
      %v4316 = vpack.c.bf16 %v4297, %v3867
      %v4333 = vunpack.c.l.b16 %v4300
      %v4334 = vunpack.c.l.b16 %v4301
      %v4335 = vunpack.c.l.b16 %v4302
      %v4336 = vunpack.c.l.b16 %v4303
      %v4337 = vunpack.c.l.b16 %v4304
      %v4338 = vunpack.c.l.b16 %v4305
      %v4339 = vunpack.c.l.b16 %v4306
      %v4340 = vunpack.c.l.b16 %v4307
      %v4341 = vunpack.c.l.b16 %v4308
      %v4342 = vunpack.c.l.b16 %v4309
      %v4343 = vunpack.c.l.b16 %v4310
      %v4344 = vunpack.c.l.b16 %v4311
      %v4345 = vunpack.c.l.b16 %v4312
      %v4346 = vunpack.c.l.b16 %v4313
      %v4347 = vunpack.c.l.b16 %v4314
      %v4348 = vunpack.c.l.b16 %v4315
      %v4349 = vpack.c.b16 %v4334, %v4333
      %v4350 = vpack.c.b16 %v4336, %v4335
      %v4351 = vpack.c.b16 %v4338, %v4337
      %v4352 = vpack.c.b16 %v4340, %v4339
      %v4353 = vpack.c.b16 %v4342, %v4341
      %v4354 = vpack.c.b16 %v4344, %v4343
      %v4355 = vpack.c.b16 %v4346, %v4345
      %v4356 = vpack.c.b16 %v4348, %v4347
      %4365 = vmatprep.subr.bf16.mxu0 0
      %4366 = vmatpush1.bf16.msra.mxu0 %v4349
      %4367 = vmatprep.subr.bf16.mxu0 0
      %4368 = vmatpush1.bf16.msra.mxu0 %v4350
      %4369 = vmatprep.subr.bf16.mxu0 0
      %4370 = vmatpush1.bf16.msra.mxu0 %v4351
      %4371 = vmatprep.subr.bf16.mxu0 0
      %4372 = vmatpush1.bf16.msra.mxu0 %v4352
      %4373 = vmatprep.subr.bf16.mxu0 0
      %4374 = vmatpush1.bf16.msra.mxu0 %v4353
      %4375 = vmatprep.subr.bf16.mxu0 0
      %4376 = vmatpush1.bf16.msra.mxu0 %v4354
      %4377 = vmatprep.subr.bf16.mxu0 0
      %4378 = vmatpush1.bf16.msra.mxu0 %v4355
      %4379 = vmatprep.subr.bf16.mxu0 0
      %4380 = vmatpush1.bf16.msra.mxu0 %v4356
      %4381 = vmatprep.subr.bf16.mxu0 0
      %4382 = vmatpush1.bf16.msra.mxu0 0
      %4383 = vmatprep.subr.bf16.mxu0 0
      %4384 = vmatpush1.bf16.msra.mxu0 0
      %4385 = vmatprep.subr.bf16.mxu0 0
      %4386 = vmatpush1.bf16.msra.mxu0 0
      %4387 = vmatprep.subr.bf16.mxu0 0
      %4388 = vmatpush1.bf16.msra.mxu0 0
      %4389 = vmatprep.subr.bf16.mxu0 0
      %4390 = vmatpush1.bf16.msra.mxu0 0
      %4391 = vmatprep.subr.bf16.mxu0 0
      %4392 = vmatpush1.bf16.msra.mxu0 0
      %4393 = vmatprep.subr.bf16.mxu0 0
      %4394 = vmatpush1.bf16.msra.mxu0 0
      %4395 = vmatprep.subr.bf16.mxu0 0
      %4396 = vmatpush1.bf16.msra.mxu0 0
      %4397 = vmatprep.mubr.bf16.mxu0 0
      %4398 = vmatmul.mubr.bf16.gmra.mrb[0].mxu0 %v3451
      %v4399 = vpop.f32.mrb[0].mxu0
      %v4400 = vadd.f32 0.0, %v4399
      %v4401 = vpop.f32.mrb[0].mxu0
      %v4402 = vpop.f32.mrb[0].mxu0
      %v4403 = vadd.f32 0.0, %v4402
      %v4404 = vpop.f32.mrb[0].mxu0
      %4405 = vmatprep.mubr.bf16.mxu0 0
      %4406 = vmatmul.mubr.bf16.gmra.mrb[0].mxu0 %v3452
      %v4407 = vpop.f32.mrb[0].mxu0
      %v4408 = vadd.f32 0.0, %v4407
      %v4409 = vpop.f32.mrb[0].mxu0
      %v4410 = vpop.f32.mrb[0].mxu0
      %v4411 = vadd.f32 0.0, %v4410
      %v4412 = vpop.f32.mrb[0].mxu0
      %4413 = vmatprep.mubr.bf16.mxu0 0
      %4414 = vmatmul.mubr.bf16.gmra.mrb[0].mxu0 %v3453
      %v4415 = vpop.f32.mrb[0].mxu0
      %v4416 = vadd.f32 0.0, %v4415
      %v4417 = vpop.f32.mrb[0].mxu0
      %v4418 = vpop.f32.mrb[0].mxu0
      %v4419 = vadd.f32 0.0, %v4418
      %v4420 = vpop.f32.mrb[0].mxu0
      %4421 = vmatprep.mubr.bf16.mxu0 0
      %4422 = vmatmul.mubr.bf16.gmra.mrb[0].mxu0 %v4316
      %v4423 = vpop.f32.mrb[0].mxu0
      %v4424 = vadd.f32 0.0, %v4423
      %v4425 = vpop.f32.mrb[0].mxu0
      %v4426 = vpop.f32.mrb[0].mxu0
      %v4427 = vadd.f32 0.0, %v4426
      %v4428 = vpop.f32.mrb[0].mxu0
      %4429 = vdwg.mxu0
      %v4430 = vadd.f32 %v4287, %v4400
      %v4431 = vadd.f32 %v4288, %v4403
      %v4432 = vadd.f32 %v4289, %v4408
      %v4433 = vadd.f32 %v4290, %v4411
      %v4434 = vadd.f32 %v4291, %v4416
      %v4435 = vadd.f32 %v4292, %v4419
      %v4436 = vadd.f32 %v4293, %v4424
      %v4437 = vadd.f32 %v4294, %v4427
      %4438 = vst [vmem:[%s205] sm:$0xff] %v4430
      %4439 = vst [vmem:[%s205 + $0x8] sm:$0xff] %v4431
      %4440 = vst [vmem:[%s205 + $0x10] sm:$0xff] %v4432
      %4441 = vst [vmem:[%s205 + $0x18] sm:$0xff] %v4433
      %4442 = vst [vmem:[%s205 + $0x20] sm:$0xff] %v4434
      %4443 = vst [vmem:[%s205 + $0x28] sm:$0xff] %v4435
      %4444 = vst [vmem:[%s205 + $0x30] sm:$0xff] %v4436
      %4445 = vst [vmem:[%s205 + $0x38] sm:$0xff] %v4437
      %v4446 = vadd.f32 %v4430, %v4431
      %v4447 = vadd.f32 %v4446, %v4432
      %v4448 = vadd.f32 %v4447, %v4433
      %v4449 = vadd.f32 %v4448, %v4434
      %v4450 = vadd.f32 %v4449, %v4435
      %v4451 = vadd.f32 %v4450, %v4436
      %v4452 = vadd.f32 %v4451, %v4437
      %v4453 = vrot.slane %v4452, 4
      %v4454 = vadd.f32 %v4452, %v4453
      %v4455 = vrot.slane %v4454, 2
      %v4456 = vadd.f32 %v4454, %v4455
      %v4457 = vrot.slane %v4456, 1
      %v4458 = vadd.f32 %v4456, %v4457
      %v4459 = vmul.f32 %v4430, %v4430
      %v4460 = vmul.f32 %v4431, %v4431
      %v4461 = vmul.f32 %v4432, %v4432
      %v4462 = vmul.f32 %v4433, %v4433
      %v4463 = vmul.f32 %v4434, %v4434
      %v4464 = vmul.f32 %v4435, %v4435
      %v4465 = vmul.f32 %v4436, %v4436
      %v4466 = vmul.f32 %v4437, %v4437
      %v4467 = vadd.f32 %v4459, %v4460
      %v4468 = vadd.f32 %v4467, %v4461
      %v4469 = vadd.f32 %v4468, %v4462
      %v4470 = vadd.f32 %v4469, %v4463
      %v4471 = vadd.f32 %v4470, %v4464
      %v4472 = vadd.f32 %v4471, %v4465
      %v4473 = vadd.f32 %v4472, %v4466
      %v4474 = vrot.slane %v4473, 4
      %v4475 = vadd.f32 %v4473, %v4474
      %v4476 = vrot.slane %v4475, 2
      %v4477 = vadd.f32 %v4475, %v4476
      %v4478 = vrot.slane %v4477, 1
      %v4479 = vadd.f32 %v4477, %v4478
      %vm4480 = vcmask 1040384
      %v4481 = vsel %vm4480, %v4458, %v4479
      %4482 = vst [vmem:[%s213] sm:$0x3] %v4481
      %p4483 = scmp.lt.s32.totalorder %s19, 1
      %s4484 = scalar_select %p4483, %s19, 1
      %p4485 = scmp.lt.s32.totalorder %s20, 7
      %s4486 = scalar_select %p4485, %s20, 7
      %s4487 = smul.addr %s4486, 8
      %s4488 = smul.addr %s4484, 64
      %s4489 = sadd.s32 %s4487, %s4488
      %s4490 = smul.addr %s4489, 8
      %s4491 = scalar_lea.vmem %s2, %s4490
      %p4492 = scmp.lt.s32.totalorder %s19, 1
      %s4493 = scalar_select %p4492, %s19, 1
      %p4494 = scmp.lt.s32.totalorder %s20, 7
      %s4495 = scalar_select %p4494, %s20, 7
      %s4496 = smul.addr %s4493, 8
      %s4497 = sadd.s32 %s4495, %s4496
      %s4498 = smul.addr %s4497, 2
      %s4499 = scalar_lea.vmem %s3, %s4498
      // Predicated region
      $region29: #{bottleneck_forward.7} parent=27 // pred_check
        %p4500 = pneg %p94
      $region30: #{bottleneck_forward.7} parent=27 // pred_check_branch
        %4502 = sbr.rel (%p4500) target = $region32
      $region31: #{bottleneck_forward.7} parent=27 // pred_region
        _
      $region32: #{bottleneck_forward.7} parent=27 // pred_fallthru
        _
      // Predicated region
      $region33: #{bottleneck_forward.7} parent=27 // pred_check
        %p4503 = pneg %p122
      $region34: #{bottleneck_forward.7} parent=27 // pred_check_branch
        %4505 = sbr.rel (%p4503) target = $region36
      $region35: #{bottleneck_forward.7} parent=27 // pred_region
        _
      $region36: #{bottleneck_forward.7} parent=27 // pred_fallthru
        _
    $region28: #{bottleneck_forward.7} parent=5 // pred_fallthru
      _
    %p4506 = scmp.le.s32.totalorder 2, %s10
    // Predicated region
    $region37: #{bottleneck_forward.7} parent=5 // pred_check
      %p4507 = pneg %p4506
    $region38: #{bottleneck_forward.7} parent=5 // pred_check_branch
      %4509 = sbr.rel (%p4507) target = $region40
    $region39: #{bottleneck_forward.7} parent=5 // pred_region
      %s4510 = ssub.s32 %s10, 2
      // Predicated region
      $region41: #{bottleneck_forward.7} parent=39 // pred_check
        %p4511 = pneg %p100
      $region42: #{bottleneck_forward.7} parent=39 // pred_check_branch
        %4513 = sbr.rel (%p4511) target = $region44
      $region43: #{bottleneck_forward.7} parent=39 // pred_region
        %p4514 = scmp.lt.s32.totalorder %s21, 1
        %s4515 = scalar_select %p4514, %s21, 1
        %p4516 = scmp.lt.s32.totalorder %s22, 7
        %s4517 = scalar_select %p4516, %s22, 7
        %s4518 = smul.addr %s4517, 8
        %s4519 = smul.addr %s4515, 64
        %s4520 = sadd.s32 %s4518, %s4519
        %s4521 = smul.addr %s4520, 8
        %s4522 = scalar_lea.vmem %s2, %s4521
      $region44: #{bottleneck_forward.7} parent=39 // pred_fallthru
        _
      // Predicated region
      $region45: #{bottleneck_forward.7} parent=39 // pred_check
        %p4523 = pneg %p128
      $region46: #{bottleneck_forward.7} parent=39 // pred_check_branch
        %4525 = sbr.rel (%p4523) target = $region48
      $region47: #{bottleneck_forward.7} parent=39 // pred_region
        %p4526 = scmp.lt.s32.totalorder %s21, 1
        %s4527 = scalar_select %p4526, %s21, 1
        %p4528 = scmp.lt.s32.totalorder %s22, 7
        %s4529 = scalar_select %p4528, %s22, 7
        %s4530 = smul.addr %s4527, 8
        %s4531 = sadd.s32 %s4529, %s4530
        %s4532 = smul.addr %s4531, 2
        %s4533 = scalar_lea.vmem %s3, %s4532
      $region48: #{bottleneck_forward.7} parent=39 // pred_fallthru
        _
    $region40: #{bottleneck_forward.7} parent=5 // pred_fallthru
      _
  $region6: #{bottleneck_forward.7} parent=0 // loop_footer
    %s14 = sadd.s32 1, %s10
  $region7: #{bottleneck_forward.7} parent=0 // loop_footer_branch
    %9 = sbr.rel target = $region3
  $region8: #{bottleneck_forward.7} parent=0 // loop_exit
    _

</llo_original>
